<compile_context>
chip_gen: v5e
topology: v5e:2x2
jax: 0.10.0
libtpu: 0.0.40
codegen_flags: <defaults>
</compile_context>

<pallas_src>
import math
import functools

import jax
import jax.numpy as jnp
from jax.experimental import pallas as pl
from jax.experimental.pallas import tpu as pltpu

T_SEQ = 24        # CNN output width == PositionalEncoding length == block input_length
NEG_INF = -1e9    # bias for padded lexicon columns (drives exp() to exactly 0)


def _round_up(x, m):
    return (x + m - 1) // m * m


# ----------------------------- Pallas kernel ---------------------------------

def model2_kernel(patches_ref, cnn_w_ref, pe_b_ref, lin1_w_ref, lin1_b_ref,
                  qkv_w_ref, qkv_b_ref, proj_w_ref, proj_b_ref,
                  fc1_w_ref, fc1_b_ref, fc2_w_ref, fc2_b_ref,
                  lin2_w_ref, lin2_b_ref,
                  out_ref, *, depth, num_heads, d_real):
    f32, bf16 = jnp.float32, jnp.bfloat16
    Dp = lin1_w_ref.shape[0]                       # padded hidden (128)
    dh = Dp // num_heads                           # padded head dim (16)
    rows = patches_ref.shape[0]                    # samples_in_block * T_SEQ
    n_blk = rows // T_SEQ

    # LayerNorm over the *real* feature columns only (padded lanes stay exactly 0).
    # Affine (g, b) is folded into the following matmul weights at prep time, so the
    # normalizer emits the bf16 matmul operand directly (casts hoisted).
    col = jax.lax.broadcasted_iota(jnp.int32, (1, Dp), 1)
    feat_mask = (col < d_real).astype(f32)
    inv_d = 1.0 / d_real

    def layernorm_bf16(x, eps=1e-5):
        mu = jnp.sum(x, axis=-1, keepdims=True) * inv_d
        diff = (x - mu) * feat_mask
        var = jnp.sum(diff * diff, axis=-1, keepdims=True) * inv_d
        return (diff * jax.lax.rsqrt(var + eps)).astype(bf16)

    # --- CNN stand-in (patch-embedding matmul) + (cnn_b + pe) positional bias -----
    # pe_b is a tiny (T_SEQ, Dp) constant weight, broadcast over the samples of the
    # block in-kernel (no pre-tiled (NT, Dp) f32 array is streamed from HBM).
    x = jnp.dot(patches_ref[...], cnn_w_ref[...], preferred_element_type=f32)
    x = (x.reshape(n_blk, T_SEQ, Dp) + pe_b_ref[...][None, :, :]).reshape(rows, Dp)

    # --- linear1 ---
    x = jnp.dot(x.astype(bf16), lin1_w_ref[...],
                preferred_element_type=f32) + lin1_b_ref[...]          # (rows, Dp) f32

    # --- MixingBlocks: pre-norm global attention + MLP (mlp_ratio=2) ---
    for blk in range(depth):
        # attention: LN affine and 1/sqrt(head_dim) already folded into qkv_w / qkv_b
        h = layernorm_bf16(x)
        qkv = jnp.dot(h, qkv_w_ref[blk],
                      preferred_element_type=f32) + qkv_b_ref[blk]     # (rows, 3*Dp) f32
        qkv3 = qkv.astype(bf16).reshape(n_blk, T_SEQ, 3 * Dp)          # single bf16 cast
        pw = proj_w_ref[blk]                                           # (Dp, Dp), head-major rows
        attn = jnp.zeros((rows, Dp), f32)
        for hh in range(num_heads):
            q3 = qkv3[:, :, hh * dh:(hh + 1) * dh]                               # (n,T,dh) bf16
            k3 = qkv3[:, :, Dp + hh * dh:Dp + (hh + 1) * dh]
            v3 = qkv3[:, :, 2 * Dp + hh * dh:2 * Dp + (hh + 1) * dh]
            s = jnp.einsum("bqd,bkd->bqk", q3, k3,
                           preferred_element_type=f32)                           # (n,T,T)
            s = s - jnp.max(s, axis=-1, keepdims=True)
            e = jnp.exp(s)
            p = e * pl.reciprocal(jnp.sum(e, axis=-1, keepdims=True), approx=True)
            o = jnp.einsum("bqk,bkd->bqd", p.astype(bf16), v3,
                           preferred_element_type=f32)                           # (n,T,dh)
            # output projection folded per head -> no 8-way lane-dim concatenate
            attn = attn + jnp.dot(o.reshape(rows, dh).astype(bf16),
                                  pw[hh * dh:(hh + 1) * dh, :],
                                  preferred_element_type=f32)                    # (rows, Dp)
        x = x + attn + proj_b_ref[blk]

        # MLP: LN affine folded into fc1_w / fc1_b
        h = layernorm_bf16(x)
        h = jnp.dot(h, fc1_w_ref[blk],
                    preferred_element_type=f32) + fc1_b_ref[blk]
        h = jax.nn.gelu(h, approximate=True)
        h = jnp.dot(h.astype(bf16), fc2_w_ref[blk],
                    preferred_element_type=f32) + fc2_b_ref[blk]
        x = x + h

    # --- final LayerNorm (affine folded into lin2) + linear2 + log_softmax ---
    h = layernorm_bf16(x)
    logits = jnp.dot(h, lin2_w_ref[...],
                     preferred_element_type=f32) + lin2_b_ref[...]     # (rows, Lp)
    m = jnp.max(logits, axis=-1, keepdims=True)
    z = logits - m
    lse = jnp.log(jnp.sum(jnp.exp(z), axis=-1, keepdims=True))
    out_ref[...] = z - lse


# ------------------------- wrapper / weight preparation ------------------------

def _extract_patches(x_nchw):
    """NCHW image -> (N, T_SEQ, C*H*(W//T_SEQ)) patch sequence (glue, plain JAX)."""
    N, C, H, W = x_nchw.shape
    assert W % T_SEQ == 0, "input width must be a multiple of 24"
    pw = W // T_SEQ
    patches = x_nchw.reshape(N, C, H, T_SEQ, pw)
    patches = patches.transpose(0, 3, 1, 2, 4).reshape(N, T_SEQ, C * H * pw)
    return patches


def _prepare_padded_params(params, *, num_heads, Dp, Pp, Fp, Lp):
    """Fold LayerNorm affines + attention scale into the following matmul weights,
    pad feature dims to lane-aligned sizes, pad each attention head 15->16, and
    cast matmul weights to bf16 (biases / pe stay f32)."""
    D = params["lin1_w"].shape[0]
    depth = params["qkv_w"].shape[0]
    dh, dh_p = D // num_heads, Dp // num_heads
    scale = 1.0 / math.sqrt(dh)            # real head dim (15)
    bf16 = jnp.bfloat16

    def pad_last(a, new, value=0.0):
        return jnp.pad(a, [(0, 0)] * (a.ndim - 1) + [(0, new - a.shape[-1])],
                       constant_values=value)

    def pad_axis(a, axis, new):
        cfg = [(0, 0)] * a.ndim
        cfg[axis] = (0, new - a.shape[axis])
        return jnp.pad(a, cfg)

    # ---- fold LayerNorm affines (and the attention scale) into matmul weights ----
    # norm1 -> qkv; Q section additionally pre-scaled by 1/sqrt(head_dim)
    qkv_w = params["n1_g"][:, 0, :, None] * params["qkv_w"]                 # (depth, D, 3D)
    qkv_b = jnp.matmul(params["n1_b"], params["qkv_w"]) + params["qkv_b"]   # (depth, 1, 3D)
    qkv_w = qkv_w.at[:, :, :D].multiply(scale)
    qkv_b = qkv_b.at[:, :, :D].multiply(scale)
    # norm2 -> fc1
    fc1_w = params["n2_g"][:, 0, :, None] * params["fc1_w"]
    fc1_b = jnp.matmul(params["n2_b"], params["fc1_w"]) + params["fc1_b"]
    # final norm -> lin2
    lin2_w = params["norm_g"][0, :, None] * params["lin2_w"]
    lin2_b = params["norm_b"] @ params["lin2_w"] + params["lin2_b"]

    # ---- pad to lane-aligned shapes ----
    # qkv_w: columns ordered [q|k|v], each section head-major (H, dh); pad dh 15->16
    qkv_w = qkv_w.reshape(depth, D, 3, num_heads, dh)
    qkv_w = pad_axis(pad_axis(qkv_w, 1, Dp), 4, dh_p).reshape(depth, Dp, 3 * Dp)
    qkv_b = qkv_b.reshape(depth, 1, 3, num_heads, dh)
    qkv_b = pad_axis(qkv_b, 4, dh_p).reshape(depth, 1, 3 * Dp)

    # proj_w: rows are head-major (H, dh); padded head rows are zero
    proj_w = params["proj_w"].reshape(depth, num_heads, dh, D)
    proj_w = pad_axis(pad_axis(proj_w, 2, dh_p), 3, Dp).reshape(depth, Dp, Dp)

    return dict(
        cnn_w=pad_axis(pad_last(params["cnn_w"], Dp), 0, Pp).astype(bf16),
        pe_b=pad_last(params["pe"] + params["cnn_b"], Dp),                  # (T_SEQ, Dp) f32
        lin1_w=pad_axis(pad_last(params["lin1_w"], Dp), 0, Dp).astype(bf16),
        lin1_b=pad_last(params["lin1_b"], Dp),
        qkv_w=qkv_w.astype(bf16),
        qkv_b=qkv_b,
        proj_w=proj_w.astype(bf16),
        proj_b=pad_last(params["proj_b"], Dp),
        fc1_w=pad_axis(pad_last(fc1_w, Fp), 1, Dp).astype(bf16),
        fc1_b=pad_last(fc1_b, Fp),
        fc2_w=pad_axis(pad_last(params["fc2_w"], Dp), 1, Fp).astype(bf16),
        fc2_b=pad_last(params["fc2_b"], Dp),
        lin2_w=pad_axis(pad_last(lin2_w, Lp), 0, Dp).astype(bf16),
        lin2_b=pad_last(lin2_b, Lp, value=NEG_INF),
    )


def model2_forward(x_nchw, params, *, num_heads=8, depth=2, batch_chunks=1):
    # batch_chunks=1 is best on 1-TC chips (v5e/v6e); use a multiple of 2 on v7x so
    # the 'parallel' grid axis is sharded across both TensorCores, and keep rows per
    # chunk <= ~2K there to stay within its 64 MiB VMEM.
    N = x_nchw.shape[0]
    patches = _extract_patches(x_nchw)                      # (N, T, P) f32
    P = patches.shape[-1]
    D = params["lin1_w"].shape[0]
    L = params["lin2_w"].shape[-1]
    F = params["fc1_w"].shape[-1]

    Dp = _round_up(D, 128)
    Pp = _round_up(P, 128)
    Fp = _round_up(F, 128)
    Lp = _round_up(L, 128)
    assert Dp % num_heads == 0 and Dp // num_heads >= D // num_heads

    pp = _prepare_padded_params(params, num_heads=num_heads, Dp=Dp, Pp=Pp, Fp=Fp, Lp=Lp)

    NT = N * T_SEQ
    patches2 = jnp.pad(patches.reshape(NT, P), ((0, 0), (0, Pp - P))).astype(jnp.bfloat16)

    assert N % batch_chunks == 0
    rows_blk = (N // batch_chunks) * T_SEQ

    kernel = functools.partial(model2_kernel, depth=depth,
                               num_heads=num_heads, d_real=D)

    def wspec(arr):
        nd = arr.ndim
        return pl.BlockSpec(arr.shape, lambda i, _nd=nd: (0,) * _nd)

    weight_names = ["cnn_w", "pe_b", "lin1_w", "lin1_b",
                    "qkv_w", "qkv_b", "proj_w", "proj_b",
                    "fc1_w", "fc1_b", "fc2_w", "fc2_b",
                    "lin2_w", "lin2_b"]
    weights = [pp[k] for k in weight_names]

    in_specs = [pl.BlockSpec((rows_blk, Pp), lambda i: (i, 0))]
    in_specs += [wspec(w) for w in weights]

    out = pl.pallas_call(
        kernel,
        out_shape=jax.ShapeDtypeStruct((NT, Lp), jnp.float32),
        grid_spec=pltpu.PrefetchScalarGridSpec(
            num_scalar_prefetch=0,
            grid=(batch_chunks,),
            in_specs=in_specs,
            out_specs=pl.BlockSpec((rows_blk, Lp), lambda i: (i, 0)),
        ),
        compiler_params=pltpu.CompilerParams(
            dimension_semantics=("parallel",)),
    )(patches2, *weights)

    # drop padded lexicon columns; x.permute((1, 0, 2)): (N, T, L) -> (T, N, L)
    out = out.reshape(N, T_SEQ, Lp)[:, :, :L]
    return jnp.transpose(out, (1, 0, 2))


# --------------------------- params / reference --------------------------------

def sinusoidal_pe(length, dim):
    pos = jnp.arange(length, dtype=jnp.float32)[:, None]
    div = jnp.exp(jnp.arange(0, dim, 2, dtype=jnp.float32) * (-math.log(10000.0) / dim))
    pe = jnp.zeros((length, dim), jnp.float32)
    pe = pe.at[:, 0::2].set(jnp.sin(pos * div))
    pe = pe.at[:, 1::2].set(jnp.cos(pos * div))
    return pe


def init_params(key, in_channels, H, W, hidden, lexicon, depth, mlp_ratio=2):
    """Deterministic synthetic weights in TRUE (unpadded) shapes; x @ W orientation."""
    pw = W // T_SEQ
    P = in_channels * H * pw
    ks = jax.random.split(key, 13)

    def w(k, shape, scale=0.05):
        return scale * jax.random.normal(k, shape, jnp.float32)

    return dict(
        cnn_w=w(ks[0], (P, hidden)),
        cnn_b=jnp.zeros((1, hidden), jnp.float32),
        pe=sinusoidal_pe(T_SEQ, hidden),
        lin1_w=w(ks[1], (hidden, hidden)),
        lin1_b=w(ks[2], (1, hidden)),
        n1_g=jnp.ones((depth, 1, hidden), jnp.float32),
        n1_b=jnp.zeros((depth, 1, hidden), jnp.float32),
        qkv_w=w(ks[3], (depth, hidden, 3 * hidden)),
        qkv_b=w(ks[4], (depth, 1, 3 * hidden)),
        proj_w=w(ks[5], (depth, hidden, hidden)),
        proj_b=w(ks[6], (depth, 1, hidden)),
        n2_g=jnp.ones((depth, 1, hidden), jnp.float32),
        n2_b=jnp.zeros((depth, 1, hidden), jnp.float32),
        fc1_w=w(ks[7], (depth, hidden, mlp_ratio * hidden)),
        fc1_b=w(ks[8], (depth, 1, mlp_ratio * hidden)),
        fc2_w=w(ks[9], (depth, mlp_ratio * hidden, hidden)),
        fc2_b=w(ks[10], (depth, 1, hidden)),
        norm_g=jnp.ones((1, hidden), jnp.float32),
        norm_b=jnp.zeros((1, hidden), jnp.float32),
        lin2_w=w(ks[11], (hidden, lexicon)),
        lin2_b=w(ks[12], (1, lexicon)),
    )


def reference_forward(x_nchw, params, *, num_heads=8, depth=2):
    """Pure-JAX reference of the same math on TRUE shapes (bf16 matmul operands with
    f32 accumulation to mirror the kernel's MXU precision); mirrors the module's
    unfolded two-linear / affine-LayerNorm structure."""
    patches = _extract_patches(x_nchw)
    N = patches.shape[0]
    D = params["lin1_w"].shape[0]
    dh = D // num_heads
    scale = 1.0 / math.sqrt(dh)
    bf16, f32 = jnp.bfloat16, jnp.float32

    def mm(a, b):
        return jnp.dot(a.astype(bf16), b.astype(bf16), preferred_element_type=f32)

    def ln(x, g, b, eps=1e-5):
        mu = x.mean(-1, keepdims=True)
        var = ((x - mu) ** 2).mean(-1, keepdims=True)
        return (x - mu) / jnp.sqrt(var + eps) * g + b

    x = mm(patches, params["cnn_w"]) + params["cnn_b"]
    x = x + params["pe"]
    x = mm(x, params["lin1_w"]) + params["lin1_b"]
    for blk in range(depth):
        h = ln(x, params["n1_g"][blk], params["n1_b"][blk])
        qkv = mm(h, params["qkv_w"][blk]) + params["qkv_b"][blk]
        q, k, v = jnp.split(qkv, 3, axis=-1)
        q = q.reshape(N, T_SEQ, num_heads, dh).astype(bf16)
        k = k.reshape(N, T_SEQ, num_heads, dh).astype(bf16)
        v = v.reshape(N, T_SEQ, num_heads, dh).astype(bf16)
        s = jnp.einsum("nthd,nshd->nhts", q, k, preferred_element_type=f32) * scale
        p = jax.nn.softmax(s, axis=-1)
        attn = jnp.einsum("nhts,nshd->nthd", p.astype(bf16), v,
                          preferred_element_type=f32).reshape(N, T_SEQ, D)
        x = x + mm(attn, params["proj_w"][blk]) + params["proj_b"][blk]
        h = ln(x, params["n2_g"][blk], params["n2_b"][blk])
        h = jax.nn.gelu(mm(h, params["fc1_w"][blk]) + params["fc1_b"][blk],
                        approximate=True)
        x = x + mm(h, params["fc2_w"][blk]) + params["fc2_b"][blk]
    x = ln(x, params["norm_g"], params["norm_b"])
    logits = mm(x, params["lin2_w"]) + params["lin2_b"]
    out = jax.nn.log_softmax(logits, axis=-1)
    return jnp.transpose(out, (1, 0, 2))


# ---------------------------------- main ---------------------------------------

if __name__ == "__main__":
    N, C, H, W = 2, 4, 16, 48          # NCHW; W = 24 * 2 -> T_SEQ = 24; P = 4*16*2 = 128
    lexicon, hidden, heads, depth = 32, 120, 8, 2

    key = jax.random.PRNGKey(0)
    pkey, xkey = jax.random.split(key)
    params = init_params(pkey, C, H, W, hidden, lexicon, depth)
    x = jax.random.normal(xkey, (N, C, H, W), jnp.float32)

    out = model2_forward(x, params, num_heads=heads, depth=depth)
    out = jax.block_until_ready(out)

    assert out.shape == (T_SEQ, N, lexicon), out.shape
    ref = reference_forward(x, params, num_heads=heads, depth=depth)
    max_diff = float(jnp.max(jnp.abs(out - ref)))
    # rows of exp(log_softmax) must sum to 1
    row_sum_err = float(jnp.max(jnp.abs(jnp.exp(out).sum(-1) - 1.0)))
    assert bool(jnp.all(jnp.isfinite(out)))
    assert max_diff < 1e-2, f"max diff vs reference: {max_diff}"
    assert row_sum_err < 1e-4, f"log_softmax row-sum error: {row_sum_err}"

    print("KERNEL_OK")
</pallas_src>

<mosaic_0001>
module attributes {stable_mosaic.version = 11 : i64} {
  func.func @model2_kernel(%arg0: i32, %arg1: memref<48x128xbf16, #tpu.memory_space<vmem>>, %arg2: memref<128x128xbf16, #tpu.memory_space<vmem>>, %arg3: memref<24x128xf32, #tpu.memory_space<vmem>>, %arg4: memref<128x128xbf16, #tpu.memory_space<vmem>>, %arg5: memref<1x128xf32, #tpu.memory_space<vmem>>, %arg6: memref<2x128x384xbf16, #tpu.memory_space<vmem>>, %arg7: memref<2x1x384xf32, #tpu.memory_space<vmem>>, %arg8: memref<2x128x128xbf16, #tpu.memory_space<vmem>>, %arg9: memref<2x1x128xf32, #tpu.memory_space<vmem>>, %arg10: memref<2x128x256xbf16, #tpu.memory_space<vmem>>, %arg11: memref<2x1x256xf32, #tpu.memory_space<vmem>>, %arg12: memref<2x256x128xbf16, #tpu.memory_space<vmem>>, %arg13: memref<2x1x128xf32, #tpu.memory_space<vmem>>, %arg14: memref<128x128xbf16, #tpu.memory_space<vmem>>, %arg15: memref<1x128xf32, #tpu.memory_space<vmem>>, %arg16: memref<48x128xf32, #tpu.memory_space<vmem>>) attributes {dimension_semantics = [#tpu.dimension_semantics<parallel>], iteration_bounds = array<i64: 1>, scalar_prefetch = 0 : i64, scratch_operands = 0 : i64, tpu.core_type = #tpu.core_type<tc>, window_params = [{transform_indices = @transform_0, window_bounds = array<i64: 48, 128>}, {pipeline_mode = #tpu.pipeline_mode<synchronous>, transform_indices = @transform_1, window_bounds = array<i64: 128, 128>}, {pipeline_mode = #tpu.pipeline_mode<synchronous>, transform_indices = @transform_2, window_bounds = array<i64: 24, 128>}, {pipeline_mode = #tpu.pipeline_mode<synchronous>, transform_indices = @transform_3, window_bounds = array<i64: 128, 128>}, {pipeline_mode = #tpu.pipeline_mode<synchronous>, transform_indices = @transform_4, window_bounds = array<i64: 1, 128>}, {pipeline_mode = #tpu.pipeline_mode<synchronous>, transform_indices = @transform_5, window_bounds = array<i64: 2, 128, 384>}, {pipeline_mode = #tpu.pipeline_mode<synchronous>, transform_indices = @transform_6, window_bounds = array<i64: 2, 1, 384>}, {pipeline_mode = #tpu.pipeline_mode<synchronous>, transform_indices = @transform_7, window_bounds = array<i64: 2, 128, 128>}, {pipeline_mode = #tpu.pipeline_mode<synchronous>, transform_indices = @transform_8, window_bounds = array<i64: 2, 1, 128>}, {pipeline_mode = #tpu.pipeline_mode<synchronous>, transform_indices = @transform_9, window_bounds = array<i64: 2, 128, 256>}, {pipeline_mode = #tpu.pipeline_mode<synchronous>, transform_indices = @transform_10, window_bounds = array<i64: 2, 1, 256>}, {pipeline_mode = #tpu.pipeline_mode<synchronous>, transform_indices = @transform_11, window_bounds = array<i64: 2, 256, 128>}, {pipeline_mode = #tpu.pipeline_mode<synchronous>, transform_indices = @transform_12, window_bounds = array<i64: 2, 1, 128>}, {pipeline_mode = #tpu.pipeline_mode<synchronous>, transform_indices = @transform_13, window_bounds = array<i64: 128, 128>}, {pipeline_mode = #tpu.pipeline_mode<synchronous>, transform_indices = @transform_14, window_bounds = array<i64: 1, 128>}, {transform_indices = @transform_15, window_bounds = array<i64: 48, 128>}]} {
    %0 = tpu.iota {dimensions = array<i32: 1>} : vector<1x128xi32>
    %c120_i32 = arith.constant 120 : i32
    %1 = vector.broadcast %c120_i32 : i32 to vector<1x128xi32>
    %2 = arith.cmpi slt, %0, %1 : vector<1x128xi32>
    %3 = arith.extui %2 : vector<1x128xi1> to vector<1x128xi32>
    %4 = arith.sitofp %3 : vector<1x128xi32> to vector<1x128xf32>
    %c0 = arith.constant 0 : index
    %c0_0 = arith.constant 0 : index
    %5 = vector.load %arg1[%c0, %c0_0] : memref<48x128xbf16, #tpu.memory_space<vmem>>, vector<48x128xbf16>
    %c0_1 = arith.constant 0 : index
    %c0_2 = arith.constant 0 : index
    %6 = vector.load %arg2[%c0_1, %c0_2] : memref<128x128xbf16, #tpu.memory_space<vmem>>, vector<128x128xbf16>
    %cst = arith.constant dense<0.000000e+00> : vector<48x128xf32>
    %7 = tpu.matmul %5, %6, %cst {dimension_numbers = #tpu.dot_dimension_numbers<[1], [0], [0], [1], [0, 0, 1, 1], [], []>} : vector<48x128xbf16>, vector<128x128xbf16>, vector<48x128xf32> -> vector<48x128xf32>
    %8 = vector.shape_cast %7 : vector<48x128xf32> to vector<2x24x128xf32>
    %c0_3 = arith.constant 0 : index
    %c0_4 = arith.constant 0 : index
    %9 = vector.load %arg3[%c0_3, %c0_4] : memref<24x128xf32, #tpu.memory_space<vmem>>, vector<24x128xf32>
    %10 = vector.shape_cast %9 : vector<24x128xf32> to vector<1x24x128xf32>
    %11 = vector.broadcast %10 : vector<1x24x128xf32> to vector<2x24x128xf32>
    %12 = arith.addf %8, %11 : vector<2x24x128xf32>
    %13 = vector.shape_cast %12 : vector<2x24x128xf32> to vector<48x128xf32>
    %14 = arith.truncf %13 : vector<48x128xf32> to vector<48x128xbf16>
    %c0_5 = arith.constant 0 : index
    %c0_6 = arith.constant 0 : index
    %15 = vector.load %arg4[%c0_5, %c0_6] : memref<128x128xbf16, #tpu.memory_space<vmem>>, vector<128x128xbf16>
    %cst_7 = arith.constant dense<0.000000e+00> : vector<48x128xf32>
    %16 = tpu.matmul %14, %15, %cst_7 {dimension_numbers = #tpu.dot_dimension_numbers<[1], [0], [0], [1], [0, 0, 1, 1], [], []>} : vector<48x128xbf16>, vector<128x128xbf16>, vector<48x128xf32> -> vector<48x128xf32>
    %c0_8 = arith.constant 0 : index
    %c0_9 = arith.constant 0 : index
    %17 = vector.load %arg5[%c0_8, %c0_9] : memref<1x128xf32, #tpu.memory_space<vmem>>, vector<1x128xf32>
    %18 = vector.broadcast %17 : vector<1x128xf32> to vector<48x128xf32>
    %19 = arith.addf %16, %18 : vector<48x128xf32>
    %cst_10 = arith.constant dense<0.000000e+00> : vector<48xf32>
    %20 = vector.multi_reduction <add>, %19, %cst_10 [1] : vector<48x128xf32> to vector<48xf32>
    %21 = vector.shape_cast %20 : vector<48xf32> to vector<48x1xf32>
    %cst_11 = arith.constant 0.00833333377 : f32
    %22 = vector.broadcast %cst_11 : f32 to vector<48x1xf32>
    %23 = arith.mulf %21, %22 : vector<48x1xf32>
    %24 = vector.broadcast %23 : vector<48x1xf32> to vector<48x128xf32>
    %25 = arith.subf %19, %24 : vector<48x128xf32>
    %26 = vector.broadcast %4 : vector<1x128xf32> to vector<48x128xf32>
    %27 = arith.mulf %25, %26 : vector<48x128xf32>
    %28 = arith.mulf %27, %27 : vector<48x128xf32>
    %cst_12 = arith.constant dense<0.000000e+00> : vector<48xf32>
    %29 = vector.multi_reduction <add>, %28, %cst_12 [1] : vector<48x128xf32> to vector<48xf32>
    %30 = vector.shape_cast %29 : vector<48xf32> to vector<48x1xf32>
    %cst_13 = arith.constant 0.00833333377 : f32
    %31 = vector.broadcast %cst_13 : f32 to vector<48x1xf32>
    %32 = arith.mulf %30, %31 : vector<48x1xf32>
    %cst_14 = arith.constant 9.99999974E-6 : f32
    %33 = vector.broadcast %cst_14 : f32 to vector<48x1xf32>
    %34 = arith.addf %32, %33 : vector<48x1xf32>
    %35 = math.rsqrt %34 : vector<48x1xf32>
    %36 = vector.broadcast %35 : vector<48x1xf32> to vector<48x128xf32>
    %37 = arith.mulf %27, %36 : vector<48x128xf32>
    %38 = arith.truncf %37 : vector<48x128xf32> to vector<48x128xbf16>
    %c0_15 = arith.constant 0 : index
    %c0_16 = arith.constant 0 : index
    %c0_17 = arith.constant 0 : index
    %39 = vector.load %arg6[%c0_15, %c0_16, %c0_17] : memref<2x128x384xbf16, #tpu.memory_space<vmem>>, vector<1x128x384xbf16>
    %40 = vector.shape_cast %39 : vector<1x128x384xbf16> to vector<128x384xbf16>
    %cst_18 = arith.constant dense<0.000000e+00> : vector<48x384xf32>
    %41 = tpu.matmul %38, %40, %cst_18 {dimension_numbers = #tpu.dot_dimension_numbers<[1], [0], [0], [1], [0, 0, 1, 1], [], []>} : vector<48x128xbf16>, vector<128x384xbf16>, vector<48x384xf32> -> vector<48x384xf32>
    %c0_19 = arith.constant 0 : index
    %c0_20 = arith.constant 0 : index
    %c0_21 = arith.constant 0 : index
    %42 = vector.load %arg7[%c0_19, %c0_20, %c0_21] : memref<2x1x384xf32, #tpu.memory_space<vmem>>, vector<1x1x384xf32>
    %43 = vector.shape_cast %42 : vector<1x1x384xf32> to vector<1x384xf32>
    %44 = vector.broadcast %43 : vector<1x384xf32> to vector<48x384xf32>
    %45 = arith.addf %41, %44 : vector<48x384xf32>
    %46 = arith.truncf %45 : vector<48x384xf32> to vector<48x384xbf16>
    %47 = vector.shape_cast %46 : vector<48x384xbf16> to vector<2x24x384xbf16>
    %c0_22 = arith.constant 0 : index
    %c0_23 = arith.constant 0 : index
    %c0_24 = arith.constant 0 : index
    %48 = vector.load %arg8[%c0_22, %c0_23, %c0_24] : memref<2x128x128xbf16, #tpu.memory_space<vmem>>, vector<1x128x128xbf16>
    %49 = vector.shape_cast %48 : vector<1x128x128xbf16> to vector<128x128xbf16>
    %cst_25 = arith.constant 0.000000e+00 : f32
    %50 = vector.broadcast %cst_25 : f32 to vector<48x128xf32>
    %51 = vector.extract_strided_slice %47 {offsets = [0, 0, 0], sizes = [2, 24, 16], strides = [1, 1, 1]} : vector<2x24x384xbf16> to vector<2x24x16xbf16>
    %52 = vector.extract_strided_slice %47 {offsets = [0, 0, 128], sizes = [2, 24, 16], strides = [1, 1, 1]} : vector<2x24x384xbf16> to vector<2x24x16xbf16>
    %53 = vector.extract_strided_slice %47 {offsets = [0, 0, 256], sizes = [2, 24, 16], strides = [1, 1, 1]} : vector<2x24x384xbf16> to vector<2x24x16xbf16>
    "tpu.trace_start"() <{level = 10 : i32, message = "bqd,bkd->bqk"}> : () -> ()
    %cst_26 = arith.constant dense<0.000000e+00> : vector<2x24x24xf32>
    %54 = tpu.matmul %51, %52, %cst_26 {dimension_numbers = #tpu.dot_dimension_numbers<[2], [2], [1], [1], [0, 0, 0, 1, 1, 1], [0], [0]>} : vector<2x24x16xbf16>, vector<2x24x16xbf16>, vector<2x24x24xf32> -> vector<2x24x24xf32>
    "tpu.trace_stop"() : () -> ()
    %cst_27 = arith.constant dense<0xFF800000> : vector<2x24xf32>
    %55 = vector.multi_reduction <maximumf>, %54, %cst_27 [2] : vector<2x24x24xf32> to vector<2x24xf32>
    %56 = vector.shape_cast %55 : vector<2x24xf32> to vector<2x24x1xf32>
    %57 = vector.broadcast %56 : vector<2x24x1xf32> to vector<2x24x24xf32>
    %58 = arith.subf %54, %57 : vector<2x24x24xf32>
    %59 = math.exp %58 : vector<2x24x24xf32>
    %cst_28 = arith.constant dense<0.000000e+00> : vector<2x24xf32>
    %60 = vector.multi_reduction <add>, %59, %cst_28 [2] : vector<2x24x24xf32> to vector<2x24xf32>
    %61 = vector.shape_cast %60 : vector<2x24xf32> to vector<2x24x1xf32>
    %62 = tpu.reciprocal %61 {approx = true} : vector<2x24x1xf32> -> vector<2x24x1xf32>
    %63 = vector.broadcast %62 : vector<2x24x1xf32> to vector<2x24x24xf32>
    %64 = arith.mulf %59, %63 : vector<2x24x24xf32>
    %65 = arith.truncf %64 : vector<2x24x24xf32> to vector<2x24x24xbf16>
    "tpu.trace_start"() <{level = 10 : i32, message = "bqk,bkd->bqd"}> : () -> ()
    %cst_29 = arith.constant dense<0.000000e+00> : vector<2x24x16xf32>
    %66 = tpu.matmul %65, %53, %cst_29 {dimension_numbers = #tpu.dot_dimension_numbers<[2], [1], [1], [2], [0, 0, 0, 1, 1, 2], [0], [0]>} : vector<2x24x24xbf16>, vector<2x24x16xbf16>, vector<2x24x16xf32> -> vector<2x24x16xf32>
    "tpu.trace_stop"() : () -> ()
    %67 = vector.shape_cast %66 : vector<2x24x16xf32> to vector<48x16xf32>
    %68 = arith.truncf %67 : vector<48x16xf32> to vector<48x16xbf16>
    %69 = vector.extract_strided_slice %49 {offsets = [0, 0], sizes = [16, 128], strides = [1, 1]} : vector<128x128xbf16> to vector<16x128xbf16>
    %cst_30 = arith.constant dense<0.000000e+00> : vector<48x128xf32>
    %70 = tpu.matmul %68, %69, %cst_30 {dimension_numbers = #tpu.dot_dimension_numbers<[1], [0], [0], [1], [0, 0, 1, 1], [], []>} : vector<48x16xbf16>, vector<16x128xbf16>, vector<48x128xf32> -> vector<48x128xf32>
    %71 = arith.addf %50, %70 : vector<48x128xf32>
    %72 = vector.extract_strided_slice %47 {offsets = [0, 0, 16], sizes = [2, 24, 16], strides = [1, 1, 1]} : vector<2x24x384xbf16> to vector<2x24x16xbf16>
    %73 = vector.extract_strided_slice %47 {offsets = [0, 0, 144], sizes = [2, 24, 16], strides = [1, 1, 1]} : vector<2x24x384xbf16> to vector<2x24x16xbf16>
    %74 = vector.extract_strided_slice %47 {offsets = [0, 0, 272], sizes = [2, 24, 16], strides = [1, 1, 1]} : vector<2x24x384xbf16> to vector<2x24x16xbf16>
    "tpu.trace_start"() <{level = 10 : i32, message = "bqd,bkd->bqk"}> : () -> ()
    %cst_31 = arith.constant dense<0.000000e+00> : vector<2x24x24xf32>
    %75 = tpu.matmul %72, %73, %cst_31 {dimension_numbers = #tpu.dot_dimension_numbers<[2], [2], [1], [1], [0, 0, 0, 1, 1, 1], [0], [0]>} : vector<2x24x16xbf16>, vector<2x24x16xbf16>, vector<2x24x24xf32> -> vector<2x24x24xf32>
    "tpu.trace_stop"() : () -> ()
    %cst_32 = arith.constant dense<0xFF800000> : vector<2x24xf32>
    %76 = vector.multi_reduction <maximumf>, %75, %cst_32 [2] : vector<2x24x24xf32> to vector<2x24xf32>
    %77 = vector.shape_cast %76 : vector<2x24xf32> to vector<2x24x1xf32>
    %78 = vector.broadcast %77 : vector<2x24x1xf32> to vector<2x24x24xf32>
    %79 = arith.subf %75, %78 : vector<2x24x24xf32>
    %80 = math.exp %79 : vector<2x24x24xf32>
    %cst_33 = arith.constant dense<0.000000e+00> : vector<2x24xf32>
    %81 = vector.multi_reduction <add>, %80, %cst_33 [2] : vector<2x24x24xf32> to vector<2x24xf32>
    %82 = vector.shape_cast %81 : vector<2x24xf32> to vector<2x24x1xf32>
    %83 = tpu.reciprocal %82 {approx = true} : vector<2x24x1xf32> -> vector<2x24x1xf32>
    %84 = vector.broadcast %83 : vector<2x24x1xf32> to vector<2x24x24xf32>
    %85 = arith.mulf %80, %84 : vector<2x24x24xf32>
    %86 = arith.truncf %85 : vector<2x24x24xf32> to vector<2x24x24xbf16>
    "tpu.trace_start"() <{level = 10 : i32, message = "bqk,bkd->bqd"}> : () -> ()
    %cst_34 = arith.constant dense<0.000000e+00> : vector<2x24x16xf32>
    %87 = tpu.matmul %86, %74, %cst_34 {dimension_numbers = #tpu.dot_dimension_numbers<[2], [1], [1], [2], [0, 0, 0, 1, 1, 2], [0], [0]>} : vector<2x24x24xbf16>, vector<2x24x16xbf16>, vector<2x24x16xf32> -> vector<2x24x16xf32>
    "tpu.trace_stop"() : () -> ()
    %88 = vector.shape_cast %87 : vector<2x24x16xf32> to vector<48x16xf32>
    %89 = arith.truncf %88 : vector<48x16xf32> to vector<48x16xbf16>
    %90 = vector.extract_strided_slice %49 {offsets = [16, 0], sizes = [16, 128], strides = [1, 1]} : vector<128x128xbf16> to vector<16x128xbf16>
    %cst_35 = arith.constant dense<0.000000e+00> : vector<48x128xf32>
    %91 = tpu.matmul %89, %90, %cst_35 {dimension_numbers = #tpu.dot_dimension_numbers<[1], [0], [0], [1], [0, 0, 1, 1], [], []>} : vector<48x16xbf16>, vector<16x128xbf16>, vector<48x128xf32> -> vector<48x128xf32>
    %92 = arith.addf %71, %91 : vector<48x128xf32>
    %93 = vector.extract_strided_slice %47 {offsets = [0, 0, 32], sizes = [2, 24, 16], strides = [1, 1, 1]} : vector<2x24x384xbf16> to vector<2x24x16xbf16>
    %94 = vector.extract_strided_slice %47 {offsets = [0, 0, 160], sizes = [2, 24, 16], strides = [1, 1, 1]} : vector<2x24x384xbf16> to vector<2x24x16xbf16>
    %95 = vector.extract_strided_slice %47 {offsets = [0, 0, 288], sizes = [2, 24, 16], strides = [1, 1, 1]} : vector<2x24x384xbf16> to vector<2x24x16xbf16>
    "tpu.trace_start"() <{level = 10 : i32, message = "bqd,bkd->bqk"}> : () -> ()
    %cst_36 = arith.constant dense<0.000000e+00> : vector<2x24x24xf32>
    %96 = tpu.matmul %93, %94, %cst_36 {dimension_numbers = #tpu.dot_dimension_numbers<[2], [2], [1], [1], [0, 0, 0, 1, 1, 1], [0], [0]>} : vector<2x24x16xbf16>, vector<2x24x16xbf16>, vector<2x24x24xf32> -> vector<2x24x24xf32>
    "tpu.trace_stop"() : () -> ()
    %cst_37 = arith.constant dense<0xFF800000> : vector<2x24xf32>
    %97 = vector.multi_reduction <maximumf>, %96, %cst_37 [2] : vector<2x24x24xf32> to vector<2x24xf32>
    %98 = vector.shape_cast %97 : vector<2x24xf32> to vector<2x24x1xf32>
    %99 = vector.broadcast %98 : vector<2x24x1xf32> to vector<2x24x24xf32>
    %100 = arith.subf %96, %99 : vector<2x24x24xf32>
    %101 = math.exp %100 : vector<2x24x24xf32>
    %cst_38 = arith.constant dense<0.000000e+00> : vector<2x24xf32>
    %102 = vector.multi_reduction <add>, %101, %cst_38 [2] : vector<2x24x24xf32> to vector<2x24xf32>
    %103 = vector.shape_cast %102 : vector<2x24xf32> to vector<2x24x1xf32>
    %104 = tpu.reciprocal %103 {approx = true} : vector<2x24x1xf32> -> vector<2x24x1xf32>
    %105 = vector.broadcast %104 : vector<2x24x1xf32> to vector<2x24x24xf32>
    %106 = arith.mulf %101, %105 : vector<2x24x24xf32>
    %107 = arith.truncf %106 : vector<2x24x24xf32> to vector<2x24x24xbf16>
    "tpu.trace_start"() <{level = 10 : i32, message = "bqk,bkd->bqd"}> : () -> ()
    %cst_39 = arith.constant dense<0.000000e+00> : vector<2x24x16xf32>
    %108 = tpu.matmul %107, %95, %cst_39 {dimension_numbers = #tpu.dot_dimension_numbers<[2], [1], [1], [2], [0, 0, 0, 1, 1, 2], [0], [0]>} : vector<2x24x24xbf16>, vector<2x24x16xbf16>, vector<2x24x16xf32> -> vector<2x24x16xf32>
    "tpu.trace_stop"() : () -> ()
    %109 = vector.shape_cast %108 : vector<2x24x16xf32> to vector<48x16xf32>
    %110 = arith.truncf %109 : vector<48x16xf32> to vector<48x16xbf16>
    %111 = vector.extract_strided_slice %49 {offsets = [32, 0], sizes = [16, 128], strides = [1, 1]} : vector<128x128xbf16> to vector<16x128xbf16>
    %cst_40 = arith.constant dense<0.000000e+00> : vector<48x128xf32>
    %112 = tpu.matmul %110, %111, %cst_40 {dimension_numbers = #tpu.dot_dimension_numbers<[1], [0], [0], [1], [0, 0, 1, 1], [], []>} : vector<48x16xbf16>, vector<16x128xbf16>, vector<48x128xf32> -> vector<48x128xf32>
    %113 = arith.addf %92, %112 : vector<48x128xf32>
    %114 = vector.extract_strided_slice %47 {offsets = [0, 0, 48], sizes = [2, 24, 16], strides = [1, 1, 1]} : vector<2x24x384xbf16> to vector<2x24x16xbf16>
    %115 = vector.extract_strided_slice %47 {offsets = [0, 0, 176], sizes = [2, 24, 16], strides = [1, 1, 1]} : vector<2x24x384xbf16> to vector<2x24x16xbf16>
    %116 = vector.extract_strided_slice %47 {offsets = [0, 0, 304], sizes = [2, 24, 16], strides = [1, 1, 1]} : vector<2x24x384xbf16> to vector<2x24x16xbf16>
    "tpu.trace_start"() <{level = 10 : i32, message = "bqd,bkd->bqk"}> : () -> ()
    %cst_41 = arith.constant dense<0.000000e+00> : vector<2x24x24xf32>
    %117 = tpu.matmul %114, %115, %cst_41 {dimension_numbers = #tpu.dot_dimension_numbers<[2], [2], [1], [1], [0, 0, 0, 1, 1, 1], [0], [0]>} : vector<2x24x16xbf16>, vector<2x24x16xbf16>, vector<2x24x24xf32> -> vector<2x24x24xf32>
    "tpu.trace_stop"() : () -> ()
    %cst_42 = arith.constant dense<0xFF800000> : vector<2x24xf32>
    %118 = vector.multi_reduction <maximumf>, %117, %cst_42 [2] : vector<2x24x24xf32> to vector<2x24xf32>
    %119 = vector.shape_cast %118 : vector<2x24xf32> to vector<2x24x1xf32>
    %120 = vector.broadcast %119 : vector<2x24x1xf32> to vector<2x24x24xf32>
    %121 = arith.subf %117, %120 : vector<2x24x24xf32>
    %122 = math.exp %121 : vector<2x24x24xf32>
    %cst_43 = arith.constant dense<0.000000e+00> : vector<2x24xf32>
    %123 = vector.multi_reduction <add>, %122, %cst_43 [2] : vector<2x24x24xf32> to vector<2x24xf32>
    %124 = vector.shape_cast %123 : vector<2x24xf32> to vector<2x24x1xf32>
    %125 = tpu.reciprocal %124 {approx = true} : vector<2x24x1xf32> -> vector<2x24x1xf32>
    %126 = vector.broadcast %125 : vector<2x24x1xf32> to vector<2x24x24xf32>
    %127 = arith.mulf %122, %126 : vector<2x24x24xf32>
    %128 = arith.truncf %127 : vector<2x24x24xf32> to vector<2x24x24xbf16>
    "tpu.trace_start"() <{level = 10 : i32, message = "bqk,bkd->bqd"}> : () -> ()
    %cst_44 = arith.constant dense<0.000000e+00> : vector<2x24x16xf32>
    %129 = tpu.matmul %128, %116, %cst_44 {dimension_numbers = #tpu.dot_dimension_numbers<[2], [1], [1], [2], [0, 0, 0, 1, 1, 2], [0], [0]>} : vector<2x24x24xbf16>, vector<2x24x16xbf16>, vector<2x24x16xf32> -> vector<2x24x16xf32>
    "tpu.trace_stop"() : () -> ()
    %130 = vector.shape_cast %129 : vector<2x24x16xf32> to vector<48x16xf32>
    %131 = arith.truncf %130 : vector<48x16xf32> to vector<48x16xbf16>
    %132 = vector.extract_strided_slice %49 {offsets = [48, 0], sizes = [16, 128], strides = [1, 1]} : vector<128x128xbf16> to vector<16x128xbf16>
    %cst_45 = arith.constant dense<0.000000e+00> : vector<48x128xf32>
    %133 = tpu.matmul %131, %132, %cst_45 {dimension_numbers = #tpu.dot_dimension_numbers<[1], [0], [0], [1], [0, 0, 1, 1], [], []>} : vector<48x16xbf16>, vector<16x128xbf16>, vector<48x128xf32> -> vector<48x128xf32>
    %134 = arith.addf %113, %133 : vector<48x128xf32>
    %135 = vector.extract_strided_slice %47 {offsets = [0, 0, 64], sizes = [2, 24, 16], strides = [1, 1, 1]} : vector<2x24x384xbf16> to vector<2x24x16xbf16>
    %136 = vector.extract_strided_slice %47 {offsets = [0, 0, 192], sizes = [2, 24, 16], strides = [1, 1, 1]} : vector<2x24x384xbf16> to vector<2x24x16xbf16>
    %137 = vector.extract_strided_slice %47 {offsets = [0, 0, 320], sizes = [2, 24, 16], strides = [1, 1, 1]} : vector<2x24x384xbf16> to vector<2x24x16xbf16>
    "tpu.trace_start"() <{level = 10 : i32, message = "bqd,bkd->bqk"}> : () -> ()
    %cst_46 = arith.constant dense<0.000000e+00> : vector<2x24x24xf32>
    %138 = tpu.matmul %135, %136, %cst_46 {dimension_numbers = #tpu.dot_dimension_numbers<[2], [2], [1], [1], [0, 0, 0, 1, 1, 1], [0], [0]>} : vector<2x24x16xbf16>, vector<2x24x16xbf16>, vector<2x24x24xf32> -> vector<2x24x24xf32>
    "tpu.trace_stop"() : () -> ()
    %cst_47 = arith.constant dense<0xFF800000> : vector<2x24xf32>
    %139 = vector.multi_reduction <maximumf>, %138, %cst_47 [2] : vector<2x24x24xf32> to vector<2x24xf32>
    %140 = vector.shape_cast %139 : vector<2x24xf32> to vector<2x24x1xf32>
    %141 = vector.broadcast %140 : vector<2x24x1xf32> to vector<2x24x24xf32>
    %142 = arith.subf %138, %141 : vector<2x24x24xf32>
    %143 = math.exp %142 : vector<2x24x24xf32>
    %cst_48 = arith.constant dense<0.000000e+00> : vector<2x24xf32>
    %144 = vector.multi_reduction <add>, %143, %cst_48 [2] : vector<2x24x24xf32> to vector<2x24xf32>
    %145 = vector.shape_cast %144 : vector<2x24xf32> to vector<2x24x1xf32>
    %146 = tpu.reciprocal %145 {approx = true} : vector<2x24x1xf32> -> vector<2x24x1xf32>
    %147 = vector.broadcast %146 : vector<2x24x1xf32> to vector<2x24x24xf32>
    %148 = arith.mulf %143, %147 : vector<2x24x24xf32>
    %149 = arith.truncf %148 : vector<2x24x24xf32> to vector<2x24x24xbf16>
    "tpu.trace_start"() <{level = 10 : i32, message = "bqk,bkd->bqd"}> : () -> ()
    %cst_49 = arith.constant dense<0.000000e+00> : vector<2x24x16xf32>
    %150 = tpu.matmul %149, %137, %cst_49 {dimension_numbers = #tpu.dot_dimension_numbers<[2], [1], [1], [2], [0, 0, 0, 1, 1, 2], [0], [0]>} : vector<2x24x24xbf16>, vector<2x24x16xbf16>, vector<2x24x16xf32> -> vector<2x24x16xf32>
    "tpu.trace_stop"() : () -> ()
    %151 = vector.shape_cast %150 : vector<2x24x16xf32> to vector<48x16xf32>
    %152 = arith.truncf %151 : vector<48x16xf32> to vector<48x16xbf16>
    %153 = vector.extract_strided_slice %49 {offsets = [64, 0], sizes = [16, 128], strides = [1, 1]} : vector<128x128xbf16> to vector<16x128xbf16>
    %cst_50 = arith.constant dense<0.000000e+00> : vector<48x128xf32>
    %154 = tpu.matmul %152, %153, %cst_50 {dimension_numbers = #tpu.dot_dimension_numbers<[1], [0], [0], [1], [0, 0, 1, 1], [], []>} : vector<48x16xbf16>, vector<16x128xbf16>, vector<48x128xf32> -> vector<48x128xf32>
    %155 = arith.addf %134, %154 : vector<48x128xf32>
    %156 = vector.extract_strided_slice %47 {offsets = [0, 0, 80], sizes = [2, 24, 16], strides = [1, 1, 1]} : vector<2x24x384xbf16> to vector<2x24x16xbf16>
    %157 = vector.extract_strided_slice %47 {offsets = [0, 0, 208], sizes = [2, 24, 16], strides = [1, 1, 1]} : vector<2x24x384xbf16> to vector<2x24x16xbf16>
    %158 = vector.extract_strided_slice %47 {offsets = [0, 0, 336], sizes = [2, 24, 16], strides = [1, 1, 1]} : vector<2x24x384xbf16> to vector<2x24x16xbf16>
    "tpu.trace_start"() <{level = 10 : i32, message = "bqd,bkd->bqk"}> : () -> ()
    %cst_51 = arith.constant dense<0.000000e+00> : vector<2x24x24xf32>
    %159 = tpu.matmul %156, %157, %cst_51 {dimension_numbers = #tpu.dot_dimension_numbers<[2], [2], [1], [1], [0, 0, 0, 1, 1, 1], [0], [0]>} : vector<2x24x16xbf16>, vector<2x24x16xbf16>, vector<2x24x24xf32> -> vector<2x24x24xf32>
    "tpu.trace_stop"() : () -> ()
    %cst_52 = arith.constant dense<0xFF800000> : vector<2x24xf32>
    %160 = vector.multi_reduction <maximumf>, %159, %cst_52 [2] : vector<2x24x24xf32> to vector<2x24xf32>
    %161 = vector.shape_cast %160 : vector<2x24xf32> to vector<2x24x1xf32>
    %162 = vector.broadcast %161 : vector<2x24x1xf32> to vector<2x24x24xf32>
    %163 = arith.subf %159, %162 : vector<2x24x24xf32>
    %164 = math.exp %163 : vector<2x24x24xf32>
    %cst_53 = arith.constant dense<0.000000e+00> : vector<2x24xf32>
    %165 = vector.multi_reduction <add>, %164, %cst_53 [2] : vector<2x24x24xf32> to vector<2x24xf32>
    %166 = vector.shape_cast %165 : vector<2x24xf32> to vector<2x24x1xf32>
    %167 = tpu.reciprocal %166 {approx = true} : vector<2x24x1xf32> -> vector<2x24x1xf32>
    %168 = vector.broadcast %167 : vector<2x24x1xf32> to vector<2x24x24xf32>
    %169 = arith.mulf %164, %168 : vector<2x24x24xf32>
    %170 = arith.truncf %169 : vector<2x24x24xf32> to vector<2x24x24xbf16>
    "tpu.trace_start"() <{level = 10 : i32, message = "bqk,bkd->bqd"}> : () -> ()
    %cst_54 = arith.constant dense<0.000000e+00> : vector<2x24x16xf32>
    %171 = tpu.matmul %170, %158, %cst_54 {dimension_numbers = #tpu.dot_dimension_numbers<[2], [1], [1], [2], [0, 0, 0, 1, 1, 2], [0], [0]>} : vector<2x24x24xbf16>, vector<2x24x16xbf16>, vector<2x24x16xf32> -> vector<2x24x16xf32>
    "tpu.trace_stop"() : () -> ()
    %172 = vector.shape_cast %171 : vector<2x24x16xf32> to vector<48x16xf32>
    %173 = arith.truncf %172 : vector<48x16xf32> to vector<48x16xbf16>
    %174 = vector.extract_strided_slice %49 {offsets = [80, 0], sizes = [16, 128], strides = [1, 1]} : vector<128x128xbf16> to vector<16x128xbf16>
    %cst_55 = arith.constant dense<0.000000e+00> : vector<48x128xf32>
    %175 = tpu.matmul %173, %174, %cst_55 {dimension_numbers = #tpu.dot_dimension_numbers<[1], [0], [0], [1], [0, 0, 1, 1], [], []>} : vector<48x16xbf16>, vector<16x128xbf16>, vector<48x128xf32> -> vector<48x128xf32>
    %176 = arith.addf %155, %175 : vector<48x128xf32>
    %177 = vector.extract_strided_slice %47 {offsets = [0, 0, 96], sizes = [2, 24, 16], strides = [1, 1, 1]} : vector<2x24x384xbf16> to vector<2x24x16xbf16>
    %178 = vector.extract_strided_slice %47 {offsets = [0, 0, 224], sizes = [2, 24, 16], strides = [1, 1, 1]} : vector<2x24x384xbf16> to vector<2x24x16xbf16>
    %179 = vector.extract_strided_slice %47 {offsets = [0, 0, 352], sizes = [2, 24, 16], strides = [1, 1, 1]} : vector<2x24x384xbf16> to vector<2x24x16xbf16>
    "tpu.trace_start"() <{level = 10 : i32, message = "bqd,bkd->bqk"}> : () -> ()
    %cst_56 = arith.constant dense<0.000000e+00> : vector<2x24x24xf32>
    %180 = tpu.matmul %177, %178, %cst_56 {dimension_numbers = #tpu.dot_dimension_numbers<[2], [2], [1], [1], [0, 0, 0, 1, 1, 1], [0], [0]>} : vector<2x24x16xbf16>, vector<2x24x16xbf16>, vector<2x24x24xf32> -> vector<2x24x24xf32>
    "tpu.trace_stop"() : () -> ()
    %cst_57 = arith.constant dense<0xFF800000> : vector<2x24xf32>
    %181 = vector.multi_reduction <maximumf>, %180, %cst_57 [2] : vector<2x24x24xf32> to vector<2x24xf32>
    %182 = vector.shape_cast %181 : vector<2x24xf32> to vector<2x24x1xf32>
    %183 = vector.broadcast %182 : vector<2x24x1xf32> to vector<2x24x24xf32>
    %184 = arith.subf %180, %183 : vector<2x24x24xf32>
    %185 = math.exp %184 : vector<2x24x24xf32>
    %cst_58 = arith.constant dense<0.000000e+00> : vector<2x24xf32>
    %186 = vector.multi_reduction <add>, %185, %cst_58 [2] : vector<2x24x24xf32> to vector<2x24xf32>
    %187 = vector.shape_cast %186 : vector<2x24xf32> to vector<2x24x1xf32>
    %188 = tpu.reciprocal %187 {approx = true} : vector<2x24x1xf32> -> vector<2x24x1xf32>
    %189 = vector.broadcast %188 : vector<2x24x1xf32> to vector<2x24x24xf32>
    %190 = arith.mulf %185, %189 : vector<2x24x24xf32>
    %191 = arith.truncf %190 : vector<2x24x24xf32> to vector<2x24x24xbf16>
    "tpu.trace_start"() <{level = 10 : i32, message = "bqk,bkd->bqd"}> : () -> ()
    %cst_59 = arith.constant dense<0.000000e+00> : vector<2x24x16xf32>
    %192 = tpu.matmul %191, %179, %cst_59 {dimension_numbers = #tpu.dot_dimension_numbers<[2], [1], [1], [2], [0, 0, 0, 1, 1, 2], [0], [0]>} : vector<2x24x24xbf16>, vector<2x24x16xbf16>, vector<2x24x16xf32> -> vector<2x24x16xf32>
    "tpu.trace_stop"() : () -> ()
    %193 = vector.shape_cast %192 : vector<2x24x16xf32> to vector<48x16xf32>
    %194 = arith.truncf %193 : vector<48x16xf32> to vector<48x16xbf16>
    %195 = vector.extract_strided_slice %49 {offsets = [96, 0], sizes = [16, 128], strides = [1, 1]} : vector<128x128xbf16> to vector<16x128xbf16>
    %cst_60 = arith.constant dense<0.000000e+00> : vector<48x128xf32>
    %196 = tpu.matmul %194, %195, %cst_60 {dimension_numbers = #tpu.dot_dimension_numbers<[1], [0], [0], [1], [0, 0, 1, 1], [], []>} : vector<48x16xbf16>, vector<16x128xbf16>, vector<48x128xf32> -> vector<48x128xf32>
    %197 = arith.addf %176, %196 : vector<48x128xf32>
    %198 = vector.extract_strided_slice %47 {offsets = [0, 0, 112], sizes = [2, 24, 16], strides = [1, 1, 1]} : vector<2x24x384xbf16> to vector<2x24x16xbf16>
    %199 = vector.extract_strided_slice %47 {offsets = [0, 0, 240], sizes = [2, 24, 16], strides = [1, 1, 1]} : vector<2x24x384xbf16> to vector<2x24x16xbf16>
    %200 = vector.extract_strided_slice %47 {offsets = [0, 0, 368], sizes = [2, 24, 16], strides = [1, 1, 1]} : vector<2x24x384xbf16> to vector<2x24x16xbf16>
    "tpu.trace_start"() <{level = 10 : i32, message = "bqd,bkd->bqk"}> : () -> ()
    %cst_61 = arith.constant dense<0.000000e+00> : vector<2x24x24xf32>
    %201 = tpu.matmul %198, %199, %cst_61 {dimension_numbers = #tpu.dot_dimension_numbers<[2], [2], [1], [1], [0, 0, 0, 1, 1, 1], [0], [0]>} : vector<2x24x16xbf16>, vector<2x24x16xbf16>, vector<2x24x24xf32> -> vector<2x24x24xf32>
    "tpu.trace_stop"() : () -> ()
    %cst_62 = arith.constant dense<0xFF800000> : vector<2x24xf32>
    %202 = vector.multi_reduction <maximumf>, %201, %cst_62 [2] : vector<2x24x24xf32> to vector<2x24xf32>
    %203 = vector.shape_cast %202 : vector<2x24xf32> to vector<2x24x1xf32>
    %204 = vector.broadcast %203 : vector<2x24x1xf32> to vector<2x24x24xf32>
    %205 = arith.subf %201, %204 : vector<2x24x24xf32>
    %206 = math.exp %205 : vector<2x24x24xf32>
    %cst_63 = arith.constant dense<0.000000e+00> : vector<2x24xf32>
    %207 = vector.multi_reduction <add>, %206, %cst_63 [2] : vector<2x24x24xf32> to vector<2x24xf32>
    %208 = vector.shape_cast %207 : vector<2x24xf32> to vector<2x24x1xf32>
    %209 = tpu.reciprocal %208 {approx = true} : vector<2x24x1xf32> -> vector<2x24x1xf32>
    %210 = vector.broadcast %209 : vector<2x24x1xf32> to vector<2x24x24xf32>
    %211 = arith.mulf %206, %210 : vector<2x24x24xf32>
    %212 = arith.truncf %211 : vector<2x24x24xf32> to vector<2x24x24xbf16>
    "tpu.trace_start"() <{level = 10 : i32, message = "bqk,bkd->bqd"}> : () -> ()
    %cst_64 = arith.constant dense<0.000000e+00> : vector<2x24x16xf32>
    %213 = tpu.matmul %212, %200, %cst_64 {dimension_numbers = #tpu.dot_dimension_numbers<[2], [1], [1], [2], [0, 0, 0, 1, 1, 2], [0], [0]>} : vector<2x24x24xbf16>, vector<2x24x16xbf16>, vector<2x24x16xf32> -> vector<2x24x16xf32>
    "tpu.trace_stop"() : () -> ()
    %214 = vector.shape_cast %213 : vector<2x24x16xf32> to vector<48x16xf32>
    %215 = arith.truncf %214 : vector<48x16xf32> to vector<48x16xbf16>
    %216 = vector.extract_strided_slice %49 {offsets = [112, 0], sizes = [16, 128], strides = [1, 1]} : vector<128x128xbf16> to vector<16x128xbf16>
    %cst_65 = arith.constant dense<0.000000e+00> : vector<48x128xf32>
    %217 = tpu.matmul %215, %216, %cst_65 {dimension_numbers = #tpu.dot_dimension_numbers<[1], [0], [0], [1], [0, 0, 1, 1], [], []>} : vector<48x16xbf16>, vector<16x128xbf16>, vector<48x128xf32> -> vector<48x128xf32>
    %218 = arith.addf %197, %217 : vector<48x128xf32>
    %219 = arith.addf %19, %218 : vector<48x128xf32>
    %c0_66 = arith.constant 0 : index
    %c0_67 = arith.constant 0 : index
    %c0_68 = arith.constant 0 : index
    %220 = vector.load %arg9[%c0_66, %c0_67, %c0_68] : memref<2x1x128xf32, #tpu.memory_space<vmem>>, vector<1x1x128xf32>
    %221 = vector.shape_cast %220 : vector<1x1x128xf32> to vector<1x128xf32>
    %222 = vector.broadcast %221 : vector<1x128xf32> to vector<48x128xf32>
    %223 = arith.addf %219, %222 : vector<48x128xf32>
    %cst_69 = arith.constant dense<0.000000e+00> : vector<48xf32>
    %224 = vector.multi_reduction <add>, %223, %cst_69 [1] : vector<48x128xf32> to vector<48xf32>
    %225 = vector.shape_cast %224 : vector<48xf32> to vector<48x1xf32>
    %cst_70 = arith.constant 0.00833333377 : f32
    %226 = vector.broadcast %cst_70 : f32 to vector<48x1xf32>
    %227 = arith.mulf %225, %226 : vector<48x1xf32>
    %228 = vector.broadcast %227 : vector<48x1xf32> to vector<48x128xf32>
    %229 = arith.subf %223, %228 : vector<48x128xf32>
    %230 = vector.broadcast %4 : vector<1x128xf32> to vector<48x128xf32>
    %231 = arith.mulf %229, %230 : vector<48x128xf32>
    %232 = arith.mulf %231, %231 : vector<48x128xf32>
    %cst_71 = arith.constant dense<0.000000e+00> : vector<48xf32>
    %233 = vector.multi_reduction <add>, %232, %cst_71 [1] : vector<48x128xf32> to vector<48xf32>
    %234 = vector.shape_cast %233 : vector<48xf32> to vector<48x1xf32>
    %cst_72 = arith.constant 0.00833333377 : f32
    %235 = vector.broadcast %cst_72 : f32 to vector<48x1xf32>
    %236 = arith.mulf %234, %235 : vector<48x1xf32>
    %cst_73 = arith.constant 9.99999974E-6 : f32
    %237 = vector.broadcast %cst_73 : f32 to vector<48x1xf32>
    %238 = arith.addf %236, %237 : vector<48x1xf32>
    %239 = math.rsqrt %238 : vector<48x1xf32>
    %240 = vector.broadcast %239 : vector<48x1xf32> to vector<48x128xf32>
    %241 = arith.mulf %231, %240 : vector<48x128xf32>
    %242 = arith.truncf %241 : vector<48x128xf32> to vector<48x128xbf16>
    %c0_74 = arith.constant 0 : index
    %c0_75 = arith.constant 0 : index
    %c0_76 = arith.constant 0 : index
    %243 = vector.load %arg10[%c0_74, %c0_75, %c0_76] : memref<2x128x256xbf16, #tpu.memory_space<vmem>>, vector<1x128x256xbf16>
    %244 = vector.shape_cast %243 : vector<1x128x256xbf16> to vector<128x256xbf16>
    %cst_77 = arith.constant dense<0.000000e+00> : vector<48x256xf32>
    %245 = tpu.matmul %242, %244, %cst_77 {dimension_numbers = #tpu.dot_dimension_numbers<[1], [0], [0], [1], [0, 0, 1, 1], [], []>} : vector<48x128xbf16>, vector<128x256xbf16>, vector<48x256xf32> -> vector<48x256xf32>
    %c0_78 = arith.constant 0 : index
    %c0_79 = arith.constant 0 : index
    %c0_80 = arith.constant 0 : index
    %246 = vector.load %arg11[%c0_78, %c0_79, %c0_80] : memref<2x1x256xf32, #tpu.memory_space<vmem>>, vector<1x1x256xf32>
    %247 = vector.shape_cast %246 : vector<1x1x256xf32> to vector<1x256xf32>
    %248 = vector.broadcast %247 : vector<1x256xf32> to vector<48x256xf32>
    %249 = arith.addf %245, %248 : vector<48x256xf32>
    %250 = arith.mulf %249, %249 : vector<48x256xf32>
    %251 = arith.mulf %249, %250 : vector<48x256xf32>
    %cst_81 = arith.constant 4.471500e-02 : f32
    %252 = vector.broadcast %cst_81 : f32 to vector<48x256xf32>
    %253 = arith.mulf %252, %251 : vector<48x256xf32>
    %254 = arith.addf %249, %253 : vector<48x256xf32>
    %cst_82 = arith.constant 0.797884583 : f32
    %255 = vector.broadcast %cst_82 : f32 to vector<48x256xf32>
    %256 = arith.mulf %255, %254 : vector<48x256xf32>
    %257 = math.tanh %256 : vector<48x256xf32>
    %cst_83 = arith.constant 1.000000e+00 : f32
    %258 = vector.broadcast %cst_83 : f32 to vector<48x256xf32>
    %259 = arith.addf %258, %257 : vector<48x256xf32>
    %cst_84 = arith.constant 5.000000e-01 : f32
    %260 = vector.broadcast %cst_84 : f32 to vector<48x256xf32>
    %261 = arith.mulf %260, %259 : vector<48x256xf32>
    %262 = arith.mulf %249, %261 : vector<48x256xf32>
    %263 = arith.truncf %262 : vector<48x256xf32> to vector<48x256xbf16>
    %c0_85 = arith.constant 0 : index
    %c0_86 = arith.constant 0 : index
    %c0_87 = arith.constant 0 : index
    %264 = vector.load %arg12[%c0_85, %c0_86, %c0_87] : memref<2x256x128xbf16, #tpu.memory_space<vmem>>, vector<1x256x128xbf16>
    %265 = vector.shape_cast %264 : vector<1x256x128xbf16> to vector<256x128xbf16>
    %cst_88 = arith.constant dense<0.000000e+00> : vector<48x128xf32>
    %266 = tpu.matmul %263, %265, %cst_88 {dimension_numbers = #tpu.dot_dimension_numbers<[1], [0], [0], [1], [0, 0, 1, 1], [], []>} : vector<48x256xbf16>, vector<256x128xbf16>, vector<48x128xf32> -> vector<48x128xf32>
    %c0_89 = arith.constant 0 : index
    %c0_90 = arith.constant 0 : index
    %c0_91 = arith.constant 0 : index
    %267 = vector.load %arg13[%c0_89, %c0_90, %c0_91] : memref<2x1x128xf32, #tpu.memory_space<vmem>>, vector<1x1x128xf32>
    %268 = vector.shape_cast %267 : vector<1x1x128xf32> to vector<1x128xf32>
    %269 = vector.broadcast %268 : vector<1x128xf32> to vector<48x128xf32>
    %270 = arith.addf %266, %269 : vector<48x128xf32>
    %271 = arith.addf %223, %270 : vector<48x128xf32>
    %cst_92 = arith.constant dense<0.000000e+00> : vector<48xf32>
    %272 = vector.multi_reduction <add>, %271, %cst_92 [1] : vector<48x128xf32> to vector<48xf32>
    %273 = vector.shape_cast %272 : vector<48xf32> to vector<48x1xf32>
    %cst_93 = arith.constant 0.00833333377 : f32
    %274 = vector.broadcast %cst_93 : f32 to vector<48x1xf32>
    %275 = arith.mulf %273, %274 : vector<48x1xf32>
    %276 = vector.broadcast %275 : vector<48x1xf32> to vector<48x128xf32>
    %277 = arith.subf %271, %276 : vector<48x128xf32>
    %278 = vector.broadcast %4 : vector<1x128xf32> to vector<48x128xf32>
    %279 = arith.mulf %277, %278 : vector<48x128xf32>
    %280 = arith.mulf %279, %279 : vector<48x128xf32>
    %cst_94 = arith.constant dense<0.000000e+00> : vector<48xf32>
    %281 = vector.multi_reduction <add>, %280, %cst_94 [1] : vector<48x128xf32> to vector<48xf32>
    %282 = vector.shape_cast %281 : vector<48xf32> to vector<48x1xf32>
    %cst_95 = arith.constant 0.00833333377 : f32
    %283 = vector.broadcast %cst_95 : f32 to vector<48x1xf32>
    %284 = arith.mulf %282, %283 : vector<48x1xf32>
    %cst_96 = arith.constant 9.99999974E-6 : f32
    %285 = vector.broadcast %cst_96 : f32 to vector<48x1xf32>
    %286 = arith.addf %284, %285 : vector<48x1xf32>
    %287 = math.rsqrt %286 : vector<48x1xf32>
    %288 = vector.broadcast %287 : vector<48x1xf32> to vector<48x128xf32>
    %289 = arith.mulf %279, %288 : vector<48x128xf32>
    %290 = arith.truncf %289 : vector<48x128xf32> to vector<48x128xbf16>
    %c1 = arith.constant 1 : index
    %c0_97 = arith.constant 0 : index
    %c0_98 = arith.constant 0 : index
    %291 = vector.load %arg6[%c1, %c0_97, %c0_98] : memref<2x128x384xbf16, #tpu.memory_space<vmem>>, vector<1x128x384xbf16>
    %292 = vector.shape_cast %291 : vector<1x128x384xbf16> to vector<128x384xbf16>
    %cst_99 = arith.constant dense<0.000000e+00> : vector<48x384xf32>
    %293 = tpu.matmul %290, %292, %cst_99 {dimension_numbers = #tpu.dot_dimension_numbers<[1], [0], [0], [1], [0, 0, 1, 1], [], []>} : vector<48x128xbf16>, vector<128x384xbf16>, vector<48x384xf32> -> vector<48x384xf32>
    %c1_100 = arith.constant 1 : index
    %c0_101 = arith.constant 0 : index
    %c0_102 = arith.constant 0 : index
    %294 = vector.load %arg7[%c1_100, %c0_101, %c0_102] : memref<2x1x384xf32, #tpu.memory_space<vmem>>, vector<1x1x384xf32>
    %295 = vector.shape_cast %294 : vector<1x1x384xf32> to vector<1x384xf32>
    %296 = vector.broadcast %295 : vector<1x384xf32> to vector<48x384xf32>
    %297 = arith.addf %293, %296 : vector<48x384xf32>
    %298 = arith.truncf %297 : vector<48x384xf32> to vector<48x384xbf16>
    %299 = vector.shape_cast %298 : vector<48x384xbf16> to vector<2x24x384xbf16>
    %c1_103 = arith.constant 1 : index
    %c0_104 = arith.constant 0 : index
    %c0_105 = arith.constant 0 : index
    %300 = vector.load %arg8[%c1_103, %c0_104, %c0_105] : memref<2x128x128xbf16, #tpu.memory_space<vmem>>, vector<1x128x128xbf16>
    %301 = vector.shape_cast %300 : vector<1x128x128xbf16> to vector<128x128xbf16>
    %cst_106 = arith.constant 0.000000e+00 : f32
    %302 = vector.broadcast %cst_106 : f32 to vector<48x128xf32>
    %303 = vector.extract_strided_slice %299 {offsets = [0, 0, 0], sizes = [2, 24, 16], strides = [1, 1, 1]} : vector<2x24x384xbf16> to vector<2x24x16xbf16>
    %304 = vector.extract_strided_slice %299 {offsets = [0, 0, 128], sizes = [2, 24, 16], strides = [1, 1, 1]} : vector<2x24x384xbf16> to vector<2x24x16xbf16>
    %305 = vector.extract_strided_slice %299 {offsets = [0, 0, 256], sizes = [2, 24, 16], strides = [1, 1, 1]} : vector<2x24x384xbf16> to vector<2x24x16xbf16>
    "tpu.trace_start"() <{level = 10 : i32, message = "bqd,bkd->bqk"}> : () -> ()
    %cst_107 = arith.constant dense<0.000000e+00> : vector<2x24x24xf32>
    %306 = tpu.matmul %303, %304, %cst_107 {dimension_numbers = #tpu.dot_dimension_numbers<[2], [2], [1], [1], [0, 0, 0, 1, 1, 1], [0], [0]>} : vector<2x24x16xbf16>, vector<2x24x16xbf16>, vector<2x24x24xf32> -> vector<2x24x24xf32>
    "tpu.trace_stop"() : () -> ()
    %cst_108 = arith.constant dense<0xFF800000> : vector<2x24xf32>
    %307 = vector.multi_reduction <maximumf>, %306, %cst_108 [2] : vector<2x24x24xf32> to vector<2x24xf32>
    %308 = vector.shape_cast %307 : vector<2x24xf32> to vector<2x24x1xf32>
    %309 = vector.broadcast %308 : vector<2x24x1xf32> to vector<2x24x24xf32>
    %310 = arith.subf %306, %309 : vector<2x24x24xf32>
    %311 = math.exp %310 : vector<2x24x24xf32>
    %cst_109 = arith.constant dense<0.000000e+00> : vector<2x24xf32>
    %312 = vector.multi_reduction <add>, %311, %cst_109 [2] : vector<2x24x24xf32> to vector<2x24xf32>
    %313 = vector.shape_cast %312 : vector<2x24xf32> to vector<2x24x1xf32>
    %314 = tpu.reciprocal %313 {approx = true} : vector<2x24x1xf32> -> vector<2x24x1xf32>
    %315 = vector.broadcast %314 : vector<2x24x1xf32> to vector<2x24x24xf32>
    %316 = arith.mulf %311, %315 : vector<2x24x24xf32>
    %317 = arith.truncf %316 : vector<2x24x24xf32> to vector<2x24x24xbf16>
    "tpu.trace_start"() <{level = 10 : i32, message = "bqk,bkd->bqd"}> : () -> ()
    %cst_110 = arith.constant dense<0.000000e+00> : vector<2x24x16xf32>
    %318 = tpu.matmul %317, %305, %cst_110 {dimension_numbers = #tpu.dot_dimension_numbers<[2], [1], [1], [2], [0, 0, 0, 1, 1, 2], [0], [0]>} : vector<2x24x24xbf16>, vector<2x24x16xbf16>, vector<2x24x16xf32> -> vector<2x24x16xf32>
    "tpu.trace_stop"() : () -> ()
    %319 = vector.shape_cast %318 : vector<2x24x16xf32> to vector<48x16xf32>
    %320 = arith.truncf %319 : vector<48x16xf32> to vector<48x16xbf16>
    %321 = vector.extract_strided_slice %301 {offsets = [0, 0], sizes = [16, 128], strides = [1, 1]} : vector<128x128xbf16> to vector<16x128xbf16>
    %cst_111 = arith.constant dense<0.000000e+00> : vector<48x128xf32>
    %322 = tpu.matmul %320, %321, %cst_111 {dimension_numbers = #tpu.dot_dimension_numbers<[1], [0], [0], [1], [0, 0, 1, 1], [], []>} : vector<48x16xbf16>, vector<16x128xbf16>, vector<48x128xf32> -> vector<48x128xf32>
    %323 = arith.addf %302, %322 : vector<48x128xf32>
    %324 = vector.extract_strided_slice %299 {offsets = [0, 0, 16], sizes = [2, 24, 16], strides = [1, 1, 1]} : vector<2x24x384xbf16> to vector<2x24x16xbf16>
    %325 = vector.extract_strided_slice %299 {offsets = [0, 0, 144], sizes = [2, 24, 16], strides = [1, 1, 1]} : vector<2x24x384xbf16> to vector<2x24x16xbf16>
    %326 = vector.extract_strided_slice %299 {offsets = [0, 0, 272], sizes = [2, 24, 16], strides = [1, 1, 1]} : vector<2x24x384xbf16> to vector<2x24x16xbf16>
    "tpu.trace_start"() <{level = 10 : i32, message = "bqd,bkd->bqk"}> : () -> ()
    %cst_112 = arith.constant dense<0.000000e+00> : vector<2x24x24xf32>
    %327 = tpu.matmul %324, %325, %cst_112 {dimension_numbers = #tpu.dot_dimension_numbers<[2], [2], [1], [1], [0, 0, 0, 1, 1, 1], [0], [0]>} : vector<2x24x16xbf16>, vector<2x24x16xbf16>, vector<2x24x24xf32> -> vector<2x24x24xf32>
    "tpu.trace_stop"() : () -> ()
    %cst_113 = arith.constant dense<0xFF800000> : vector<2x24xf32>
    %328 = vector.multi_reduction <maximumf>, %327, %cst_113 [2] : vector<2x24x24xf32> to vector<2x24xf32>
    %329 = vector.shape_cast %328 : vector<2x24xf32> to vector<2x24x1xf32>
    %330 = vector.broadcast %329 : vector<2x24x1xf32> to vector<2x24x24xf32>
    %331 = arith.subf %327, %330 : vector<2x24x24xf32>
    %332 = math.exp %331 : vector<2x24x24xf32>
    %cst_114 = arith.constant dense<0.000000e+00> : vector<2x24xf32>
    %333 = vector.multi_reduction <add>, %332, %cst_114 [2] : vector<2x24x24xf32> to vector<2x24xf32>
    %334 = vector.shape_cast %333 : vector<2x24xf32> to vector<2x24x1xf32>
    %335 = tpu.reciprocal %334 {approx = true} : vector<2x24x1xf32> -> vector<2x24x1xf32>
    %336 = vector.broadcast %335 : vector<2x24x1xf32> to vector<2x24x24xf32>
    %337 = arith.mulf %332, %336 : vector<2x24x24xf32>
    %338 = arith.truncf %337 : vector<2x24x24xf32> to vector<2x24x24xbf16>
    "tpu.trace_start"() <{level = 10 : i32, message = "bqk,bkd->bqd"}> : () -> ()
    %cst_115 = arith.constant dense<0.000000e+00> : vector<2x24x16xf32>
    %339 = tpu.matmul %338, %326, %cst_115 {dimension_numbers = #tpu.dot_dimension_numbers<[2], [1], [1], [2], [0, 0, 0, 1, 1, 2], [0], [0]>} : vector<2x24x24xbf16>, vector<2x24x16xbf16>, vector<2x24x16xf32> -> vector<2x24x16xf32>
    "tpu.trace_stop"() : () -> ()
    %340 = vector.shape_cast %339 : vector<2x24x16xf32> to vector<48x16xf32>
    %341 = arith.truncf %340 : vector<48x16xf32> to vector<48x16xbf16>
    %342 = vector.extract_strided_slice %301 {offsets = [16, 0], sizes = [16, 128], strides = [1, 1]} : vector<128x128xbf16> to vector<16x128xbf16>
    %cst_116 = arith.constant dense<0.000000e+00> : vector<48x128xf32>
    %343 = tpu.matmul %341, %342, %cst_116 {dimension_numbers = #tpu.dot_dimension_numbers<[1], [0], [0], [1], [0, 0, 1, 1], [], []>} : vector<48x16xbf16>, vector<16x128xbf16>, vector<48x128xf32> -> vector<48x128xf32>
    %344 = arith.addf %323, %343 : vector<48x128xf32>
    %345 = vector.extract_strided_slice %299 {offsets = [0, 0, 32], sizes = [2, 24, 16], strides = [1, 1, 1]} : vector<2x24x384xbf16> to vector<2x24x16xbf16>
    %346 = vector.extract_strided_slice %299 {offsets = [0, 0, 160], sizes = [2, 24, 16], strides = [1, 1, 1]} : vector<2x24x384xbf16> to vector<2x24x16xbf16>
    %347 = vector.extract_strided_slice %299 {offsets = [0, 0, 288], sizes = [2, 24, 16], strides = [1, 1, 1]} : vector<2x24x384xbf16> to vector<2x24x16xbf16>
    "tpu.trace_start"() <{level = 10 : i32, message = "bqd,bkd->bqk"}> : () -> ()
    %cst_117 = arith.constant dense<0.000000e+00> : vector<2x24x24xf32>
    %348 = tpu.matmul %345, %346, %cst_117 {dimension_numbers = #tpu.dot_dimension_numbers<[2], [2], [1], [1], [0, 0, 0, 1, 1, 1], [0], [0]>} : vector<2x24x16xbf16>, vector<2x24x16xbf16>, vector<2x24x24xf32> -> vector<2x24x24xf32>
    "tpu.trace_stop"() : () -> ()
    %cst_118 = arith.constant dense<0xFF800000> : vector<2x24xf32>
    %349 = vector.multi_reduction <maximumf>, %348, %cst_118 [2] : vector<2x24x24xf32> to vector<2x24xf32>
    %350 = vector.shape_cast %349 : vector<2x24xf32> to vector<2x24x1xf32>
    %351 = vector.broadcast %350 : vector<2x24x1xf32> to vector<2x24x24xf32>
    %352 = arith.subf %348, %351 : vector<2x24x24xf32>
    %353 = math.exp %352 : vector<2x24x24xf32>
    %cst_119 = arith.constant dense<0.000000e+00> : vector<2x24xf32>
    %354 = vector.multi_reduction <add>, %353, %cst_119 [2] : vector<2x24x24xf32> to vector<2x24xf32>
    %355 = vector.shape_cast %354 : vector<2x24xf32> to vector<2x24x1xf32>
    %356 = tpu.reciprocal %355 {approx = true} : vector<2x24x1xf32> -> vector<2x24x1xf32>
    %357 = vector.broadcast %356 : vector<2x24x1xf32> to vector<2x24x24xf32>
    %358 = arith.mulf %353, %357 : vector<2x24x24xf32>
    %359 = arith.truncf %358 : vector<2x24x24xf32> to vector<2x24x24xbf16>
    "tpu.trace_start"() <{level = 10 : i32, message = "bqk,bkd->bqd"}> : () -> ()
    %cst_120 = arith.constant dense<0.000000e+00> : vector<2x24x16xf32>
    %360 = tpu.matmul %359, %347, %cst_120 {dimension_numbers = #tpu.dot_dimension_numbers<[2], [1], [1], [2], [0, 0, 0, 1, 1, 2], [0], [0]>} : vector<2x24x24xbf16>, vector<2x24x16xbf16>, vector<2x24x16xf32> -> vector<2x24x16xf32>
    "tpu.trace_stop"() : () -> ()
    %361 = vector.shape_cast %360 : vector<2x24x16xf32> to vector<48x16xf32>
    %362 = arith.truncf %361 : vector<48x16xf32> to vector<48x16xbf16>
    %363 = vector.extract_strided_slice %301 {offsets = [32, 0], sizes = [16, 128], strides = [1, 1]} : vector<128x128xbf16> to vector<16x128xbf16>
    %cst_121 = arith.constant dense<0.000000e+00> : vector<48x128xf32>
    %364 = tpu.matmul %362, %363, %cst_121 {dimension_numbers = #tpu.dot_dimension_numbers<[1], [0], [0], [1], [0, 0, 1, 1], [], []>} : vector<48x16xbf16>, vector<16x128xbf16>, vector<48x128xf32> -> vector<48x128xf32>
    %365 = arith.addf %344, %364 : vector<48x128xf32>
    %366 = vector.extract_strided_slice %299 {offsets = [0, 0, 48], sizes = [2, 24, 16], strides = [1, 1, 1]} : vector<2x24x384xbf16> to vector<2x24x16xbf16>
    %367 = vector.extract_strided_slice %299 {offsets = [0, 0, 176], sizes = [2, 24, 16], strides = [1, 1, 1]} : vector<2x24x384xbf16> to vector<2x24x16xbf16>
    %368 = vector.extract_strided_slice %299 {offsets = [0, 0, 304], sizes = [2, 24, 16], strides = [1, 1, 1]} : vector<2x24x384xbf16> to vector<2x24x16xbf16>
    "tpu.trace_start"() <{level = 10 : i32, message = "bqd,bkd->bqk"}> : () -> ()
    %cst_122 = arith.constant dense<0.000000e+00> : vector<2x24x24xf32>
    %369 = tpu.matmul %366, %367, %cst_122 {dimension_numbers = #tpu.dot_dimension_numbers<[2], [2], [1], [1], [0, 0, 0, 1, 1, 1], [0], [0]>} : vector<2x24x16xbf16>, vector<2x24x16xbf16>, vector<2x24x24xf32> -> vector<2x24x24xf32>
    "tpu.trace_stop"() : () -> ()
    %cst_123 = arith.constant dense<0xFF800000> : vector<2x24xf32>
    %370 = vector.multi_reduction <maximumf>, %369, %cst_123 [2] : vector<2x24x24xf32> to vector<2x24xf32>
    %371 = vector.shape_cast %370 : vector<2x24xf32> to vector<2x24x1xf32>
    %372 = vector.broadcast %371 : vector<2x24x1xf32> to vector<2x24x24xf32>
    %373 = arith.subf %369, %372 : vector<2x24x24xf32>
    %374 = math.exp %373 : vector<2x24x24xf32>
    %cst_124 = arith.constant dense<0.000000e+00> : vector<2x24xf32>
    %375 = vector.multi_reduction <add>, %374, %cst_124 [2] : vector<2x24x24xf32> to vector<2x24xf32>
    %376 = vector.shape_cast %375 : vector<2x24xf32> to vector<2x24x1xf32>
    %377 = tpu.reciprocal %376 {approx = true} : vector<2x24x1xf32> -> vector<2x24x1xf32>
    %378 = vector.broadcast %377 : vector<2x24x1xf32> to vector<2x24x24xf32>
    %379 = arith.mulf %374, %378 : vector<2x24x24xf32>
    %380 = arith.truncf %379 : vector<2x24x24xf32> to vector<2x24x24xbf16>
    "tpu.trace_start"() <{level = 10 : i32, message = "bqk,bkd->bqd"}> : () -> ()
    %cst_125 = arith.constant dense<0.000000e+00> : vector<2x24x16xf32>
    %381 = tpu.matmul %380, %368, %cst_125 {dimension_numbers = #tpu.dot_dimension_numbers<[2], [1], [1], [2], [0, 0, 0, 1, 1, 2], [0], [0]>} : vector<2x24x24xbf16>, vector<2x24x16xbf16>, vector<2x24x16xf32> -> vector<2x24x16xf32>
    "tpu.trace_stop"() : () -> ()
    %382 = vector.shape_cast %381 : vector<2x24x16xf32> to vector<48x16xf32>
    %383 = arith.truncf %382 : vector<48x16xf32> to vector<48x16xbf16>
    %384 = vector.extract_strided_slice %301 {offsets = [48, 0], sizes = [16, 128], strides = [1, 1]} : vector<128x128xbf16> to vector<16x128xbf16>
    %cst_126 = arith.constant dense<0.000000e+00> : vector<48x128xf32>
    %385 = tpu.matmul %383, %384, %cst_126 {dimension_numbers = #tpu.dot_dimension_numbers<[1], [0], [0], [1], [0, 0, 1, 1], [], []>} : vector<48x16xbf16>, vector<16x128xbf16>, vector<48x128xf32> -> vector<48x128xf32>
    %386 = arith.addf %365, %385 : vector<48x128xf32>
    %387 = vector.extract_strided_slice %299 {offsets = [0, 0, 64], sizes = [2, 24, 16], strides = [1, 1, 1]} : vector<2x24x384xbf16> to vector<2x24x16xbf16>
    %388 = vector.extract_strided_slice %299 {offsets = [0, 0, 192], sizes = [2, 24, 16], strides = [1, 1, 1]} : vector<2x24x384xbf16> to vector<2x24x16xbf16>
    %389 = vector.extract_strided_slice %299 {offsets = [0, 0, 320], sizes = [2, 24, 16], strides = [1, 1, 1]} : vector<2x24x384xbf16> to vector<2x24x16xbf16>
    "tpu.trace_start"() <{level = 10 : i32, message = "bqd,bkd->bqk"}> : () -> ()
    %cst_127 = arith.constant dense<0.000000e+00> : vector<2x24x24xf32>
    %390 = tpu.matmul %387, %388, %cst_127 {dimension_numbers = #tpu.dot_dimension_numbers<[2], [2], [1], [1], [0, 0, 0, 1, 1, 1], [0], [0]>} : vector<2x24x16xbf16>, vector<2x24x16xbf16>, vector<2x24x24xf32> -> vector<2x24x24xf32>
    "tpu.trace_stop"() : () -> ()
    %cst_128 = arith.constant dense<0xFF800000> : vector<2x24xf32>
    %391 = vector.multi_reduction <maximumf>, %390, %cst_128 [2] : vector<2x24x24xf32> to vector<2x24xf32>
    %392 = vector.shape_cast %391 : vector<2x24xf32> to vector<2x24x1xf32>
    %393 = vector.broadcast %392 : vector<2x24x1xf32> to vector<2x24x24xf32>
    %394 = arith.subf %390, %393 : vector<2x24x24xf32>
    %395 = math.exp %394 : vector<2x24x24xf32>
    %cst_129 = arith.constant dense<0.000000e+00> : vector<2x24xf32>
    %396 = vector.multi_reduction <add>, %395, %cst_129 [2] : vector<2x24x24xf32> to vector<2x24xf32>
    %397 = vector.shape_cast %396 : vector<2x24xf32> to vector<2x24x1xf32>
    %398 = tpu.reciprocal %397 {approx = true} : vector<2x24x1xf32> -> vector<2x24x1xf32>
    %399 = vector.broadcast %398 : vector<2x24x1xf32> to vector<2x24x24xf32>
    %400 = arith.mulf %395, %399 : vector<2x24x24xf32>
    %401 = arith.truncf %400 : vector<2x24x24xf32> to vector<2x24x24xbf16>
    "tpu.trace_start"() <{level = 10 : i32, message = "bqk,bkd->bqd"}> : () -> ()
    %cst_130 = arith.constant dense<0.000000e+00> : vector<2x24x16xf32>
    %402 = tpu.matmul %401, %389, %cst_130 {dimension_numbers = #tpu.dot_dimension_numbers<[2], [1], [1], [2], [0, 0, 0, 1, 1, 2], [0], [0]>} : vector<2x24x24xbf16>, vector<2x24x16xbf16>, vector<2x24x16xf32> -> vector<2x24x16xf32>
    "tpu.trace_stop"() : () -> ()
    %403 = vector.shape_cast %402 : vector<2x24x16xf32> to vector<48x16xf32>
    %404 = arith.truncf %403 : vector<48x16xf32> to vector<48x16xbf16>
    %405 = vector.extract_strided_slice %301 {offsets = [64, 0], sizes = [16, 128], strides = [1, 1]} : vector<128x128xbf16> to vector<16x128xbf16>
    %cst_131 = arith.constant dense<0.000000e+00> : vector<48x128xf32>
    %406 = tpu.matmul %404, %405, %cst_131 {dimension_numbers = #tpu.dot_dimension_numbers<[1], [0], [0], [1], [0, 0, 1, 1], [], []>} : vector<48x16xbf16>, vector<16x128xbf16>, vector<48x128xf32> -> vector<48x128xf32>
    %407 = arith.addf %386, %406 : vector<48x128xf32>
    %408 = vector.extract_strided_slice %299 {offsets = [0, 0, 80], sizes = [2, 24, 16], strides = [1, 1, 1]} : vector<2x24x384xbf16> to vector<2x24x16xbf16>
    %409 = vector.extract_strided_slice %299 {offsets = [0, 0, 208], sizes = [2, 24, 16], strides = [1, 1, 1]} : vector<2x24x384xbf16> to vector<2x24x16xbf16>
    %410 = vector.extract_strided_slice %299 {offsets = [0, 0, 336], sizes = [2, 24, 16], strides = [1, 1, 1]} : vector<2x24x384xbf16> to vector<2x24x16xbf16>
    "tpu.trace_start"() <{level = 10 : i32, message = "bqd,bkd->bqk"}> : () -> ()
    %cst_132 = arith.constant dense<0.000000e+00> : vector<2x24x24xf32>
    %411 = tpu.matmul %408, %409, %cst_132 {dimension_numbers = #tpu.dot_dimension_numbers<[2], [2], [1], [1], [0, 0, 0, 1, 1, 1], [0], [0]>} : vector<2x24x16xbf16>, vector<2x24x16xbf16>, vector<2x24x24xf32> -> vector<2x24x24xf32>
    "tpu.trace_stop"() : () -> ()
    %cst_133 = arith.constant dense<0xFF800000> : vector<2x24xf32>
    %412 = vector.multi_reduction <maximumf>, %411, %cst_133 [2] : vector<2x24x24xf32> to vector<2x24xf32>
    %413 = vector.shape_cast %412 : vector<2x24xf32> to vector<2x24x1xf32>
    %414 = vector.broadcast %413 : vector<2x24x1xf32> to vector<2x24x24xf32>
    %415 = arith.subf %411, %414 : vector<2x24x24xf32>
    %416 = math.exp %415 : vector<2x24x24xf32>
    %cst_134 = arith.constant dense<0.000000e+00> : vector<2x24xf32>
    %417 = vector.multi_reduction <add>, %416, %cst_134 [2] : vector<2x24x24xf32> to vector<2x24xf32>
    %418 = vector.shape_cast %417 : vector<2x24xf32> to vector<2x24x1xf32>
    %419 = tpu.reciprocal %418 {approx = true} : vector<2x24x1xf32> -> vector<2x24x1xf32>
    %420 = vector.broadcast %419 : vector<2x24x1xf32> to vector<2x24x24xf32>
    %421 = arith.mulf %416, %420 : vector<2x24x24xf32>
    %422 = arith.truncf %421 : vector<2x24x24xf32> to vector<2x24x24xbf16>
    "tpu.trace_start"() <{level = 10 : i32, message = "bqk,bkd->bqd"}> : () -> ()
    %cst_135 = arith.constant dense<0.000000e+00> : vector<2x24x16xf32>
    %423 = tpu.matmul %422, %410, %cst_135 {dimension_numbers = #tpu.dot_dimension_numbers<[2], [1], [1], [2], [0, 0, 0, 1, 1, 2], [0], [0]>} : vector<2x24x24xbf16>, vector<2x24x16xbf16>, vector<2x24x16xf32> -> vector<2x24x16xf32>
    "tpu.trace_stop"() : () -> ()
    %424 = vector.shape_cast %423 : vector<2x24x16xf32> to vector<48x16xf32>
    %425 = arith.truncf %424 : vector<48x16xf32> to vector<48x16xbf16>
    %426 = vector.extract_strided_slice %301 {offsets = [80, 0], sizes = [16, 128], strides = [1, 1]} : vector<128x128xbf16> to vector<16x128xbf16>
    %cst_136 = arith.constant dense<0.000000e+00> : vector<48x128xf32>
    %427 = tpu.matmul %425, %426, %cst_136 {dimension_numbers = #tpu.dot_dimension_numbers<[1], [0], [0], [1], [0, 0, 1, 1], [], []>} : vector<48x16xbf16>, vector<16x128xbf16>, vector<48x128xf32> -> vector<48x128xf32>
    %428 = arith.addf %407, %427 : vector<48x128xf32>
    %429 = vector.extract_strided_slice %299 {offsets = [0, 0, 96], sizes = [2, 24, 16], strides = [1, 1, 1]} : vector<2x24x384xbf16> to vector<2x24x16xbf16>
    %430 = vector.extract_strided_slice %299 {offsets = [0, 0, 224], sizes = [2, 24, 16], strides = [1, 1, 1]} : vector<2x24x384xbf16> to vector<2x24x16xbf16>
    %431 = vector.extract_strided_slice %299 {offsets = [0, 0, 352], sizes = [2, 24, 16], strides = [1, 1, 1]} : vector<2x24x384xbf16> to vector<2x24x16xbf16>
    "tpu.trace_start"() <{level = 10 : i32, message = "bqd,bkd->bqk"}> : () -> ()
    %cst_137 = arith.constant dense<0.000000e+00> : vector<2x24x24xf32>
    %432 = tpu.matmul %429, %430, %cst_137 {dimension_numbers = #tpu.dot_dimension_numbers<[2], [2], [1], [1], [0, 0, 0, 1, 1, 1], [0], [0]>} : vector<2x24x16xbf16>, vector<2x24x16xbf16>, vector<2x24x24xf32> -> vector<2x24x24xf32>
    "tpu.trace_stop"() : () -> ()
    %cst_138 = arith.constant dense<0xFF800000> : vector<2x24xf32>
    %433 = vector.multi_reduction <maximumf>, %432, %cst_138 [2] : vector<2x24x24xf32> to vector<2x24xf32>
    %434 = vector.shape_cast %433 : vector<2x24xf32> to vector<2x24x1xf32>
    %435 = vector.broadcast %434 : vector<2x24x1xf32> to vector<2x24x24xf32>
    %436 = arith.subf %432, %435 : vector<2x24x24xf32>
    %437 = math.exp %436 : vector<2x24x24xf32>
    %cst_139 = arith.constant dense<0.000000e+00> : vector<2x24xf32>
    %438 = vector.multi_reduction <add>, %437, %cst_139 [2] : vector<2x24x24xf32> to vector<2x24xf32>
    %439 = vector.shape_cast %438 : vector<2x24xf32> to vector<2x24x1xf32>
    %440 = tpu.reciprocal %439 {approx = true} : vector<2x24x1xf32> -> vector<2x24x1xf32>
    %441 = vector.broadcast %440 : vector<2x24x1xf32> to vector<2x24x24xf32>
    %442 = arith.mulf %437, %441 : vector<2x24x24xf32>
    %443 = arith.truncf %442 : vector<2x24x24xf32> to vector<2x24x24xbf16>
    "tpu.trace_start"() <{level = 10 : i32, message = "bqk,bkd->bqd"}> : () -> ()
    %cst_140 = arith.constant dense<0.000000e+00> : vector<2x24x16xf32>
    %444 = tpu.matmul %443, %431, %cst_140 {dimension_numbers = #tpu.dot_dimension_numbers<[2], [1], [1], [2], [0, 0, 0, 1, 1, 2], [0], [0]>} : vector<2x24x24xbf16>, vector<2x24x16xbf16>, vector<2x24x16xf32> -> vector<2x24x16xf32>
    "tpu.trace_stop"() : () -> ()
    %445 = vector.shape_cast %444 : vector<2x24x16xf32> to vector<48x16xf32>
    %446 = arith.truncf %445 : vector<48x16xf32> to vector<48x16xbf16>
    %447 = vector.extract_strided_slice %301 {offsets = [96, 0], sizes = [16, 128], strides = [1, 1]} : vector<128x128xbf16> to vector<16x128xbf16>
    %cst_141 = arith.constant dense<0.000000e+00> : vector<48x128xf32>
    %448 = tpu.matmul %446, %447, %cst_141 {dimension_numbers = #tpu.dot_dimension_numbers<[1], [0], [0], [1], [0, 0, 1, 1], [], []>} : vector<48x16xbf16>, vector<16x128xbf16>, vector<48x128xf32> -> vector<48x128xf32>
    %449 = arith.addf %428, %448 : vector<48x128xf32>
    %450 = vector.extract_strided_slice %299 {offsets = [0, 0, 112], sizes = [2, 24, 16], strides = [1, 1, 1]} : vector<2x24x384xbf16> to vector<2x24x16xbf16>
    %451 = vector.extract_strided_slice %299 {offsets = [0, 0, 240], sizes = [2, 24, 16], strides = [1, 1, 1]} : vector<2x24x384xbf16> to vector<2x24x16xbf16>
    %452 = vector.extract_strided_slice %299 {offsets = [0, 0, 368], sizes = [2, 24, 16], strides = [1, 1, 1]} : vector<2x24x384xbf16> to vector<2x24x16xbf16>
    "tpu.trace_start"() <{level = 10 : i32, message = "bqd,bkd->bqk"}> : () -> ()
    %cst_142 = arith.constant dense<0.000000e+00> : vector<2x24x24xf32>
    %453 = tpu.matmul %450, %451, %cst_142 {dimension_numbers = #tpu.dot_dimension_numbers<[2], [2], [1], [1], [0, 0, 0, 1, 1, 1], [0], [0]>} : vector<2x24x16xbf16>, vector<2x24x16xbf16>, vector<2x24x24xf32> -> vector<2x24x24xf32>
    "tpu.trace_stop"() : () -> ()
    %cst_143 = arith.constant dense<0xFF800000> : vector<2x24xf32>
    %454 = vector.multi_reduction <maximumf>, %453, %cst_143 [2] : vector<2x24x24xf32> to vector<2x24xf32>
    %455 = vector.shape_cast %454 : vector<2x24xf32> to vector<2x24x1xf32>
    %456 = vector.broadcast %455 : vector<2x24x1xf32> to vector<2x24x24xf32>
    %457 = arith.subf %453, %456 : vector<2x24x24xf32>
    %458 = math.exp %457 : vector<2x24x24xf32>
    %cst_144 = arith.constant dense<0.000000e+00> : vector<2x24xf32>
    %459 = vector.multi_reduction <add>, %458, %cst_144 [2] : vector<2x24x24xf32> to vector<2x24xf32>
    %460 = vector.shape_cast %459 : vector<2x24xf32> to vector<2x24x1xf32>
    %461 = tpu.reciprocal %460 {approx = true} : vector<2x24x1xf32> -> vector<2x24x1xf32>
    %462 = vector.broadcast %461 : vector<2x24x1xf32> to vector<2x24x24xf32>
    %463 = arith.mulf %458, %462 : vector<2x24x24xf32>
    %464 = arith.truncf %463 : vector<2x24x24xf32> to vector<2x24x24xbf16>
    "tpu.trace_start"() <{level = 10 : i32, message = "bqk,bkd->bqd"}> : () -> ()
    %cst_145 = arith.constant dense<0.000000e+00> : vector<2x24x16xf32>
    %465 = tpu.matmul %464, %452, %cst_145 {dimension_numbers = #tpu.dot_dimension_numbers<[2], [1], [1], [2], [0, 0, 0, 1, 1, 2], [0], [0]>} : vector<2x24x24xbf16>, vector<2x24x16xbf16>, vector<2x24x16xf32> -> vector<2x24x16xf32>
    "tpu.trace_stop"() : () -> ()
    %466 = vector.shape_cast %465 : vector<2x24x16xf32> to vector<48x16xf32>
    %467 = arith.truncf %466 : vector<48x16xf32> to vector<48x16xbf16>
    %468 = vector.extract_strided_slice %301 {offsets = [112, 0], sizes = [16, 128], strides = [1, 1]} : vector<128x128xbf16> to vector<16x128xbf16>
    %cst_146 = arith.constant dense<0.000000e+00> : vector<48x128xf32>
    %469 = tpu.matmul %467, %468, %cst_146 {dimension_numbers = #tpu.dot_dimension_numbers<[1], [0], [0], [1], [0, 0, 1, 1], [], []>} : vector<48x16xbf16>, vector<16x128xbf16>, vector<48x128xf32> -> vector<48x128xf32>
    %470 = arith.addf %449, %469 : vector<48x128xf32>
    %471 = arith.addf %271, %470 : vector<48x128xf32>
    %c1_147 = arith.constant 1 : index
    %c0_148 = arith.constant 0 : index
    %c0_149 = arith.constant 0 : index
    %472 = vector.load %arg9[%c1_147, %c0_148, %c0_149] : memref<2x1x128xf32, #tpu.memory_space<vmem>>, vector<1x1x128xf32>
    %473 = vector.shape_cast %472 : vector<1x1x128xf32> to vector<1x128xf32>
    %474 = vector.broadcast %473 : vector<1x128xf32> to vector<48x128xf32>
    %475 = arith.addf %471, %474 : vector<48x128xf32>
    %cst_150 = arith.constant dense<0.000000e+00> : vector<48xf32>
    %476 = vector.multi_reduction <add>, %475, %cst_150 [1] : vector<48x128xf32> to vector<48xf32>
    %477 = vector.shape_cast %476 : vector<48xf32> to vector<48x1xf32>
    %cst_151 = arith.constant 0.00833333377 : f32
    %478 = vector.broadcast %cst_151 : f32 to vector<48x1xf32>
    %479 = arith.mulf %477, %478 : vector<48x1xf32>
    %480 = vector.broadcast %479 : vector<48x1xf32> to vector<48x128xf32>
    %481 = arith.subf %475, %480 : vector<48x128xf32>
    %482 = vector.broadcast %4 : vector<1x128xf32> to vector<48x128xf32>
    %483 = arith.mulf %481, %482 : vector<48x128xf32>
    %484 = arith.mulf %483, %483 : vector<48x128xf32>
    %cst_152 = arith.constant dense<0.000000e+00> : vector<48xf32>
    %485 = vector.multi_reduction <add>, %484, %cst_152 [1] : vector<48x128xf32> to vector<48xf32>
    %486 = vector.shape_cast %485 : vector<48xf32> to vector<48x1xf32>
    %cst_153 = arith.constant 0.00833333377 : f32
    %487 = vector.broadcast %cst_153 : f32 to vector<48x1xf32>
    %488 = arith.mulf %486, %487 : vector<48x1xf32>
    %cst_154 = arith.constant 9.99999974E-6 : f32
    %489 = vector.broadcast %cst_154 : f32 to vector<48x1xf32>
    %490 = arith.addf %488, %489 : vector<48x1xf32>
    %491 = math.rsqrt %490 : vector<48x1xf32>
    %492 = vector.broadcast %491 : vector<48x1xf32> to vector<48x128xf32>
    %493 = arith.mulf %483, %492 : vector<48x128xf32>
    %494 = arith.truncf %493 : vector<48x128xf32> to vector<48x128xbf16>
    %c1_155 = arith.constant 1 : index
    %c0_156 = arith.constant 0 : index
    %c0_157 = arith.constant 0 : index
    %495 = vector.load %arg10[%c1_155, %c0_156, %c0_157] : memref<2x128x256xbf16, #tpu.memory_space<vmem>>, vector<1x128x256xbf16>
    %496 = vector.shape_cast %495 : vector<1x128x256xbf16> to vector<128x256xbf16>
    %cst_158 = arith.constant dense<0.000000e+00> : vector<48x256xf32>
    %497 = tpu.matmul %494, %496, %cst_158 {dimension_numbers = #tpu.dot_dimension_numbers<[1], [0], [0], [1], [0, 0, 1, 1], [], []>} : vector<48x128xbf16>, vector<128x256xbf16>, vector<48x256xf32> -> vector<48x256xf32>
    %c1_159 = arith.constant 1 : index
    %c0_160 = arith.constant 0 : index
    %c0_161 = arith.constant 0 : index
    %498 = vector.load %arg11[%c1_159, %c0_160, %c0_161] : memref<2x1x256xf32, #tpu.memory_space<vmem>>, vector<1x1x256xf32>
    %499 = vector.shape_cast %498 : vector<1x1x256xf32> to vector<1x256xf32>
    %500 = vector.broadcast %499 : vector<1x256xf32> to vector<48x256xf32>
    %501 = arith.addf %497, %500 : vector<48x256xf32>
    %502 = arith.mulf %501, %501 : vector<48x256xf32>
    %503 = arith.mulf %501, %502 : vector<48x256xf32>
    %cst_162 = arith.constant 4.471500e-02 : f32
    %504 = vector.broadcast %cst_162 : f32 to vector<48x256xf32>
    %505 = arith.mulf %504, %503 : vector<48x256xf32>
    %506 = arith.addf %501, %505 : vector<48x256xf32>
    %cst_163 = arith.constant 0.797884583 : f32
    %507 = vector.broadcast %cst_163 : f32 to vector<48x256xf32>
    %508 = arith.mulf %507, %506 : vector<48x256xf32>
    %509 = math.tanh %508 : vector<48x256xf32>
    %cst_164 = arith.constant 1.000000e+00 : f32
    %510 = vector.broadcast %cst_164 : f32 to vector<48x256xf32>
    %511 = arith.addf %510, %509 : vector<48x256xf32>
    %cst_165 = arith.constant 5.000000e-01 : f32
    %512 = vector.broadcast %cst_165 : f32 to vector<48x256xf32>
    %513 = arith.mulf %512, %511 : vector<48x256xf32>
    %514 = arith.mulf %501, %513 : vector<48x256xf32>
    %515 = arith.truncf %514 : vector<48x256xf32> to vector<48x256xbf16>
    %c1_166 = arith.constant 1 : index
    %c0_167 = arith.constant 0 : index
    %c0_168 = arith.constant 0 : index
    %516 = vector.load %arg12[%c1_166, %c0_167, %c0_168] : memref<2x256x128xbf16, #tpu.memory_space<vmem>>, vector<1x256x128xbf16>
    %517 = vector.shape_cast %516 : vector<1x256x128xbf16> to vector<256x128xbf16>
    %cst_169 = arith.constant dense<0.000000e+00> : vector<48x128xf32>
    %518 = tpu.matmul %515, %517, %cst_169 {dimension_numbers = #tpu.dot_dimension_numbers<[1], [0], [0], [1], [0, 0, 1, 1], [], []>} : vector<48x256xbf16>, vector<256x128xbf16>, vector<48x128xf32> -> vector<48x128xf32>
    %c1_170 = arith.constant 1 : index
    %c0_171 = arith.constant 0 : index
    %c0_172 = arith.constant 0 : index
    %519 = vector.load %arg13[%c1_170, %c0_171, %c0_172] : memref<2x1x128xf32, #tpu.memory_space<vmem>>, vector<1x1x128xf32>
    %520 = vector.shape_cast %519 : vector<1x1x128xf32> to vector<1x128xf32>
    %521 = vector.broadcast %520 : vector<1x128xf32> to vector<48x128xf32>
    %522 = arith.addf %518, %521 : vector<48x128xf32>
    %523 = arith.addf %475, %522 : vector<48x128xf32>
    %cst_173 = arith.constant dense<0.000000e+00> : vector<48xf32>
    %524 = vector.multi_reduction <add>, %523, %cst_173 [1] : vector<48x128xf32> to vector<48xf32>
    %525 = vector.shape_cast %524 : vector<48xf32> to vector<48x1xf32>
    %cst_174 = arith.constant 0.00833333377 : f32
    %526 = vector.broadcast %cst_174 : f32 to vector<48x1xf32>
    %527 = arith.mulf %525, %526 : vector<48x1xf32>
    %528 = vector.broadcast %527 : vector<48x1xf32> to vector<48x128xf32>
    %529 = arith.subf %523, %528 : vector<48x128xf32>
    %530 = vector.broadcast %4 : vector<1x128xf32> to vector<48x128xf32>
    %531 = arith.mulf %529, %530 : vector<48x128xf32>
    %532 = arith.mulf %531, %531 : vector<48x128xf32>
    %cst_175 = arith.constant dense<0.000000e+00> : vector<48xf32>
    %533 = vector.multi_reduction <add>, %532, %cst_175 [1] : vector<48x128xf32> to vector<48xf32>
    %534 = vector.shape_cast %533 : vector<48xf32> to vector<48x1xf32>
    %cst_176 = arith.constant 0.00833333377 : f32
    %535 = vector.broadcast %cst_176 : f32 to vector<48x1xf32>
    %536 = arith.mulf %534, %535 : vector<48x1xf32>
    %cst_177 = arith.constant 9.99999974E-6 : f32
    %537 = vector.broadcast %cst_177 : f32 to vector<48x1xf32>
    %538 = arith.addf %536, %537 : vector<48x1xf32>
    %539 = math.rsqrt %538 : vector<48x1xf32>
    %540 = vector.broadcast %539 : vector<48x1xf32> to vector<48x128xf32>
    %541 = arith.mulf %531, %540 : vector<48x128xf32>
    %542 = arith.truncf %541 : vector<48x128xf32> to vector<48x128xbf16>
    %c0_178 = arith.constant 0 : index
    %c0_179 = arith.constant 0 : index
    %543 = vector.load %arg14[%c0_178, %c0_179] : memref<128x128xbf16, #tpu.memory_space<vmem>>, vector<128x128xbf16>
    %cst_180 = arith.constant dense<0.000000e+00> : vector<48x128xf32>
    %544 = tpu.matmul %542, %543, %cst_180 {dimension_numbers = #tpu.dot_dimension_numbers<[1], [0], [0], [1], [0, 0, 1, 1], [], []>} : vector<48x128xbf16>, vector<128x128xbf16>, vector<48x128xf32> -> vector<48x128xf32>
    %c0_181 = arith.constant 0 : index
    %c0_182 = arith.constant 0 : index
    %545 = vector.load %arg15[%c0_181, %c0_182] : memref<1x128xf32, #tpu.memory_space<vmem>>, vector<1x128xf32>
    %546 = vector.broadcast %545 : vector<1x128xf32> to vector<48x128xf32>
    %547 = arith.addf %544, %546 : vector<48x128xf32>
    %cst_183 = arith.constant dense<0xFF800000> : vector<48xf32>
    %548 = vector.multi_reduction <maximumf>, %547, %cst_183 [1] : vector<48x128xf32> to vector<48xf32>
    %549 = vector.shape_cast %548 : vector<48xf32> to vector<48x1xf32>
    %550 = vector.broadcast %549 : vector<48x1xf32> to vector<48x128xf32>
    %551 = arith.subf %547, %550 : vector<48x128xf32>
    %552 = math.exp %551 : vector<48x128xf32>
    %cst_184 = arith.constant dense<0.000000e+00> : vector<48xf32>
    %553 = vector.multi_reduction <add>, %552, %cst_184 [1] : vector<48x128xf32> to vector<48xf32>
    %554 = vector.shape_cast %553 : vector<48xf32> to vector<48x1xf32>
    %555 = math.log %554 : vector<48x1xf32>
    %556 = vector.broadcast %555 : vector<48x1xf32> to vector<48x128xf32>
    %557 = arith.subf %551, %556 : vector<48x128xf32>
    %c0_185 = arith.constant 0 : index
    %c0_186 = arith.constant 0 : index
    %558 = vector.load %arg16[%c0_185, %c0_186] : memref<48x128xf32, #tpu.memory_space<vmem>>, vector<48x128xf32>
    tpu.vector_store %arg16[%c0_185, %c0_186], %557 {strides = array<i32>} : memref<48x128xf32, #tpu.memory_space<vmem>>, vector<48x128xf32>,
    return
  }
  func.func @transform_0(%arg0: i32) -> (i32, i32) {
    %c0_i32 = arith.constant 0 : i32
    %c0_i32_0 = arith.constant 0 : i32
    return %arg0, %c0_i32 : i32, i32
  }
  func.func @transform_1(%arg0: i32) -> (i32, i32) {
    %c0_i32 = arith.constant 0 : i32
    %c0_i32_0 = arith.constant 0 : i32
    %c0_i32_1 = arith.constant 0 : i32
    return %c0_i32, %c0_i32_0 : i32, i32
  }
  func.func @transform_2(%arg0: i32) -> (i32, i32) {
    %c0_i32 = arith.constant 0 : i32
    %c0_i32_0 = arith.constant 0 : i32
    %c0_i32_1 = arith.constant 0 : i32
    return %c0_i32, %c0_i32_0 : i32, i32
  }
  func.func @transform_3(%arg0: i32) -> (i32, i32) {
    %c0_i32 = arith.constant 0 : i32
    %c0_i32_0 = arith.constant 0 : i32
    %c0_i32_1 = arith.constant 0 : i32
    return %c0_i32, %c0_i32_0 : i32, i32
  }
  func.func @transform_4(%arg0: i32) -> (i32, i32) {
    %c0_i32 = arith.constant 0 : i32
    %c0_i32_0 = arith.constant 0 : i32
    %c0_i32_1 = arith.constant 0 : i32
    return %c0_i32, %c0_i32_0 : i32, i32
  }
  func.func @transform_5(%arg0: i32) -> (i32, i32, i32) {
    %c0_i32 = arith.constant 0 : i32
    %c0_i32_0 = arith.constant 0 : i32
    %c0_i32_1 = arith.constant 0 : i32
    %c0_i32_2 = arith.constant 0 : i32
    return %c0_i32, %c0_i32_0, %c0_i32_1 : i32, i32, i32
  }
  func.func @transform_6(%arg0: i32) -> (i32, i32, i32) {
    %c0_i32 = arith.constant 0 : i32
    %c0_i32_0 = arith.constant 0 : i32
    %c0_i32_1 = arith.constant 0 : i32
    %c0_i32_2 = arith.constant 0 : i32
    return %c0_i32, %c0_i32_0, %c0_i32_1 : i32, i32, i32
  }
  func.func @transform_7(%arg0: i32) -> (i32, i32, i32) {
    %c0_i32 = arith.constant 0 : i32
    %c0_i32_0 = arith.constant 0 : i32
    %c0_i32_1 = arith.constant 0 : i32
    %c0_i32_2 = arith.constant 0 : i32
    return %c0_i32, %c0_i32_0, %c0_i32_1 : i32, i32, i32
  }
  func.func @transform_8(%arg0: i32) -> (i32, i32, i32) {
    %c0_i32 = arith.constant 0 : i32
    %c0_i32_0 = arith.constant 0 : i32
    %c0_i32_1 = arith.constant 0 : i32
    %c0_i32_2 = arith.constant 0 : i32
    return %c0_i32, %c0_i32_0, %c0_i32_1 : i32, i32, i32
  }
  func.func @transform_9(%arg0: i32) -> (i32, i32, i32) {
    %c0_i32 = arith.constant 0 : i32
    %c0_i32_0 = arith.constant 0 : i32
    %c0_i32_1 = arith.constant 0 : i32
    %c0_i32_2 = arith.constant 0 : i32
    return %c0_i32, %c0_i32_0, %c0_i32_1 : i32, i32, i32
  }
  func.func @transform_10(%arg0: i32) -> (i32, i32, i32) {
    %c0_i32 = arith.constant 0 : i32
    %c0_i32_0 = arith.constant 0 : i32
    %c0_i32_1 = arith.constant 0 : i32
    %c0_i32_2 = arith.constant 0 : i32
    return %c0_i32, %c0_i32_0, %c0_i32_1 : i32, i32, i32
  }
  func.func @transform_11(%arg0: i32) -> (i32, i32, i32) {
    %c0_i32 = arith.constant 0 : i32
    %c0_i32_0 = arith.constant 0 : i32
    %c0_i32_1 = arith.constant 0 : i32
    %c0_i32_2 = arith.constant 0 : i32
    return %c0_i32, %c0_i32_0, %c0_i32_1 : i32, i32, i32
  }
  func.func @transform_12(%arg0: i32) -> (i32, i32, i32) {
    %c0_i32 = arith.constant 0 : i32
    %c0_i32_0 = arith.constant 0 : i32
    %c0_i32_1 = arith.constant 0 : i32
    %c0_i32_2 = arith.constant 0 : i32
    return %c0_i32, %c0_i32_0, %c0_i32_1 : i32, i32, i32
  }
  func.func @transform_13(%arg0: i32) -> (i32, i32) {
    %c0_i32 = arith.constant 0 : i32
    %c0_i32_0 = arith.constant 0 : i32
    %c0_i32_1 = arith.constant 0 : i32
    return %c0_i32, %c0_i32_0 : i32, i32
  }
  func.func @transform_14(%arg0: i32) -> (i32, i32) {
    %c0_i32 = arith.constant 0 : i32
    %c0_i32_0 = arith.constant 0 : i32
    %c0_i32_1 = arith.constant 0 : i32
    return %c0_i32, %c0_i32_0 : i32, i32
  }
  func.func @transform_15(%arg0: i32) -> (i32, i32) {
    %c0_i32 = arith.constant 0 : i32
    %c0_i32_0 = arith.constant 0 : i32
    return %arg0, %c0_i32 : i32, i32
  }
}

</mosaic_0001>

<llo_original>
// kernel: tpu_custom_call.1
$region0: #{tpu_custom_call.1}
  #allocation0 [shape = 'u32[]', space=smem, size = 0x4, offset = 0x4, fixed_abs, tag = 'smem constant byte address 0x4 - core index']
  #allocation1 [shape = 'u32[72,128]{1,0:T(1,128)}', space=vmem, size = 0x9000, scoped, tag = 'internal scratch']
  %s0 = inlined_call_operand.hbm [shape: bf16[48,128], index: 0, kind: input, shape index: {}]
  %s1 = inlined_call_operand.hbm [shape: bf16[128,128], index: 1, kind: input, shape index: {}]
  %s2 = inlined_call_operand.hbm [shape: f32[24,128], index: 2, kind: input, shape index: {}]
  %s3 = inlined_call_operand.hbm [shape: bf16[128,128], index: 3, kind: input, shape index: {}]
  %s4 = inlined_call_operand.hbm [shape: f32[1,128], index: 4, kind: input, shape index: {}]
  %s5 = inlined_call_operand.hbm [shape: bf16[2,128,384], index: 5, kind: input, shape index: {}]
  %s6 = inlined_call_operand.hbm [shape: f32[2,1,384], index: 6, kind: input, shape index: {}]
  %s7 = inlined_call_operand.hbm [shape: bf16[2,128,128], index: 7, kind: input, shape index: {}]
  %s8 = inlined_call_operand.vmem [shape: f32[2,1,128], index: 8, kind: input, shape index: {}]
  %s9 = inlined_call_operand.hbm [shape: bf16[2,128,256], index: 9, kind: input, shape index: {}]
  %s10 = inlined_call_operand.vmem [shape: f32[2,1,256], index: 10, kind: input, shape index: {}]
  %s11 = inlined_call_operand.hbm [shape: bf16[2,256,128], index: 11, kind: input, shape index: {}]
  %s12 = inlined_call_operand.vmem [shape: f32[2,1,128], index: 12, kind: input, shape index: {}]
  %s13 = inlined_call_operand.hbm [shape: bf16[128,128], index: 13, kind: input, shape index: {}]
  %s14 = inlined_call_operand.vmem [shape: f32[1,128], index: 14, kind: input, shape index: {}]
  %s15 = inlined_call_operand.hbm [shape: f32[48,128], index: 15, kind: output, shape index: {}]
  %s16 = sld [smem:[#allocation0]]
  $region114: #{tpu_custom_call.1} parent=0
    _
  %s18 = ssub.s32 1, %s16
  %s19 = scalar_select 0, %s18, %s16
  $region1: #{tpu_custom_call.1} parent=0
    #allocation2 [shape = 'u8[12288]{0}', space=vmem, size = 0x3000, scoped, tag = 'input window, operand 0, single buffered']
    #allocation3 [shape = 's32[1]{0}', space=sflag, size = 0x4, scoped, tag = 'scoped memory for tpu_custom_call.1']
    #allocation4 [shape = 's32[1]{0}', space=sflag, size = 0x4, scoped, tag = 'scoped memory for tpu_custom_call.1']
    #allocation5 [shape = 'u8[32768]{0}', space=vmem, size = 0x8000, scoped, tag = 'input window, operand 1, single buffered']
    #allocation6 [shape = 's32[1]{0}', space=sflag, size = 0x4, scoped, tag = 'scoped memory for tpu_custom_call.1']
    #allocation7 [shape = 'u8[12288]{0}', space=vmem, size = 0x3000, scoped, tag = 'input window, operand 2, single buffered']
    #allocation8 [shape = 'u8[32768]{0}', space=vmem, size = 0x8000, scoped, tag = 'input window, operand 3, single buffered']
    #allocation9 [shape = 's32[1]{0}', space=sflag, size = 0x4, scoped, tag = 'scoped memory for tpu_custom_call.1']
    #allocation10 [shape = 'u8[512]{0}', space=vmem, size = 0x400, scoped, tag = 'input window, operand 4, single buffered']
    #allocation11 [shape = 'u8[196608]{0}', space=vmem, size = 0x30000, scoped, tag = 'input window, operand 5, single buffered']
    #allocation12 [shape = 's32[1]{0}', space=sflag, size = 0x4, scoped, tag = 'scoped memory for tpu_custom_call.1']
    #allocation13 [shape = 'u8[3072]{0}', space=vmem, size = 0xc00, scoped, tag = 'input window, operand 6, single buffered']
    #allocation14 [shape = 'u8[65536]{0}', space=vmem, size = 0x10000, scoped, tag = 'input window, operand 7, single buffered']
    #allocation15 [shape = 's32[1]{0}', space=sflag, size = 0x4, scoped, tag = 'scoped memory for tpu_custom_call.1']
    #allocation16 [shape = 'u8[131072]{0}', space=vmem, size = 0x20000, scoped, tag = 'input window, operand 9, single buffered']
    #allocation17 [shape = 'u8[131072]{0}', space=vmem, size = 0x20000, scoped, tag = 'input window, operand 11, single buffered']
    #allocation18 [shape = 's32[1]{0}', space=sflag, size = 0x4, scoped, tag = 'scoped memory for tpu_custom_call.1']
    #allocation19 [shape = 'u8[32768]{0}', space=vmem, size = 0x8000, scoped, tag = 'input window, operand 13, single buffered']
    #allocation20 [shape = 'u8[24576]{0}', space=vmem, size = 0x6000, scoped, tag = 'output window, operand 0, single buffered']
    %20 = vsyncpa [#allocation3], 0
    %21 = vsyncpa [#allocation6], 0
    %22 = vsyncpa [#allocation9], 0
    %23 = vsyncpa [#allocation12], 0
    %24 = vsyncpa [#allocation15], 0
    %25 = vsyncpa [#allocation18], 0
    %26 = vsyncpa [#allocation4], 0
    // Predicated region
    $region2: #{tpu_custom_call.1} parent=1 // pred_check
      _
    $region3: #{tpu_custom_call.1} parent=1 // pred_check_branch
      %28 = sbr.rel (0) target = $region5
    $region4: #{tpu_custom_call.1} parent=1 // pred_region
      %30 = vsyncadd [#allocation3], 0
      %s31 = sshll.u32 %s0, 4
      %s32 = int_to_ptr.hbm [resolvable:$true] %s31
      %s33 = sshll.u32 [#allocation2], 4
      %s34 = int_to_ptr.vmem [resolvable:$true] %s33
      %39 = dma.hbm_to_vmem [thread:$0]  %s32, 384, %s34, [#allocation3], 64, 64, 4
    $region5: #{tpu_custom_call.1} parent=1 // pred_fallthru
      _
    // Predicated region
    $region6: #{tpu_custom_call.1} parent=1 // pred_check
      _
    $region7: #{tpu_custom_call.1} parent=1 // pred_check_branch
      %41 = sbr.rel (0) target = $region9
    $region8: #{tpu_custom_call.1} parent=1 // pred_region
      %43 = vsyncadd [#allocation6], 0
      %s44 = sshll.u32 %s1, 4
      %s45 = int_to_ptr.hbm [resolvable:$true] %s44
      %s46 = sshll.u32 [#allocation5], 4
      %s47 = int_to_ptr.vmem [resolvable:$true] %s46
      %52 = dma.hbm_to_vmem [thread:$0]  %s45, 1024, %s47, [#allocation6], 64, 64, 4
    $region9: #{tpu_custom_call.1} parent=1 // pred_fallthru
      _
    // Predicated region
    $region10: #{tpu_custom_call.1} parent=1 // pred_check
      _
    $region11: #{tpu_custom_call.1} parent=1 // pred_check_branch
      %54 = sbr.rel (0) target = $region13
    $region12: #{tpu_custom_call.1} parent=1 // pred_region
      %56 = vsyncadd [#allocation6], 0
      %s57 = sshll.u32 %s2, 4
      %s58 = int_to_ptr.hbm [resolvable:$true] %s57
      %s59 = sshll.u32 [#allocation7], 4
      %s60 = int_to_ptr.vmem [resolvable:$true] %s59
      %65 = dma.hbm_to_vmem [thread:$0]  %s58, 384, %s60, [#allocation6], 128, 128, 8
    $region13: #{tpu_custom_call.1} parent=1 // pred_fallthru
      _
    // Predicated region
    $region14: #{tpu_custom_call.1} parent=1 // pred_check
      _
    $region15: #{tpu_custom_call.1} parent=1 // pred_check_branch
      %67 = sbr.rel (0) target = $region17
    $region16: #{tpu_custom_call.1} parent=1 // pred_region
      %69 = vsyncadd [#allocation9], 0
      %s70 = sshll.u32 %s3, 4
      %s71 = int_to_ptr.hbm [resolvable:$true] %s70
      %s72 = sshll.u32 [#allocation8], 4
      %s73 = int_to_ptr.vmem [resolvable:$true] %s72
      %78 = dma.hbm_to_vmem [thread:$0]  %s71, 1024, %s73, [#allocation9], 64, 64, 4
    $region17: #{tpu_custom_call.1} parent=1 // pred_fallthru
      _
    // Predicated region
    $region18: #{tpu_custom_call.1} parent=1 // pred_check
      _
    $region19: #{tpu_custom_call.1} parent=1 // pred_check_branch
      %80 = sbr.rel (0) target = $region21
    $region20: #{tpu_custom_call.1} parent=1 // pred_region
      %82 = vsyncadd [#allocation9], 0
      %s84 = sshll.u32 %s4, 4
      %s85 = int_to_ptr.hbm [resolvable:$true] %s84
      %s86 = sshll.u32 [#allocation10], 4
      %s87 = int_to_ptr.vmem [resolvable:$true] %s86
      %89 = dma.hbm_to_vmem [thread:$0]  %s85, 16, %s87, [#allocation9]
    $region21: #{tpu_custom_call.1} parent=1 // pred_fallthru
      _
    // Predicated region
    $region22: #{tpu_custom_call.1} parent=1 // pred_check
      _
    $region23: #{tpu_custom_call.1} parent=1 // pred_check_branch
      %91 = sbr.rel (0) target = $region25
    $region24: #{tpu_custom_call.1} parent=1 // pred_region
      %93 = vsyncadd [#allocation12], 0
      %s94 = sshll.u32 %s5, 4
      %s95 = int_to_ptr.hbm [resolvable:$true] %s94
      %s96 = sshll.u32 [#allocation11], 4
      %s97 = int_to_ptr.vmem [resolvable:$true] %s96
      %102 = dma.hbm_to_vmem [thread:$0]  %s95, 6144, %s97, [#allocation12], 192, 192, 12
    $region25: #{tpu_custom_call.1} parent=1 // pred_fallthru
      _
    // Predicated region
    $region26: #{tpu_custom_call.1} parent=1 // pred_check
      _
    $region27: #{tpu_custom_call.1} parent=1 // pred_check_branch
      %104 = sbr.rel (0) target = $region29
    $region28: #{tpu_custom_call.1} parent=1 // pred_region
      %106 = vsyncadd [#allocation12], 0
      %s107 = sshll.u32 %s6, 4
      %s108 = int_to_ptr.hbm [resolvable:$true] %s107
      %s109 = sshll.u32 [#allocation13], 4
      %s110 = int_to_ptr.vmem [resolvable:$true] %s109
      %115 = dma.hbm_to_vmem [thread:$0]  %s108, 96, %s110, [#allocation12], 48, 48, 3
    $region29: #{tpu_custom_call.1} parent=1 // pred_fallthru
      _
    // Predicated region
    $region30: #{tpu_custom_call.1} parent=1 // pred_check
      _
    $region31: #{tpu_custom_call.1} parent=1 // pred_check_branch
      %117 = sbr.rel (0) target = $region33
    $region32: #{tpu_custom_call.1} parent=1 // pred_region
      %119 = vsyncadd [#allocation15], 0
      %s120 = sshll.u32 %s7, 4
      %s121 = int_to_ptr.hbm [resolvable:$true] %s120
      %s122 = sshll.u32 [#allocation14], 4
      %s123 = int_to_ptr.vmem [resolvable:$true] %s122
      %128 = dma.hbm_to_vmem [thread:$0]  %s121, 2048, %s123, [#allocation15], 64, 64, 4
    $region33: #{tpu_custom_call.1} parent=1 // pred_fallthru
      _
    // Predicated region
    $region34: #{tpu_custom_call.1} parent=1 // pred_check
      _
    $region35: #{tpu_custom_call.1} parent=1 // pred_check_branch
      %130 = sbr.rel (0) target = $region37
    $region36: #{tpu_custom_call.1} parent=1 // pred_region
      _
    $region37: #{tpu_custom_call.1} parent=1 // pred_fallthru
      _
    // Predicated region
    $region38: #{tpu_custom_call.1} parent=1 // pred_check
      _
    $region39: #{tpu_custom_call.1} parent=1 // pred_check_branch
      %132 = sbr.rel (0) target = $region41
    $region40: #{tpu_custom_call.1} parent=1 // pred_region
      %134 = vsyncadd [#allocation15], 0
      %s135 = sshll.u32 %s9, 4
      %s136 = int_to_ptr.hbm [resolvable:$true] %s135
      %s137 = sshll.u32 [#allocation16], 4
      %s138 = int_to_ptr.vmem [resolvable:$true] %s137
      %143 = dma.hbm_to_vmem [thread:$0]  %s136, 4096, %s138, [#allocation15], 128, 128, 8
    $region41: #{tpu_custom_call.1} parent=1 // pred_fallthru
      _
    // Predicated region
    $region42: #{tpu_custom_call.1} parent=1 // pred_check
      _
    $region43: #{tpu_custom_call.1} parent=1 // pred_check_branch
      %145 = sbr.rel (0) target = $region45
    $region44: #{tpu_custom_call.1} parent=1 // pred_region
      _
    $region45: #{tpu_custom_call.1} parent=1 // pred_fallthru
      _
    // Predicated region
    $region46: #{tpu_custom_call.1} parent=1 // pred_check
      _
    $region47: #{tpu_custom_call.1} parent=1 // pred_check_branch
      %147 = sbr.rel (0) target = $region49
    $region48: #{tpu_custom_call.1} parent=1 // pred_region
      %149 = vsyncadd [#allocation18], 0
      %s150 = sshll.u32 %s11, 4
      %s151 = int_to_ptr.hbm [resolvable:$true] %s150
      %s152 = sshll.u32 [#allocation17], 4
      %s153 = int_to_ptr.vmem [resolvable:$true] %s152
      %158 = dma.hbm_to_vmem [thread:$0]  %s151, 4096, %s153, [#allocation18], 64, 64, 4
    $region49: #{tpu_custom_call.1} parent=1 // pred_fallthru
      _
    // Predicated region
    $region50: #{tpu_custom_call.1} parent=1 // pred_check
      _
    $region51: #{tpu_custom_call.1} parent=1 // pred_check_branch
      %160 = sbr.rel (0) target = $region53
    $region52: #{tpu_custom_call.1} parent=1 // pred_region
      _
    $region53: #{tpu_custom_call.1} parent=1 // pred_fallthru
      _
    // Predicated region
    $region54: #{tpu_custom_call.1} parent=1 // pred_check
      _
    $region55: #{tpu_custom_call.1} parent=1 // pred_check_branch
      %162 = sbr.rel (0) target = $region57
    $region56: #{tpu_custom_call.1} parent=1 // pred_region
      %164 = vsyncadd [#allocation18], 0
      %s165 = sshll.u32 %s13, 4
      %s166 = int_to_ptr.hbm [resolvable:$true] %s165
      %s167 = sshll.u32 [#allocation19], 4
      %s168 = int_to_ptr.vmem [resolvable:$true] %s167
      %173 = dma.hbm_to_vmem [thread:$0]  %s166, 1024, %s168, [#allocation18], 64, 64, 4
    $region57: #{tpu_custom_call.1} parent=1 // pred_fallthru
      _
    // Predicated region
    $region58: #{tpu_custom_call.1} parent=1 // pred_check
      _
    $region59: #{tpu_custom_call.1} parent=1 // pred_check_branch
      %175 = sbr.rel (0) target = $region61
    $region60: #{tpu_custom_call.1} parent=1 // pred_region
      _
    $region61: #{tpu_custom_call.1} parent=1 // pred_fallthru
      _
    // Predicated region
    $region62: #{tpu_custom_call.1} parent=1 // pred_check
      _
    $region63: #{tpu_custom_call.1} parent=1 // pred_check_branch
      %177 = sbr.rel (0) target = $region65
    $region64: #{tpu_custom_call.1} parent=1 // pred_region
      %179 = dma.done [#allocation3], 384
    $region65: #{tpu_custom_call.1} parent=1 // pred_fallthru
      _
    // Predicated region
    $region66: #{tpu_custom_call.1} parent=1 // pred_check
      _
    $region67: #{tpu_custom_call.1} parent=1 // pred_check_branch
      %181 = sbr.rel (0) target = $region69
    $region68: #{tpu_custom_call.1} parent=1 // pred_region
      %183 = dma.done [#allocation6], 1024
    $region69: #{tpu_custom_call.1} parent=1 // pred_fallthru
      _
    // Predicated region
    $region70: #{tpu_custom_call.1} parent=1 // pred_check
      _
    $region71: #{tpu_custom_call.1} parent=1 // pred_check_branch
      %185 = sbr.rel (0) target = $region73
    $region72: #{tpu_custom_call.1} parent=1 // pred_region
      %187 = dma.done [#allocation6], 384
    $region73: #{tpu_custom_call.1} parent=1 // pred_fallthru
      _
    // Predicated region
    $region74: #{tpu_custom_call.1} parent=1 // pred_check
      _
    $region75: #{tpu_custom_call.1} parent=1 // pred_check_branch
      %189 = sbr.rel (0) target = $region77
    $region76: #{tpu_custom_call.1} parent=1 // pred_region
      %191 = dma.done [#allocation9], 1024
    $region77: #{tpu_custom_call.1} parent=1 // pred_fallthru
      _
    // Predicated region
    $region78: #{tpu_custom_call.1} parent=1 // pred_check
      _
    $region79: #{tpu_custom_call.1} parent=1 // pred_check_branch
      %193 = sbr.rel (0) target = $region81
    $region80: #{tpu_custom_call.1} parent=1 // pred_region
      %195 = dma.done [#allocation9], 16
    $region81: #{tpu_custom_call.1} parent=1 // pred_fallthru
      _
    // Predicated region
    $region82: #{tpu_custom_call.1} parent=1 // pred_check
      _
    $region83: #{tpu_custom_call.1} parent=1 // pred_check_branch
      %197 = sbr.rel (0) target = $region85
    $region84: #{tpu_custom_call.1} parent=1 // pred_region
      %199 = dma.done [#allocation12], 6144
    $region85: #{tpu_custom_call.1} parent=1 // pred_fallthru
      _
    // Predicated region
    $region86: #{tpu_custom_call.1} parent=1 // pred_check
      _
    $region87: #{tpu_custom_call.1} parent=1 // pred_check_branch
      %201 = sbr.rel (0) target = $region89
    $region88: #{tpu_custom_call.1} parent=1 // pred_region
      %203 = dma.done [#allocation12], 96
    $region89: #{tpu_custom_call.1} parent=1 // pred_fallthru
      _
    // Predicated region
    $region90: #{tpu_custom_call.1} parent=1 // pred_check
      _
    $region91: #{tpu_custom_call.1} parent=1 // pred_check_branch
      %205 = sbr.rel (0) target = $region93
    $region92: #{tpu_custom_call.1} parent=1 // pred_region
      %207 = dma.done [#allocation15], 2048
    $region93: #{tpu_custom_call.1} parent=1 // pred_fallthru
      _
    // Predicated region
    $region94: #{tpu_custom_call.1} parent=1 // pred_check
      _
    $region95: #{tpu_custom_call.1} parent=1 // pred_check_branch
      %209 = sbr.rel (0) target = $region97
    $region96: #{tpu_custom_call.1} parent=1 // pred_region
      %211 = dma.done [#allocation15], 4096
    $region97: #{tpu_custom_call.1} parent=1 // pred_fallthru
      _
    // Predicated region
    $region98: #{tpu_custom_call.1} parent=1 // pred_check
      _
    $region99: #{tpu_custom_call.1} parent=1 // pred_check_branch
      %213 = sbr.rel (0) target = $region101
    $region100: #{tpu_custom_call.1} parent=1 // pred_region
      %215 = dma.done [#allocation18], 4096
    $region101: #{tpu_custom_call.1} parent=1 // pred_fallthru
      _
    // Predicated region
    $region102: #{tpu_custom_call.1} parent=1 // pred_check
      _
    $region103: #{tpu_custom_call.1} parent=1 // pred_check_branch
      %217 = sbr.rel (0) target = $region105
    $region104: #{tpu_custom_call.1} parent=1 // pred_region
      %219 = dma.done [#allocation18], 1024
    $region105: #{tpu_custom_call.1} parent=1 // pred_fallthru
      _
    %v221 = vlaneseq
    %v222 = vand.u32 %v221, 127
    %vm223 = vcmp.lt.s32.totalorder %v222, 120
    %v224 = vsel %vm223, 1, 0
    %v225 = vcvt.s32.f32 %v224
    %v226 = vld [vmem:[#allocation2] sm:$0xf]
    %v227 = vld [vmem:[#allocation2 + $0x4] sm:$0xf]
    %v228 = vld [vmem:[#allocation2 + $0x8] sm:$0xf]
    %v229 = vld [vmem:[#allocation2 + $0xc] sm:$0xf]
    %v230 = vld [vmem:[#allocation2 + $0x10] sm:$0xf]
    %v231 = vld [vmem:[#allocation2 + $0x14] sm:$0xf]
    %v232 = vld [vmem:[#allocation5] sm:$0xf]
    %v233 = vld [vmem:[#allocation5 + $0x4] sm:$0xf]
    %v234 = vld [vmem:[#allocation5 + $0x8] sm:$0xf]
    %v235 = vld [vmem:[#allocation5 + $0xc] sm:$0xf]
    %v236 = vld [vmem:[#allocation5 + $0x10] sm:$0xf]
    %v237 = vld [vmem:[#allocation5 + $0x14] sm:$0xf]
    %v238 = vld [vmem:[#allocation5 + $0x18] sm:$0xf]
    %v239 = vld [vmem:[#allocation5 + $0x1c] sm:$0xf]
    %v240 = vld [vmem:[#allocation5 + $0x20] sm:$0xf]
    %v241 = vld [vmem:[#allocation5 + $0x24] sm:$0xf]
    %v242 = vld [vmem:[#allocation5 + $0x28] sm:$0xf]
    %v243 = vld [vmem:[#allocation5 + $0x2c] sm:$0xf]
    %v244 = vld [vmem:[#allocation5 + $0x30] sm:$0xf]
    %v245 = vld [vmem:[#allocation5 + $0x34] sm:$0xf]
    %v246 = vld [vmem:[#allocation5 + $0x38] sm:$0xf]
    %v247 = vld [vmem:[#allocation5 + $0x3c] sm:$0xf]
    %v254 = vunpack.c.l.b16 %v226
    %v255 = vunpack.c.l.b16 %v227
    %v256 = vunpack.c.l.b16 %v228
    %v257 = vunpack.c.l.b16 %v229
    %v258 = vunpack.c.l.b16 %v230
    %v259 = vunpack.c.l.b16 %v231
    %v260 = vpack.c.b16 %v255, %v254
    %v261 = vpack.c.b16 %v257, %v256
    %v262 = vpack.c.b16 %v259, %v258
    %v282 = vunpack.c.l.b16 %v232
    %v283 = vunpack.c.l.b16 %v233
    %v284 = vunpack.c.l.b16 %v234
    %v285 = vunpack.c.l.b16 %v235
    %v286 = vunpack.c.l.b16 %v236
    %v287 = vunpack.c.l.b16 %v237
    %v288 = vunpack.c.l.b16 %v238
    %v289 = vunpack.c.l.b16 %v239
    %v290 = vunpack.c.l.b16 %v240
    %v291 = vunpack.c.l.b16 %v241
    %v292 = vunpack.c.l.b16 %v242
    %v293 = vunpack.c.l.b16 %v243
    %v294 = vunpack.c.l.b16 %v244
    %v295 = vunpack.c.l.b16 %v245
    %v296 = vunpack.c.l.b16 %v246
    %v297 = vunpack.c.l.b16 %v247
    %v298 = vpack.c.b16 %v283, %v282
    %v299 = vpack.c.b16 %v285, %v284
    %v300 = vpack.c.b16 %v287, %v286
    %v301 = vpack.c.b16 %v289, %v288
    %v302 = vpack.c.b16 %v291, %v290
    %v303 = vpack.c.b16 %v293, %v292
    %v304 = vpack.c.b16 %v295, %v294
    %v305 = vpack.c.b16 %v297, %v296
    %314 = vmatpush.bf16.msra.mxu0 %v305
    %315 = vmatpush.bf16.msra.mxu0 %v304
    %316 = vmatpush.bf16.msra.mxu0 %v303
    %317 = vmatpush.bf16.msra.mxu0 %v302
    %318 = vmatpush.bf16.msra.mxu0 %v301
    %319 = vmatpush.bf16.msra.mxu0 %v300
    %320 = vmatpush.bf16.msra.mxu0 %v299
    %321 = vmatpush.bf16.msra.mxu0 %v298
    %322 = vmatmul.bf16.gmra.mxu0 %v260
    %v323 = vpop.f32.mrf.mxu0
    %v324 = vadd.f32 0.0, %v323
    %v325 = vpop.f32.mrf.mxu0
    %v326 = vadd.f32 0.0, %v325
    %327 = vmatmul.bf16.gmra.mxu0 %v261
    %v328 = vpop.f32.mrf.mxu0
    %v329 = vadd.f32 0.0, %v328
    %v330 = vpop.f32.mrf.mxu0
    %v331 = vadd.f32 0.0, %v330
    %332 = vmatmul.bf16.gmra.mxu0 %v262
    %v333 = vpop.f32.mrf.mxu0
    %v334 = vadd.f32 0.0, %v333
    %v335 = vpop.f32.mrf.mxu0
    %v336 = vadd.f32 0.0, %v335
    %337 = vdwg.mxu0
    %v338 = vld [vmem:[#allocation7] sm:$0xff]
    %v339 = vld [vmem:[#allocation7 + $0x8] sm:$0xff]
    %v340 = vld [vmem:[#allocation7 + $0x10] sm:$0xff]
    %v341 = vadd.f32 %v324, %v338
    %v342 = vadd.f32 %v326, %v339
    %v343 = vadd.f32 %v329, %v340
    %v344 = vadd.f32 %v331, %v338
    %v345 = vadd.f32 %v334, %v339
    %v346 = vadd.f32 %v336, %v340
    %v347 = vpack.c.bf16 %v342, %v341
    %v348 = vpack.c.bf16 %v344, %v343
    %v349 = vpack.c.bf16 %v346, %v345
    %v350 = vld [vmem:[#allocation8] sm:$0xf]
    %v351 = vld [vmem:[#allocation8 + $0x4] sm:$0xf]
    %v352 = vld [vmem:[#allocation8 + $0x8] sm:$0xf]
    %v353 = vld [vmem:[#allocation8 + $0xc] sm:$0xf]
    %v354 = vld [vmem:[#allocation8 + $0x10] sm:$0xf]
    %v355 = vld [vmem:[#allocation8 + $0x14] sm:$0xf]
    %v356 = vld [vmem:[#allocation8 + $0x18] sm:$0xf]
    %v357 = vld [vmem:[#allocation8 + $0x1c] sm:$0xf]
    %v358 = vld [vmem:[#allocation8 + $0x20] sm:$0xf]
    %v359 = vld [vmem:[#allocation8 + $0x24] sm:$0xf]
    %v360 = vld [vmem:[#allocation8 + $0x28] sm:$0xf]
    %v361 = vld [vmem:[#allocation8 + $0x2c] sm:$0xf]
    %v362 = vld [vmem:[#allocation8 + $0x30] sm:$0xf]
    %v363 = vld [vmem:[#allocation8 + $0x34] sm:$0xf]
    %v364 = vld [vmem:[#allocation8 + $0x38] sm:$0xf]
    %v365 = vld [vmem:[#allocation8 + $0x3c] sm:$0xf]
    %v366 = vld [vmem:[#allocation10] sm:$0x1]
    %v368 = vperm.slane %v366, 0
    %v386 = vunpack.c.l.b16 %v350
    %v387 = vunpack.c.l.b16 %v351
    %v388 = vunpack.c.l.b16 %v352
    %v389 = vunpack.c.l.b16 %v353
    %v390 = vunpack.c.l.b16 %v354
    %v391 = vunpack.c.l.b16 %v355
    %v392 = vunpack.c.l.b16 %v356
    %v393 = vunpack.c.l.b16 %v357
    %v394 = vunpack.c.l.b16 %v358
    %v395 = vunpack.c.l.b16 %v359
    %v396 = vunpack.c.l.b16 %v360
    %v397 = vunpack.c.l.b16 %v361
    %v398 = vunpack.c.l.b16 %v362
    %v399 = vunpack.c.l.b16 %v363
    %v400 = vunpack.c.l.b16 %v364
    %v401 = vunpack.c.l.b16 %v365
    %v402 = vpack.c.b16 %v387, %v386
    %v403 = vpack.c.b16 %v389, %v388
    %v404 = vpack.c.b16 %v391, %v390
    %v405 = vpack.c.b16 %v393, %v392
    %v406 = vpack.c.b16 %v395, %v394
    %v407 = vpack.c.b16 %v397, %v396
    %v408 = vpack.c.b16 %v399, %v398
    %v409 = vpack.c.b16 %v401, %v400
    %418 = vmatpush.bf16.msra.mxu0 %v409
    %419 = vmatpush.bf16.msra.mxu0 %v408
    %420 = vmatpush.bf16.msra.mxu0 %v407
    %421 = vmatpush.bf16.msra.mxu0 %v406
    %422 = vmatpush.bf16.msra.mxu0 %v405
    %423 = vmatpush.bf16.msra.mxu0 %v404
    %424 = vmatpush.bf16.msra.mxu0 %v403
    %425 = vmatpush.bf16.msra.mxu0 %v402
    %426 = vmatmul.bf16.gmra.mxu0 %v347
    %v427 = vpop.f32.mrf.mxu0
    %v428 = vadd.f32 %v368, %v427
    %v429 = vpop.f32.mrf.mxu0
    %v430 = vadd.f32 %v368, %v429
    %431 = vmatmul.bf16.gmra.mxu0 %v348
    %v432 = vpop.f32.mrf.mxu0
    %v433 = vadd.f32 %v368, %v432
    %v434 = vpop.f32.mrf.mxu0
    %v435 = vadd.f32 %v368, %v434
    %436 = vmatmul.bf16.gmra.mxu0 %v349
    %v437 = vpop.f32.mrf.mxu0
    %v438 = vadd.f32 %v368, %v437
    %v439 = vpop.f32.mrf.mxu0
    %v440 = vadd.f32 %v368, %v439
    %441 = vdwg.mxu0
    %442 = vadd.xlane.f32.xlu0 %v428
    %v443 = vpop.xlane.xlu0 %442
    %444 = vadd.xlane.f32.xlu0 %v430
    %v445 = vpop.xlane.xlu0 %444
    %446 = vadd.xlane.f32.xlu0 %v433
    %v447 = vpop.xlane.xlu0 %446
    %448 = vadd.xlane.f32.xlu0 %v435
    %v449 = vpop.xlane.xlu0 %448
    %450 = vadd.xlane.f32.xlu0 %v438
    %v451 = vpop.xlane.xlu0 %450
    %452 = vadd.xlane.f32.xlu0 %v440
    %v453 = vpop.xlane.xlu0 %452
    %v454 = vmul.f32 %v443, 0.008333334
    %v455 = vmul.f32 %v445, 0.008333334
    %v456 = vmul.f32 %v447, 0.008333334
    %v457 = vmul.f32 %v449, 0.008333334
    %v458 = vmul.f32 %v451, 0.008333334
    %v459 = vmul.f32 %v453, 0.008333334
    %v460 = vsub.f32 %v428, %v454
    %v461 = vsub.f32 %v430, %v455
    %v462 = vsub.f32 %v433, %v456
    %v463 = vsub.f32 %v435, %v457
    %v464 = vsub.f32 %v438, %v458
    %v465 = vsub.f32 %v440, %v459
    %v466 = vmul.f32 %v460, %v225
    %v467 = vmul.f32 %v461, %v225
    %v468 = vmul.f32 %v462, %v225
    %v469 = vmul.f32 %v463, %v225
    %v470 = vmul.f32 %v464, %v225
    %v471 = vmul.f32 %v465, %v225
    %v472 = vmul.f32 %v466, %v466
    %v473 = vmul.f32 %v467, %v467
    %v474 = vmul.f32 %v468, %v468
    %v475 = vmul.f32 %v469, %v469
    %v476 = vmul.f32 %v470, %v470
    %v477 = vmul.f32 %v471, %v471
    %478 = vadd.xlane.f32.xlu0 %v472
    %v479 = vpop.xlane.xlu0 %478
    %480 = vadd.xlane.f32.xlu0 %v473
    %v481 = vpop.xlane.xlu0 %480
    %482 = vadd.xlane.f32.xlu0 %v474
    %v483 = vpop.xlane.xlu0 %482
    %484 = vadd.xlane.f32.xlu0 %v475
    %v485 = vpop.xlane.xlu0 %484
    %486 = vadd.xlane.f32.xlu0 %v476
    %v487 = vpop.xlane.xlu0 %486
    %488 = vadd.xlane.f32.xlu0 %v477
    %v489 = vpop.xlane.xlu0 %488
    %v490 = vmul.f32 %v479, 0.008333334
    %v491 = vmul.f32 %v481, 0.008333334
    %v492 = vmul.f32 %v483, 0.008333334
    %v493 = vmul.f32 %v485, 0.008333334
    %v494 = vmul.f32 %v487, 0.008333334
    %v495 = vmul.f32 %v489, 0.008333334
    %v496 = vadd.f32 %v490, 1e-05
    %v497 = vadd.f32 %v491, 1e-05
    %v498 = vadd.f32 %v492, 1e-05
    %v499 = vadd.f32 %v493, 1e-05
    %v500 = vadd.f32 %v494, 1e-05
    %v501 = vadd.f32 %v495, 1e-05
    %v502 = vrsqrt.pop %v496
    %v503 = vmul.f32 %v502, %v496
    %v504 = vmul.f32 %v503, %v502
    %v505 = vmul.f32 0.5, %v504
    %v506 = vsub.f32 1.5, %v505
    %v507 = vmul.f32 %v502, %v506
    %vm508 = vweird.f32 %v496
    %vm509 = vweird.f32 %v502
    %vm510 = vmor %vm508, %vm509
    %v511 = vsel %vm510, %v502, %v507
    %v512 = vrsqrt.pop %v497
    %v513 = vmul.f32 %v512, %v497
    %v514 = vmul.f32 %v513, %v512
    %v515 = vmul.f32 0.5, %v514
    %v516 = vsub.f32 1.5, %v515
    %v517 = vmul.f32 %v512, %v516
    %vm518 = vweird.f32 %v497
    %vm519 = vweird.f32 %v512
    %vm520 = vmor %vm518, %vm519
    %v521 = vsel %vm520, %v512, %v517
    %v522 = vrsqrt.pop %v498
    %v523 = vmul.f32 %v522, %v498
    %v524 = vmul.f32 %v523, %v522
    %v525 = vmul.f32 0.5, %v524
    %v526 = vsub.f32 1.5, %v525
    %v527 = vmul.f32 %v522, %v526
    %vm528 = vweird.f32 %v498
    %vm529 = vweird.f32 %v522
    %vm530 = vmor %vm528, %vm529
    %v531 = vsel %vm530, %v522, %v527
    %v532 = vrsqrt.pop %v499
    %v533 = vmul.f32 %v532, %v499
    %v534 = vmul.f32 %v533, %v532
    %v535 = vmul.f32 0.5, %v534
    %v536 = vsub.f32 1.5, %v535
    %v537 = vmul.f32 %v532, %v536
    %vm538 = vweird.f32 %v499
    %vm539 = vweird.f32 %v532
    %vm540 = vmor %vm538, %vm539
    %v541 = vsel %vm540, %v532, %v537
    %v542 = vrsqrt.pop %v500
    %v543 = vmul.f32 %v542, %v500
    %v544 = vmul.f32 %v543, %v542
    %v545 = vmul.f32 0.5, %v544
    %v546 = vsub.f32 1.5, %v545
    %v547 = vmul.f32 %v542, %v546
    %vm548 = vweird.f32 %v500
    %vm549 = vweird.f32 %v542
    %vm550 = vmor %vm548, %vm549
    %v551 = vsel %vm550, %v542, %v547
    %v552 = vrsqrt.pop %v501
    %v553 = vmul.f32 %v552, %v501
    %v554 = vmul.f32 %v553, %v552
    %v555 = vmul.f32 0.5, %v554
    %v556 = vsub.f32 1.5, %v555
    %v557 = vmul.f32 %v552, %v556
    %vm558 = vweird.f32 %v501
    %vm559 = vweird.f32 %v552
    %vm560 = vmor %vm558, %vm559
    %v561 = vsel %vm560, %v552, %v557
    %v562 = vmul.f32 %v466, %v511
    %v563 = vmul.f32 %v467, %v521
    %v564 = vmul.f32 %v468, %v531
    %v565 = vmul.f32 %v469, %v541
    %v566 = vmul.f32 %v470, %v551
    %v567 = vmul.f32 %v471, %v561
    %v568 = vpack.c.bf16 %v563, %v562
    %v569 = vpack.c.bf16 %v565, %v564
    %v570 = vpack.c.bf16 %v567, %v566
    %v571 = vld [vmem:[#allocation11] sm:$0xff]
    %v572 = vld [vmem:[#allocation11 + $0x8] sm:$0xf]
    %v573 = vld [vmem:[#allocation11 + $0xc] sm:$0xff]
    %v574 = vld [vmem:[#allocation11 + $0x14] sm:$0xf]
    %v575 = vld [vmem:[#allocation11 + $0x18] sm:$0xff]
    %v576 = vld [vmem:[#allocation11 + $0x20] sm:$0xf]
    %v577 = vld [vmem:[#allocation11 + $0x24] sm:$0xff]
    %v578 = vld [vmem:[#allocation11 + $0x2c] sm:$0xf]
    %v579 = vld [vmem:[#allocation11 + $0x30] sm:$0xff]
    %v580 = vld [vmem:[#allocation11 + $0x38] sm:$0xf]
    %v581 = vld [vmem:[#allocation11 + $0x3c] sm:$0xff]
    %v582 = vld [vmem:[#allocation11 + $0x44] sm:$0xf]
    %v583 = vld [vmem:[#allocation11 + $0x48] sm:$0xff]
    %v584 = vld [vmem:[#allocation11 + $0x50] sm:$0xf]
    %v585 = vld [vmem:[#allocation11 + $0x54] sm:$0xff]
    %v586 = vld [vmem:[#allocation11 + $0x5c] sm:$0xf]
    %v587 = vld [vmem:[#allocation11 + $0x60] sm:$0xff]
    %v588 = vld [vmem:[#allocation11 + $0x68] sm:$0xf]
    %v589 = vld [vmem:[#allocation11 + $0x6c] sm:$0xff]
    %v590 = vld [vmem:[#allocation11 + $0x74] sm:$0xf]
    %v591 = vld [vmem:[#allocation11 + $0x78] sm:$0xff]
    %v592 = vld [vmem:[#allocation11 + $0x80] sm:$0xf]
    %v593 = vld [vmem:[#allocation11 + $0x84] sm:$0xff]
    %v594 = vld [vmem:[#allocation11 + $0x8c] sm:$0xf]
    %v595 = vld [vmem:[#allocation11 + $0x90] sm:$0xff]
    %v596 = vld [vmem:[#allocation11 + $0x98] sm:$0xf]
    %v597 = vld [vmem:[#allocation11 + $0x9c] sm:$0xff]
    %v598 = vld [vmem:[#allocation11 + $0xa4] sm:$0xf]
    %v599 = vld [vmem:[#allocation11 + $0xa8] sm:$0xff]
    %v600 = vld [vmem:[#allocation11 + $0xb0] sm:$0xf]
    %v601 = vld [vmem:[#allocation11 + $0xb4] sm:$0xff]
    %v602 = vld [vmem:[#allocation11 + $0xbc] sm:$0xf]
    %v603 = vld [vmem:[#allocation13] sm:$0x7]
    %v605 = vperm.slane %v603, 0
    %v606 = vperm.slane %v603, 1
    %v607 = vperm.slane %v603, 2
    %v643 = vunpack.c.l.b16 %v571
    %v644 = vunpack.c.h.b16 %v571
    %v645 = vunpack.c.l.b16 %v572
    %v646 = vunpack.c.l.b16 %v573
    %v647 = vunpack.c.h.b16 %v573
    %v648 = vunpack.c.l.b16 %v574
    %v649 = vunpack.c.l.b16 %v575
    %v650 = vunpack.c.h.b16 %v575
    %v651 = vunpack.c.l.b16 %v576
    %v652 = vunpack.c.l.b16 %v577
    %v653 = vunpack.c.h.b16 %v577
    %v654 = vunpack.c.l.b16 %v578
    %v655 = vunpack.c.l.b16 %v579
    %v656 = vunpack.c.h.b16 %v579
    %v657 = vunpack.c.l.b16 %v580
    %v658 = vunpack.c.l.b16 %v581
    %v659 = vunpack.c.h.b16 %v581
    %v660 = vunpack.c.l.b16 %v582
    %v661 = vunpack.c.l.b16 %v583
    %v662 = vunpack.c.h.b16 %v583
    %v663 = vunpack.c.l.b16 %v584
    %v664 = vunpack.c.l.b16 %v585
    %v665 = vunpack.c.h.b16 %v585
    %v666 = vunpack.c.l.b16 %v586
    %v667 = vunpack.c.l.b16 %v587
    %v668 = vunpack.c.h.b16 %v587
    %v669 = vunpack.c.l.b16 %v588
    %v670 = vunpack.c.l.b16 %v589
    %v671 = vunpack.c.h.b16 %v589
    %v672 = vunpack.c.l.b16 %v590
    %v673 = vunpack.c.l.b16 %v591
    %v674 = vunpack.c.h.b16 %v591
    %v675 = vunpack.c.l.b16 %v592
    %v676 = vunpack.c.l.b16 %v593
    %v677 = vunpack.c.h.b16 %v593
    %v678 = vunpack.c.l.b16 %v594
    %v679 = vunpack.c.l.b16 %v595
    %v680 = vunpack.c.h.b16 %v595
    %v681 = vunpack.c.l.b16 %v596
    %v682 = vunpack.c.l.b16 %v597
    %v683 = vunpack.c.h.b16 %v597
    %v684 = vunpack.c.l.b16 %v598
    %v685 = vunpack.c.l.b16 %v599
    %v686 = vunpack.c.h.b16 %v599
    %v687 = vunpack.c.l.b16 %v600
    %v688 = vunpack.c.l.b16 %v601
    %v689 = vunpack.c.h.b16 %v601
    %v690 = vunpack.c.l.b16 %v602
    %v691 = vpack.c.b16 %v646, %v643
    %v692 = vpack.c.b16 %v647, %v644
    %v693 = vpack.c.b16 %v648, %v645
    %v694 = vpack.c.b16 %v652, %v649
    %v695 = vpack.c.b16 %v653, %v650
    %v696 = vpack.c.b16 %v654, %v651
    %v697 = vpack.c.b16 %v658, %v655
    %v698 = vpack.c.b16 %v659, %v656
    %v699 = vpack.c.b16 %v660, %v657
    %v700 = vpack.c.b16 %v664, %v661
    %v701 = vpack.c.b16 %v665, %v662
    %v702 = vpack.c.b16 %v666, %v663
    %v703 = vpack.c.b16 %v670, %v667
    %v704 = vpack.c.b16 %v671, %v668
    %v705 = vpack.c.b16 %v672, %v669
    %v706 = vpack.c.b16 %v676, %v673
    %v707 = vpack.c.b16 %v677, %v674
    %v708 = vpack.c.b16 %v678, %v675
    %v709 = vpack.c.b16 %v682, %v679
    %v710 = vpack.c.b16 %v683, %v680
    %v711 = vpack.c.b16 %v684, %v681
    %v712 = vpack.c.b16 %v688, %v685
    %v713 = vpack.c.b16 %v689, %v686
    %v714 = vpack.c.b16 %v690, %v687
    %739 = vmatpush.bf16.msra.mxu0 %v712
    %740 = vmatpush.bf16.msra.mxu0 %v709
    %741 = vmatpush.bf16.msra.mxu0 %v706
    %742 = vmatpush.bf16.msra.mxu0 %v703
    %743 = vmatpush.bf16.msra.mxu0 %v700
    %744 = vmatpush.bf16.msra.mxu0 %v697
    %745 = vmatpush.bf16.msra.mxu0 %v694
    %746 = vmatpush.bf16.msra.mxu0 %v691
    %747 = vmatmul.bf16.gmra.mxu0 %v568
    %v748 = vpop.f32.mrf.mxu0
    %v749 = vadd.f32 %v605, %v748
    %v750 = vpop.f32.mrf.mxu0
    %v751 = vadd.f32 %v605, %v750
    %752 = vmatmul.bf16.gmra.mxu0 %v569
    %v753 = vpop.f32.mrf.mxu0
    %v754 = vadd.f32 %v605, %v753
    %v755 = vpop.f32.mrf.mxu0
    %v756 = vadd.f32 %v605, %v755
    %757 = vmatmul.bf16.gmra.mxu0 %v570
    %v758 = vpop.f32.mrf.mxu0
    %v759 = vadd.f32 %v605, %v758
    %v760 = vpop.f32.mrf.mxu0
    %v761 = vadd.f32 %v605, %v760
    %762 = vdwg.mxu0
    %763 = vmatpush.bf16.msra.mxu0 %v713
    %764 = vmatpush.bf16.msra.mxu0 %v710
    %765 = vmatpush.bf16.msra.mxu0 %v707
    %766 = vmatpush.bf16.msra.mxu0 %v704
    %767 = vmatpush.bf16.msra.mxu0 %v701
    %768 = vmatpush.bf16.msra.mxu0 %v698
    %769 = vmatpush.bf16.msra.mxu0 %v695
    %770 = vmatpush.bf16.msra.mxu0 %v692
    %771 = vmatmul.bf16.gmra.mxu0 %v568
    %v772 = vpop.f32.mrf.mxu0
    %v773 = vadd.f32 %v606, %v772
    %v774 = vpop.f32.mrf.mxu0
    %v775 = vadd.f32 %v606, %v774
    %776 = vmatmul.bf16.gmra.mxu0 %v569
    %v777 = vpop.f32.mrf.mxu0
    %v778 = vadd.f32 %v606, %v777
    %v779 = vpop.f32.mrf.mxu0
    %v780 = vadd.f32 %v606, %v779
    %781 = vmatmul.bf16.gmra.mxu0 %v570
    %v782 = vpop.f32.mrf.mxu0
    %v783 = vadd.f32 %v606, %v782
    %v784 = vpop.f32.mrf.mxu0
    %v785 = vadd.f32 %v606, %v784
    %786 = vdwg.mxu0
    %787 = vmatpush.bf16.msra.mxu0 %v714
    %788 = vmatpush.bf16.msra.mxu0 %v711
    %789 = vmatpush.bf16.msra.mxu0 %v708
    %790 = vmatpush.bf16.msra.mxu0 %v705
    %791 = vmatpush.bf16.msra.mxu0 %v702
    %792 = vmatpush.bf16.msra.mxu0 %v699
    %793 = vmatpush.bf16.msra.mxu0 %v696
    %794 = vmatpush.bf16.msra.mxu0 %v693
    %795 = vmatmul.bf16.gmra.mxu0 %v568
    %v796 = vpop.f32.mrf.mxu0
    %v797 = vadd.f32 %v607, %v796
    %v798 = vpop.f32.mrf.mxu0
    %v799 = vadd.f32 %v607, %v798
    %800 = vmatmul.bf16.gmra.mxu0 %v569
    %v801 = vpop.f32.mrf.mxu0
    %v802 = vadd.f32 %v607, %v801
    %v803 = vpop.f32.mrf.mxu0
    %v804 = vadd.f32 %v607, %v803
    %805 = vmatmul.bf16.gmra.mxu0 %v570
    %v806 = vpop.f32.mrf.mxu0
    %v807 = vadd.f32 %v607, %v806
    %v808 = vpop.f32.mrf.mxu0
    %v809 = vadd.f32 %v607, %v808
    %810 = vdwg.mxu0
    %v811 = vpack.c.bf16 %v773, %v749
    %v812 = vpack.c.bf16 %v797, %v797
    %v813 = vpack.c.bf16 %v775, %v751
    %v814 = vpack.c.bf16 %v799, %v799
    %v815 = vpack.c.bf16 %v778, %v754
    %v816 = vpack.c.bf16 %v802, %v802
    %v817 = vpack.c.bf16 %v780, %v756
    %v818 = vpack.c.bf16 %v804, %v804
    %v819 = vpack.c.bf16 %v783, %v759
    %v820 = vpack.c.bf16 %v807, %v807
    %v821 = vpack.c.bf16 %v785, %v761
    %v822 = vpack.c.bf16 %v809, %v809
    %v823 = vld [vmem:[#allocation14] sm:$0xf]
    %v824 = vld [vmem:[#allocation14 + $0x4] sm:$0xf]
    %v825 = vld [vmem:[#allocation14 + $0x8] sm:$0xf]
    %v826 = vld [vmem:[#allocation14 + $0xc] sm:$0xf]
    %v827 = vld [vmem:[#allocation14 + $0x10] sm:$0xf]
    %v828 = vld [vmem:[#allocation14 + $0x14] sm:$0xf]
    %v829 = vld [vmem:[#allocation14 + $0x18] sm:$0xf]
    %v830 = vld [vmem:[#allocation14 + $0x1c] sm:$0xf]
    %v831 = vld [vmem:[#allocation14 + $0x20] sm:$0xf]
    %v832 = vld [vmem:[#allocation14 + $0x24] sm:$0xf]
    %v833 = vld [vmem:[#allocation14 + $0x28] sm:$0xf]
    %v834 = vld [vmem:[#allocation14 + $0x2c] sm:$0xf]
    %v835 = vld [vmem:[#allocation14 + $0x30] sm:$0xf]
    %v836 = vld [vmem:[#allocation14 + $0x34] sm:$0xf]
    %v837 = vld [vmem:[#allocation14 + $0x38] sm:$0xf]
    %v838 = vld [vmem:[#allocation14 + $0x3c] sm:$0xf]
    %v842 = vrot.slane %v811, 4
    %v843 = vrot.slane %v813, 4
    %v844 = vrot.slane %v815, 4
    %v845 = vunpack.c.l.b16 %v811
    %v846 = vunpack.c.l.b16 %v813
    %v847 = vunpack.c.l.b16 %v815
    %v848 = vpack.c.b16 %v846, %v845
    %v849 = vpack.c.b16 %v847, %v847
    %v850 = vunpack.c.l.b16 %v842
    %v851 = vunpack.c.l.b16 %v843
    %v852 = vunpack.c.l.b16 %v844
    %v853 = vpack.c.b16 %v851, %v850
    %v854 = vpack.c.b16 %v852, %v852
    %vm855 = vcmask 130048
    %v857 = vsel %vm855, %v848, 0
    %v860 = vsel %vm855, %v849, 0
    %v863 = vsel %vm855, %v853, 0
    %v866 = vsel %vm855, %v854, 0
    %868 = vmatpush.bf16.xpose.msra.mxu0 0
    %869 = vmatpush.bf16.xpose.msra.mxu0 0
    %870 = vmatpush.bf16.xpose.msra.mxu0 0
    %871 = vmatpush.bf16.xpose.msra.mxu0 0
    %872 = vmatpush.bf16.xpose.msra.mxu0 0
    %873 = vmatpush.bf16.xpose.msra.mxu0 0
    %874 = vmatpush.bf16.xpose.msra.mxu0 %v866
    %875 = vmatpush.bf16.xpose.msra.mxu0 %v863
    %876 = vmatmul.bf16.gmra.mxu0 %v857
    %v877 = vpop.f32.mrf.mxu0
    %v878 = vadd.f32 0.0, %v877
    %v879 = vpop.f32.mrf.mxu0
    %v880 = vadd.f32 0.0, %v879
    %881 = vmatmul.bf16.gmra.mxu0 %v860
    %v882 = vpop.f32.mrf.mxu0
    %v883 = vadd.f32 0.0, %v882
    %v884 = vpop.f32.mrf.mxu0
    %885 = vdwg.mxu0
    %v889 = vrot.slane %v817, 4
    %v890 = vrot.slane %v819, 4
    %v891 = vrot.slane %v821, 4
    %v892 = vunpack.c.l.b16 %v817
    %v893 = vunpack.c.l.b16 %v819
    %v894 = vunpack.c.l.b16 %v821
    %v895 = vpack.c.b16 %v893, %v892
    %v896 = vpack.c.b16 %v894, %v894
    %v897 = vunpack.c.l.b16 %v889
    %v898 = vunpack.c.l.b16 %v890
    %v899 = vunpack.c.l.b16 %v891
    %v900 = vpack.c.b16 %v898, %v897
    %v901 = vpack.c.b16 %v899, %v899
    %v903 = vsel %vm855, %v895, 0
    %v906 = vsel %vm855, %v896, 0
    %v909 = vsel %vm855, %v900, 0
    %v912 = vsel %vm855, %v901, 0
    %914 = vmatpush.bf16.xpose.msra.mxu0 0
    %915 = vmatpush.bf16.xpose.msra.mxu0 0
    %916 = vmatpush.bf16.xpose.msra.mxu0 0
    %917 = vmatpush.bf16.xpose.msra.mxu0 0
    %918 = vmatpush.bf16.xpose.msra.mxu0 0
    %919 = vmatpush.bf16.xpose.msra.mxu0 0
    %920 = vmatpush.bf16.xpose.msra.mxu0 %v912
    %921 = vmatpush.bf16.xpose.msra.mxu0 %v909
    %922 = vmatmul.bf16.gmra.mxu0 %v903
    %v923 = vpop.f32.mrf.mxu0
    %v924 = vadd.f32 0.0, %v923
    %v925 = vpop.f32.mrf.mxu0
    %v926 = vadd.f32 0.0, %v925
    %927 = vmatmul.bf16.gmra.mxu0 %v906
    %v928 = vpop.f32.mrf.mxu0
    %v929 = vadd.f32 0.0, %v928
    %v930 = vpop.f32.mrf.mxu0
    %931 = vdwg.mxu0
    %vm932 = vcmask 195584
    %v933 = vsel %vm932, %v878, -inf
    %934 = vmax.xlane.f32.xlu0 %v933
    %v935 = vpop.xlane.xlu0 %934
    %v936 = vsel %vm932, %v880, -inf
    %937 = vmax.xlane.f32.xlu0 %v936
    %v938 = vpop.xlane.xlu0 %937
    %v939 = vsel %vm932, %v883, -inf
    %940 = vmax.xlane.f32.xlu0 %v939
    %v941 = vpop.xlane.xlu0 %940
    %v942 = vsel %vm932, %v924, -inf
    %943 = vmax.xlane.f32.xlu0 %v942
    %v944 = vpop.xlane.xlu0 %943
    %v945 = vsel %vm932, %v926, -inf
    %946 = vmax.xlane.f32.xlu0 %v945
    %v947 = vpop.xlane.xlu0 %946
    %v948 = vsel %vm932, %v929, -inf
    %949 = vmax.xlane.f32.xlu0 %v948
    %v950 = vpop.xlane.xlu0 %949
    %v951 = vsub.f32 %v878, %v935
    %v952 = vsub.f32 %v880, %v938
    %v953 = vsub.f32 %v883, %v941
    %v954 = vsub.f32 %v924, %v944
    %v955 = vsub.f32 %v926, %v947
    %v956 = vsub.f32 %v929, %v950
    %v957 = vmul.f32 %v951, 1.442695
    %v958 = vpow.pop %v957
    %v959 = vmul.f32 %v952, 1.442695
    %v960 = vpow.pop %v959
    %v961 = vmul.f32 %v953, 1.442695
    %v962 = vpow.pop %v961
    %v963 = vmul.f32 %v954, 1.442695
    %v964 = vpow.pop %v963
    %v965 = vmul.f32 %v955, 1.442695
    %v966 = vpow.pop %v965
    %v967 = vmul.f32 %v956, 1.442695
    %v968 = vpow.pop %v967
    %v969 = vsel %vm932, %v958, 0.0
    %970 = vadd.xlane.f32.xlu0 %v969
    %v971 = vpop.xlane.xlu0 %970
    %v972 = vsel %vm932, %v960, 0.0
    %973 = vadd.xlane.f32.xlu0 %v972
    %v974 = vpop.xlane.xlu0 %973
    %v975 = vsel %vm932, %v962, 0.0
    %976 = vadd.xlane.f32.xlu0 %v975
    %v977 = vpop.xlane.xlu0 %976
    %v978 = vsel %vm932, %v964, 0.0
    %979 = vadd.xlane.f32.xlu0 %v978
    %v980 = vpop.xlane.xlu0 %979
    %v981 = vsel %vm932, %v966, 0.0
    %982 = vadd.xlane.f32.xlu0 %v981
    %v983 = vpop.xlane.xlu0 %982
    %v984 = vsel %vm932, %v968, 0.0
    %985 = vadd.xlane.f32.xlu0 %v984
    %v986 = vpop.xlane.xlu0 %985
    %v987 = vrcp.pop %v971
    %v988 = vrcp.pop %v974
    %v989 = vrcp.pop %v977
    %v990 = vrcp.pop %v980
    %v991 = vrcp.pop %v983
    %v992 = vrcp.pop %v986
    %v993 = vmul.f32 %v958, %v987
    %v994 = vmul.f32 %v960, %v988
    %v995 = vmul.f32 %v962, %v989
    %v996 = vmul.f32 %v964, %v990
    %v997 = vmul.f32 %v966, %v991
    %v998 = vmul.f32 %v968, %v992
    %v999 = vpack.c.bf16 %v993, %v993
    %v1000 = vpack.c.bf16 %v994, %v994
    %v1001 = vpack.c.bf16 %v995, %v995
    %v1002 = vpack.c.bf16 %v996, %v996
    %v1003 = vpack.c.bf16 %v997, %v997
    %v1004 = vpack.c.bf16 %v998, %v998
    %v1008 = vunpack.c.l.b16 %v999
    %v1009 = vunpack.c.l.b16 %v1000
    %v1010 = vunpack.c.l.b16 %v1001
    %v1011 = vpack.c.b16 %v1009, %v1008
    %v1012 = vpack.c.b16 %v1010, %v1010
    %v1016 = vunpack.c.l.b16 %v812
    %v1017 = vunpack.c.l.b16 %v814
    %v1018 = vunpack.c.l.b16 %v816
    %v1019 = vpack.c.b16 %v1017, %v1016
    %v1020 = vpack.c.b16 %v1018, %v1018
    %v1023 = vsel %vm932, %v1011, 0
    %v1026 = vsel %vm932, %v1012, 0
    %vm1028 = vcmask 1043456
    %v1030 = vsel %vm1028, %v1020, 0
    %1032 = vmatpush.bf16.msra.mxu0 0
    %1033 = vmatpush.bf16.msra.mxu0 0
    %1034 = vmatpush.bf16.msra.mxu0 0
    %1035 = vmatpush.bf16.msra.mxu0 0
    %1036 = vmatpush.bf16.msra.mxu0 0
    %1037 = vmatpush.bf16.msra.mxu0 0
    %1038 = vmatpush.bf16.msra.mxu0 %v1030
    %1039 = vmatpush.bf16.msra.mxu0 %v1019
    %1040 = vmatmul.bf16.gmra.mxu0 %v1023
    %v1041 = vpop.f32.mrf.mxu0
    %v1042 = vadd.f32 0.0, %v1041
    %v1043 = vpop.f32.mrf.mxu0
    %v1044 = vadd.f32 0.0, %v1043
    %1045 = vmatmul.bf16.gmra.mxu0 %v1026
    %v1046 = vpop.f32.mrf.mxu0
    %v1047 = vadd.f32 0.0, %v1046
    %v1048 = vpop.f32.mrf.mxu0
    %1049 = vdwg.mxu0
    %v1053 = vunpack.c.l.b16 %v1002
    %v1054 = vunpack.c.l.b16 %v1003
    %v1055 = vunpack.c.l.b16 %v1004
    %v1056 = vpack.c.b16 %v1054, %v1053
    %v1057 = vpack.c.b16 %v1055, %v1055
    %v1061 = vunpack.c.l.b16 %v818
    %v1062 = vunpack.c.l.b16 %v820
    %v1063 = vunpack.c.l.b16 %v822
    %v1064 = vpack.c.b16 %v1062, %v1061
    %v1065 = vpack.c.b16 %v1063, %v1063
    %v1068 = vsel %vm932, %v1056, 0
    %v1071 = vsel %vm932, %v1057, 0
    %v1074 = vsel %vm1028, %v1065, 0
    %1076 = vmatpush.bf16.msra.mxu0 0
    %1077 = vmatpush.bf16.msra.mxu0 0
    %1078 = vmatpush.bf16.msra.mxu0 0
    %1079 = vmatpush.bf16.msra.mxu0 0
    %1080 = vmatpush.bf16.msra.mxu0 0
    %1081 = vmatpush.bf16.msra.mxu0 0
    %1082 = vmatpush.bf16.msra.mxu0 %v1074
    %1083 = vmatpush.bf16.msra.mxu0 %v1064
    %1084 = vmatmul.bf16.gmra.mxu0 %v1068
    %v1085 = vpop.f32.mrf.mxu0
    %v1086 = vadd.f32 0.0, %v1085
    %v1087 = vpop.f32.mrf.mxu0
    %v1088 = vadd.f32 0.0, %v1087
    %1089 = vmatmul.bf16.gmra.mxu0 %v1071
    %v1090 = vpop.f32.mrf.mxu0
    %v1091 = vadd.f32 0.0, %v1090
    %v1092 = vpop.f32.mrf.mxu0
    %1093 = vdwg.mxu0
    %v1094 = vpack.c.bf16 %v1044, %v1042
    %v1095 = vpack.c.bf16 %v1086, %v1047
    %v1096 = vpack.c.bf16 %v1091, %v1088
    %1097 = vrot.lane.b32.xlu0 %v811, 112
    %v1098 = vpop.permute.xlu0 %1097
    %1099 = vrot.lane.b32.xlu0 %v813, 112
    %v1100 = vpop.permute.xlu0 %1099
    %1101 = vrot.lane.b32.xlu0 %v815, 112
    %v1102 = vpop.permute.xlu0 %1101
    %v1103 = vrot.slane %v1098, 4
    %v1104 = vrot.slane %v1100, 4
    %v1105 = vrot.slane %v1102, 4
    %1106 = vrot.lane.b32.xlu0 %v848, 112
    %v1107 = vpop.permute.xlu0 %1106
    %1108 = vrot.lane.b32.xlu0 %v849, 112
    %v1109 = vpop.permute.xlu0 %1108
    %v1110 = vunpack.c.l.b16 %v1103
    %v1111 = vunpack.c.l.b16 %v1104
    %v1112 = vunpack.c.l.b16 %v1105
    %v1113 = vpack.c.b16 %v1111, %v1110
    %v1114 = vpack.c.b16 %v1112, %v1112
    %v1116 = vsel %vm855, %v1107, 0
    %v1119 = vsel %vm855, %v1109, 0
    %v1122 = vsel %vm855, %v1113, 0
    %v1125 = vsel %vm855, %v1114, 0
    %1127 = vmatpush.bf16.xpose.msra.mxu0 0
    %1128 = vmatpush.bf16.xpose.msra.mxu0 0
    %1129 = vmatpush.bf16.xpose.msra.mxu0 0
    %1130 = vmatpush.bf16.xpose.msra.mxu0 0
    %1131 = vmatpush.bf16.xpose.msra.mxu0 0
    %1132 = vmatpush.bf16.xpose.msra.mxu0 0
    %1133 = vmatpush.bf16.xpose.msra.mxu0 %v1125
    %1134 = vmatpush.bf16.xpose.msra.mxu0 %v1122
    %1135 = vmatmul.bf16.gmra.mxu0 %v1116
    %v1136 = vpop.f32.mrf.mxu0
    %v1137 = vadd.f32 0.0, %v1136
    %v1138 = vpop.f32.mrf.mxu0
    %v1139 = vadd.f32 0.0, %v1138
    %1140 = vmatmul.bf16.gmra.mxu0 %v1119
    %v1141 = vpop.f32.mrf.mxu0
    %v1142 = vadd.f32 0.0, %v1141
    %v1143 = vpop.f32.mrf.mxu0
    %1144 = vdwg.mxu0
    %1145 = vrot.lane.b32.xlu0 %v817, 112
    %v1146 = vpop.permute.xlu0 %1145
    %1147 = vrot.lane.b32.xlu0 %v819, 112
    %v1148 = vpop.permute.xlu0 %1147
    %1149 = vrot.lane.b32.xlu0 %v821, 112
    %v1150 = vpop.permute.xlu0 %1149
    %v1151 = vrot.slane %v1146, 4
    %v1152 = vrot.slane %v1148, 4
    %v1153 = vrot.slane %v1150, 4
    %1154 = vrot.lane.b32.xlu0 %v895, 112
    %v1155 = vpop.permute.xlu0 %1154
    %1156 = vrot.lane.b32.xlu0 %v896, 112
    %v1157 = vpop.permute.xlu0 %1156
    %v1158 = vunpack.c.l.b16 %v1151
    %v1159 = vunpack.c.l.b16 %v1152
    %v1160 = vunpack.c.l.b16 %v1153
    %v1161 = vpack.c.b16 %v1159, %v1158
    %v1162 = vpack.c.b16 %v1160, %v1160
    %v1164 = vsel %vm855, %v1155, 0
    %v1167 = vsel %vm855, %v1157, 0
    %v1170 = vsel %vm855, %v1161, 0
    %v1173 = vsel %vm855, %v1162, 0
    %1175 = vmatpush.bf16.xpose.msra.mxu0 0
    %1176 = vmatpush.bf16.xpose.msra.mxu0 0
    %1177 = vmatpush.bf16.xpose.msra.mxu0 0
    %1178 = vmatpush.bf16.xpose.msra.mxu0 0
    %1179 = vmatpush.bf16.xpose.msra.mxu0 0
    %1180 = vmatpush.bf16.xpose.msra.mxu0 0
    %1181 = vmatpush.bf16.xpose.msra.mxu0 %v1173
    %1182 = vmatpush.bf16.xpose.msra.mxu0 %v1170
    %1183 = vmatmul.bf16.gmra.mxu0 %v1164
    %v1184 = vpop.f32.mrf.mxu0
    %v1185 = vadd.f32 0.0, %v1184
    %v1186 = vpop.f32.mrf.mxu0
    %v1187 = vadd.f32 0.0, %v1186
    %1188 = vmatmul.bf16.gmra.mxu0 %v1167
    %v1189 = vpop.f32.mrf.mxu0
    %v1190 = vadd.f32 0.0, %v1189
    %v1191 = vpop.f32.mrf.mxu0
    %1192 = vdwg.mxu0
    %v1193 = vsel %vm932, %v1137, -inf
    %1194 = vmax.xlane.f32.xlu0 %v1193
    %v1195 = vpop.xlane.xlu0 %1194
    %v1196 = vsel %vm932, %v1139, -inf
    %1197 = vmax.xlane.f32.xlu0 %v1196
    %v1198 = vpop.xlane.xlu0 %1197
    %v1199 = vsel %vm932, %v1142, -inf
    %1200 = vmax.xlane.f32.xlu0 %v1199
    %v1201 = vpop.xlane.xlu0 %1200
    %v1202 = vsel %vm932, %v1185, -inf
    %1203 = vmax.xlane.f32.xlu0 %v1202
    %v1204 = vpop.xlane.xlu0 %1203
    %v1205 = vsel %vm932, %v1187, -inf
    %1206 = vmax.xlane.f32.xlu0 %v1205
    %v1207 = vpop.xlane.xlu0 %1206
    %v1208 = vsel %vm932, %v1190, -inf
    %1209 = vmax.xlane.f32.xlu0 %v1208
    %v1210 = vpop.xlane.xlu0 %1209
    %v1211 = vsub.f32 %v1137, %v1195
    %v1212 = vsub.f32 %v1139, %v1198
    %v1213 = vsub.f32 %v1142, %v1201
    %v1214 = vsub.f32 %v1185, %v1204
    %v1215 = vsub.f32 %v1187, %v1207
    %v1216 = vsub.f32 %v1190, %v1210
    %v1217 = vmul.f32 %v1211, 1.442695
    %v1218 = vpow.pop %v1217
    %v1219 = vmul.f32 %v1212, 1.442695
    %v1220 = vpow.pop %v1219
    %v1221 = vmul.f32 %v1213, 1.442695
    %v1222 = vpow.pop %v1221
    %v1223 = vmul.f32 %v1214, 1.442695
    %v1224 = vpow.pop %v1223
    %v1225 = vmul.f32 %v1215, 1.442695
    %v1226 = vpow.pop %v1225
    %v1227 = vmul.f32 %v1216, 1.442695
    %v1228 = vpow.pop %v1227
    %v1229 = vsel %vm932, %v1218, 0.0
    %1230 = vadd.xlane.f32.xlu0 %v1229
    %v1231 = vpop.xlane.xlu0 %1230
    %v1232 = vsel %vm932, %v1220, 0.0
    %1233 = vadd.xlane.f32.xlu0 %v1232
    %v1234 = vpop.xlane.xlu0 %1233
    %v1235 = vsel %vm932, %v1222, 0.0
    %1236 = vadd.xlane.f32.xlu0 %v1235
    %v1237 = vpop.xlane.xlu0 %1236
    %v1238 = vsel %vm932, %v1224, 0.0
    %1239 = vadd.xlane.f32.xlu0 %v1238
    %v1240 = vpop.xlane.xlu0 %1239
    %v1241 = vsel %vm932, %v1226, 0.0
    %1242 = vadd.xlane.f32.xlu0 %v1241
    %v1243 = vpop.xlane.xlu0 %1242
    %v1244 = vsel %vm932, %v1228, 0.0
    %1245 = vadd.xlane.f32.xlu0 %v1244
    %v1246 = vpop.xlane.xlu0 %1245
    %v1247 = vrcp.pop %v1231
    %v1248 = vrcp.pop %v1234
    %v1249 = vrcp.pop %v1237
    %v1250 = vrcp.pop %v1240
    %v1251 = vrcp.pop %v1243
    %v1252 = vrcp.pop %v1246
    %v1253 = vmul.f32 %v1218, %v1247
    %v1254 = vmul.f32 %v1220, %v1248
    %v1255 = vmul.f32 %v1222, %v1249
    %v1256 = vmul.f32 %v1224, %v1250
    %v1257 = vmul.f32 %v1226, %v1251
    %v1258 = vmul.f32 %v1228, %v1252
    %v1259 = vpack.c.bf16 %v1253, %v1253
    %v1260 = vpack.c.bf16 %v1254, %v1254
    %v1261 = vpack.c.bf16 %v1255, %v1255
    %v1262 = vpack.c.bf16 %v1256, %v1256
    %v1263 = vpack.c.bf16 %v1257, %v1257
    %v1264 = vpack.c.bf16 %v1258, %v1258
    %v1268 = vunpack.c.l.b16 %v1259
    %v1269 = vunpack.c.l.b16 %v1260
    %v1270 = vunpack.c.l.b16 %v1261
    %v1271 = vpack.c.b16 %v1269, %v1268
    %v1272 = vpack.c.b16 %v1270, %v1270
    %1273 = vrot.lane.b32.xlu0 %v1019, 112
    %v1274 = vpop.permute.xlu0 %1273
    %1275 = vrot.lane.b32.xlu0 %v1020, 112
    %v1276 = vpop.permute.xlu0 %1275
    %v1279 = vsel %vm932, %v1271, 0
    %v1282 = vsel %vm932, %v1272, 0
    %v1285 = vsel %vm1028, %v1276, 0
    %1287 = vmatpush.bf16.msra.mxu0 0
    %1288 = vmatpush.bf16.msra.mxu0 0
    %1289 = vmatpush.bf16.msra.mxu0 0
    %1290 = vmatpush.bf16.msra.mxu0 0
    %1291 = vmatpush.bf16.msra.mxu0 0
    %1292 = vmatpush.bf16.msra.mxu0 0
    %1293 = vmatpush.bf16.msra.mxu0 %v1285
    %1294 = vmatpush.bf16.msra.mxu0 %v1274
    %1295 = vmatmul.bf16.gmra.mxu0 %v1279
    %v1296 = vpop.f32.mrf.mxu0
    %v1297 = vadd.f32 0.0, %v1296
    %v1298 = vpop.f32.mrf.mxu0
    %v1299 = vadd.f32 0.0, %v1298
    %1300 = vmatmul.bf16.gmra.mxu0 %v1282
    %v1301 = vpop.f32.mrf.mxu0
    %v1302 = vadd.f32 0.0, %v1301
    %v1303 = vpop.f32.mrf.mxu0
    %1304 = vdwg.mxu0
    %v1308 = vunpack.c.l.b16 %v1262
    %v1309 = vunpack.c.l.b16 %v1263
    %v1310 = vunpack.c.l.b16 %v1264
    %v1311 = vpack.c.b16 %v1309, %v1308
    %v1312 = vpack.c.b16 %v1310, %v1310
    %1313 = vrot.lane.b32.xlu0 %v1064, 112
    %v1314 = vpop.permute.xlu0 %1313
    %1315 = vrot.lane.b32.xlu0 %v1065, 112
    %v1316 = vpop.permute.xlu0 %1315
    %v1319 = vsel %vm932, %v1311, 0
    %v1322 = vsel %vm932, %v1312, 0
    %v1325 = vsel %vm1028, %v1316, 0
    %1327 = vmatpush.bf16.msra.mxu0 0
    %1328 = vmatpush.bf16.msra.mxu0 0
    %1329 = vmatpush.bf16.msra.mxu0 0
    %1330 = vmatpush.bf16.msra.mxu0 0
    %1331 = vmatpush.bf16.msra.mxu0 0
    %1332 = vmatpush.bf16.msra.mxu0 0
    %1333 = vmatpush.bf16.msra.mxu0 %v1325
    %1334 = vmatpush.bf16.msra.mxu0 %v1314
    %1335 = vmatmul.bf16.gmra.mxu0 %v1319
    %v1336 = vpop.f32.mrf.mxu0
    %v1337 = vadd.f32 0.0, %v1336
    %v1338 = vpop.f32.mrf.mxu0
    %v1339 = vadd.f32 0.0, %v1338
    %1340 = vmatmul.bf16.gmra.mxu0 %v1322
    %v1341 = vpop.f32.mrf.mxu0
    %v1342 = vadd.f32 0.0, %v1341
    %v1343 = vpop.f32.mrf.mxu0
    %1344 = vdwg.mxu0
    %v1345 = vpack.c.bf16 %v1299, %v1297
    %v1346 = vpack.c.bf16 %v1337, %v1302
    %v1347 = vpack.c.bf16 %v1342, %v1339
    %v1350 = vunpack.c.l.b16 %v825
    %v1351 = vunpack.c.l.b16 %v826
    %v1352 = vpack.c.b16 %v1351, %v1350
    %v1355 = vsel %vm855, %v1345, 0
    %v1358 = vsel %vm855, %v1346, 0
    %v1361 = vsel %vm855, %v1347, 0
    %1363 = vmatpush.bf16.msra.mxu0 0
    %1364 = vmatpush.bf16.msra.mxu0 0
    %1365 = vmatpush.bf16.msra.mxu0 0
    %1366 = vmatpush.bf16.msra.mxu0 0
    %1367 = vmatpush.bf16.msra.mxu0 0
    %1368 = vmatpush.bf16.msra.mxu0 0
    %1369 = vmatpush.bf16.msra.mxu0 0
    %1370 = vmatpush.bf16.msra.mxu0 %v1352
    %1371 = vmatmul.bf16.gmra.mxu0 %v1355
    %v1372 = vpop.f32.mrf.mxu0
    %v1373 = vadd.f32 0.0, %v1372
    %v1374 = vpop.f32.mrf.mxu0
    %v1375 = vadd.f32 0.0, %v1374
    %1376 = vmatmul.bf16.gmra.mxu0 %v1358
    %v1377 = vpop.f32.mrf.mxu0
    %v1378 = vadd.f32 0.0, %v1377
    %v1379 = vpop.f32.mrf.mxu0
    %v1380 = vadd.f32 0.0, %v1379
    %1381 = vmatmul.bf16.gmra.mxu0 %v1361
    %v1382 = vpop.f32.mrf.mxu0
    %v1383 = vadd.f32 0.0, %v1382
    %v1384 = vpop.f32.mrf.mxu0
    %v1385 = vadd.f32 0.0, %v1384
    %1386 = vdwg.mxu0
    %v1389 = vunpack.c.l.b16 %v823
    %v1390 = vunpack.c.l.b16 %v824
    %v1391 = vpack.c.b16 %v1390, %v1389
    %v1394 = vsel %vm855, %v1094, 0
    %v1397 = vsel %vm855, %v1095, 0
    %v1400 = vsel %vm855, %v1096, 0
    %1402 = vmatpush.bf16.msra.mxu0 0
    %1403 = vmatpush.bf16.msra.mxu0 0
    %1404 = vmatpush.bf16.msra.mxu0 0
    %1405 = vmatpush.bf16.msra.mxu0 0
    %1406 = vmatpush.bf16.msra.mxu0 0
    %1407 = vmatpush.bf16.msra.mxu0 0
    %1408 = vmatpush.bf16.msra.mxu0 0
    %1409 = vmatpush.bf16.msra.mxu0 %v1391
    %1410 = vmatmul.bf16.gmra.mxu0 %v1394
    %v1411 = vpop.f32.mrf.mxu0
    %v1412 = vadd.f32 %v1373, %v1411
    %v1413 = vpop.f32.mrf.mxu0
    %v1414 = vadd.f32 %v1375, %v1413
    %1415 = vmatmul.bf16.gmra.mxu0 %v1397
    %v1416 = vpop.f32.mrf.mxu0
    %v1417 = vadd.f32 %v1378, %v1416
    %v1418 = vpop.f32.mrf.mxu0
    %v1419 = vadd.f32 %v1380, %v1418
    %1420 = vmatmul.bf16.gmra.mxu0 %v1400
    %v1421 = vpop.f32.mrf.mxu0
    %v1422 = vadd.f32 %v1383, %v1421
    %v1423 = vpop.f32.mrf.mxu0
    %v1424 = vadd.f32 %v1385, %v1423
    %1425 = vdwg.mxu0
    %1426 = vrot.lane.b32.xlu0 %v811, 96
    %v1427 = vpop.permute.xlu0 %1426
    %1428 = vrot.lane.b32.xlu0 %v813, 96
    %v1429 = vpop.permute.xlu0 %1428
    %1430 = vrot.lane.b32.xlu0 %v815, 96
    %v1431 = vpop.permute.xlu0 %1430
    %v1432 = vrot.slane %v1427, 4
    %v1433 = vrot.slane %v1429, 4
    %v1434 = vrot.slane %v1431, 4
    %1435 = vrot.lane.b32.xlu0 %v848, 96
    %v1436 = vpop.permute.xlu0 %1435
    %1437 = vrot.lane.b32.xlu0 %v849, 96
    %v1438 = vpop.permute.xlu0 %1437
    %v1439 = vunpack.c.l.b16 %v1432
    %v1440 = vunpack.c.l.b16 %v1433
    %v1441 = vunpack.c.l.b16 %v1434
    %v1442 = vpack.c.b16 %v1440, %v1439
    %v1443 = vpack.c.b16 %v1441, %v1441
    %v1445 = vsel %vm855, %v1436, 0
    %v1448 = vsel %vm855, %v1438, 0
    %v1451 = vsel %vm855, %v1442, 0
    %v1454 = vsel %vm855, %v1443, 0
    %1456 = vmatpush.bf16.xpose.msra.mxu0 0
    %1457 = vmatpush.bf16.xpose.msra.mxu0 0
    %1458 = vmatpush.bf16.xpose.msra.mxu0 0
    %1459 = vmatpush.bf16.xpose.msra.mxu0 0
    %1460 = vmatpush.bf16.xpose.msra.mxu0 0
    %1461 = vmatpush.bf16.xpose.msra.mxu0 0
    %1462 = vmatpush.bf16.xpose.msra.mxu0 %v1454
    %1463 = vmatpush.bf16.xpose.msra.mxu0 %v1451
    %1464 = vmatmul.bf16.gmra.mxu0 %v1445
    %v1465 = vpop.f32.mrf.mxu0
    %v1466 = vadd.f32 0.0, %v1465
    %v1467 = vpop.f32.mrf.mxu0
    %v1468 = vadd.f32 0.0, %v1467
    %1469 = vmatmul.bf16.gmra.mxu0 %v1448
    %v1470 = vpop.f32.mrf.mxu0
    %v1471 = vadd.f32 0.0, %v1470
    %v1472 = vpop.f32.mrf.mxu0
    %1473 = vdwg.mxu0
    %1474 = vrot.lane.b32.xlu0 %v817, 96
    %v1475 = vpop.permute.xlu0 %1474
    %1476 = vrot.lane.b32.xlu0 %v819, 96
    %v1477 = vpop.permute.xlu0 %1476
    %1478 = vrot.lane.b32.xlu0 %v821, 96
    %v1479 = vpop.permute.xlu0 %1478
    %v1480 = vrot.slane %v1475, 4
    %v1481 = vrot.slane %v1477, 4
    %v1482 = vrot.slane %v1479, 4
    %1483 = vrot.lane.b32.xlu0 %v895, 96
    %v1484 = vpop.permute.xlu0 %1483
    %1485 = vrot.lane.b32.xlu0 %v896, 96
    %v1486 = vpop.permute.xlu0 %1485
    %v1487 = vunpack.c.l.b16 %v1480
    %v1488 = vunpack.c.l.b16 %v1481
    %v1489 = vunpack.c.l.b16 %v1482
    %v1490 = vpack.c.b16 %v1488, %v1487
    %v1491 = vpack.c.b16 %v1489, %v1489
    %v1493 = vsel %vm855, %v1484, 0
    %v1496 = vsel %vm855, %v1486, 0
    %v1499 = vsel %vm855, %v1490, 0
    %v1502 = vsel %vm855, %v1491, 0
    %1504 = vmatpush.bf16.xpose.msra.mxu0 0
    %1505 = vmatpush.bf16.xpose.msra.mxu0 0
    %1506 = vmatpush.bf16.xpose.msra.mxu0 0
    %1507 = vmatpush.bf16.xpose.msra.mxu0 0
    %1508 = vmatpush.bf16.xpose.msra.mxu0 0
    %1509 = vmatpush.bf16.xpose.msra.mxu0 0
    %1510 = vmatpush.bf16.xpose.msra.mxu0 %v1502
    %1511 = vmatpush.bf16.xpose.msra.mxu0 %v1499
    %1512 = vmatmul.bf16.gmra.mxu0 %v1493
    %v1513 = vpop.f32.mrf.mxu0
    %v1514 = vadd.f32 0.0, %v1513
    %v1515 = vpop.f32.mrf.mxu0
    %v1516 = vadd.f32 0.0, %v1515
    %1517 = vmatmul.bf16.gmra.mxu0 %v1496
    %v1518 = vpop.f32.mrf.mxu0
    %v1519 = vadd.f32 0.0, %v1518
    %v1520 = vpop.f32.mrf.mxu0
    %1521 = vdwg.mxu0
    %v1522 = vsel %vm932, %v1466, -inf
    %1523 = vmax.xlane.f32.xlu0 %v1522
    %v1524 = vpop.xlane.xlu0 %1523
    %v1525 = vsel %vm932, %v1468, -inf
    %1526 = vmax.xlane.f32.xlu0 %v1525
    %v1527 = vpop.xlane.xlu0 %1526
    %v1528 = vsel %vm932, %v1471, -inf
    %1529 = vmax.xlane.f32.xlu0 %v1528
    %v1530 = vpop.xlane.xlu0 %1529
    %v1531 = vsel %vm932, %v1514, -inf
    %1532 = vmax.xlane.f32.xlu0 %v1531
    %v1533 = vpop.xlane.xlu0 %1532
    %v1534 = vsel %vm932, %v1516, -inf
    %1535 = vmax.xlane.f32.xlu0 %v1534
    %v1536 = vpop.xlane.xlu0 %1535
    %v1537 = vsel %vm932, %v1519, -inf
    %1538 = vmax.xlane.f32.xlu0 %v1537
    %v1539 = vpop.xlane.xlu0 %1538
    %v1540 = vsub.f32 %v1466, %v1524
    %v1541 = vsub.f32 %v1468, %v1527
    %v1542 = vsub.f32 %v1471, %v1530
    %v1543 = vsub.f32 %v1514, %v1533
    %v1544 = vsub.f32 %v1516, %v1536
    %v1545 = vsub.f32 %v1519, %v1539
    %v1546 = vmul.f32 %v1540, 1.442695
    %v1547 = vpow.pop %v1546
    %v1548 = vmul.f32 %v1541, 1.442695
    %v1549 = vpow.pop %v1548
    %v1550 = vmul.f32 %v1542, 1.442695
    %v1551 = vpow.pop %v1550
    %v1552 = vmul.f32 %v1543, 1.442695
    %v1553 = vpow.pop %v1552
    %v1554 = vmul.f32 %v1544, 1.442695
    %v1555 = vpow.pop %v1554
    %v1556 = vmul.f32 %v1545, 1.442695
    %v1557 = vpow.pop %v1556
    %v1558 = vsel %vm932, %v1547, 0.0
    %1559 = vadd.xlane.f32.xlu0 %v1558
    %v1560 = vpop.xlane.xlu0 %1559
    %v1561 = vsel %vm932, %v1549, 0.0
    %1562 = vadd.xlane.f32.xlu0 %v1561
    %v1563 = vpop.xlane.xlu0 %1562
    %v1564 = vsel %vm932, %v1551, 0.0
    %1565 = vadd.xlane.f32.xlu0 %v1564
    %v1566 = vpop.xlane.xlu0 %1565
    %v1567 = vsel %vm932, %v1553, 0.0
    %1568 = vadd.xlane.f32.xlu0 %v1567
    %v1569 = vpop.xlane.xlu0 %1568
    %v1570 = vsel %vm932, %v1555, 0.0
    %1571 = vadd.xlane.f32.xlu0 %v1570
    %v1572 = vpop.xlane.xlu0 %1571
    %v1573 = vsel %vm932, %v1557, 0.0
    %1574 = vadd.xlane.f32.xlu0 %v1573
    %v1575 = vpop.xlane.xlu0 %1574
    %v1576 = vrcp.pop %v1560
    %v1577 = vrcp.pop %v1563
    %v1578 = vrcp.pop %v1566
    %v1579 = vrcp.pop %v1569
    %v1580 = vrcp.pop %v1572
    %v1581 = vrcp.pop %v1575
    %v1582 = vmul.f32 %v1547, %v1576
    %v1583 = vmul.f32 %v1549, %v1577
    %v1584 = vmul.f32 %v1551, %v1578
    %v1585 = vmul.f32 %v1553, %v1579
    %v1586 = vmul.f32 %v1555, %v1580
    %v1587 = vmul.f32 %v1557, %v1581
    %v1588 = vpack.c.bf16 %v1582, %v1582
    %v1589 = vpack.c.bf16 %v1583, %v1583
    %v1590 = vpack.c.bf16 %v1584, %v1584
    %v1591 = vpack.c.bf16 %v1585, %v1585
    %v1592 = vpack.c.bf16 %v1586, %v1586
    %v1593 = vpack.c.bf16 %v1587, %v1587
    %v1597 = vunpack.c.l.b16 %v1588
    %v1598 = vunpack.c.l.b16 %v1589
    %v1599 = vunpack.c.l.b16 %v1590
    %v1600 = vpack.c.b16 %v1598, %v1597
    %v1601 = vpack.c.b16 %v1599, %v1599
    %1602 = vrot.lane.b32.xlu0 %v1019, 96
    %v1603 = vpop.permute.xlu0 %1602
    %1604 = vrot.lane.b32.xlu0 %v1020, 96
    %v1605 = vpop.permute.xlu0 %1604
    %v1608 = vsel %vm932, %v1600, 0
    %v1611 = vsel %vm932, %v1601, 0
    %v1614 = vsel %vm1028, %v1605, 0
    %1616 = vmatpush.bf16.msra.mxu0 0
    %1617 = vmatpush.bf16.msra.mxu0 0
    %1618 = vmatpush.bf16.msra.mxu0 0
    %1619 = vmatpush.bf16.msra.mxu0 0
    %1620 = vmatpush.bf16.msra.mxu0 0
    %1621 = vmatpush.bf16.msra.mxu0 0
    %1622 = vmatpush.bf16.msra.mxu0 %v1614
    %1623 = vmatpush.bf16.msra.mxu0 %v1603
    %1624 = vmatmul.bf16.gmra.mxu0 %v1608
    %v1625 = vpop.f32.mrf.mxu0
    %v1626 = vadd.f32 0.0, %v1625
    %v1627 = vpop.f32.mrf.mxu0
    %v1628 = vadd.f32 0.0, %v1627
    %1629 = vmatmul.bf16.gmra.mxu0 %v1611
    %v1630 = vpop.f32.mrf.mxu0
    %v1631 = vadd.f32 0.0, %v1630
    %v1632 = vpop.f32.mrf.mxu0
    %1633 = vdwg.mxu0
    %v1637 = vunpack.c.l.b16 %v1591
    %v1638 = vunpack.c.l.b16 %v1592
    %v1639 = vunpack.c.l.b16 %v1593
    %v1640 = vpack.c.b16 %v1638, %v1637
    %v1641 = vpack.c.b16 %v1639, %v1639
    %1642 = vrot.lane.b32.xlu0 %v1064, 96
    %v1643 = vpop.permute.xlu0 %1642
    %1644 = vrot.lane.b32.xlu0 %v1065, 96
    %v1645 = vpop.permute.xlu0 %1644
    %v1648 = vsel %vm932, %v1640, 0
    %v1651 = vsel %vm932, %v1641, 0
    %v1654 = vsel %vm1028, %v1645, 0
    %1656 = vmatpush.bf16.msra.mxu0 0
    %1657 = vmatpush.bf16.msra.mxu0 0
    %1658 = vmatpush.bf16.msra.mxu0 0
    %1659 = vmatpush.bf16.msra.mxu0 0
    %1660 = vmatpush.bf16.msra.mxu0 0
    %1661 = vmatpush.bf16.msra.mxu0 0
    %1662 = vmatpush.bf16.msra.mxu0 %v1654
    %1663 = vmatpush.bf16.msra.mxu0 %v1643
    %1664 = vmatmul.bf16.gmra.mxu0 %v1648
    %v1665 = vpop.f32.mrf.mxu0
    %v1666 = vadd.f32 0.0, %v1665
    %v1667 = vpop.f32.mrf.mxu0
    %v1668 = vadd.f32 0.0, %v1667
    %1669 = vmatmul.bf16.gmra.mxu0 %v1651
    %v1670 = vpop.f32.mrf.mxu0
    %v1671 = vadd.f32 0.0, %v1670
    %v1672 = vpop.f32.mrf.mxu0
    %1673 = vdwg.mxu0
    %v1674 = vpack.c.bf16 %v1628, %v1626
    %v1675 = vpack.c.bf16 %v1666, %v1631
    %v1676 = vpack.c.bf16 %v1671, %v1668
    %v1679 = vunpack.c.l.b16 %v827
    %v1680 = vunpack.c.l.b16 %v828
    %v1681 = vpack.c.b16 %v1680, %v1679
    %v1684 = vsel %vm855, %v1674, 0
    %v1687 = vsel %vm855, %v1675, 0
    %v1690 = vsel %vm855, %v1676, 0
    %1692 = vmatpush.bf16.msra.mxu0 0
    %1693 = vmatpush.bf16.msra.mxu0 0
    %1694 = vmatpush.bf16.msra.mxu0 0
    %1695 = vmatpush.bf16.msra.mxu0 0
    %1696 = vmatpush.bf16.msra.mxu0 0
    %1697 = vmatpush.bf16.msra.mxu0 0
    %1698 = vmatpush.bf16.msra.mxu0 0
    %1699 = vmatpush.bf16.msra.mxu0 %v1681
    %1700 = vmatmul.bf16.gmra.mxu0 %v1684
    %v1701 = vpop.f32.mrf.mxu0
    %v1702 = vadd.f32 0.0, %v1701
    %v1703 = vpop.f32.mrf.mxu0
    %v1704 = vadd.f32 0.0, %v1703
    %1705 = vmatmul.bf16.gmra.mxu0 %v1687
    %v1706 = vpop.f32.mrf.mxu0
    %v1707 = vadd.f32 0.0, %v1706
    %v1708 = vpop.f32.mrf.mxu0
    %v1709 = vadd.f32 0.0, %v1708
    %1710 = vmatmul.bf16.gmra.mxu0 %v1690
    %v1711 = vpop.f32.mrf.mxu0
    %v1712 = vadd.f32 0.0, %v1711
    %v1713 = vpop.f32.mrf.mxu0
    %v1714 = vadd.f32 0.0, %v1713
    %1715 = vdwg.mxu0
    %v1716 = vadd.f32 %v1412, %v1702
    %v1717 = vadd.f32 %v1414, %v1704
    %v1718 = vadd.f32 %v1417, %v1707
    %v1719 = vadd.f32 %v1419, %v1709
    %v1720 = vadd.f32 %v1422, %v1712
    %v1721 = vadd.f32 %v1424, %v1714
    %1722 = vrot.lane.b32.xlu0 %v811, 80
    %v1723 = vpop.permute.xlu0 %1722
    %1724 = vrot.lane.b32.xlu0 %v813, 80
    %v1725 = vpop.permute.xlu0 %1724
    %1726 = vrot.lane.b32.xlu0 %v815, 80
    %v1727 = vpop.permute.xlu0 %1726
    %v1728 = vrot.slane %v1723, 4
    %v1729 = vrot.slane %v1725, 4
    %v1730 = vrot.slane %v1727, 4
    %1731 = vrot.lane.b32.xlu0 %v848, 80
    %v1732 = vpop.permute.xlu0 %1731
    %1733 = vrot.lane.b32.xlu0 %v849, 80
    %v1734 = vpop.permute.xlu0 %1733
    %v1735 = vunpack.c.l.b16 %v1728
    %v1736 = vunpack.c.l.b16 %v1729
    %v1737 = vunpack.c.l.b16 %v1730
    %v1738 = vpack.c.b16 %v1736, %v1735
    %v1739 = vpack.c.b16 %v1737, %v1737
    %v1741 = vsel %vm855, %v1732, 0
    %v1744 = vsel %vm855, %v1734, 0
    %v1747 = vsel %vm855, %v1738, 0
    %v1750 = vsel %vm855, %v1739, 0
    %1752 = vmatpush.bf16.xpose.msra.mxu0 0
    %1753 = vmatpush.bf16.xpose.msra.mxu0 0
    %1754 = vmatpush.bf16.xpose.msra.mxu0 0
    %1755 = vmatpush.bf16.xpose.msra.mxu0 0
    %1756 = vmatpush.bf16.xpose.msra.mxu0 0
    %1757 = vmatpush.bf16.xpose.msra.mxu0 0
    %1758 = vmatpush.bf16.xpose.msra.mxu0 %v1750
    %1759 = vmatpush.bf16.xpose.msra.mxu0 %v1747
    %1760 = vmatmul.bf16.gmra.mxu0 %v1741
    %v1761 = vpop.f32.mrf.mxu0
    %v1762 = vadd.f32 0.0, %v1761
    %v1763 = vpop.f32.mrf.mxu0
    %v1764 = vadd.f32 0.0, %v1763
    %1765 = vmatmul.bf16.gmra.mxu0 %v1744
    %v1766 = vpop.f32.mrf.mxu0
    %v1767 = vadd.f32 0.0, %v1766
    %v1768 = vpop.f32.mrf.mxu0
    %1769 = vdwg.mxu0
    %1770 = vrot.lane.b32.xlu0 %v817, 80
    %v1771 = vpop.permute.xlu0 %1770
    %1772 = vrot.lane.b32.xlu0 %v819, 80
    %v1773 = vpop.permute.xlu0 %1772
    %1774 = vrot.lane.b32.xlu0 %v821, 80
    %v1775 = vpop.permute.xlu0 %1774
    %v1776 = vrot.slane %v1771, 4
    %v1777 = vrot.slane %v1773, 4
    %v1778 = vrot.slane %v1775, 4
    %1779 = vrot.lane.b32.xlu0 %v895, 80
    %v1780 = vpop.permute.xlu0 %1779
    %1781 = vrot.lane.b32.xlu0 %v896, 80
    %v1782 = vpop.permute.xlu0 %1781
    %v1783 = vunpack.c.l.b16 %v1776
    %v1784 = vunpack.c.l.b16 %v1777
    %v1785 = vunpack.c.l.b16 %v1778
    %v1786 = vpack.c.b16 %v1784, %v1783
    %v1787 = vpack.c.b16 %v1785, %v1785
    %v1789 = vsel %vm855, %v1780, 0
    %v1792 = vsel %vm855, %v1782, 0
    %v1795 = vsel %vm855, %v1786, 0
    %v1798 = vsel %vm855, %v1787, 0
    %1800 = vmatpush.bf16.xpose.msra.mxu0 0
    %1801 = vmatpush.bf16.xpose.msra.mxu0 0
    %1802 = vmatpush.bf16.xpose.msra.mxu0 0
    %1803 = vmatpush.bf16.xpose.msra.mxu0 0
    %1804 = vmatpush.bf16.xpose.msra.mxu0 0
    %1805 = vmatpush.bf16.xpose.msra.mxu0 0
    %1806 = vmatpush.bf16.xpose.msra.mxu0 %v1798
    %1807 = vmatpush.bf16.xpose.msra.mxu0 %v1795
    %1808 = vmatmul.bf16.gmra.mxu0 %v1789
    %v1809 = vpop.f32.mrf.mxu0
    %v1810 = vadd.f32 0.0, %v1809
    %v1811 = vpop.f32.mrf.mxu0
    %v1812 = vadd.f32 0.0, %v1811
    %1813 = vmatmul.bf16.gmra.mxu0 %v1792
    %v1814 = vpop.f32.mrf.mxu0
    %v1815 = vadd.f32 0.0, %v1814
    %v1816 = vpop.f32.mrf.mxu0
    %1817 = vdwg.mxu0
    %v1818 = vsel %vm932, %v1762, -inf
    %1819 = vmax.xlane.f32.xlu0 %v1818
    %v1820 = vpop.xlane.xlu0 %1819
    %v1821 = vsel %vm932, %v1764, -inf
    %1822 = vmax.xlane.f32.xlu0 %v1821
    %v1823 = vpop.xlane.xlu0 %1822
    %v1824 = vsel %vm932, %v1767, -inf
    %1825 = vmax.xlane.f32.xlu0 %v1824
    %v1826 = vpop.xlane.xlu0 %1825
    %v1827 = vsel %vm932, %v1810, -inf
    %1828 = vmax.xlane.f32.xlu0 %v1827
    %v1829 = vpop.xlane.xlu0 %1828
    %v1830 = vsel %vm932, %v1812, -inf
    %1831 = vmax.xlane.f32.xlu0 %v1830
    %v1832 = vpop.xlane.xlu0 %1831
    %v1833 = vsel %vm932, %v1815, -inf
    %1834 = vmax.xlane.f32.xlu0 %v1833
    %v1835 = vpop.xlane.xlu0 %1834
    %v1836 = vsub.f32 %v1762, %v1820
    %v1837 = vsub.f32 %v1764, %v1823
    %v1838 = vsub.f32 %v1767, %v1826
    %v1839 = vsub.f32 %v1810, %v1829
    %v1840 = vsub.f32 %v1812, %v1832
    %v1841 = vsub.f32 %v1815, %v1835
    %v1842 = vmul.f32 %v1836, 1.442695
    %v1843 = vpow.pop %v1842
    %v1844 = vmul.f32 %v1837, 1.442695
    %v1845 = vpow.pop %v1844
    %v1846 = vmul.f32 %v1838, 1.442695
    %v1847 = vpow.pop %v1846
    %v1848 = vmul.f32 %v1839, 1.442695
    %v1849 = vpow.pop %v1848
    %v1850 = vmul.f32 %v1840, 1.442695
    %v1851 = vpow.pop %v1850
    %v1852 = vmul.f32 %v1841, 1.442695
    %v1853 = vpow.pop %v1852
    %v1854 = vsel %vm932, %v1843, 0.0
    %1855 = vadd.xlane.f32.xlu0 %v1854
    %v1856 = vpop.xlane.xlu0 %1855
    %v1857 = vsel %vm932, %v1845, 0.0
    %1858 = vadd.xlane.f32.xlu0 %v1857
    %v1859 = vpop.xlane.xlu0 %1858
    %v1860 = vsel %vm932, %v1847, 0.0
    %1861 = vadd.xlane.f32.xlu0 %v1860
    %v1862 = vpop.xlane.xlu0 %1861
    %v1863 = vsel %vm932, %v1849, 0.0
    %1864 = vadd.xlane.f32.xlu0 %v1863
    %v1865 = vpop.xlane.xlu0 %1864
    %v1866 = vsel %vm932, %v1851, 0.0
    %1867 = vadd.xlane.f32.xlu0 %v1866
    %v1868 = vpop.xlane.xlu0 %1867
    %v1869 = vsel %vm932, %v1853, 0.0
    %1870 = vadd.xlane.f32.xlu0 %v1869
    %v1871 = vpop.xlane.xlu0 %1870
    %v1872 = vrcp.pop %v1856
    %v1873 = vrcp.pop %v1859
    %v1874 = vrcp.pop %v1862
    %v1875 = vrcp.pop %v1865
    %v1876 = vrcp.pop %v1868
    %v1877 = vrcp.pop %v1871
    %v1878 = vmul.f32 %v1843, %v1872
    %v1879 = vmul.f32 %v1845, %v1873
    %v1880 = vmul.f32 %v1847, %v1874
    %v1881 = vmul.f32 %v1849, %v1875
    %v1882 = vmul.f32 %v1851, %v1876
    %v1883 = vmul.f32 %v1853, %v1877
    %v1884 = vpack.c.bf16 %v1878, %v1878
    %v1885 = vpack.c.bf16 %v1879, %v1879
    %v1886 = vpack.c.bf16 %v1880, %v1880
    %v1887 = vpack.c.bf16 %v1881, %v1881
    %v1888 = vpack.c.bf16 %v1882, %v1882
    %v1889 = vpack.c.bf16 %v1883, %v1883
    %v1893 = vunpack.c.l.b16 %v1884
    %v1894 = vunpack.c.l.b16 %v1885
    %v1895 = vunpack.c.l.b16 %v1886
    %v1896 = vpack.c.b16 %v1894, %v1893
    %v1897 = vpack.c.b16 %v1895, %v1895
    %1898 = vrot.lane.b32.xlu0 %v1019, 80
    %v1899 = vpop.permute.xlu0 %1898
    %1900 = vrot.lane.b32.xlu0 %v1020, 80
    %v1901 = vpop.permute.xlu0 %1900
    %v1904 = vsel %vm932, %v1896, 0
    %v1907 = vsel %vm932, %v1897, 0
    %v1910 = vsel %vm1028, %v1901, 0
    %1912 = vmatpush.bf16.msra.mxu0 0
    %1913 = vmatpush.bf16.msra.mxu0 0
    %1914 = vmatpush.bf16.msra.mxu0 0
    %1915 = vmatpush.bf16.msra.mxu0 0
    %1916 = vmatpush.bf16.msra.mxu0 0
    %1917 = vmatpush.bf16.msra.mxu0 0
    %1918 = vmatpush.bf16.msra.mxu0 %v1910
    %1919 = vmatpush.bf16.msra.mxu0 %v1899
    %1920 = vmatmul.bf16.gmra.mxu0 %v1904
    %v1921 = vpop.f32.mrf.mxu0
    %v1922 = vadd.f32 0.0, %v1921
    %v1923 = vpop.f32.mrf.mxu0
    %v1924 = vadd.f32 0.0, %v1923
    %1925 = vmatmul.bf16.gmra.mxu0 %v1907
    %v1926 = vpop.f32.mrf.mxu0
    %v1927 = vadd.f32 0.0, %v1926
    %v1928 = vpop.f32.mrf.mxu0
    %1929 = vdwg.mxu0
    %v1933 = vunpack.c.l.b16 %v1887
    %v1934 = vunpack.c.l.b16 %v1888
    %v1935 = vunpack.c.l.b16 %v1889
    %v1936 = vpack.c.b16 %v1934, %v1933
    %v1937 = vpack.c.b16 %v1935, %v1935
    %1938 = vrot.lane.b32.xlu0 %v1064, 80
    %v1939 = vpop.permute.xlu0 %1938
    %1940 = vrot.lane.b32.xlu0 %v1065, 80
    %v1941 = vpop.permute.xlu0 %1940
    %v1944 = vsel %vm932, %v1936, 0
    %v1947 = vsel %vm932, %v1937, 0
    %v1950 = vsel %vm1028, %v1941, 0
    %1952 = vmatpush.bf16.msra.mxu0 0
    %1953 = vmatpush.bf16.msra.mxu0 0
    %1954 = vmatpush.bf16.msra.mxu0 0
    %1955 = vmatpush.bf16.msra.mxu0 0
    %1956 = vmatpush.bf16.msra.mxu0 0
    %1957 = vmatpush.bf16.msra.mxu0 0
    %1958 = vmatpush.bf16.msra.mxu0 %v1950
    %1959 = vmatpush.bf16.msra.mxu0 %v1939
    %1960 = vmatmul.bf16.gmra.mxu0 %v1944
    %v1961 = vpop.f32.mrf.mxu0
    %v1962 = vadd.f32 0.0, %v1961
    %v1963 = vpop.f32.mrf.mxu0
    %v1964 = vadd.f32 0.0, %v1963
    %1965 = vmatmul.bf16.gmra.mxu0 %v1947
    %v1966 = vpop.f32.mrf.mxu0
    %v1967 = vadd.f32 0.0, %v1966
    %v1968 = vpop.f32.mrf.mxu0
    %1969 = vdwg.mxu0
    %v1970 = vpack.c.bf16 %v1924, %v1922
    %v1971 = vpack.c.bf16 %v1962, %v1927
    %v1972 = vpack.c.bf16 %v1967, %v1964
    %v1975 = vunpack.c.l.b16 %v829
    %v1976 = vunpack.c.l.b16 %v830
    %v1977 = vpack.c.b16 %v1976, %v1975
    %v1980 = vsel %vm855, %v1970, 0
    %v1983 = vsel %vm855, %v1971, 0
    %v1986 = vsel %vm855, %v1972, 0
    %1988 = vmatpush.bf16.msra.mxu0 0
    %1989 = vmatpush.bf16.msra.mxu0 0
    %1990 = vmatpush.bf16.msra.mxu0 0
    %1991 = vmatpush.bf16.msra.mxu0 0
    %1992 = vmatpush.bf16.msra.mxu0 0
    %1993 = vmatpush.bf16.msra.mxu0 0
    %1994 = vmatpush.bf16.msra.mxu0 0
    %1995 = vmatpush.bf16.msra.mxu0 %v1977
    %1996 = vmatmul.bf16.gmra.mxu0 %v1980
    %v1997 = vpop.f32.mrf.mxu0
    %v1998 = vadd.f32 0.0, %v1997
    %v1999 = vpop.f32.mrf.mxu0
    %v2000 = vadd.f32 0.0, %v1999
    %2001 = vmatmul.bf16.gmra.mxu0 %v1983
    %v2002 = vpop.f32.mrf.mxu0
    %v2003 = vadd.f32 0.0, %v2002
    %v2004 = vpop.f32.mrf.mxu0
    %v2005 = vadd.f32 0.0, %v2004
    %2006 = vmatmul.bf16.gmra.mxu0 %v1986
    %v2007 = vpop.f32.mrf.mxu0
    %v2008 = vadd.f32 0.0, %v2007
    %v2009 = vpop.f32.mrf.mxu0
    %v2010 = vadd.f32 0.0, %v2009
    %2011 = vdwg.mxu0
    %v2012 = vadd.f32 %v1716, %v1998
    %v2013 = vadd.f32 %v1717, %v2000
    %v2014 = vadd.f32 %v1718, %v2003
    %v2015 = vadd.f32 %v1719, %v2005
    %v2016 = vadd.f32 %v1720, %v2008
    %v2017 = vadd.f32 %v1721, %v2010
    %2018 = vrot.lane.b32.xlu0 %v811, 64
    %v2019 = vpop.permute.xlu0 %2018
    %2020 = vrot.lane.b32.xlu0 %v813, 64
    %v2021 = vpop.permute.xlu0 %2020
    %2022 = vrot.lane.b32.xlu0 %v815, 64
    %v2023 = vpop.permute.xlu0 %2022
    %v2024 = vrot.slane %v2019, 4
    %v2025 = vrot.slane %v2021, 4
    %v2026 = vrot.slane %v2023, 4
    %2027 = vrot.lane.b32.xlu0 %v848, 64
    %v2028 = vpop.permute.xlu0 %2027
    %2029 = vrot.lane.b32.xlu0 %v849, 64
    %v2030 = vpop.permute.xlu0 %2029
    %v2031 = vunpack.c.l.b16 %v2024
    %v2032 = vunpack.c.l.b16 %v2025
    %v2033 = vunpack.c.l.b16 %v2026
    %v2034 = vpack.c.b16 %v2032, %v2031
    %v2035 = vpack.c.b16 %v2033, %v2033
    %v2037 = vsel %vm855, %v2028, 0
    %v2040 = vsel %vm855, %v2030, 0
    %v2043 = vsel %vm855, %v2034, 0
    %v2046 = vsel %vm855, %v2035, 0
    %2048 = vmatpush.bf16.xpose.msra.mxu0 0
    %2049 = vmatpush.bf16.xpose.msra.mxu0 0
    %2050 = vmatpush.bf16.xpose.msra.mxu0 0
    %2051 = vmatpush.bf16.xpose.msra.mxu0 0
    %2052 = vmatpush.bf16.xpose.msra.mxu0 0
    %2053 = vmatpush.bf16.xpose.msra.mxu0 0
    %2054 = vmatpush.bf16.xpose.msra.mxu0 %v2046
    %2055 = vmatpush.bf16.xpose.msra.mxu0 %v2043
    %2056 = vmatmul.bf16.gmra.mxu0 %v2037
    %v2057 = vpop.f32.mrf.mxu0
    %v2058 = vadd.f32 0.0, %v2057
    %v2059 = vpop.f32.mrf.mxu0
    %v2060 = vadd.f32 0.0, %v2059
    %2061 = vmatmul.bf16.gmra.mxu0 %v2040
    %v2062 = vpop.f32.mrf.mxu0
    %v2063 = vadd.f32 0.0, %v2062
    %v2064 = vpop.f32.mrf.mxu0
    %2065 = vdwg.mxu0
    %2066 = vrot.lane.b32.xlu0 %v817, 64
    %v2067 = vpop.permute.xlu0 %2066
    %2068 = vrot.lane.b32.xlu0 %v819, 64
    %v2069 = vpop.permute.xlu0 %2068
    %2070 = vrot.lane.b32.xlu0 %v821, 64
    %v2071 = vpop.permute.xlu0 %2070
    %v2072 = vrot.slane %v2067, 4
    %v2073 = vrot.slane %v2069, 4
    %v2074 = vrot.slane %v2071, 4
    %2075 = vrot.lane.b32.xlu0 %v895, 64
    %v2076 = vpop.permute.xlu0 %2075
    %2077 = vrot.lane.b32.xlu0 %v896, 64
    %v2078 = vpop.permute.xlu0 %2077
    %v2079 = vunpack.c.l.b16 %v2072
    %v2080 = vunpack.c.l.b16 %v2073
    %v2081 = vunpack.c.l.b16 %v2074
    %v2082 = vpack.c.b16 %v2080, %v2079
    %v2083 = vpack.c.b16 %v2081, %v2081
    %v2085 = vsel %vm855, %v2076, 0
    %v2088 = vsel %vm855, %v2078, 0
    %v2091 = vsel %vm855, %v2082, 0
    %v2094 = vsel %vm855, %v2083, 0
    %2096 = vmatpush.bf16.xpose.msra.mxu0 0
    %2097 = vmatpush.bf16.xpose.msra.mxu0 0
    %2098 = vmatpush.bf16.xpose.msra.mxu0 0
    %2099 = vmatpush.bf16.xpose.msra.mxu0 0
    %2100 = vmatpush.bf16.xpose.msra.mxu0 0
    %2101 = vmatpush.bf16.xpose.msra.mxu0 0
    %2102 = vmatpush.bf16.xpose.msra.mxu0 %v2094
    %2103 = vmatpush.bf16.xpose.msra.mxu0 %v2091
    %2104 = vmatmul.bf16.gmra.mxu0 %v2085
    %v2105 = vpop.f32.mrf.mxu0
    %v2106 = vadd.f32 0.0, %v2105
    %v2107 = vpop.f32.mrf.mxu0
    %v2108 = vadd.f32 0.0, %v2107
    %2109 = vmatmul.bf16.gmra.mxu0 %v2088
    %v2110 = vpop.f32.mrf.mxu0
    %v2111 = vadd.f32 0.0, %v2110
    %v2112 = vpop.f32.mrf.mxu0
    %2113 = vdwg.mxu0
    %v2114 = vsel %vm932, %v2058, -inf
    %2115 = vmax.xlane.f32.xlu0 %v2114
    %v2116 = vpop.xlane.xlu0 %2115
    %v2117 = vsel %vm932, %v2060, -inf
    %2118 = vmax.xlane.f32.xlu0 %v2117
    %v2119 = vpop.xlane.xlu0 %2118
    %v2120 = vsel %vm932, %v2063, -inf
    %2121 = vmax.xlane.f32.xlu0 %v2120
    %v2122 = vpop.xlane.xlu0 %2121
    %v2123 = vsel %vm932, %v2106, -inf
    %2124 = vmax.xlane.f32.xlu0 %v2123
    %v2125 = vpop.xlane.xlu0 %2124
    %v2126 = vsel %vm932, %v2108, -inf
    %2127 = vmax.xlane.f32.xlu0 %v2126
    %v2128 = vpop.xlane.xlu0 %2127
    %v2129 = vsel %vm932, %v2111, -inf
    %2130 = vmax.xlane.f32.xlu0 %v2129
    %v2131 = vpop.xlane.xlu0 %2130
    %v2132 = vsub.f32 %v2058, %v2116
    %v2133 = vsub.f32 %v2060, %v2119
    %v2134 = vsub.f32 %v2063, %v2122
    %v2135 = vsub.f32 %v2106, %v2125
    %v2136 = vsub.f32 %v2108, %v2128
    %v2137 = vsub.f32 %v2111, %v2131
    %v2138 = vmul.f32 %v2132, 1.442695
    %v2139 = vpow.pop %v2138
    %v2140 = vmul.f32 %v2133, 1.442695
    %v2141 = vpow.pop %v2140
    %v2142 = vmul.f32 %v2134, 1.442695
    %v2143 = vpow.pop %v2142
    %v2144 = vmul.f32 %v2135, 1.442695
    %v2145 = vpow.pop %v2144
    %v2146 = vmul.f32 %v2136, 1.442695
    %v2147 = vpow.pop %v2146
    %v2148 = vmul.f32 %v2137, 1.442695
    %v2149 = vpow.pop %v2148
    %v2150 = vsel %vm932, %v2139, 0.0
    %2151 = vadd.xlane.f32.xlu0 %v2150
    %v2152 = vpop.xlane.xlu0 %2151
    %v2153 = vsel %vm932, %v2141, 0.0
    %2154 = vadd.xlane.f32.xlu0 %v2153
    %v2155 = vpop.xlane.xlu0 %2154
    %v2156 = vsel %vm932, %v2143, 0.0
    %2157 = vadd.xlane.f32.xlu0 %v2156
    %v2158 = vpop.xlane.xlu0 %2157
    %v2159 = vsel %vm932, %v2145, 0.0
    %2160 = vadd.xlane.f32.xlu0 %v2159
    %v2161 = vpop.xlane.xlu0 %2160
    %v2162 = vsel %vm932, %v2147, 0.0
    %2163 = vadd.xlane.f32.xlu0 %v2162
    %v2164 = vpop.xlane.xlu0 %2163
    %v2165 = vsel %vm932, %v2149, 0.0
    %2166 = vadd.xlane.f32.xlu0 %v2165
    %v2167 = vpop.xlane.xlu0 %2166
    %v2168 = vrcp.pop %v2152
    %v2169 = vrcp.pop %v2155
    %v2170 = vrcp.pop %v2158
    %v2171 = vrcp.pop %v2161
    %v2172 = vrcp.pop %v2164
    %v2173 = vrcp.pop %v2167
    %v2174 = vmul.f32 %v2139, %v2168
    %v2175 = vmul.f32 %v2141, %v2169
    %v2176 = vmul.f32 %v2143, %v2170
    %v2177 = vmul.f32 %v2145, %v2171
    %v2178 = vmul.f32 %v2147, %v2172
    %v2179 = vmul.f32 %v2149, %v2173
    %v2180 = vpack.c.bf16 %v2174, %v2174
    %v2181 = vpack.c.bf16 %v2175, %v2175
    %v2182 = vpack.c.bf16 %v2176, %v2176
    %v2183 = vpack.c.bf16 %v2177, %v2177
    %v2184 = vpack.c.bf16 %v2178, %v2178
    %v2185 = vpack.c.bf16 %v2179, %v2179
    %v2189 = vunpack.c.l.b16 %v2180
    %v2190 = vunpack.c.l.b16 %v2181
    %v2191 = vunpack.c.l.b16 %v2182
    %v2192 = vpack.c.b16 %v2190, %v2189
    %v2193 = vpack.c.b16 %v2191, %v2191
    %2194 = vrot.lane.b32.xlu0 %v1019, 64
    %v2195 = vpop.permute.xlu0 %2194
    %2196 = vrot.lane.b32.xlu0 %v1020, 64
    %v2197 = vpop.permute.xlu0 %2196
    %v2200 = vsel %vm932, %v2192, 0
    %v2203 = vsel %vm932, %v2193, 0
    %v2206 = vsel %vm1028, %v2197, 0
    %2208 = vmatpush.bf16.msra.mxu0 0
    %2209 = vmatpush.bf16.msra.mxu0 0
    %2210 = vmatpush.bf16.msra.mxu0 0
    %2211 = vmatpush.bf16.msra.mxu0 0
    %2212 = vmatpush.bf16.msra.mxu0 0
    %2213 = vmatpush.bf16.msra.mxu0 0
    %2214 = vmatpush.bf16.msra.mxu0 %v2206
    %2215 = vmatpush.bf16.msra.mxu0 %v2195
    %2216 = vmatmul.bf16.gmra.mxu0 %v2200
    %v2217 = vpop.f32.mrf.mxu0
    %v2218 = vadd.f32 0.0, %v2217
    %v2219 = vpop.f32.mrf.mxu0
    %v2220 = vadd.f32 0.0, %v2219
    %2221 = vmatmul.bf16.gmra.mxu0 %v2203
    %v2222 = vpop.f32.mrf.mxu0
    %v2223 = vadd.f32 0.0, %v2222
    %v2224 = vpop.f32.mrf.mxu0
    %2225 = vdwg.mxu0
    %v2229 = vunpack.c.l.b16 %v2183
    %v2230 = vunpack.c.l.b16 %v2184
    %v2231 = vunpack.c.l.b16 %v2185
    %v2232 = vpack.c.b16 %v2230, %v2229
    %v2233 = vpack.c.b16 %v2231, %v2231
    %2234 = vrot.lane.b32.xlu0 %v1064, 64
    %v2235 = vpop.permute.xlu0 %2234
    %2236 = vrot.lane.b32.xlu0 %v1065, 64
    %v2237 = vpop.permute.xlu0 %2236
    %v2240 = vsel %vm932, %v2232, 0
    %v2243 = vsel %vm932, %v2233, 0
    %v2246 = vsel %vm1028, %v2237, 0
    %2248 = vmatpush.bf16.msra.mxu0 0
    %2249 = vmatpush.bf16.msra.mxu0 0
    %2250 = vmatpush.bf16.msra.mxu0 0
    %2251 = vmatpush.bf16.msra.mxu0 0
    %2252 = vmatpush.bf16.msra.mxu0 0
    %2253 = vmatpush.bf16.msra.mxu0 0
    %2254 = vmatpush.bf16.msra.mxu0 %v2246
    %2255 = vmatpush.bf16.msra.mxu0 %v2235
    %2256 = vmatmul.bf16.gmra.mxu0 %v2240
    %v2257 = vpop.f32.mrf.mxu0
    %v2258 = vadd.f32 0.0, %v2257
    %v2259 = vpop.f32.mrf.mxu0
    %v2260 = vadd.f32 0.0, %v2259
    %2261 = vmatmul.bf16.gmra.mxu0 %v2243
    %v2262 = vpop.f32.mrf.mxu0
    %v2263 = vadd.f32 0.0, %v2262
    %v2264 = vpop.f32.mrf.mxu0
    %2265 = vdwg.mxu0
    %v2266 = vpack.c.bf16 %v2220, %v2218
    %v2267 = vpack.c.bf16 %v2258, %v2223
    %v2268 = vpack.c.bf16 %v2263, %v2260
    %v2271 = vunpack.c.l.b16 %v831
    %v2272 = vunpack.c.l.b16 %v832
    %v2273 = vpack.c.b16 %v2272, %v2271
    %v2276 = vsel %vm855, %v2266, 0
    %v2279 = vsel %vm855, %v2267, 0
    %v2282 = vsel %vm855, %v2268, 0
    %2284 = vmatpush.bf16.msra.mxu0 0
    %2285 = vmatpush.bf16.msra.mxu0 0
    %2286 = vmatpush.bf16.msra.mxu0 0
    %2287 = vmatpush.bf16.msra.mxu0 0
    %2288 = vmatpush.bf16.msra.mxu0 0
    %2289 = vmatpush.bf16.msra.mxu0 0
    %2290 = vmatpush.bf16.msra.mxu0 0
    %2291 = vmatpush.bf16.msra.mxu0 %v2273
    %2292 = vmatmul.bf16.gmra.mxu0 %v2276
    %v2293 = vpop.f32.mrf.mxu0
    %v2294 = vadd.f32 0.0, %v2293
    %v2295 = vpop.f32.mrf.mxu0
    %v2296 = vadd.f32 0.0, %v2295
    %2297 = vmatmul.bf16.gmra.mxu0 %v2279
    %v2298 = vpop.f32.mrf.mxu0
    %v2299 = vadd.f32 0.0, %v2298
    %v2300 = vpop.f32.mrf.mxu0
    %v2301 = vadd.f32 0.0, %v2300
    %2302 = vmatmul.bf16.gmra.mxu0 %v2282
    %v2303 = vpop.f32.mrf.mxu0
    %v2304 = vadd.f32 0.0, %v2303
    %v2305 = vpop.f32.mrf.mxu0
    %v2306 = vadd.f32 0.0, %v2305
    %2307 = vdwg.mxu0
    %v2308 = vadd.f32 %v2012, %v2294
    %v2309 = vadd.f32 %v2013, %v2296
    %v2310 = vadd.f32 %v2014, %v2299
    %v2311 = vadd.f32 %v2015, %v2301
    %v2312 = vadd.f32 %v2016, %v2304
    %v2313 = vadd.f32 %v2017, %v2306
    %2314 = vrot.lane.b32.xlu0 %v811, 48
    %v2315 = vpop.permute.xlu0 %2314
    %2316 = vrot.lane.b32.xlu0 %v813, 48
    %v2317 = vpop.permute.xlu0 %2316
    %2318 = vrot.lane.b32.xlu0 %v815, 48
    %v2319 = vpop.permute.xlu0 %2318
    %v2320 = vrot.slane %v2315, 4
    %v2321 = vrot.slane %v2317, 4
    %v2322 = vrot.slane %v2319, 4
    %2323 = vrot.lane.b32.xlu0 %v848, 48
    %v2324 = vpop.permute.xlu0 %2323
    %2325 = vrot.lane.b32.xlu0 %v849, 48
    %v2326 = vpop.permute.xlu0 %2325
    %v2327 = vunpack.c.l.b16 %v2320
    %v2328 = vunpack.c.l.b16 %v2321
    %v2329 = vunpack.c.l.b16 %v2322
    %v2330 = vpack.c.b16 %v2328, %v2327
    %v2331 = vpack.c.b16 %v2329, %v2329
    %v2333 = vsel %vm855, %v2324, 0
    %v2336 = vsel %vm855, %v2326, 0
    %v2339 = vsel %vm855, %v2330, 0
    %v2342 = vsel %vm855, %v2331, 0
    %2344 = vmatpush.bf16.xpose.msra.mxu0 0
    %2345 = vmatpush.bf16.xpose.msra.mxu0 0
    %2346 = vmatpush.bf16.xpose.msra.mxu0 0
    %2347 = vmatpush.bf16.xpose.msra.mxu0 0
    %2348 = vmatpush.bf16.xpose.msra.mxu0 0
    %2349 = vmatpush.bf16.xpose.msra.mxu0 0
    %2350 = vmatpush.bf16.xpose.msra.mxu0 %v2342
    %2351 = vmatpush.bf16.xpose.msra.mxu0 %v2339
    %2352 = vmatmul.bf16.gmra.mxu0 %v2333
    %v2353 = vpop.f32.mrf.mxu0
    %v2354 = vadd.f32 0.0, %v2353
    %v2355 = vpop.f32.mrf.mxu0
    %v2356 = vadd.f32 0.0, %v2355
    %2357 = vmatmul.bf16.gmra.mxu0 %v2336
    %v2358 = vpop.f32.mrf.mxu0
    %v2359 = vadd.f32 0.0, %v2358
    %v2360 = vpop.f32.mrf.mxu0
    %2361 = vdwg.mxu0
    %2362 = vrot.lane.b32.xlu0 %v817, 48
    %v2363 = vpop.permute.xlu0 %2362
    %2364 = vrot.lane.b32.xlu0 %v819, 48
    %v2365 = vpop.permute.xlu0 %2364
    %2366 = vrot.lane.b32.xlu0 %v821, 48
    %v2367 = vpop.permute.xlu0 %2366
    %v2368 = vrot.slane %v2363, 4
    %v2369 = vrot.slane %v2365, 4
    %v2370 = vrot.slane %v2367, 4
    %2371 = vrot.lane.b32.xlu0 %v895, 48
    %v2372 = vpop.permute.xlu0 %2371
    %2373 = vrot.lane.b32.xlu0 %v896, 48
    %v2374 = vpop.permute.xlu0 %2373
    %v2375 = vunpack.c.l.b16 %v2368
    %v2376 = vunpack.c.l.b16 %v2369
    %v2377 = vunpack.c.l.b16 %v2370
    %v2378 = vpack.c.b16 %v2376, %v2375
    %v2379 = vpack.c.b16 %v2377, %v2377
    %v2381 = vsel %vm855, %v2372, 0
    %v2384 = vsel %vm855, %v2374, 0
    %v2387 = vsel %vm855, %v2378, 0
    %v2390 = vsel %vm855, %v2379, 0
    %2392 = vmatpush.bf16.xpose.msra.mxu0 0
    %2393 = vmatpush.bf16.xpose.msra.mxu0 0
    %2394 = vmatpush.bf16.xpose.msra.mxu0 0
    %2395 = vmatpush.bf16.xpose.msra.mxu0 0
    %2396 = vmatpush.bf16.xpose.msra.mxu0 0
    %2397 = vmatpush.bf16.xpose.msra.mxu0 0
    %2398 = vmatpush.bf16.xpose.msra.mxu0 %v2390
    %2399 = vmatpush.bf16.xpose.msra.mxu0 %v2387
    %2400 = vmatmul.bf16.gmra.mxu0 %v2381
    %v2401 = vpop.f32.mrf.mxu0
    %v2402 = vadd.f32 0.0, %v2401
    %v2403 = vpop.f32.mrf.mxu0
    %v2404 = vadd.f32 0.0, %v2403
    %2405 = vmatmul.bf16.gmra.mxu0 %v2384
    %v2406 = vpop.f32.mrf.mxu0
    %v2407 = vadd.f32 0.0, %v2406
    %v2408 = vpop.f32.mrf.mxu0
    %2409 = vdwg.mxu0
    %v2410 = vsel %vm932, %v2354, -inf
    %2411 = vmax.xlane.f32.xlu0 %v2410
    %v2412 = vpop.xlane.xlu0 %2411
    %v2413 = vsel %vm932, %v2356, -inf
    %2414 = vmax.xlane.f32.xlu0 %v2413
    %v2415 = vpop.xlane.xlu0 %2414
    %v2416 = vsel %vm932, %v2359, -inf
    %2417 = vmax.xlane.f32.xlu0 %v2416
    %v2418 = vpop.xlane.xlu0 %2417
    %v2419 = vsel %vm932, %v2402, -inf
    %2420 = vmax.xlane.f32.xlu0 %v2419
    %v2421 = vpop.xlane.xlu0 %2420
    %v2422 = vsel %vm932, %v2404, -inf
    %2423 = vmax.xlane.f32.xlu0 %v2422
    %v2424 = vpop.xlane.xlu0 %2423
    %v2425 = vsel %vm932, %v2407, -inf
    %2426 = vmax.xlane.f32.xlu0 %v2425
    %v2427 = vpop.xlane.xlu0 %2426
    %v2428 = vsub.f32 %v2354, %v2412
    %v2429 = vsub.f32 %v2356, %v2415
    %v2430 = vsub.f32 %v2359, %v2418
    %v2431 = vsub.f32 %v2402, %v2421
    %v2432 = vsub.f32 %v2404, %v2424
    %v2433 = vsub.f32 %v2407, %v2427
    %v2434 = vmul.f32 %v2428, 1.442695
    %v2435 = vpow.pop %v2434
    %v2436 = vmul.f32 %v2429, 1.442695
    %v2437 = vpow.pop %v2436
    %v2438 = vmul.f32 %v2430, 1.442695
    %v2439 = vpow.pop %v2438
    %v2440 = vmul.f32 %v2431, 1.442695
    %v2441 = vpow.pop %v2440
    %v2442 = vmul.f32 %v2432, 1.442695
    %v2443 = vpow.pop %v2442
    %v2444 = vmul.f32 %v2433, 1.442695
    %v2445 = vpow.pop %v2444
    %v2446 = vsel %vm932, %v2435, 0.0
    %2447 = vadd.xlane.f32.xlu0 %v2446
    %v2448 = vpop.xlane.xlu0 %2447
    %v2449 = vsel %vm932, %v2437, 0.0
    %2450 = vadd.xlane.f32.xlu0 %v2449
    %v2451 = vpop.xlane.xlu0 %2450
    %v2452 = vsel %vm932, %v2439, 0.0
    %2453 = vadd.xlane.f32.xlu0 %v2452
    %v2454 = vpop.xlane.xlu0 %2453
    %v2455 = vsel %vm932, %v2441, 0.0
    %2456 = vadd.xlane.f32.xlu0 %v2455
    %v2457 = vpop.xlane.xlu0 %2456
    %v2458 = vsel %vm932, %v2443, 0.0
    %2459 = vadd.xlane.f32.xlu0 %v2458
    %v2460 = vpop.xlane.xlu0 %2459
    %v2461 = vsel %vm932, %v2445, 0.0
    %2462 = vadd.xlane.f32.xlu0 %v2461
    %v2463 = vpop.xlane.xlu0 %2462
    %v2464 = vrcp.pop %v2448
    %v2465 = vrcp.pop %v2451
    %v2466 = vrcp.pop %v2454
    %v2467 = vrcp.pop %v2457
    %v2468 = vrcp.pop %v2460
    %v2469 = vrcp.pop %v2463
    %v2470 = vmul.f32 %v2435, %v2464
    %v2471 = vmul.f32 %v2437, %v2465
    %v2472 = vmul.f32 %v2439, %v2466
    %v2473 = vmul.f32 %v2441, %v2467
    %v2474 = vmul.f32 %v2443, %v2468
    %v2475 = vmul.f32 %v2445, %v2469
    %v2476 = vpack.c.bf16 %v2470, %v2470
    %v2477 = vpack.c.bf16 %v2471, %v2471
    %v2478 = vpack.c.bf16 %v2472, %v2472
    %v2479 = vpack.c.bf16 %v2473, %v2473
    %v2480 = vpack.c.bf16 %v2474, %v2474
    %v2481 = vpack.c.bf16 %v2475, %v2475
    %v2485 = vunpack.c.l.b16 %v2476
    %v2486 = vunpack.c.l.b16 %v2477
    %v2487 = vunpack.c.l.b16 %v2478
    %v2488 = vpack.c.b16 %v2486, %v2485
    %v2489 = vpack.c.b16 %v2487, %v2487
    %2490 = vrot.lane.b32.xlu0 %v1019, 48
    %v2491 = vpop.permute.xlu0 %2490
    %2492 = vrot.lane.b32.xlu0 %v1020, 48
    %v2493 = vpop.permute.xlu0 %2492
    %v2496 = vsel %vm932, %v2488, 0
    %v2499 = vsel %vm932, %v2489, 0
    %v2502 = vsel %vm1028, %v2493, 0
    %2504 = vmatpush.bf16.msra.mxu0 0
    %2505 = vmatpush.bf16.msra.mxu0 0
    %2506 = vmatpush.bf16.msra.mxu0 0
    %2507 = vmatpush.bf16.msra.mxu0 0
    %2508 = vmatpush.bf16.msra.mxu0 0
    %2509 = vmatpush.bf16.msra.mxu0 0
    %2510 = vmatpush.bf16.msra.mxu0 %v2502
    %2511 = vmatpush.bf16.msra.mxu0 %v2491
    %2512 = vmatmul.bf16.gmra.mxu0 %v2496
    %v2513 = vpop.f32.mrf.mxu0
    %v2514 = vadd.f32 0.0, %v2513
    %v2515 = vpop.f32.mrf.mxu0
    %v2516 = vadd.f32 0.0, %v2515
    %2517 = vmatmul.bf16.gmra.mxu0 %v2499
    %v2518 = vpop.f32.mrf.mxu0
    %v2519 = vadd.f32 0.0, %v2518
    %v2520 = vpop.f32.mrf.mxu0
    %2521 = vdwg.mxu0
    %v2525 = vunpack.c.l.b16 %v2479
    %v2526 = vunpack.c.l.b16 %v2480
    %v2527 = vunpack.c.l.b16 %v2481
    %v2528 = vpack.c.b16 %v2526, %v2525
    %v2529 = vpack.c.b16 %v2527, %v2527
    %2530 = vrot.lane.b32.xlu0 %v1064, 48
    %v2531 = vpop.permute.xlu0 %2530
    %2532 = vrot.lane.b32.xlu0 %v1065, 48
    %v2533 = vpop.permute.xlu0 %2532
    %v2536 = vsel %vm932, %v2528, 0
    %v2539 = vsel %vm932, %v2529, 0
    %v2542 = vsel %vm1028, %v2533, 0
    %2544 = vmatpush.bf16.msra.mxu0 0
    %2545 = vmatpush.bf16.msra.mxu0 0
    %2546 = vmatpush.bf16.msra.mxu0 0
    %2547 = vmatpush.bf16.msra.mxu0 0
    %2548 = vmatpush.bf16.msra.mxu0 0
    %2549 = vmatpush.bf16.msra.mxu0 0
    %2550 = vmatpush.bf16.msra.mxu0 %v2542
    %2551 = vmatpush.bf16.msra.mxu0 %v2531
    %2552 = vmatmul.bf16.gmra.mxu0 %v2536
    %v2553 = vpop.f32.mrf.mxu0
    %v2554 = vadd.f32 0.0, %v2553
    %v2555 = vpop.f32.mrf.mxu0
    %v2556 = vadd.f32 0.0, %v2555
    %2557 = vmatmul.bf16.gmra.mxu0 %v2539
    %v2558 = vpop.f32.mrf.mxu0
    %v2559 = vadd.f32 0.0, %v2558
    %v2560 = vpop.f32.mrf.mxu0
    %2561 = vdwg.mxu0
    %v2562 = vpack.c.bf16 %v2516, %v2514
    %v2563 = vpack.c.bf16 %v2554, %v2519
    %v2564 = vpack.c.bf16 %v2559, %v2556
    %v2567 = vunpack.c.l.b16 %v833
    %v2568 = vunpack.c.l.b16 %v834
    %v2569 = vpack.c.b16 %v2568, %v2567
    %v2572 = vsel %vm855, %v2562, 0
    %v2575 = vsel %vm855, %v2563, 0
    %v2578 = vsel %vm855, %v2564, 0
    %2580 = vmatpush.bf16.msra.mxu0 0
    %2581 = vmatpush.bf16.msra.mxu0 0
    %2582 = vmatpush.bf16.msra.mxu0 0
    %2583 = vmatpush.bf16.msra.mxu0 0
    %2584 = vmatpush.bf16.msra.mxu0 0
    %2585 = vmatpush.bf16.msra.mxu0 0
    %2586 = vmatpush.bf16.msra.mxu0 0
    %2587 = vmatpush.bf16.msra.mxu0 %v2569
    %2588 = vmatmul.bf16.gmra.mxu0 %v2572
    %v2589 = vpop.f32.mrf.mxu0
    %v2590 = vadd.f32 0.0, %v2589
    %v2591 = vpop.f32.mrf.mxu0
    %v2592 = vadd.f32 0.0, %v2591
    %2593 = vmatmul.bf16.gmra.mxu0 %v2575
    %v2594 = vpop.f32.mrf.mxu0
    %v2595 = vadd.f32 0.0, %v2594
    %v2596 = vpop.f32.mrf.mxu0
    %v2597 = vadd.f32 0.0, %v2596
    %2598 = vmatmul.bf16.gmra.mxu0 %v2578
    %v2599 = vpop.f32.mrf.mxu0
    %v2600 = vadd.f32 0.0, %v2599
    %v2601 = vpop.f32.mrf.mxu0
    %v2602 = vadd.f32 0.0, %v2601
    %2603 = vdwg.mxu0
    %v2604 = vadd.f32 %v2308, %v2590
    %v2605 = vadd.f32 %v2309, %v2592
    %v2606 = vadd.f32 %v2310, %v2595
    %v2607 = vadd.f32 %v2311, %v2597
    %v2608 = vadd.f32 %v2312, %v2600
    %v2609 = vadd.f32 %v2313, %v2602
    %2610 = vrot.lane.b32.xlu0 %v811, 32
    %v2611 = vpop.permute.xlu0 %2610
    %2612 = vrot.lane.b32.xlu0 %v813, 32
    %v2613 = vpop.permute.xlu0 %2612
    %2614 = vrot.lane.b32.xlu0 %v815, 32
    %v2615 = vpop.permute.xlu0 %2614
    %v2616 = vrot.slane %v2611, 4
    %v2617 = vrot.slane %v2613, 4
    %v2618 = vrot.slane %v2615, 4
    %2619 = vrot.lane.b32.xlu0 %v848, 32
    %v2620 = vpop.permute.xlu0 %2619
    %2621 = vrot.lane.b32.xlu0 %v849, 32
    %v2622 = vpop.permute.xlu0 %2621
    %v2623 = vunpack.c.l.b16 %v2616
    %v2624 = vunpack.c.l.b16 %v2617
    %v2625 = vunpack.c.l.b16 %v2618
    %v2626 = vpack.c.b16 %v2624, %v2623
    %v2627 = vpack.c.b16 %v2625, %v2625
    %v2629 = vsel %vm855, %v2620, 0
    %v2632 = vsel %vm855, %v2622, 0
    %v2635 = vsel %vm855, %v2626, 0
    %v2638 = vsel %vm855, %v2627, 0
    %2640 = vmatpush.bf16.xpose.msra.mxu0 0
    %2641 = vmatpush.bf16.xpose.msra.mxu0 0
    %2642 = vmatpush.bf16.xpose.msra.mxu0 0
    %2643 = vmatpush.bf16.xpose.msra.mxu0 0
    %2644 = vmatpush.bf16.xpose.msra.mxu0 0
    %2645 = vmatpush.bf16.xpose.msra.mxu0 0
    %2646 = vmatpush.bf16.xpose.msra.mxu0 %v2638
    %2647 = vmatpush.bf16.xpose.msra.mxu0 %v2635
    %2648 = vmatmul.bf16.gmra.mxu0 %v2629
    %v2649 = vpop.f32.mrf.mxu0
    %v2650 = vadd.f32 0.0, %v2649
    %v2651 = vpop.f32.mrf.mxu0
    %v2652 = vadd.f32 0.0, %v2651
    %2653 = vmatmul.bf16.gmra.mxu0 %v2632
    %v2654 = vpop.f32.mrf.mxu0
    %v2655 = vadd.f32 0.0, %v2654
    %v2656 = vpop.f32.mrf.mxu0
    %2657 = vdwg.mxu0
    %2658 = vrot.lane.b32.xlu0 %v817, 32
    %v2659 = vpop.permute.xlu0 %2658
    %2660 = vrot.lane.b32.xlu0 %v819, 32
    %v2661 = vpop.permute.xlu0 %2660
    %2662 = vrot.lane.b32.xlu0 %v821, 32
    %v2663 = vpop.permute.xlu0 %2662
    %v2664 = vrot.slane %v2659, 4
    %v2665 = vrot.slane %v2661, 4
    %v2666 = vrot.slane %v2663, 4
    %2667 = vrot.lane.b32.xlu0 %v895, 32
    %v2668 = vpop.permute.xlu0 %2667
    %2669 = vrot.lane.b32.xlu0 %v896, 32
    %v2670 = vpop.permute.xlu0 %2669
    %v2671 = vunpack.c.l.b16 %v2664
    %v2672 = vunpack.c.l.b16 %v2665
    %v2673 = vunpack.c.l.b16 %v2666
    %v2674 = vpack.c.b16 %v2672, %v2671
    %v2675 = vpack.c.b16 %v2673, %v2673
    %v2677 = vsel %vm855, %v2668, 0
    %v2680 = vsel %vm855, %v2670, 0
    %v2683 = vsel %vm855, %v2674, 0
    %v2686 = vsel %vm855, %v2675, 0
    %2688 = vmatpush.bf16.xpose.msra.mxu0 0
    %2689 = vmatpush.bf16.xpose.msra.mxu0 0
    %2690 = vmatpush.bf16.xpose.msra.mxu0 0
    %2691 = vmatpush.bf16.xpose.msra.mxu0 0
    %2692 = vmatpush.bf16.xpose.msra.mxu0 0
    %2693 = vmatpush.bf16.xpose.msra.mxu0 0
    %2694 = vmatpush.bf16.xpose.msra.mxu0 %v2686
    %2695 = vmatpush.bf16.xpose.msra.mxu0 %v2683
    %2696 = vmatmul.bf16.gmra.mxu0 %v2677
    %v2697 = vpop.f32.mrf.mxu0
    %v2698 = vadd.f32 0.0, %v2697
    %v2699 = vpop.f32.mrf.mxu0
    %v2700 = vadd.f32 0.0, %v2699
    %2701 = vmatmul.bf16.gmra.mxu0 %v2680
    %v2702 = vpop.f32.mrf.mxu0
    %v2703 = vadd.f32 0.0, %v2702
    %v2704 = vpop.f32.mrf.mxu0
    %2705 = vdwg.mxu0
    %v2706 = vsel %vm932, %v2650, -inf
    %2707 = vmax.xlane.f32.xlu0 %v2706
    %v2708 = vpop.xlane.xlu0 %2707
    %v2709 = vsel %vm932, %v2652, -inf
    %2710 = vmax.xlane.f32.xlu0 %v2709
    %v2711 = vpop.xlane.xlu0 %2710
    %v2712 = vsel %vm932, %v2655, -inf
    %2713 = vmax.xlane.f32.xlu0 %v2712
    %v2714 = vpop.xlane.xlu0 %2713
    %v2715 = vsel %vm932, %v2698, -inf
    %2716 = vmax.xlane.f32.xlu0 %v2715
    %v2717 = vpop.xlane.xlu0 %2716
    %v2718 = vsel %vm932, %v2700, -inf
    %2719 = vmax.xlane.f32.xlu0 %v2718
    %v2720 = vpop.xlane.xlu0 %2719
    %v2721 = vsel %vm932, %v2703, -inf
    %2722 = vmax.xlane.f32.xlu0 %v2721
    %v2723 = vpop.xlane.xlu0 %2722
    %v2724 = vsub.f32 %v2650, %v2708
    %v2725 = vsub.f32 %v2652, %v2711
    %v2726 = vsub.f32 %v2655, %v2714
    %v2727 = vsub.f32 %v2698, %v2717
    %v2728 = vsub.f32 %v2700, %v2720
    %v2729 = vsub.f32 %v2703, %v2723
    %v2730 = vmul.f32 %v2724, 1.442695
    %v2731 = vpow.pop %v2730
    %v2732 = vmul.f32 %v2725, 1.442695
    %v2733 = vpow.pop %v2732
    %v2734 = vmul.f32 %v2726, 1.442695
    %v2735 = vpow.pop %v2734
    %v2736 = vmul.f32 %v2727, 1.442695
    %v2737 = vpow.pop %v2736
    %v2738 = vmul.f32 %v2728, 1.442695
    %v2739 = vpow.pop %v2738
    %v2740 = vmul.f32 %v2729, 1.442695
    %v2741 = vpow.pop %v2740
    %v2742 = vsel %vm932, %v2731, 0.0
    %2743 = vadd.xlane.f32.xlu0 %v2742
    %v2744 = vpop.xlane.xlu0 %2743
    %v2745 = vsel %vm932, %v2733, 0.0
    %2746 = vadd.xlane.f32.xlu0 %v2745
    %v2747 = vpop.xlane.xlu0 %2746
    %v2748 = vsel %vm932, %v2735, 0.0
    %2749 = vadd.xlane.f32.xlu0 %v2748
    %v2750 = vpop.xlane.xlu0 %2749
    %v2751 = vsel %vm932, %v2737, 0.0
    %2752 = vadd.xlane.f32.xlu0 %v2751
    %v2753 = vpop.xlane.xlu0 %2752
    %v2754 = vsel %vm932, %v2739, 0.0
    %2755 = vadd.xlane.f32.xlu0 %v2754
    %v2756 = vpop.xlane.xlu0 %2755
    %v2757 = vsel %vm932, %v2741, 0.0
    %2758 = vadd.xlane.f32.xlu0 %v2757
    %v2759 = vpop.xlane.xlu0 %2758
    %v2760 = vrcp.pop %v2744
    %v2761 = vrcp.pop %v2747
    %v2762 = vrcp.pop %v2750
    %v2763 = vrcp.pop %v2753
    %v2764 = vrcp.pop %v2756
    %v2765 = vrcp.pop %v2759
    %v2766 = vmul.f32 %v2731, %v2760
    %v2767 = vmul.f32 %v2733, %v2761
    %v2768 = vmul.f32 %v2735, %v2762
    %v2769 = vmul.f32 %v2737, %v2763
    %v2770 = vmul.f32 %v2739, %v2764
    %v2771 = vmul.f32 %v2741, %v2765
    %v2772 = vpack.c.bf16 %v2766, %v2766
    %v2773 = vpack.c.bf16 %v2767, %v2767
    %v2774 = vpack.c.bf16 %v2768, %v2768
    %v2775 = vpack.c.bf16 %v2769, %v2769
    %v2776 = vpack.c.bf16 %v2770, %v2770
    %v2777 = vpack.c.bf16 %v2771, %v2771
    %v2781 = vunpack.c.l.b16 %v2772
    %v2782 = vunpack.c.l.b16 %v2773
    %v2783 = vunpack.c.l.b16 %v2774
    %v2784 = vpack.c.b16 %v2782, %v2781
    %v2785 = vpack.c.b16 %v2783, %v2783
    %2786 = vrot.lane.b32.xlu0 %v1019, 32
    %v2787 = vpop.permute.xlu0 %2786
    %2788 = vrot.lane.b32.xlu0 %v1020, 32
    %v2789 = vpop.permute.xlu0 %2788
    %v2792 = vsel %vm932, %v2784, 0
    %v2795 = vsel %vm932, %v2785, 0
    %v2798 = vsel %vm1028, %v2789, 0
    %2800 = vmatpush.bf16.msra.mxu0 0
    %2801 = vmatpush.bf16.msra.mxu0 0
    %2802 = vmatpush.bf16.msra.mxu0 0
    %2803 = vmatpush.bf16.msra.mxu0 0
    %2804 = vmatpush.bf16.msra.mxu0 0
    %2805 = vmatpush.bf16.msra.mxu0 0
    %2806 = vmatpush.bf16.msra.mxu0 %v2798
    %2807 = vmatpush.bf16.msra.mxu0 %v2787
    %2808 = vmatmul.bf16.gmra.mxu0 %v2792
    %v2809 = vpop.f32.mrf.mxu0
    %v2810 = vadd.f32 0.0, %v2809
    %v2811 = vpop.f32.mrf.mxu0
    %v2812 = vadd.f32 0.0, %v2811
    %2813 = vmatmul.bf16.gmra.mxu0 %v2795
    %v2814 = vpop.f32.mrf.mxu0
    %v2815 = vadd.f32 0.0, %v2814
    %v2816 = vpop.f32.mrf.mxu0
    %2817 = vdwg.mxu0
    %v2821 = vunpack.c.l.b16 %v2775
    %v2822 = vunpack.c.l.b16 %v2776
    %v2823 = vunpack.c.l.b16 %v2777
    %v2824 = vpack.c.b16 %v2822, %v2821
    %v2825 = vpack.c.b16 %v2823, %v2823
    %2826 = vrot.lane.b32.xlu0 %v1064, 32
    %v2827 = vpop.permute.xlu0 %2826
    %2828 = vrot.lane.b32.xlu0 %v1065, 32
    %v2829 = vpop.permute.xlu0 %2828
    %v2832 = vsel %vm932, %v2824, 0
    %v2835 = vsel %vm932, %v2825, 0
    %v2838 = vsel %vm1028, %v2829, 0
    %2840 = vmatpush.bf16.msra.mxu0 0
    %2841 = vmatpush.bf16.msra.mxu0 0
    %2842 = vmatpush.bf16.msra.mxu0 0
    %2843 = vmatpush.bf16.msra.mxu0 0
    %2844 = vmatpush.bf16.msra.mxu0 0
    %2845 = vmatpush.bf16.msra.mxu0 0
    %2846 = vmatpush.bf16.msra.mxu0 %v2838
    %2847 = vmatpush.bf16.msra.mxu0 %v2827
    %2848 = vmatmul.bf16.gmra.mxu0 %v2832
    %v2849 = vpop.f32.mrf.mxu0
    %v2850 = vadd.f32 0.0, %v2849
    %v2851 = vpop.f32.mrf.mxu0
    %v2852 = vadd.f32 0.0, %v2851
    %2853 = vmatmul.bf16.gmra.mxu0 %v2835
    %v2854 = vpop.f32.mrf.mxu0
    %v2855 = vadd.f32 0.0, %v2854
    %v2856 = vpop.f32.mrf.mxu0
    %2857 = vdwg.mxu0
    %v2858 = vpack.c.bf16 %v2812, %v2810
    %v2859 = vpack.c.bf16 %v2850, %v2815
    %v2860 = vpack.c.bf16 %v2855, %v2852
    %v2863 = vunpack.c.l.b16 %v835
    %v2864 = vunpack.c.l.b16 %v836
    %v2865 = vpack.c.b16 %v2864, %v2863
    %v2868 = vsel %vm855, %v2858, 0
    %v2871 = vsel %vm855, %v2859, 0
    %v2874 = vsel %vm855, %v2860, 0
    %2876 = vmatpush.bf16.msra.mxu0 0
    %2877 = vmatpush.bf16.msra.mxu0 0
    %2878 = vmatpush.bf16.msra.mxu0 0
    %2879 = vmatpush.bf16.msra.mxu0 0
    %2880 = vmatpush.bf16.msra.mxu0 0
    %2881 = vmatpush.bf16.msra.mxu0 0
    %2882 = vmatpush.bf16.msra.mxu0 0
    %2883 = vmatpush.bf16.msra.mxu0 %v2865
    %2884 = vmatmul.bf16.gmra.mxu0 %v2868
    %v2885 = vpop.f32.mrf.mxu0
    %v2886 = vadd.f32 0.0, %v2885
    %v2887 = vpop.f32.mrf.mxu0
    %v2888 = vadd.f32 0.0, %v2887
    %2889 = vmatmul.bf16.gmra.mxu0 %v2871
    %v2890 = vpop.f32.mrf.mxu0
    %v2891 = vadd.f32 0.0, %v2890
    %v2892 = vpop.f32.mrf.mxu0
    %v2893 = vadd.f32 0.0, %v2892
    %2894 = vmatmul.bf16.gmra.mxu0 %v2874
    %v2895 = vpop.f32.mrf.mxu0
    %v2896 = vadd.f32 0.0, %v2895
    %v2897 = vpop.f32.mrf.mxu0
    %v2898 = vadd.f32 0.0, %v2897
    %2899 = vdwg.mxu0
    %v2900 = vadd.f32 %v2604, %v2886
    %v2901 = vadd.f32 %v2605, %v2888
    %v2902 = vadd.f32 %v2606, %v2891
    %v2903 = vadd.f32 %v2607, %v2893
    %v2904 = vadd.f32 %v2608, %v2896
    %v2905 = vadd.f32 %v2609, %v2898
    %2906 = vrot.lane.b32.xlu0 %v811, 16
    %v2907 = vpop.permute.xlu0 %2906
    %2908 = vrot.lane.b32.xlu0 %v813, 16
    %v2909 = vpop.permute.xlu0 %2908
    %2910 = vrot.lane.b32.xlu0 %v815, 16
    %v2911 = vpop.permute.xlu0 %2910
    %v2912 = vrot.slane %v2907, 4
    %v2913 = vrot.slane %v2909, 4
    %v2914 = vrot.slane %v2911, 4
    %2915 = vrot.lane.b32.xlu0 %v848, 16
    %v2916 = vpop.permute.xlu0 %2915
    %2917 = vrot.lane.b32.xlu0 %v849, 16
    %v2918 = vpop.permute.xlu0 %2917
    %v2919 = vunpack.c.l.b16 %v2912
    %v2920 = vunpack.c.l.b16 %v2913
    %v2921 = vunpack.c.l.b16 %v2914
    %v2922 = vpack.c.b16 %v2920, %v2919
    %v2923 = vpack.c.b16 %v2921, %v2921
    %v2925 = vsel %vm855, %v2916, 0
    %v2928 = vsel %vm855, %v2918, 0
    %v2931 = vsel %vm855, %v2922, 0
    %v2934 = vsel %vm855, %v2923, 0
    %2936 = vmatpush.bf16.xpose.msra.mxu0 0
    %2937 = vmatpush.bf16.xpose.msra.mxu0 0
    %2938 = vmatpush.bf16.xpose.msra.mxu0 0
    %2939 = vmatpush.bf16.xpose.msra.mxu0 0
    %2940 = vmatpush.bf16.xpose.msra.mxu0 0
    %2941 = vmatpush.bf16.xpose.msra.mxu0 0
    %2942 = vmatpush.bf16.xpose.msra.mxu0 %v2934
    %2943 = vmatpush.bf16.xpose.msra.mxu0 %v2931
    %2944 = vmatmul.bf16.gmra.mxu0 %v2925
    %v2945 = vpop.f32.mrf.mxu0
    %v2946 = vadd.f32 0.0, %v2945
    %v2947 = vpop.f32.mrf.mxu0
    %v2948 = vadd.f32 0.0, %v2947
    %2949 = vmatmul.bf16.gmra.mxu0 %v2928
    %v2950 = vpop.f32.mrf.mxu0
    %v2951 = vadd.f32 0.0, %v2950
    %v2952 = vpop.f32.mrf.mxu0
    %2953 = vdwg.mxu0
    %2954 = vrot.lane.b32.xlu0 %v817, 16
    %v2955 = vpop.permute.xlu0 %2954
    %2956 = vrot.lane.b32.xlu0 %v819, 16
    %v2957 = vpop.permute.xlu0 %2956
    %2958 = vrot.lane.b32.xlu0 %v821, 16
    %v2959 = vpop.permute.xlu0 %2958
    %v2960 = vrot.slane %v2955, 4
    %v2961 = vrot.slane %v2957, 4
    %v2962 = vrot.slane %v2959, 4
    %2963 = vrot.lane.b32.xlu0 %v895, 16
    %v2964 = vpop.permute.xlu0 %2963
    %2965 = vrot.lane.b32.xlu0 %v896, 16
    %v2966 = vpop.permute.xlu0 %2965
    %v2967 = vunpack.c.l.b16 %v2960
    %v2968 = vunpack.c.l.b16 %v2961
    %v2969 = vunpack.c.l.b16 %v2962
    %v2970 = vpack.c.b16 %v2968, %v2967
    %v2971 = vpack.c.b16 %v2969, %v2969
    %v2973 = vsel %vm855, %v2964, 0
    %v2976 = vsel %vm855, %v2966, 0
    %v2979 = vsel %vm855, %v2970, 0
    %v2982 = vsel %vm855, %v2971, 0
    %2984 = vmatpush.bf16.xpose.msra.mxu0 0
    %2985 = vmatpush.bf16.xpose.msra.mxu0 0
    %2986 = vmatpush.bf16.xpose.msra.mxu0 0
    %2987 = vmatpush.bf16.xpose.msra.mxu0 0
    %2988 = vmatpush.bf16.xpose.msra.mxu0 0
    %2989 = vmatpush.bf16.xpose.msra.mxu0 0
    %2990 = vmatpush.bf16.xpose.msra.mxu0 %v2982
    %2991 = vmatpush.bf16.xpose.msra.mxu0 %v2979
    %2992 = vmatmul.bf16.gmra.mxu0 %v2973
    %v2993 = vpop.f32.mrf.mxu0
    %v2994 = vadd.f32 0.0, %v2993
    %v2995 = vpop.f32.mrf.mxu0
    %v2996 = vadd.f32 0.0, %v2995
    %2997 = vmatmul.bf16.gmra.mxu0 %v2976
    %v2998 = vpop.f32.mrf.mxu0
    %v2999 = vadd.f32 0.0, %v2998
    %v3000 = vpop.f32.mrf.mxu0
    %3001 = vdwg.mxu0
    %v3002 = vsel %vm932, %v2946, -inf
    %3003 = vmax.xlane.f32.xlu0 %v3002
    %v3004 = vpop.xlane.xlu0 %3003
    %v3005 = vsel %vm932, %v2948, -inf
    %3006 = vmax.xlane.f32.xlu0 %v3005
    %v3007 = vpop.xlane.xlu0 %3006
    %v3008 = vsel %vm932, %v2951, -inf
    %3009 = vmax.xlane.f32.xlu0 %v3008
    %v3010 = vpop.xlane.xlu0 %3009
    %v3011 = vsel %vm932, %v2994, -inf
    %3012 = vmax.xlane.f32.xlu0 %v3011
    %v3013 = vpop.xlane.xlu0 %3012
    %v3014 = vsel %vm932, %v2996, -inf
    %3015 = vmax.xlane.f32.xlu0 %v3014
    %v3016 = vpop.xlane.xlu0 %3015
    %v3017 = vsel %vm932, %v2999, -inf
    %3018 = vmax.xlane.f32.xlu0 %v3017
    %v3019 = vpop.xlane.xlu0 %3018
    %v3020 = vsub.f32 %v2946, %v3004
    %v3021 = vsub.f32 %v2948, %v3007
    %v3022 = vsub.f32 %v2951, %v3010
    %v3023 = vsub.f32 %v2994, %v3013
    %v3024 = vsub.f32 %v2996, %v3016
    %v3025 = vsub.f32 %v2999, %v3019
    %v3026 = vmul.f32 %v3020, 1.442695
    %v3027 = vpow.pop %v3026
    %v3028 = vmul.f32 %v3021, 1.442695
    %v3029 = vpow.pop %v3028
    %v3030 = vmul.f32 %v3022, 1.442695
    %v3031 = vpow.pop %v3030
    %v3032 = vmul.f32 %v3023, 1.442695
    %v3033 = vpow.pop %v3032
    %v3034 = vmul.f32 %v3024, 1.442695
    %v3035 = vpow.pop %v3034
    %v3036 = vmul.f32 %v3025, 1.442695
    %v3037 = vpow.pop %v3036
    %v3038 = vsel %vm932, %v3027, 0.0
    %3039 = vadd.xlane.f32.xlu0 %v3038
    %v3040 = vpop.xlane.xlu0 %3039
    %v3041 = vsel %vm932, %v3029, 0.0
    %3042 = vadd.xlane.f32.xlu0 %v3041
    %v3043 = vpop.xlane.xlu0 %3042
    %v3044 = vsel %vm932, %v3031, 0.0
    %3045 = vadd.xlane.f32.xlu0 %v3044
    %v3046 = vpop.xlane.xlu0 %3045
    %v3047 = vsel %vm932, %v3033, 0.0
    %3048 = vadd.xlane.f32.xlu0 %v3047
    %v3049 = vpop.xlane.xlu0 %3048
    %v3050 = vsel %vm932, %v3035, 0.0
    %3051 = vadd.xlane.f32.xlu0 %v3050
    %v3052 = vpop.xlane.xlu0 %3051
    %v3053 = vsel %vm932, %v3037, 0.0
    %3054 = vadd.xlane.f32.xlu0 %v3053
    %v3055 = vpop.xlane.xlu0 %3054
    %v3056 = vrcp.pop %v3040
    %v3057 = vrcp.pop %v3043
    %v3058 = vrcp.pop %v3046
    %v3059 = vrcp.pop %v3049
    %v3060 = vrcp.pop %v3052
    %v3061 = vrcp.pop %v3055
    %v3062 = vmul.f32 %v3027, %v3056
    %v3063 = vmul.f32 %v3029, %v3057
    %v3064 = vmul.f32 %v3031, %v3058
    %v3065 = vmul.f32 %v3033, %v3059
    %v3066 = vmul.f32 %v3035, %v3060
    %v3067 = vmul.f32 %v3037, %v3061
    %v3068 = vpack.c.bf16 %v3062, %v3062
    %v3069 = vpack.c.bf16 %v3063, %v3063
    %v3070 = vpack.c.bf16 %v3064, %v3064
    %v3071 = vpack.c.bf16 %v3065, %v3065
    %v3072 = vpack.c.bf16 %v3066, %v3066
    %v3073 = vpack.c.bf16 %v3067, %v3067
    %v3077 = vunpack.c.l.b16 %v3068
    %v3078 = vunpack.c.l.b16 %v3069
    %v3079 = vunpack.c.l.b16 %v3070
    %v3080 = vpack.c.b16 %v3078, %v3077
    %v3081 = vpack.c.b16 %v3079, %v3079
    %3082 = vrot.lane.b32.xlu0 %v1019, 16
    %v3083 = vpop.permute.xlu0 %3082
    %3084 = vrot.lane.b32.xlu0 %v1020, 16
    %v3085 = vpop.permute.xlu0 %3084
    %v3088 = vsel %vm932, %v3080, 0
    %v3091 = vsel %vm932, %v3081, 0
    %v3094 = vsel %vm1028, %v3085, 0
    %3096 = vmatpush.bf16.msra.mxu0 0
    %3097 = vmatpush.bf16.msra.mxu0 0
    %3098 = vmatpush.bf16.msra.mxu0 0
    %3099 = vmatpush.bf16.msra.mxu0 0
    %3100 = vmatpush.bf16.msra.mxu0 0
    %3101 = vmatpush.bf16.msra.mxu0 0
    %3102 = vmatpush.bf16.msra.mxu0 %v3094
    %3103 = vmatpush.bf16.msra.mxu0 %v3083
    %3104 = vmatmul.bf16.gmra.mxu0 %v3088
    %v3105 = vpop.f32.mrf.mxu0
    %v3106 = vadd.f32 0.0, %v3105
    %v3107 = vpop.f32.mrf.mxu0
    %v3108 = vadd.f32 0.0, %v3107
    %3109 = vmatmul.bf16.gmra.mxu0 %v3091
    %v3110 = vpop.f32.mrf.mxu0
    %v3111 = vadd.f32 0.0, %v3110
    %v3112 = vpop.f32.mrf.mxu0
    %3113 = vdwg.mxu0
    %v3117 = vunpack.c.l.b16 %v3071
    %v3118 = vunpack.c.l.b16 %v3072
    %v3119 = vunpack.c.l.b16 %v3073
    %v3120 = vpack.c.b16 %v3118, %v3117
    %v3121 = vpack.c.b16 %v3119, %v3119
    %3122 = vrot.lane.b32.xlu0 %v1064, 16
    %v3123 = vpop.permute.xlu0 %3122
    %3124 = vrot.lane.b32.xlu0 %v1065, 16
    %v3125 = vpop.permute.xlu0 %3124
    %v3128 = vsel %vm932, %v3120, 0
    %v3131 = vsel %vm932, %v3121, 0
    %v3134 = vsel %vm1028, %v3125, 0
    %3136 = vmatpush.bf16.msra.mxu0 0
    %3137 = vmatpush.bf16.msra.mxu0 0
    %3138 = vmatpush.bf16.msra.mxu0 0
    %3139 = vmatpush.bf16.msra.mxu0 0
    %3140 = vmatpush.bf16.msra.mxu0 0
    %3141 = vmatpush.bf16.msra.mxu0 0
    %3142 = vmatpush.bf16.msra.mxu0 %v3134
    %3143 = vmatpush.bf16.msra.mxu0 %v3123
    %3144 = vmatmul.bf16.gmra.mxu0 %v3128
    %v3145 = vpop.f32.mrf.mxu0
    %v3146 = vadd.f32 0.0, %v3145
    %v3147 = vpop.f32.mrf.mxu0
    %v3148 = vadd.f32 0.0, %v3147
    %3149 = vmatmul.bf16.gmra.mxu0 %v3131
    %v3150 = vpop.f32.mrf.mxu0
    %v3151 = vadd.f32 0.0, %v3150
    %v3152 = vpop.f32.mrf.mxu0
    %3153 = vdwg.mxu0
    %v3154 = vpack.c.bf16 %v3108, %v3106
    %v3155 = vpack.c.bf16 %v3146, %v3111
    %v3156 = vpack.c.bf16 %v3151, %v3148
    %v3159 = vunpack.c.l.b16 %v837
    %v3160 = vunpack.c.l.b16 %v838
    %v3161 = vpack.c.b16 %v3160, %v3159
    %v3164 = vsel %vm855, %v3154, 0
    %v3167 = vsel %vm855, %v3155, 0
    %v3170 = vsel %vm855, %v3156, 0
    %3172 = vmatpush.bf16.msra.mxu0 0
    %3173 = vmatpush.bf16.msra.mxu0 0
    %3174 = vmatpush.bf16.msra.mxu0 0
    %3175 = vmatpush.bf16.msra.mxu0 0
    %3176 = vmatpush.bf16.msra.mxu0 0
    %3177 = vmatpush.bf16.msra.mxu0 0
    %3178 = vmatpush.bf16.msra.mxu0 0
    %3179 = vmatpush.bf16.msra.mxu0 %v3161
    %3180 = vmatmul.bf16.gmra.mxu0 %v3164
    %v3181 = vpop.f32.mrf.mxu0
    %v3182 = vadd.f32 0.0, %v3181
    %v3183 = vpop.f32.mrf.mxu0
    %v3184 = vadd.f32 0.0, %v3183
    %3185 = vmatmul.bf16.gmra.mxu0 %v3167
    %v3186 = vpop.f32.mrf.mxu0
    %v3187 = vadd.f32 0.0, %v3186
    %v3188 = vpop.f32.mrf.mxu0
    %v3189 = vadd.f32 0.0, %v3188
    %3190 = vmatmul.bf16.gmra.mxu0 %v3170
    %v3191 = vpop.f32.mrf.mxu0
    %v3192 = vadd.f32 0.0, %v3191
    %v3193 = vpop.f32.mrf.mxu0
    %v3194 = vadd.f32 0.0, %v3193
    %3195 = vdwg.mxu0
    %v3196 = vadd.f32 %v2900, %v3182
    %v3197 = vadd.f32 %v2901, %v3184
    %v3198 = vadd.f32 %v2902, %v3187
    %v3199 = vadd.f32 %v2903, %v3189
    %v3200 = vadd.f32 %v2904, %v3192
    %v3201 = vadd.f32 %v2905, %v3194
    %v3202 = vadd.f32 %v428, %v3196
    %v3203 = vadd.f32 %v430, %v3197
    %v3204 = vadd.f32 %v433, %v3198
    %v3205 = vadd.f32 %v435, %v3199
    %v3206 = vadd.f32 %v438, %v3200
    %v3207 = vadd.f32 %v440, %v3201
    %v3208 = vld [vmem:[%s8] sm:$0x1]
    %v3210 = vperm.slane %v3208, 0
    %v3212 = vadd.f32 %v3202, %v3210
    %v3213 = vadd.f32 %v3203, %v3210
    %v3214 = vadd.f32 %v3204, %v3210
    %v3215 = vadd.f32 %v3205, %v3210
    %v3216 = vadd.f32 %v3206, %v3210
    %v3217 = vadd.f32 %v3207, %v3210
    %3218 = vadd.xlane.f32.xlu0 %v3212
    %v3219 = vpop.xlane.xlu0 %3218
    %3220 = vadd.xlane.f32.xlu0 %v3213
    %v3221 = vpop.xlane.xlu0 %3220
    %3222 = vadd.xlane.f32.xlu0 %v3214
    %v3223 = vpop.xlane.xlu0 %3222
    %3224 = vadd.xlane.f32.xlu0 %v3215
    %v3225 = vpop.xlane.xlu0 %3224
    %3226 = vadd.xlane.f32.xlu0 %v3216
    %v3227 = vpop.xlane.xlu0 %3226
    %3228 = vadd.xlane.f32.xlu0 %v3217
    %v3229 = vpop.xlane.xlu0 %3228
    %v3230 = vmul.f32 %v3219, 0.008333334
    %v3231 = vmul.f32 %v3221, 0.008333334
    %v3232 = vmul.f32 %v3223, 0.008333334
    %v3233 = vmul.f32 %v3225, 0.008333334
    %v3234 = vmul.f32 %v3227, 0.008333334
    %v3235 = vmul.f32 %v3229, 0.008333334
    %v3236 = vsub.f32 %v3212, %v3230
    %v3237 = vsub.f32 %v3213, %v3231
    %v3238 = vsub.f32 %v3214, %v3232
    %v3239 = vsub.f32 %v3215, %v3233
    %v3240 = vsub.f32 %v3216, %v3234
    %v3241 = vsub.f32 %v3217, %v3235
    %v3242 = vmul.f32 %v3236, %v225
    %v3243 = vmul.f32 %v3237, %v225
    %v3244 = vmul.f32 %v3238, %v225
    %v3245 = vmul.f32 %v3239, %v225
    %v3246 = vmul.f32 %v3240, %v225
    %v3247 = vmul.f32 %v3241, %v225
    %v3248 = vmul.f32 %v3242, %v3242
    %v3249 = vmul.f32 %v3243, %v3243
    %v3250 = vmul.f32 %v3244, %v3244
    %v3251 = vmul.f32 %v3245, %v3245
    %v3252 = vmul.f32 %v3246, %v3246
    %v3253 = vmul.f32 %v3247, %v3247
    %3254 = vadd.xlane.f32.xlu0 %v3248
    %v3255 = vpop.xlane.xlu0 %3254
    %3256 = vadd.xlane.f32.xlu0 %v3249
    %v3257 = vpop.xlane.xlu0 %3256
    %3258 = vadd.xlane.f32.xlu0 %v3250
    %v3259 = vpop.xlane.xlu0 %3258
    %3260 = vadd.xlane.f32.xlu0 %v3251
    %v3261 = vpop.xlane.xlu0 %3260
    %3262 = vadd.xlane.f32.xlu0 %v3252
    %v3263 = vpop.xlane.xlu0 %3262
    %3264 = vadd.xlane.f32.xlu0 %v3253
    %v3265 = vpop.xlane.xlu0 %3264
    %v3266 = vmul.f32 %v3255, 0.008333334
    %v3267 = vmul.f32 %v3257, 0.008333334
    %v3268 = vmul.f32 %v3259, 0.008333334
    %v3269 = vmul.f32 %v3261, 0.008333334
    %v3270 = vmul.f32 %v3263, 0.008333334
    %v3271 = vmul.f32 %v3265, 0.008333334
    %v3272 = vadd.f32 %v3266, 1e-05
    %v3273 = vadd.f32 %v3267, 1e-05
    %v3274 = vadd.f32 %v3268, 1e-05
    %v3275 = vadd.f32 %v3269, 1e-05
    %v3276 = vadd.f32 %v3270, 1e-05
    %v3277 = vadd.f32 %v3271, 1e-05
    %v3278 = vrsqrt.pop %v3272
    %v3279 = vmul.f32 %v3278, %v3272
    %v3280 = vmul.f32 %v3279, %v3278
    %v3281 = vmul.f32 0.5, %v3280
    %v3282 = vsub.f32 1.5, %v3281
    %v3283 = vmul.f32 %v3278, %v3282
    %vm3284 = vweird.f32 %v3272
    %vm3285 = vweird.f32 %v3278
    %vm3286 = vmor %vm3284, %vm3285
    %v3287 = vsel %vm3286, %v3278, %v3283
    %v3288 = vrsqrt.pop %v3273
    %v3289 = vmul.f32 %v3288, %v3273
    %v3290 = vmul.f32 %v3289, %v3288
    %v3291 = vmul.f32 0.5, %v3290
    %v3292 = vsub.f32 1.5, %v3291
    %v3293 = vmul.f32 %v3288, %v3292
    %vm3294 = vweird.f32 %v3273
    %vm3295 = vweird.f32 %v3288
    %vm3296 = vmor %vm3294, %vm3295
    %v3297 = vsel %vm3296, %v3288, %v3293
    %v3298 = vrsqrt.pop %v3274
    %v3299 = vmul.f32 %v3298, %v3274
    %v3300 = vmul.f32 %v3299, %v3298
    %v3301 = vmul.f32 0.5, %v3300
    %v3302 = vsub.f32 1.5, %v3301
    %v3303 = vmul.f32 %v3298, %v3302
    %vm3304 = vweird.f32 %v3274
    %vm3305 = vweird.f32 %v3298
    %vm3306 = vmor %vm3304, %vm3305
    %v3307 = vsel %vm3306, %v3298, %v3303
    %v3308 = vrsqrt.pop %v3275
    %v3309 = vmul.f32 %v3308, %v3275
    %v3310 = vmul.f32 %v3309, %v3308
    %v3311 = vmul.f32 0.5, %v3310
    %v3312 = vsub.f32 1.5, %v3311
    %v3313 = vmul.f32 %v3308, %v3312
    %vm3314 = vweird.f32 %v3275
    %vm3315 = vweird.f32 %v3308
    %vm3316 = vmor %vm3314, %vm3315
    %v3317 = vsel %vm3316, %v3308, %v3313
    %v3318 = vrsqrt.pop %v3276
    %v3319 = vmul.f32 %v3318, %v3276
    %v3320 = vmul.f32 %v3319, %v3318
    %v3321 = vmul.f32 0.5, %v3320
    %v3322 = vsub.f32 1.5, %v3321
    %v3323 = vmul.f32 %v3318, %v3322
    %vm3324 = vweird.f32 %v3276
    %vm3325 = vweird.f32 %v3318
    %vm3326 = vmor %vm3324, %vm3325
    %v3327 = vsel %vm3326, %v3318, %v3323
    %v3328 = vrsqrt.pop %v3277
    %v3329 = vmul.f32 %v3328, %v3277
    %v3330 = vmul.f32 %v3329, %v3328
    %v3331 = vmul.f32 0.5, %v3330
    %v3332 = vsub.f32 1.5, %v3331
    %v3333 = vmul.f32 %v3328, %v3332
    %vm3334 = vweird.f32 %v3277
    %vm3335 = vweird.f32 %v3328
    %vm3336 = vmor %vm3334, %vm3335
    %v3337 = vsel %vm3336, %v3328, %v3333
    %v3338 = vmul.f32 %v3242, %v3287
    %v3339 = vmul.f32 %v3243, %v3297
    %v3340 = vmul.f32 %v3244, %v3307
    %v3341 = vmul.f32 %v3245, %v3317
    %v3342 = vmul.f32 %v3246, %v3327
    %v3343 = vmul.f32 %v3247, %v3337
    %v3344 = vpack.c.bf16 %v3339, %v3338
    %v3345 = vpack.c.bf16 %v3341, %v3340
    %v3346 = vpack.c.bf16 %v3343, %v3342
    %v3347 = vld [vmem:[#allocation16] sm:$0xff]
    %v3348 = vld [vmem:[#allocation16 + $0x8] sm:$0xff]
    %v3349 = vld [vmem:[#allocation16 + $0x10] sm:$0xff]
    %v3350 = vld [vmem:[#allocation16 + $0x18] sm:$0xff]
    %v3351 = vld [vmem:[#allocation16 + $0x20] sm:$0xff]
    %v3352 = vld [vmem:[#allocation16 + $0x28] sm:$0xff]
    %v3353 = vld [vmem:[#allocation16 + $0x30] sm:$0xff]
    %v3354 = vld [vmem:[#allocation16 + $0x38] sm:$0xff]
    %v3355 = vld [vmem:[#allocation16 + $0x40] sm:$0xff]
    %v3356 = vld [vmem:[#allocation16 + $0x48] sm:$0xff]
    %v3357 = vld [vmem:[#allocation16 + $0x50] sm:$0xff]
    %v3358 = vld [vmem:[#allocation16 + $0x58] sm:$0xff]
    %v3359 = vld [vmem:[#allocation16 + $0x60] sm:$0xff]
    %v3360 = vld [vmem:[#allocation16 + $0x68] sm:$0xff]
    %v3361 = vld [vmem:[#allocation16 + $0x70] sm:$0xff]
    %v3362 = vld [vmem:[#allocation16 + $0x78] sm:$0xff]
    %v3363 = vld [vmem:[%s10] sm:$0x3]
    %v3365 = vperm.slane %v3363, 0
    %v3366 = vperm.slane %v3363, 1
    %v3385 = vunpack.c.l.b16 %v3347
    %v3386 = vunpack.c.h.b16 %v3347
    %v3387 = vunpack.c.l.b16 %v3348
    %v3388 = vunpack.c.h.b16 %v3348
    %v3389 = vunpack.c.l.b16 %v3349
    %v3390 = vunpack.c.h.b16 %v3349
    %v3391 = vunpack.c.l.b16 %v3350
    %v3392 = vunpack.c.h.b16 %v3350
    %v3393 = vunpack.c.l.b16 %v3351
    %v3394 = vunpack.c.h.b16 %v3351
    %v3395 = vunpack.c.l.b16 %v3352
    %v3396 = vunpack.c.h.b16 %v3352
    %v3397 = vunpack.c.l.b16 %v3353
    %v3398 = vunpack.c.h.b16 %v3353
    %v3399 = vunpack.c.l.b16 %v3354
    %v3400 = vunpack.c.h.b16 %v3354
    %v3401 = vunpack.c.l.b16 %v3355
    %v3402 = vunpack.c.h.b16 %v3355
    %v3403 = vunpack.c.l.b16 %v3356
    %v3404 = vunpack.c.h.b16 %v3356
    %v3405 = vunpack.c.l.b16 %v3357
    %v3406 = vunpack.c.h.b16 %v3357
    %v3407 = vunpack.c.l.b16 %v3358
    %v3408 = vunpack.c.h.b16 %v3358
    %v3409 = vunpack.c.l.b16 %v3359
    %v3410 = vunpack.c.h.b16 %v3359
    %v3411 = vunpack.c.l.b16 %v3360
    %v3412 = vunpack.c.h.b16 %v3360
    %v3413 = vunpack.c.l.b16 %v3361
    %v3414 = vunpack.c.h.b16 %v3361
    %v3415 = vunpack.c.l.b16 %v3362
    %v3416 = vunpack.c.h.b16 %v3362
    %v3417 = vpack.c.b16 %v3387, %v3385
    %v3418 = vpack.c.b16 %v3388, %v3386
    %v3419 = vpack.c.b16 %v3391, %v3389
    %v3420 = vpack.c.b16 %v3392, %v3390
    %v3421 = vpack.c.b16 %v3395, %v3393
    %v3422 = vpack.c.b16 %v3396, %v3394
    %v3423 = vpack.c.b16 %v3399, %v3397
    %v3424 = vpack.c.b16 %v3400, %v3398
    %v3425 = vpack.c.b16 %v3403, %v3401
    %v3426 = vpack.c.b16 %v3404, %v3402
    %v3427 = vpack.c.b16 %v3407, %v3405
    %v3428 = vpack.c.b16 %v3408, %v3406
    %v3429 = vpack.c.b16 %v3411, %v3409
    %v3430 = vpack.c.b16 %v3412, %v3410
    %v3431 = vpack.c.b16 %v3415, %v3413
    %v3432 = vpack.c.b16 %v3416, %v3414
    %3449 = vmatpush.bf16.msra.mxu0 %v3431
    %3450 = vmatpush.bf16.msra.mxu0 %v3429
    %3451 = vmatpush.bf16.msra.mxu0 %v3427
    %3452 = vmatpush.bf16.msra.mxu0 %v3425
    %3453 = vmatpush.bf16.msra.mxu0 %v3423
    %3454 = vmatpush.bf16.msra.mxu0 %v3421
    %3455 = vmatpush.bf16.msra.mxu0 %v3419
    %3456 = vmatpush.bf16.msra.mxu0 %v3417
    %3457 = vmatmul.bf16.gmra.mxu0 %v3344
    %v3458 = vpop.f32.mrf.mxu0
    %v3459 = vadd.f32 %v3365, %v3458
    %v3460 = vpop.f32.mrf.mxu0
    %v3461 = vadd.f32 %v3365, %v3460
    %3462 = vmatmul.bf16.gmra.mxu0 %v3345
    %v3463 = vpop.f32.mrf.mxu0
    %v3464 = vadd.f32 %v3365, %v3463
    %v3465 = vpop.f32.mrf.mxu0
    %v3466 = vadd.f32 %v3365, %v3465
    %3467 = vmatmul.bf16.gmra.mxu0 %v3346
    %v3468 = vpop.f32.mrf.mxu0
    %v3469 = vadd.f32 %v3365, %v3468
    %v3470 = vpop.f32.mrf.mxu0
    %v3471 = vadd.f32 %v3365, %v3470
    %3472 = vdwg.mxu0
    %3473 = vmatpush.bf16.msra.mxu0 %v3432
    %3474 = vmatpush.bf16.msra.mxu0 %v3430
    %3475 = vmatpush.bf16.msra.mxu0 %v3428
    %3476 = vmatpush.bf16.msra.mxu0 %v3426
    %3477 = vmatpush.bf16.msra.mxu0 %v3424
    %3478 = vmatpush.bf16.msra.mxu0 %v3422
    %3479 = vmatpush.bf16.msra.mxu0 %v3420
    %3480 = vmatpush.bf16.msra.mxu0 %v3418
    %3481 = vmatmul.bf16.gmra.mxu0 %v3344
    %v3482 = vpop.f32.mrf.mxu0
    %v3483 = vadd.f32 %v3366, %v3482
    %v3484 = vpop.f32.mrf.mxu0
    %v3485 = vadd.f32 %v3366, %v3484
    %3486 = vmatmul.bf16.gmra.mxu0 %v3345
    %v3487 = vpop.f32.mrf.mxu0
    %v3488 = vadd.f32 %v3366, %v3487
    %v3489 = vpop.f32.mrf.mxu0
    %v3490 = vadd.f32 %v3366, %v3489
    %3491 = vmatmul.bf16.gmra.mxu0 %v3346
    %v3492 = vpop.f32.mrf.mxu0
    %v3493 = vadd.f32 %v3366, %v3492
    %v3494 = vpop.f32.mrf.mxu0
    %v3495 = vadd.f32 %v3366, %v3494
    %3496 = vdwg.mxu0
    %v3497 = vmul.f32 %v3459, %v3459
    %v3498 = vmul.f32 %v3483, %v3483
    %v3499 = vmul.f32 %v3461, %v3461
    %v3500 = vmul.f32 %v3485, %v3485
    %v3501 = vmul.f32 %v3464, %v3464
    %v3502 = vmul.f32 %v3488, %v3488
    %v3503 = vmul.f32 %v3466, %v3466
    %v3504 = vmul.f32 %v3490, %v3490
    %v3505 = vmul.f32 %v3469, %v3469
    %v3506 = vmul.f32 %v3493, %v3493
    %v3507 = vmul.f32 %v3471, %v3471
    %v3508 = vmul.f32 %v3495, %v3495
    %v3509 = vmul.f32 %v3459, %v3497
    %v3510 = vmul.f32 %v3483, %v3498
    %v3511 = vmul.f32 %v3461, %v3499
    %v3512 = vmul.f32 %v3485, %v3500
    %v3513 = vmul.f32 %v3464, %v3501
    %v3514 = vmul.f32 %v3488, %v3502
    %v3515 = vmul.f32 %v3466, %v3503
    %v3516 = vmul.f32 %v3490, %v3504
    %v3517 = vmul.f32 %v3469, %v3505
    %v3518 = vmul.f32 %v3493, %v3506
    %v3519 = vmul.f32 %v3471, %v3507
    %v3520 = vmul.f32 %v3495, %v3508
    %v3521 = vmul.f32 %v3509, 0.044715
    %v3522 = vmul.f32 %v3510, 0.044715
    %v3523 = vmul.f32 %v3511, 0.044715
    %v3524 = vmul.f32 %v3512, 0.044715
    %v3525 = vmul.f32 %v3513, 0.044715
    %v3526 = vmul.f32 %v3514, 0.044715
    %v3527 = vmul.f32 %v3515, 0.044715
    %v3528 = vmul.f32 %v3516, 0.044715
    %v3529 = vmul.f32 %v3517, 0.044715
    %v3530 = vmul.f32 %v3518, 0.044715
    %v3531 = vmul.f32 %v3519, 0.044715
    %v3532 = vmul.f32 %v3520, 0.044715
    %v3533 = vadd.f32 %v3459, %v3521
    %v3534 = vadd.f32 %v3483, %v3522
    %v3535 = vadd.f32 %v3461, %v3523
    %v3536 = vadd.f32 %v3485, %v3524
    %v3537 = vadd.f32 %v3464, %v3525
    %v3538 = vadd.f32 %v3488, %v3526
    %v3539 = vadd.f32 %v3466, %v3527
    %v3540 = vadd.f32 %v3490, %v3528
    %v3541 = vadd.f32 %v3469, %v3529
    %v3542 = vadd.f32 %v3493, %v3530
    %v3543 = vadd.f32 %v3471, %v3531
    %v3544 = vadd.f32 %v3495, %v3532
    %v3545 = vmul.f32 %v3533, 0.7978846
    %v3546 = vmul.f32 %v3534, 0.7978846
    %v3547 = vmul.f32 %v3535, 0.7978846
    %v3548 = vmul.f32 %v3536, 0.7978846
    %v3549 = vmul.f32 %v3537, 0.7978846
    %v3550 = vmul.f32 %v3538, 0.7978846
    %v3551 = vmul.f32 %v3539, 0.7978846
    %v3552 = vmul.f32 %v3540, 0.7978846
    %v3553 = vmul.f32 %v3541, 0.7978846
    %v3554 = vmul.f32 %v3542, 0.7978846
    %v3555 = vmul.f32 %v3543, 0.7978846
    %v3556 = vmul.f32 %v3544, 0.7978846
    %v3557 = vtanh.pop %v3545
    %v3558 = vtanh.pop %v3546
    %v3559 = vtanh.pop %v3547
    %v3560 = vtanh.pop %v3548
    %v3561 = vtanh.pop %v3549
    %v3562 = vtanh.pop %v3550
    %v3563 = vtanh.pop %v3551
    %v3564 = vtanh.pop %v3552
    %v3565 = vtanh.pop %v3553
    %v3566 = vtanh.pop %v3554
    %v3567 = vtanh.pop %v3555
    %v3568 = vtanh.pop %v3556
    %v3569 = vadd.f32 %v3557, 1.0
    %v3570 = vadd.f32 %v3558, 1.0
    %v3571 = vadd.f32 %v3559, 1.0
    %v3572 = vadd.f32 %v3560, 1.0
    %v3573 = vadd.f32 %v3561, 1.0
    %v3574 = vadd.f32 %v3562, 1.0
    %v3575 = vadd.f32 %v3563, 1.0
    %v3576 = vadd.f32 %v3564, 1.0
    %v3577 = vadd.f32 %v3565, 1.0
    %v3578 = vadd.f32 %v3566, 1.0
    %v3579 = vadd.f32 %v3567, 1.0
    %v3580 = vadd.f32 %v3568, 1.0
    %v3581 = vmul.f32 %v3569, 0.5
    %v3582 = vmul.f32 %v3570, 0.5
    %v3583 = vmul.f32 %v3571, 0.5
    %v3584 = vmul.f32 %v3572, 0.5
    %v3585 = vmul.f32 %v3573, 0.5
    %v3586 = vmul.f32 %v3574, 0.5
    %v3587 = vmul.f32 %v3575, 0.5
    %v3588 = vmul.f32 %v3576, 0.5
    %v3589 = vmul.f32 %v3577, 0.5
    %v3590 = vmul.f32 %v3578, 0.5
    %v3591 = vmul.f32 %v3579, 0.5
    %v3592 = vmul.f32 %v3580, 0.5
    %v3593 = vmul.f32 %v3459, %v3581
    %v3594 = vmul.f32 %v3483, %v3582
    %v3595 = vmul.f32 %v3461, %v3583
    %v3596 = vmul.f32 %v3485, %v3584
    %v3597 = vmul.f32 %v3464, %v3585
    %v3598 = vmul.f32 %v3488, %v3586
    %v3599 = vmul.f32 %v3466, %v3587
    %v3600 = vmul.f32 %v3490, %v3588
    %v3601 = vmul.f32 %v3469, %v3589
    %v3602 = vmul.f32 %v3493, %v3590
    %v3603 = vmul.f32 %v3471, %v3591
    %v3604 = vmul.f32 %v3495, %v3592
    %v3605 = vpack.c.bf16 %v3595, %v3593
    %v3606 = vpack.c.bf16 %v3596, %v3594
    %v3607 = vpack.c.bf16 %v3599, %v3597
    %v3608 = vpack.c.bf16 %v3600, %v3598
    %v3609 = vpack.c.bf16 %v3603, %v3601
    %v3610 = vpack.c.bf16 %v3604, %v3602
    %v3611 = vld [vmem:[#allocation17] sm:$0xf]
    %v3612 = vld [vmem:[#allocation17 + $0x4] sm:$0xf]
    %v3613 = vld [vmem:[#allocation17 + $0x8] sm:$0xf]
    %v3614 = vld [vmem:[#allocation17 + $0xc] sm:$0xf]
    %v3615 = vld [vmem:[#allocation17 + $0x10] sm:$0xf]
    %v3616 = vld [vmem:[#allocation17 + $0x14] sm:$0xf]
    %v3617 = vld [vmem:[#allocation17 + $0x18] sm:$0xf]
    %v3618 = vld [vmem:[#allocation17 + $0x1c] sm:$0xf]
    %v3619 = vld [vmem:[#allocation17 + $0x20] sm:$0xf]
    %v3620 = vld [vmem:[#allocation17 + $0x24] sm:$0xf]
    %v3621 = vld [vmem:[#allocation17 + $0x28] sm:$0xf]
    %v3622 = vld [vmem:[#allocation17 + $0x2c] sm:$0xf]
    %v3623 = vld [vmem:[#allocation17 + $0x30] sm:$0xf]
    %v3624 = vld [vmem:[#allocation17 + $0x34] sm:$0xf]
    %v3625 = vld [vmem:[#allocation17 + $0x38] sm:$0xf]
    %v3626 = vld [vmem:[#allocation17 + $0x3c] sm:$0xf]
    %v3627 = vld [vmem:[#allocation17 + $0x40] sm:$0xf]
    %v3628 = vld [vmem:[#allocation17 + $0x44] sm:$0xf]
    %v3629 = vld [vmem:[#allocation17 + $0x48] sm:$0xf]
    %v3630 = vld [vmem:[#allocation17 + $0x4c] sm:$0xf]
    %v3631 = vld [vmem:[#allocation17 + $0x50] sm:$0xf]
    %v3632 = vld [vmem:[#allocation17 + $0x54] sm:$0xf]
    %v3633 = vld [vmem:[#allocation17 + $0x58] sm:$0xf]
    %v3634 = vld [vmem:[#allocation17 + $0x5c] sm:$0xf]
    %v3635 = vld [vmem:[#allocation17 + $0x60] sm:$0xf]
    %v3636 = vld [vmem:[#allocation17 + $0x64] sm:$0xf]
    %v3637 = vld [vmem:[#allocation17 + $0x68] sm:$0xf]
    %v3638 = vld [vmem:[#allocation17 + $0x6c] sm:$0xf]
    %v3639 = vld [vmem:[#allocation17 + $0x70] sm:$0xf]
    %v3640 = vld [vmem:[#allocation17 + $0x74] sm:$0xf]
    %v3641 = vld [vmem:[#allocation17 + $0x78] sm:$0xf]
    %v3642 = vld [vmem:[#allocation17 + $0x7c] sm:$0xf]
    %v3643 = vld [vmem:[%s12] sm:$0x1]
    %v3645 = vperm.slane %v3643, 0
    %v3679 = vunpack.c.l.b16 %v3611
    %v3680 = vunpack.c.l.b16 %v3612
    %v3681 = vunpack.c.l.b16 %v3613
    %v3682 = vunpack.c.l.b16 %v3614
    %v3683 = vunpack.c.l.b16 %v3615
    %v3684 = vunpack.c.l.b16 %v3616
    %v3685 = vunpack.c.l.b16 %v3617
    %v3686 = vunpack.c.l.b16 %v3618
    %v3687 = vunpack.c.l.b16 %v3619
    %v3688 = vunpack.c.l.b16 %v3620
    %v3689 = vunpack.c.l.b16 %v3621
    %v3690 = vunpack.c.l.b16 %v3622
    %v3691 = vunpack.c.l.b16 %v3623
    %v3692 = vunpack.c.l.b16 %v3624
    %v3693 = vunpack.c.l.b16 %v3625
    %v3694 = vunpack.c.l.b16 %v3626
    %v3695 = vunpack.c.l.b16 %v3627
    %v3696 = vunpack.c.l.b16 %v3628
    %v3697 = vunpack.c.l.b16 %v3629
    %v3698 = vunpack.c.l.b16 %v3630
    %v3699 = vunpack.c.l.b16 %v3631
    %v3700 = vunpack.c.l.b16 %v3632
    %v3701 = vunpack.c.l.b16 %v3633
    %v3702 = vunpack.c.l.b16 %v3634
    %v3703 = vunpack.c.l.b16 %v3635
    %v3704 = vunpack.c.l.b16 %v3636
    %v3705 = vunpack.c.l.b16 %v3637
    %v3706 = vunpack.c.l.b16 %v3638
    %v3707 = vunpack.c.l.b16 %v3639
    %v3708 = vunpack.c.l.b16 %v3640
    %v3709 = vunpack.c.l.b16 %v3641
    %v3710 = vunpack.c.l.b16 %v3642
    %v3711 = vpack.c.b16 %v3680, %v3679
    %v3712 = vpack.c.b16 %v3682, %v3681
    %v3713 = vpack.c.b16 %v3684, %v3683
    %v3714 = vpack.c.b16 %v3686, %v3685
    %v3715 = vpack.c.b16 %v3688, %v3687
    %v3716 = vpack.c.b16 %v3690, %v3689
    %v3717 = vpack.c.b16 %v3692, %v3691
    %v3718 = vpack.c.b16 %v3694, %v3693
    %v3719 = vpack.c.b16 %v3696, %v3695
    %v3720 = vpack.c.b16 %v3698, %v3697
    %v3721 = vpack.c.b16 %v3700, %v3699
    %v3722 = vpack.c.b16 %v3702, %v3701
    %v3723 = vpack.c.b16 %v3704, %v3703
    %v3724 = vpack.c.b16 %v3706, %v3705
    %v3725 = vpack.c.b16 %v3708, %v3707
    %v3726 = vpack.c.b16 %v3710, %v3709
    %3743 = vmatpush.bf16.msra.mxu0 %v3718
    %3744 = vmatpush.bf16.msra.mxu0 %v3717
    %3745 = vmatpush.bf16.msra.mxu0 %v3716
    %3746 = vmatpush.bf16.msra.mxu0 %v3715
    %3747 = vmatpush.bf16.msra.mxu0 %v3714
    %3748 = vmatpush.bf16.msra.mxu0 %v3713
    %3749 = vmatpush.bf16.msra.mxu0 %v3712
    %3750 = vmatpush.bf16.msra.mxu0 %v3711
    %3751 = vmatmul.bf16.gmra.mxu0 %v3605
    %v3752 = vpop.f32.mrf.mxu0
    %v3753 = vadd.f32 %v3645, %v3752
    %v3754 = vpop.f32.mrf.mxu0
    %v3755 = vadd.f32 %v3645, %v3754
    %3756 = vmatmul.bf16.gmra.mxu0 %v3607
    %v3757 = vpop.f32.mrf.mxu0
    %v3758 = vadd.f32 %v3645, %v3757
    %v3759 = vpop.f32.mrf.mxu0
    %v3760 = vadd.f32 %v3645, %v3759
    %3761 = vmatmul.bf16.gmra.mxu0 %v3609
    %v3762 = vpop.f32.mrf.mxu0
    %v3763 = vadd.f32 %v3645, %v3762
    %v3764 = vpop.f32.mrf.mxu0
    %v3765 = vadd.f32 %v3645, %v3764
    %3766 = vdwg.mxu0
    %3767 = vmatpush.bf16.msra.mxu0 %v3726
    %3768 = vmatpush.bf16.msra.mxu0 %v3725
    %3769 = vmatpush.bf16.msra.mxu0 %v3724
    %3770 = vmatpush.bf16.msra.mxu0 %v3723
    %3771 = vmatpush.bf16.msra.mxu0 %v3722
    %3772 = vmatpush.bf16.msra.mxu0 %v3721
    %3773 = vmatpush.bf16.msra.mxu0 %v3720
    %3774 = vmatpush.bf16.msra.mxu0 %v3719
    %3775 = vmatmul.bf16.gmra.mxu0 %v3606
    %v3776 = vpop.f32.mrf.mxu0
    %v3777 = vadd.f32 %v3753, %v3776
    %v3778 = vpop.f32.mrf.mxu0
    %v3779 = vadd.f32 %v3755, %v3778
    %3780 = vmatmul.bf16.gmra.mxu0 %v3608
    %v3781 = vpop.f32.mrf.mxu0
    %v3782 = vadd.f32 %v3758, %v3781
    %v3783 = vpop.f32.mrf.mxu0
    %v3784 = vadd.f32 %v3760, %v3783
    %3785 = vmatmul.bf16.gmra.mxu0 %v3610
    %v3786 = vpop.f32.mrf.mxu0
    %v3787 = vadd.f32 %v3763, %v3786
    %v3788 = vpop.f32.mrf.mxu0
    %v3789 = vadd.f32 %v3765, %v3788
    %3790 = vdwg.mxu0
    %v3791 = vadd.f32 %v3212, %v3777
    %v3792 = vadd.f32 %v3213, %v3779
    %v3793 = vadd.f32 %v3214, %v3782
    %v3794 = vadd.f32 %v3215, %v3784
    %v3795 = vadd.f32 %v3216, %v3787
    %v3796 = vadd.f32 %v3217, %v3789
    %3797 = vadd.xlane.f32.xlu0 %v3791
    %v3798 = vpop.xlane.xlu0 %3797
    %3799 = vadd.xlane.f32.xlu0 %v3792
    %v3800 = vpop.xlane.xlu0 %3799
    %3801 = vadd.xlane.f32.xlu0 %v3793
    %v3802 = vpop.xlane.xlu0 %3801
    %3803 = vadd.xlane.f32.xlu0 %v3794
    %v3804 = vpop.xlane.xlu0 %3803
    %3805 = vadd.xlane.f32.xlu0 %v3795
    %v3806 = vpop.xlane.xlu0 %3805
    %3807 = vadd.xlane.f32.xlu0 %v3796
    %v3808 = vpop.xlane.xlu0 %3807
    %v3809 = vmul.f32 %v3798, 0.008333334
    %v3810 = vmul.f32 %v3800, 0.008333334
    %v3811 = vmul.f32 %v3802, 0.008333334
    %v3812 = vmul.f32 %v3804, 0.008333334
    %v3813 = vmul.f32 %v3806, 0.008333334
    %v3814 = vmul.f32 %v3808, 0.008333334
    %v3815 = vsub.f32 %v3791, %v3809
    %v3816 = vsub.f32 %v3792, %v3810
    %v3817 = vsub.f32 %v3793, %v3811
    %v3818 = vsub.f32 %v3794, %v3812
    %v3819 = vsub.f32 %v3795, %v3813
    %v3820 = vsub.f32 %v3796, %v3814
    %v3821 = vmul.f32 %v3815, %v225
    %v3822 = vmul.f32 %v3816, %v225
    %v3823 = vmul.f32 %v3817, %v225
    %v3824 = vmul.f32 %v3818, %v225
    %v3825 = vmul.f32 %v3819, %v225
    %v3826 = vmul.f32 %v3820, %v225
    %v3827 = vmul.f32 %v3821, %v3821
    %v3828 = vmul.f32 %v3822, %v3822
    %v3829 = vmul.f32 %v3823, %v3823
    %v3830 = vmul.f32 %v3824, %v3824
    %v3831 = vmul.f32 %v3825, %v3825
    %v3832 = vmul.f32 %v3826, %v3826
    %3833 = vadd.xlane.f32.xlu0 %v3827
    %v3834 = vpop.xlane.xlu0 %3833
    %3835 = vadd.xlane.f32.xlu0 %v3828
    %v3836 = vpop.xlane.xlu0 %3835
    %3837 = vadd.xlane.f32.xlu0 %v3829
    %v3838 = vpop.xlane.xlu0 %3837
    %3839 = vadd.xlane.f32.xlu0 %v3830
    %v3840 = vpop.xlane.xlu0 %3839
    %3841 = vadd.xlane.f32.xlu0 %v3831
    %v3842 = vpop.xlane.xlu0 %3841
    %3843 = vadd.xlane.f32.xlu0 %v3832
    %v3844 = vpop.xlane.xlu0 %3843
    %v3845 = vmul.f32 %v3834, 0.008333334
    %v3846 = vmul.f32 %v3836, 0.008333334
    %v3847 = vmul.f32 %v3838, 0.008333334
    %v3848 = vmul.f32 %v3840, 0.008333334
    %v3849 = vmul.f32 %v3842, 0.008333334
    %v3850 = vmul.f32 %v3844, 0.008333334
    %v3851 = vadd.f32 %v3845, 1e-05
    %v3852 = vadd.f32 %v3846, 1e-05
    %v3853 = vadd.f32 %v3847, 1e-05
    %v3854 = vadd.f32 %v3848, 1e-05
    %v3855 = vadd.f32 %v3849, 1e-05
    %v3856 = vadd.f32 %v3850, 1e-05
    %v3857 = vrsqrt.pop %v3851
    %v3858 = vmul.f32 %v3857, %v3851
    %v3859 = vmul.f32 %v3858, %v3857
    %v3860 = vmul.f32 0.5, %v3859
    %v3861 = vsub.f32 1.5, %v3860
    %v3862 = vmul.f32 %v3857, %v3861
    %vm3863 = vweird.f32 %v3851
    %vm3864 = vweird.f32 %v3857
    %vm3865 = vmor %vm3863, %vm3864
    %v3866 = vsel %vm3865, %v3857, %v3862
    %v3867 = vrsqrt.pop %v3852
    %v3868 = vmul.f32 %v3867, %v3852
    %v3869 = vmul.f32 %v3868, %v3867
    %v3870 = vmul.f32 0.5, %v3869
    %v3871 = vsub.f32 1.5, %v3870
    %v3872 = vmul.f32 %v3867, %v3871
    %vm3873 = vweird.f32 %v3852
    %vm3874 = vweird.f32 %v3867
    %vm3875 = vmor %vm3873, %vm3874
    %v3876 = vsel %vm3875, %v3867, %v3872
    %v3877 = vrsqrt.pop %v3853
    %v3878 = vmul.f32 %v3877, %v3853
    %v3879 = vmul.f32 %v3878, %v3877
    %v3880 = vmul.f32 0.5, %v3879
    %v3881 = vsub.f32 1.5, %v3880
    %v3882 = vmul.f32 %v3877, %v3881
    %vm3883 = vweird.f32 %v3853
    %vm3884 = vweird.f32 %v3877
    %vm3885 = vmor %vm3883, %vm3884
    %v3886 = vsel %vm3885, %v3877, %v3882
    %v3887 = vrsqrt.pop %v3854
    %v3888 = vmul.f32 %v3887, %v3854
    %v3889 = vmul.f32 %v3888, %v3887
    %v3890 = vmul.f32 0.5, %v3889
    %v3891 = vsub.f32 1.5, %v3890
    %v3892 = vmul.f32 %v3887, %v3891
    %vm3893 = vweird.f32 %v3854
    %vm3894 = vweird.f32 %v3887
    %vm3895 = vmor %vm3893, %vm3894
    %v3896 = vsel %vm3895, %v3887, %v3892
    %v3897 = vrsqrt.pop %v3855
    %v3898 = vmul.f32 %v3897, %v3855
    %v3899 = vmul.f32 %v3898, %v3897
    %v3900 = vmul.f32 0.5, %v3899
    %v3901 = vsub.f32 1.5, %v3900
    %v3902 = vmul.f32 %v3897, %v3901
    %vm3903 = vweird.f32 %v3855
    %vm3904 = vweird.f32 %v3897
    %vm3905 = vmor %vm3903, %vm3904
    %v3906 = vsel %vm3905, %v3897, %v3902
    %v3907 = vrsqrt.pop %v3856
    %v3908 = vmul.f32 %v3907, %v3856
    %v3909 = vmul.f32 %v3908, %v3907
    %v3910 = vmul.f32 0.5, %v3909
    %v3911 = vsub.f32 1.5, %v3910
    %v3912 = vmul.f32 %v3907, %v3911
    %vm3913 = vweird.f32 %v3856
    %vm3914 = vweird.f32 %v3907
    %vm3915 = vmor %vm3913, %vm3914
    %v3916 = vsel %vm3915, %v3907, %v3912
    %v3917 = vmul.f32 %v3821, %v3866
    %v3918 = vmul.f32 %v3822, %v3876
    %v3919 = vmul.f32 %v3823, %v3886
    %v3920 = vmul.f32 %v3824, %v3896
    %v3921 = vmul.f32 %v3825, %v3906
    %v3922 = vmul.f32 %v3826, %v3916
    %v3923 = vpack.c.bf16 %v3918, %v3917
    %v3924 = vpack.c.bf16 %v3920, %v3919
    %v3925 = vpack.c.bf16 %v3922, %v3921
    %s3926 = scalar_lea.vmem [#allocation11], 192
    %v3927 = vld [vmem:[%s3926] sm:$0xff]
    %v3928 = vld [vmem:[%s3926 + $0x8] sm:$0xf]
    %v3929 = vld [vmem:[%s3926 + $0xc] sm:$0xff]
    %v3930 = vld [vmem:[%s3926 + $0x14] sm:$0xf]
    %v3931 = vld [vmem:[%s3926 + $0x18] sm:$0xff]
    %v3932 = vld [vmem:[%s3926 + $0x20] sm:$0xf]
    %v3933 = vld [vmem:[%s3926 + $0x24] sm:$0xff]
    %v3934 = vld [vmem:[%s3926 + $0x2c] sm:$0xf]
    %v3935 = vld [vmem:[%s3926 + $0x30] sm:$0xff]
    %v3936 = vld [vmem:[%s3926 + $0x38] sm:$0xf]
    %v3937 = vld [vmem:[%s3926 + $0x3c] sm:$0xff]
    %v3938 = vld [vmem:[%s3926 + $0x44] sm:$0xf]
    %v3939 = vld [vmem:[%s3926 + $0x48] sm:$0xff]
    %v3940 = vld [vmem:[%s3926 + $0x50] sm:$0xf]
    %v3941 = vld [vmem:[%s3926 + $0x54] sm:$0xff]
    %v3942 = vld [vmem:[%s3926 + $0x5c] sm:$0xf]
    %v3943 = vld [vmem:[%s3926 + $0x60] sm:$0xff]
    %v3944 = vld [vmem:[%s3926 + $0x68] sm:$0xf]
    %v3945 = vld [vmem:[%s3926 + $0x6c] sm:$0xff]
    %v3946 = vld [vmem:[%s3926 + $0x74] sm:$0xf]
    %v3947 = vld [vmem:[%s3926 + $0x78] sm:$0xff]
    %v3948 = vld [vmem:[%s3926 + $0x80] sm:$0xf]
    %v3949 = vld [vmem:[%s3926 + $0x84] sm:$0xff]
    %v3950 = vld [vmem:[%s3926 + $0x8c] sm:$0xf]
    %v3951 = vld [vmem:[%s3926 + $0x90] sm:$0xff]
    %v3952 = vld [vmem:[%s3926 + $0x98] sm:$0xf]
    %v3953 = vld [vmem:[%s3926 + $0x9c] sm:$0xff]
    %v3954 = vld [vmem:[%s3926 + $0xa4] sm:$0xf]
    %v3955 = vld [vmem:[%s3926 + $0xa8] sm:$0xff]
    %v3956 = vld [vmem:[%s3926 + $0xb0] sm:$0xf]
    %v3957 = vld [vmem:[%s3926 + $0xb4] sm:$0xff]
    %v3958 = vld [vmem:[%s3926 + $0xbc] sm:$0xf]
    %s3959 = scalar_lea.vmem [#allocation13], 3
    %v3960 = vld [vmem:[%s3959] sm:$0x7]
    %v3962 = vperm.slane %v3960, 0
    %v3963 = vperm.slane %v3960, 1
    %v3964 = vperm.slane %v3960, 2
    %v4000 = vunpack.c.l.b16 %v3927
    %v4001 = vunpack.c.h.b16 %v3927
    %v4002 = vunpack.c.l.b16 %v3928
    %v4003 = vunpack.c.l.b16 %v3929
    %v4004 = vunpack.c.h.b16 %v3929
    %v4005 = vunpack.c.l.b16 %v3930
    %v4006 = vunpack.c.l.b16 %v3931
    %v4007 = vunpack.c.h.b16 %v3931
    %v4008 = vunpack.c.l.b16 %v3932
    %v4009 = vunpack.c.l.b16 %v3933
    %v4010 = vunpack.c.h.b16 %v3933
    %v4011 = vunpack.c.l.b16 %v3934
    %v4012 = vunpack.c.l.b16 %v3935
    %v4013 = vunpack.c.h.b16 %v3935
    %v4014 = vunpack.c.l.b16 %v3936
    %v4015 = vunpack.c.l.b16 %v3937
    %v4016 = vunpack.c.h.b16 %v3937
    %v4017 = vunpack.c.l.b16 %v3938
    %v4018 = vunpack.c.l.b16 %v3939
    %v4019 = vunpack.c.h.b16 %v3939
    %v4020 = vunpack.c.l.b16 %v3940
    %v4021 = vunpack.c.l.b16 %v3941
    %v4022 = vunpack.c.h.b16 %v3941
    %v4023 = vunpack.c.l.b16 %v3942
    %v4024 = vunpack.c.l.b16 %v3943
    %v4025 = vunpack.c.h.b16 %v3943
    %v4026 = vunpack.c.l.b16 %v3944
    %v4027 = vunpack.c.l.b16 %v3945
    %v4028 = vunpack.c.h.b16 %v3945
    %v4029 = vunpack.c.l.b16 %v3946
    %v4030 = vunpack.c.l.b16 %v3947
    %v4031 = vunpack.c.h.b16 %v3947
    %v4032 = vunpack.c.l.b16 %v3948
    %v4033 = vunpack.c.l.b16 %v3949
    %v4034 = vunpack.c.h.b16 %v3949
    %v4035 = vunpack.c.l.b16 %v3950
    %v4036 = vunpack.c.l.b16 %v3951
    %v4037 = vunpack.c.h.b16 %v3951
    %v4038 = vunpack.c.l.b16 %v3952
    %v4039 = vunpack.c.l.b16 %v3953
    %v4040 = vunpack.c.h.b16 %v3953
    %v4041 = vunpack.c.l.b16 %v3954
    %v4042 = vunpack.c.l.b16 %v3955
    %v4043 = vunpack.c.h.b16 %v3955
    %v4044 = vunpack.c.l.b16 %v3956
    %v4045 = vunpack.c.l.b16 %v3957
    %v4046 = vunpack.c.h.b16 %v3957
    %v4047 = vunpack.c.l.b16 %v3958
    %v4048 = vpack.c.b16 %v4003, %v4000
    %v4049 = vpack.c.b16 %v4004, %v4001
    %v4050 = vpack.c.b16 %v4005, %v4002
    %v4051 = vpack.c.b16 %v4009, %v4006
    %v4052 = vpack.c.b16 %v4010, %v4007
    %v4053 = vpack.c.b16 %v4011, %v4008
    %v4054 = vpack.c.b16 %v4015, %v4012
    %v4055 = vpack.c.b16 %v4016, %v4013
    %v4056 = vpack.c.b16 %v4017, %v4014
    %v4057 = vpack.c.b16 %v4021, %v4018
    %v4058 = vpack.c.b16 %v4022, %v4019
    %v4059 = vpack.c.b16 %v4023, %v4020
    %v4060 = vpack.c.b16 %v4027, %v4024
    %v4061 = vpack.c.b16 %v4028, %v4025
    %v4062 = vpack.c.b16 %v4029, %v4026
    %v4063 = vpack.c.b16 %v4033, %v4030
    %v4064 = vpack.c.b16 %v4034, %v4031
    %v4065 = vpack.c.b16 %v4035, %v4032
    %v4066 = vpack.c.b16 %v4039, %v4036
    %v4067 = vpack.c.b16 %v4040, %v4037
    %v4068 = vpack.c.b16 %v4041, %v4038
    %v4069 = vpack.c.b16 %v4045, %v4042
    %v4070 = vpack.c.b16 %v4046, %v4043
    %v4071 = vpack.c.b16 %v4047, %v4044
    %4096 = vmatpush.bf16.msra.mxu0 %v4069
    %4097 = vmatpush.bf16.msra.mxu0 %v4066
    %4098 = vmatpush.bf16.msra.mxu0 %v4063
    %4099 = vmatpush.bf16.msra.mxu0 %v4060
    %4100 = vmatpush.bf16.msra.mxu0 %v4057
    %4101 = vmatpush.bf16.msra.mxu0 %v4054
    %4102 = vmatpush.bf16.msra.mxu0 %v4051
    %4103 = vmatpush.bf16.msra.mxu0 %v4048
    %4104 = vmatmul.bf16.gmra.mxu0 %v3923
    %v4105 = vpop.f32.mrf.mxu0
    %v4106 = vadd.f32 %v3962, %v4105
    %v4107 = vpop.f32.mrf.mxu0
    %v4108 = vadd.f32 %v3962, %v4107
    %4109 = vmatmul.bf16.gmra.mxu0 %v3924
    %v4110 = vpop.f32.mrf.mxu0
    %v4111 = vadd.f32 %v3962, %v4110
    %v4112 = vpop.f32.mrf.mxu0
    %v4113 = vadd.f32 %v3962, %v4112
    %4114 = vmatmul.bf16.gmra.mxu0 %v3925
    %v4115 = vpop.f32.mrf.mxu0
    %v4116 = vadd.f32 %v3962, %v4115
    %v4117 = vpop.f32.mrf.mxu0
    %v4118 = vadd.f32 %v3962, %v4117
    %4119 = vdwg.mxu0
    %4120 = vmatpush.bf16.msra.mxu0 %v4070
    %4121 = vmatpush.bf16.msra.mxu0 %v4067
    %4122 = vmatpush.bf16.msra.mxu0 %v4064
    %4123 = vmatpush.bf16.msra.mxu0 %v4061
    %4124 = vmatpush.bf16.msra.mxu0 %v4058
    %4125 = vmatpush.bf16.msra.mxu0 %v4055
    %4126 = vmatpush.bf16.msra.mxu0 %v4052
    %4127 = vmatpush.bf16.msra.mxu0 %v4049
    %4128 = vmatmul.bf16.gmra.mxu0 %v3923
    %v4129 = vpop.f32.mrf.mxu0
    %v4130 = vadd.f32 %v3963, %v4129
    %v4131 = vpop.f32.mrf.mxu0
    %v4132 = vadd.f32 %v3963, %v4131
    %4133 = vmatmul.bf16.gmra.mxu0 %v3924
    %v4134 = vpop.f32.mrf.mxu0
    %v4135 = vadd.f32 %v3963, %v4134
    %v4136 = vpop.f32.mrf.mxu0
    %v4137 = vadd.f32 %v3963, %v4136
    %4138 = vmatmul.bf16.gmra.mxu0 %v3925
    %v4139 = vpop.f32.mrf.mxu0
    %v4140 = vadd.f32 %v3963, %v4139
    %v4141 = vpop.f32.mrf.mxu0
    %v4142 = vadd.f32 %v3963, %v4141
    %4143 = vdwg.mxu0
    %4144 = vmatpush.bf16.msra.mxu0 %v4071
    %4145 = vmatpush.bf16.msra.mxu0 %v4068
    %4146 = vmatpush.bf16.msra.mxu0 %v4065
    %4147 = vmatpush.bf16.msra.mxu0 %v4062
    %4148 = vmatpush.bf16.msra.mxu0 %v4059
    %4149 = vmatpush.bf16.msra.mxu0 %v4056
    %4150 = vmatpush.bf16.msra.mxu0 %v4053
    %4151 = vmatpush.bf16.msra.mxu0 %v4050
    %4152 = vmatmul.bf16.gmra.mxu0 %v3923
    %v4153 = vpop.f32.mrf.mxu0
    %v4154 = vadd.f32 %v3964, %v4153
    %v4155 = vpop.f32.mrf.mxu0
    %v4156 = vadd.f32 %v3964, %v4155
    %4157 = vmatmul.bf16.gmra.mxu0 %v3924
    %v4158 = vpop.f32.mrf.mxu0
    %v4159 = vadd.f32 %v3964, %v4158
    %v4160 = vpop.f32.mrf.mxu0
    %v4161 = vadd.f32 %v3964, %v4160
    %4162 = vmatmul.bf16.gmra.mxu0 %v3925
    %v4163 = vpop.f32.mrf.mxu0
    %v4164 = vadd.f32 %v3964, %v4163
    %v4165 = vpop.f32.mrf.mxu0
    %v4166 = vadd.f32 %v3964, %v4165
    %4167 = vdwg.mxu0
    %v4168 = vpack.c.bf16 %v4130, %v4106
    %v4169 = vpack.c.bf16 %v4154, %v4154
    %v4170 = vpack.c.bf16 %v4132, %v4108
    %v4171 = vpack.c.bf16 %v4156, %v4156
    %v4172 = vpack.c.bf16 %v4135, %v4111
    %v4173 = vpack.c.bf16 %v4159, %v4159
    %v4174 = vpack.c.bf16 %v4137, %v4113
    %v4175 = vpack.c.bf16 %v4161, %v4161
    %v4176 = vpack.c.bf16 %v4140, %v4116
    %v4177 = vpack.c.bf16 %v4164, %v4164
    %v4178 = vpack.c.bf16 %v4142, %v4118
    %v4179 = vpack.c.bf16 %v4166, %v4166
    %s4180 = scalar_lea.vmem [#allocation14], 64
    %v4181 = vld [vmem:[%s4180] sm:$0xf]
    %v4182 = vld [vmem:[%s4180 + $0x4] sm:$0xf]
    %v4183 = vld [vmem:[%s4180 + $0x8] sm:$0xf]
    %v4184 = vld [vmem:[%s4180 + $0xc] sm:$0xf]
    %v4185 = vld [vmem:[%s4180 + $0x10] sm:$0xf]
    %v4186 = vld [vmem:[%s4180 + $0x14] sm:$0xf]
    %v4187 = vld [vmem:[%s4180 + $0x18] sm:$0xf]
    %v4188 = vld [vmem:[%s4180 + $0x1c] sm:$0xf]
    %v4189 = vld [vmem:[%s4180 + $0x20] sm:$0xf]
    %v4190 = vld [vmem:[%s4180 + $0x24] sm:$0xf]
    %v4191 = vld [vmem:[%s4180 + $0x28] sm:$0xf]
    %v4192 = vld [vmem:[%s4180 + $0x2c] sm:$0xf]
    %v4193 = vld [vmem:[%s4180 + $0x30] sm:$0xf]
    %v4194 = vld [vmem:[%s4180 + $0x34] sm:$0xf]
    %v4195 = vld [vmem:[%s4180 + $0x38] sm:$0xf]
    %v4196 = vld [vmem:[%s4180 + $0x3c] sm:$0xf]
    %v4200 = vrot.slane %v4168, 4
    %v4201 = vrot.slane %v4170, 4
    %v4202 = vrot.slane %v4172, 4
    %v4203 = vunpack.c.l.b16 %v4168
    %v4204 = vunpack.c.l.b16 %v4170
    %v4205 = vunpack.c.l.b16 %v4172
    %v4206 = vpack.c.b16 %v4204, %v4203
    %v4207 = vpack.c.b16 %v4205, %v4205
    %v4208 = vunpack.c.l.b16 %v4200
    %v4209 = vunpack.c.l.b16 %v4201
    %v4210 = vunpack.c.l.b16 %v4202
    %v4211 = vpack.c.b16 %v4209, %v4208
    %v4212 = vpack.c.b16 %v4210, %v4210
    %v4214 = vsel %vm855, %v4206, 0
    %v4217 = vsel %vm855, %v4207, 0
    %v4220 = vsel %vm855, %v4211, 0
    %v4223 = vsel %vm855, %v4212, 0
    %4225 = vmatpush.bf16.xpose.msra.mxu0 0
    %4226 = vmatpush.bf16.xpose.msra.mxu0 0
    %4227 = vmatpush.bf16.xpose.msra.mxu0 0
    %4228 = vmatpush.bf16.xpose.msra.mxu0 0
    %4229 = vmatpush.bf16.xpose.msra.mxu0 0
    %4230 = vmatpush.bf16.xpose.msra.mxu0 0
    %4231 = vmatpush.bf16.xpose.msra.mxu0 %v4223
    %4232 = vmatpush.bf16.xpose.msra.mxu0 %v4220
    %4233 = vmatmul.bf16.gmra.mxu0 %v4214
    %v4234 = vpop.f32.mrf.mxu0
    %v4235 = vadd.f32 0.0, %v4234
    %v4236 = vpop.f32.mrf.mxu0
    %v4237 = vadd.f32 0.0, %v4236
    %4238 = vmatmul.bf16.gmra.mxu0 %v4217
    %v4239 = vpop.f32.mrf.mxu0
    %v4240 = vadd.f32 0.0, %v4239
    %v4241 = vpop.f32.mrf.mxu0
    %4242 = vdwg.mxu0
    %v4246 = vrot.slane %v4174, 4
    %v4247 = vrot.slane %v4176, 4
    %v4248 = vrot.slane %v4178, 4
    %v4249 = vunpack.c.l.b16 %v4174
    %v4250 = vunpack.c.l.b16 %v4176
    %v4251 = vunpack.c.l.b16 %v4178
    %v4252 = vpack.c.b16 %v4250, %v4249
    %v4253 = vpack.c.b16 %v4251, %v4251
    %v4254 = vunpack.c.l.b16 %v4246
    %v4255 = vunpack.c.l.b16 %v4247
    %v4256 = vunpack.c.l.b16 %v4248
    %v4257 = vpack.c.b16 %v4255, %v4254
    %v4258 = vpack.c.b16 %v4256, %v4256
    %v4260 = vsel %vm855, %v4252, 0
    %v4263 = vsel %vm855, %v4253, 0
    %v4266 = vsel %vm855, %v4257, 0
    %v4269 = vsel %vm855, %v4258, 0
    %4271 = vmatpush.bf16.xpose.msra.mxu0 0
    %4272 = vmatpush.bf16.xpose.msra.mxu0 0
    %4273 = vmatpush.bf16.xpose.msra.mxu0 0
    %4274 = vmatpush.bf16.xpose.msra.mxu0 0
    %4275 = vmatpush.bf16.xpose.msra.mxu0 0
    %4276 = vmatpush.bf16.xpose.msra.mxu0 0
    %4277 = vmatpush.bf16.xpose.msra.mxu0 %v4269
    %4278 = vmatpush.bf16.xpose.msra.mxu0 %v4266
    %4279 = vmatmul.bf16.gmra.mxu0 %v4260
    %v4280 = vpop.f32.mrf.mxu0
    %v4281 = vadd.f32 0.0, %v4280
    %v4282 = vpop.f32.mrf.mxu0
    %v4283 = vadd.f32 0.0, %v4282
    %4284 = vmatmul.bf16.gmra.mxu0 %v4263
    %v4285 = vpop.f32.mrf.mxu0
    %v4286 = vadd.f32 0.0, %v4285
    %v4287 = vpop.f32.mrf.mxu0
    %4288 = vdwg.mxu0
    %v4289 = vsel %vm932, %v4235, -inf
    %4290 = vmax.xlane.f32.xlu0 %v4289
    %v4291 = vpop.xlane.xlu0 %4290
    %v4292 = vsel %vm932, %v4237, -inf
    %4293 = vmax.xlane.f32.xlu0 %v4292
    %v4294 = vpop.xlane.xlu0 %4293
    %v4295 = vsel %vm932, %v4240, -inf
    %4296 = vmax.xlane.f32.xlu0 %v4295
    %v4297 = vpop.xlane.xlu0 %4296
    %v4298 = vsel %vm932, %v4281, -inf
    %4299 = vmax.xlane.f32.xlu0 %v4298
    %v4300 = vpop.xlane.xlu0 %4299
    %v4301 = vsel %vm932, %v4283, -inf
    %4302 = vmax.xlane.f32.xlu0 %v4301
    %v4303 = vpop.xlane.xlu0 %4302
    %v4304 = vsel %vm932, %v4286, -inf
    %4305 = vmax.xlane.f32.xlu0 %v4304
    %v4306 = vpop.xlane.xlu0 %4305
    %v4307 = vsub.f32 %v4235, %v4291
    %v4308 = vsub.f32 %v4237, %v4294
    %v4309 = vsub.f32 %v4240, %v4297
    %v4310 = vsub.f32 %v4281, %v4300
    %v4311 = vsub.f32 %v4283, %v4303
    %v4312 = vsub.f32 %v4286, %v4306
    %v4313 = vmul.f32 %v4307, 1.442695
    %v4314 = vpow.pop %v4313
    %v4315 = vmul.f32 %v4308, 1.442695
    %v4316 = vpow.pop %v4315
    %v4317 = vmul.f32 %v4309, 1.442695
    %v4318 = vpow.pop %v4317
    %v4319 = vmul.f32 %v4310, 1.442695
    %v4320 = vpow.pop %v4319
    %v4321 = vmul.f32 %v4311, 1.442695
    %v4322 = vpow.pop %v4321
    %v4323 = vmul.f32 %v4312, 1.442695
    %v4324 = vpow.pop %v4323
    %v4325 = vsel %vm932, %v4314, 0.0
    %4326 = vadd.xlane.f32.xlu0 %v4325
    %v4327 = vpop.xlane.xlu0 %4326
    %v4328 = vsel %vm932, %v4316, 0.0
    %4329 = vadd.xlane.f32.xlu0 %v4328
    %v4330 = vpop.xlane.xlu0 %4329
    %v4331 = vsel %vm932, %v4318, 0.0
    %4332 = vadd.xlane.f32.xlu0 %v4331
    %v4333 = vpop.xlane.xlu0 %4332
    %v4334 = vsel %vm932, %v4320, 0.0
    %4335 = vadd.xlane.f32.xlu0 %v4334
    %v4336 = vpop.xlane.xlu0 %4335
    %v4337 = vsel %vm932, %v4322, 0.0
    %4338 = vadd.xlane.f32.xlu0 %v4337
    %v4339 = vpop.xlane.xlu0 %4338
    %v4340 = vsel %vm932, %v4324, 0.0
    %4341 = vadd.xlane.f32.xlu0 %v4340
    %v4342 = vpop.xlane.xlu0 %4341
    %v4343 = vrcp.pop %v4327
    %v4344 = vrcp.pop %v4330
    %v4345 = vrcp.pop %v4333
    %v4346 = vrcp.pop %v4336
    %v4347 = vrcp.pop %v4339
    %v4348 = vrcp.pop %v4342
    %v4349 = vmul.f32 %v4314, %v4343
    %v4350 = vmul.f32 %v4316, %v4344
    %v4351 = vmul.f32 %v4318, %v4345
    %v4352 = vmul.f32 %v4320, %v4346
    %v4353 = vmul.f32 %v4322, %v4347
    %v4354 = vmul.f32 %v4324, %v4348
    %v4355 = vpack.c.bf16 %v4349, %v4349
    %v4356 = vpack.c.bf16 %v4350, %v4350
    %v4357 = vpack.c.bf16 %v4351, %v4351
    %v4358 = vpack.c.bf16 %v4352, %v4352
    %v4359 = vpack.c.bf16 %v4353, %v4353
    %v4360 = vpack.c.bf16 %v4354, %v4354
    %v4364 = vunpack.c.l.b16 %v4355
    %v4365 = vunpack.c.l.b16 %v4356
    %v4366 = vunpack.c.l.b16 %v4357
    %v4367 = vpack.c.b16 %v4365, %v4364
    %v4368 = vpack.c.b16 %v4366, %v4366
    %v4372 = vunpack.c.l.b16 %v4169
    %v4373 = vunpack.c.l.b16 %v4171
    %v4374 = vunpack.c.l.b16 %v4173
    %v4375 = vpack.c.b16 %v4373, %v4372
    %v4376 = vpack.c.b16 %v4374, %v4374
    %v4379 = vsel %vm932, %v4367, 0
    %v4382 = vsel %vm932, %v4368, 0
    %v4385 = vsel %vm1028, %v4376, 0
    %4387 = vmatpush.bf16.msra.mxu0 0
    %4388 = vmatpush.bf16.msra.mxu0 0
    %4389 = vmatpush.bf16.msra.mxu0 0
    %4390 = vmatpush.bf16.msra.mxu0 0
    %4391 = vmatpush.bf16.msra.mxu0 0
    %4392 = vmatpush.bf16.msra.mxu0 0
    %4393 = vmatpush.bf16.msra.mxu0 %v4385
    %4394 = vmatpush.bf16.msra.mxu0 %v4375
    %4395 = vmatmul.bf16.gmra.mxu0 %v4379
    %v4396 = vpop.f32.mrf.mxu0
    %v4397 = vadd.f32 0.0, %v4396
    %v4398 = vpop.f32.mrf.mxu0
    %v4399 = vadd.f32 0.0, %v4398
    %4400 = vmatmul.bf16.gmra.mxu0 %v4382
    %v4401 = vpop.f32.mrf.mxu0
    %v4402 = vadd.f32 0.0, %v4401
    %v4403 = vpop.f32.mrf.mxu0
    %4404 = vdwg.mxu0
    %v4408 = vunpack.c.l.b16 %v4358
    %v4409 = vunpack.c.l.b16 %v4359
    %v4410 = vunpack.c.l.b16 %v4360
    %v4411 = vpack.c.b16 %v4409, %v4408
    %v4412 = vpack.c.b16 %v4410, %v4410
    %v4416 = vunpack.c.l.b16 %v4175
    %v4417 = vunpack.c.l.b16 %v4177
    %v4418 = vunpack.c.l.b16 %v4179
    %v4419 = vpack.c.b16 %v4417, %v4416
    %v4420 = vpack.c.b16 %v4418, %v4418
    %v4423 = vsel %vm932, %v4411, 0
    %v4426 = vsel %vm932, %v4412, 0
    %v4429 = vsel %vm1028, %v4420, 0
    %4431 = vmatpush.bf16.msra.mxu0 0
    %4432 = vmatpush.bf16.msra.mxu0 0
    %4433 = vmatpush.bf16.msra.mxu0 0
    %4434 = vmatpush.bf16.msra.mxu0 0
    %4435 = vmatpush.bf16.msra.mxu0 0
    %4436 = vmatpush.bf16.msra.mxu0 0
    %4437 = vmatpush.bf16.msra.mxu0 %v4429
    %4438 = vmatpush.bf16.msra.mxu0 %v4419
    %4439 = vmatmul.bf16.gmra.mxu0 %v4423
    %v4440 = vpop.f32.mrf.mxu0
    %v4441 = vadd.f32 0.0, %v4440
    %v4442 = vpop.f32.mrf.mxu0
    %v4443 = vadd.f32 0.0, %v4442
    %4444 = vmatmul.bf16.gmra.mxu0 %v4426
    %v4445 = vpop.f32.mrf.mxu0
    %v4446 = vadd.f32 0.0, %v4445
    %v4447 = vpop.f32.mrf.mxu0
    %4448 = vdwg.mxu0
    %v4449 = vpack.c.bf16 %v4399, %v4397
    %v4450 = vpack.c.bf16 %v4441, %v4402
    %v4451 = vpack.c.bf16 %v4446, %v4443
    %4452 = vrot.lane.b32.xlu0 %v4168, 112
    %v4453 = vpop.permute.xlu0 %4452
    %4454 = vrot.lane.b32.xlu0 %v4170, 112
    %v4455 = vpop.permute.xlu0 %4454
    %4456 = vrot.lane.b32.xlu0 %v4172, 112
    %v4457 = vpop.permute.xlu0 %4456
    %v4458 = vrot.slane %v4453, 4
    %v4459 = vrot.slane %v4455, 4
    %v4460 = vrot.slane %v4457, 4
    %4461 = vrot.lane.b32.xlu0 %v4206, 112
    %v4462 = vpop.permute.xlu0 %4461
    %4463 = vrot.lane.b32.xlu0 %v4207, 112
    %v4464 = vpop.permute.xlu0 %4463
    %v4465 = vunpack.c.l.b16 %v4458
    %v4466 = vunpack.c.l.b16 %v4459
    %v4467 = vunpack.c.l.b16 %v4460
    %v4468 = vpack.c.b16 %v4466, %v4465
    %v4469 = vpack.c.b16 %v4467, %v4467
    %v4471 = vsel %vm855, %v4462, 0
    %v4474 = vsel %vm855, %v4464, 0
    %v4477 = vsel %vm855, %v4468, 0
    %v4480 = vsel %vm855, %v4469, 0
    %4482 = vmatpush.bf16.xpose.msra.mxu0 0
    %4483 = vmatpush.bf16.xpose.msra.mxu0 0
    %4484 = vmatpush.bf16.xpose.msra.mxu0 0
    %4485 = vmatpush.bf16.xpose.msra.mxu0 0
    %4486 = vmatpush.bf16.xpose.msra.mxu0 0
    %4487 = vmatpush.bf16.xpose.msra.mxu0 0
    %4488 = vmatpush.bf16.xpose.msra.mxu0 %v4480
    %4489 = vmatpush.bf16.xpose.msra.mxu0 %v4477
    %4490 = vmatmul.bf16.gmra.mxu0 %v4471
    %v4491 = vpop.f32.mrf.mxu0
    %v4492 = vadd.f32 0.0, %v4491
    %v4493 = vpop.f32.mrf.mxu0
    %v4494 = vadd.f32 0.0, %v4493
    %4495 = vmatmul.bf16.gmra.mxu0 %v4474
    %v4496 = vpop.f32.mrf.mxu0
    %v4497 = vadd.f32 0.0, %v4496
    %v4498 = vpop.f32.mrf.mxu0
    %4499 = vdwg.mxu0
    %4500 = vrot.lane.b32.xlu0 %v4174, 112
    %v4501 = vpop.permute.xlu0 %4500
    %4502 = vrot.lane.b32.xlu0 %v4176, 112
    %v4503 = vpop.permute.xlu0 %4502
    %4504 = vrot.lane.b32.xlu0 %v4178, 112
    %v4505 = vpop.permute.xlu0 %4504
    %v4506 = vrot.slane %v4501, 4
    %v4507 = vrot.slane %v4503, 4
    %v4508 = vrot.slane %v4505, 4
    %4509 = vrot.lane.b32.xlu0 %v4252, 112
    %v4510 = vpop.permute.xlu0 %4509
    %4511 = vrot.lane.b32.xlu0 %v4253, 112
    %v4512 = vpop.permute.xlu0 %4511
    %v4513 = vunpack.c.l.b16 %v4506
    %v4514 = vunpack.c.l.b16 %v4507
    %v4515 = vunpack.c.l.b16 %v4508
    %v4516 = vpack.c.b16 %v4514, %v4513
    %v4517 = vpack.c.b16 %v4515, %v4515
    %v4519 = vsel %vm855, %v4510, 0
    %v4522 = vsel %vm855, %v4512, 0
    %v4525 = vsel %vm855, %v4516, 0
    %v4528 = vsel %vm855, %v4517, 0
    %4530 = vmatpush.bf16.xpose.msra.mxu0 0
    %4531 = vmatpush.bf16.xpose.msra.mxu0 0
    %4532 = vmatpush.bf16.xpose.msra.mxu0 0
    %4533 = vmatpush.bf16.xpose.msra.mxu0 0
    %4534 = vmatpush.bf16.xpose.msra.mxu0 0
    %4535 = vmatpush.bf16.xpose.msra.mxu0 0
    %4536 = vmatpush.bf16.xpose.msra.mxu0 %v4528
    %4537 = vmatpush.bf16.xpose.msra.mxu0 %v4525
    %4538 = vmatmul.bf16.gmra.mxu0 %v4519
    %v4539 = vpop.f32.mrf.mxu0
    %v4540 = vadd.f32 0.0, %v4539
    %v4541 = vpop.f32.mrf.mxu0
    %v4542 = vadd.f32 0.0, %v4541
    %4543 = vmatmul.bf16.gmra.mxu0 %v4522
    %v4544 = vpop.f32.mrf.mxu0
    %v4545 = vadd.f32 0.0, %v4544
    %v4546 = vpop.f32.mrf.mxu0
    %4547 = vdwg.mxu0
    %v4548 = vsel %vm932, %v4492, -inf
    %4549 = vmax.xlane.f32.xlu0 %v4548
    %v4550 = vpop.xlane.xlu0 %4549
    %v4551 = vsel %vm932, %v4494, -inf
    %4552 = vmax.xlane.f32.xlu0 %v4551
    %v4553 = vpop.xlane.xlu0 %4552
    %v4554 = vsel %vm932, %v4497, -inf
    %4555 = vmax.xlane.f32.xlu0 %v4554
    %v4556 = vpop.xlane.xlu0 %4555
    %v4557 = vsel %vm932, %v4540, -inf
    %4558 = vmax.xlane.f32.xlu0 %v4557
    %v4559 = vpop.xlane.xlu0 %4558
    %v4560 = vsel %vm932, %v4542, -inf
    %4561 = vmax.xlane.f32.xlu0 %v4560
    %v4562 = vpop.xlane.xlu0 %4561
    %v4563 = vsel %vm932, %v4545, -inf
    %4564 = vmax.xlane.f32.xlu0 %v4563
    %v4565 = vpop.xlane.xlu0 %4564
    %v4566 = vsub.f32 %v4492, %v4550
    %v4567 = vsub.f32 %v4494, %v4553
    %v4568 = vsub.f32 %v4497, %v4556
    %v4569 = vsub.f32 %v4540, %v4559
    %v4570 = vsub.f32 %v4542, %v4562
    %v4571 = vsub.f32 %v4545, %v4565
    %v4572 = vmul.f32 %v4566, 1.442695
    %v4573 = vpow.pop %v4572
    %v4574 = vmul.f32 %v4567, 1.442695
    %v4575 = vpow.pop %v4574
    %v4576 = vmul.f32 %v4568, 1.442695
    %v4577 = vpow.pop %v4576
    %v4578 = vmul.f32 %v4569, 1.442695
    %v4579 = vpow.pop %v4578
    %v4580 = vmul.f32 %v4570, 1.442695
    %v4581 = vpow.pop %v4580
    %v4582 = vmul.f32 %v4571, 1.442695
    %v4583 = vpow.pop %v4582
    %v4584 = vsel %vm932, %v4573, 0.0
    %4585 = vadd.xlane.f32.xlu0 %v4584
    %v4586 = vpop.xlane.xlu0 %4585
    %v4587 = vsel %vm932, %v4575, 0.0
    %4588 = vadd.xlane.f32.xlu0 %v4587
    %v4589 = vpop.xlane.xlu0 %4588
    %v4590 = vsel %vm932, %v4577, 0.0
    %4591 = vadd.xlane.f32.xlu0 %v4590
    %v4592 = vpop.xlane.xlu0 %4591
    %v4593 = vsel %vm932, %v4579, 0.0
    %4594 = vadd.xlane.f32.xlu0 %v4593
    %v4595 = vpop.xlane.xlu0 %4594
    %v4596 = vsel %vm932, %v4581, 0.0
    %4597 = vadd.xlane.f32.xlu0 %v4596
    %v4598 = vpop.xlane.xlu0 %4597
    %v4599 = vsel %vm932, %v4583, 0.0
    %4600 = vadd.xlane.f32.xlu0 %v4599
    %v4601 = vpop.xlane.xlu0 %4600
    %v4602 = vrcp.pop %v4586
    %v4603 = vrcp.pop %v4589
    %v4604 = vrcp.pop %v4592
    %v4605 = vrcp.pop %v4595
    %v4606 = vrcp.pop %v4598
    %v4607 = vrcp.pop %v4601
    %v4608 = vmul.f32 %v4573, %v4602
    %v4609 = vmul.f32 %v4575, %v4603
    %v4610 = vmul.f32 %v4577, %v4604
    %v4611 = vmul.f32 %v4579, %v4605
    %v4612 = vmul.f32 %v4581, %v4606
    %v4613 = vmul.f32 %v4583, %v4607
    %v4614 = vpack.c.bf16 %v4608, %v4608
    %v4615 = vpack.c.bf16 %v4609, %v4609
    %v4616 = vpack.c.bf16 %v4610, %v4610
    %v4617 = vpack.c.bf16 %v4611, %v4611
    %v4618 = vpack.c.bf16 %v4612, %v4612
    %v4619 = vpack.c.bf16 %v4613, %v4613
    %v4623 = vunpack.c.l.b16 %v4614
    %v4624 = vunpack.c.l.b16 %v4615
    %v4625 = vunpack.c.l.b16 %v4616
    %v4626 = vpack.c.b16 %v4624, %v4623
    %v4627 = vpack.c.b16 %v4625, %v4625
    %4628 = vrot.lane.b32.xlu0 %v4375, 112
    %v4629 = vpop.permute.xlu0 %4628
    %4630 = vrot.lane.b32.xlu0 %v4376, 112
    %v4631 = vpop.permute.xlu0 %4630
    %v4634 = vsel %vm932, %v4626, 0
    %v4637 = vsel %vm932, %v4627, 0
    %v4640 = vsel %vm1028, %v4631, 0
    %4642 = vmatpush.bf16.msra.mxu0 0
    %4643 = vmatpush.bf16.msra.mxu0 0
    %4644 = vmatpush.bf16.msra.mxu0 0
    %4645 = vmatpush.bf16.msra.mxu0 0
    %4646 = vmatpush.bf16.msra.mxu0 0
    %4647 = vmatpush.bf16.msra.mxu0 0
    %4648 = vmatpush.bf16.msra.mxu0 %v4640
    %4649 = vmatpush.bf16.msra.mxu0 %v4629
    %4650 = vmatmul.bf16.gmra.mxu0 %v4634
    %v4651 = vpop.f32.mrf.mxu0
    %v4652 = vadd.f32 0.0, %v4651
    %v4653 = vpop.f32.mrf.mxu0
    %v4654 = vadd.f32 0.0, %v4653
    %4655 = vmatmul.bf16.gmra.mxu0 %v4637
    %v4656 = vpop.f32.mrf.mxu0
    %v4657 = vadd.f32 0.0, %v4656
    %v4658 = vpop.f32.mrf.mxu0
    %4659 = vdwg.mxu0
    %v4663 = vunpack.c.l.b16 %v4617
    %v4664 = vunpack.c.l.b16 %v4618
    %v4665 = vunpack.c.l.b16 %v4619
    %v4666 = vpack.c.b16 %v4664, %v4663
    %v4667 = vpack.c.b16 %v4665, %v4665
    %4668 = vrot.lane.b32.xlu0 %v4419, 112
    %v4669 = vpop.permute.xlu0 %4668
    %4670 = vrot.lane.b32.xlu0 %v4420, 112
    %v4671 = vpop.permute.xlu0 %4670
    %v4674 = vsel %vm932, %v4666, 0
    %v4677 = vsel %vm932, %v4667, 0
    %v4680 = vsel %vm1028, %v4671, 0
    %4682 = vmatpush.bf16.msra.mxu0 0
    %4683 = vmatpush.bf16.msra.mxu0 0
    %4684 = vmatpush.bf16.msra.mxu0 0
    %4685 = vmatpush.bf16.msra.mxu0 0
    %4686 = vmatpush.bf16.msra.mxu0 0
    %4687 = vmatpush.bf16.msra.mxu0 0
    %4688 = vmatpush.bf16.msra.mxu0 %v4680
    %4689 = vmatpush.bf16.msra.mxu0 %v4669
    %4690 = vmatmul.bf16.gmra.mxu0 %v4674
    %v4691 = vpop.f32.mrf.mxu0
    %v4692 = vadd.f32 0.0, %v4691
    %v4693 = vpop.f32.mrf.mxu0
    %v4694 = vadd.f32 0.0, %v4693
    %4695 = vmatmul.bf16.gmra.mxu0 %v4677
    %v4696 = vpop.f32.mrf.mxu0
    %v4697 = vadd.f32 0.0, %v4696
    %v4698 = vpop.f32.mrf.mxu0
    %4699 = vdwg.mxu0
    %v4700 = vpack.c.bf16 %v4654, %v4652
    %v4701 = vpack.c.bf16 %v4692, %v4657
    %v4702 = vpack.c.bf16 %v4697, %v4694
    %v4705 = vunpack.c.l.b16 %v4183
    %v4706 = vunpack.c.l.b16 %v4184
    %v4707 = vpack.c.b16 %v4706, %v4705
    %v4710 = vsel %vm855, %v4700, 0
    %v4713 = vsel %vm855, %v4701, 0
    %v4716 = vsel %vm855, %v4702, 0
    %4718 = vmatpush.bf16.msra.mxu0 0
    %4719 = vmatpush.bf16.msra.mxu0 0
    %4720 = vmatpush.bf16.msra.mxu0 0
    %4721 = vmatpush.bf16.msra.mxu0 0
    %4722 = vmatpush.bf16.msra.mxu0 0
    %4723 = vmatpush.bf16.msra.mxu0 0
    %4724 = vmatpush.bf16.msra.mxu0 0
    %4725 = vmatpush.bf16.msra.mxu0 %v4707
    %4726 = vmatmul.bf16.gmra.mxu0 %v4710
    %v4727 = vpop.f32.mrf.mxu0
    %v4728 = vadd.f32 0.0, %v4727
    %v4729 = vpop.f32.mrf.mxu0
    %v4730 = vadd.f32 0.0, %v4729
    %4731 = vmatmul.bf16.gmra.mxu0 %v4713
    %v4732 = vpop.f32.mrf.mxu0
    %v4733 = vadd.f32 0.0, %v4732
    %v4734 = vpop.f32.mrf.mxu0
    %v4735 = vadd.f32 0.0, %v4734
    %4736 = vmatmul.bf16.gmra.mxu0 %v4716
    %v4737 = vpop.f32.mrf.mxu0
    %v4738 = vadd.f32 0.0, %v4737
    %v4739 = vpop.f32.mrf.mxu0
    %v4740 = vadd.f32 0.0, %v4739
    %4741 = vdwg.mxu0
    %v4744 = vunpack.c.l.b16 %v4181
    %v4745 = vunpack.c.l.b16 %v4182
    %v4746 = vpack.c.b16 %v4745, %v4744
    %v4749 = vsel %vm855, %v4449, 0
    %v4752 = vsel %vm855, %v4450, 0
    %v4755 = vsel %vm855, %v4451, 0
    %4757 = vmatpush.bf16.msra.mxu0 0
    %4758 = vmatpush.bf16.msra.mxu0 0
    %4759 = vmatpush.bf16.msra.mxu0 0
    %4760 = vmatpush.bf16.msra.mxu0 0
    %4761 = vmatpush.bf16.msra.mxu0 0
    %4762 = vmatpush.bf16.msra.mxu0 0
    %4763 = vmatpush.bf16.msra.mxu0 0
    %4764 = vmatpush.bf16.msra.mxu0 %v4746
    %4765 = vmatmul.bf16.gmra.mxu0 %v4749
    %v4766 = vpop.f32.mrf.mxu0
    %v4767 = vadd.f32 %v4728, %v4766
    %v4768 = vpop.f32.mrf.mxu0
    %v4769 = vadd.f32 %v4730, %v4768
    %4770 = vmatmul.bf16.gmra.mxu0 %v4752
    %v4771 = vpop.f32.mrf.mxu0
    %v4772 = vadd.f32 %v4733, %v4771
    %v4773 = vpop.f32.mrf.mxu0
    %v4774 = vadd.f32 %v4735, %v4773
    %4775 = vmatmul.bf16.gmra.mxu0 %v4755
    %v4776 = vpop.f32.mrf.mxu0
    %v4777 = vadd.f32 %v4738, %v4776
    %v4778 = vpop.f32.mrf.mxu0
    %v4779 = vadd.f32 %v4740, %v4778
    %4780 = vdwg.mxu0
    %4781 = vrot.lane.b32.xlu0 %v4168, 96
    %v4782 = vpop.permute.xlu0 %4781
    %4783 = vrot.lane.b32.xlu0 %v4170, 96
    %v4784 = vpop.permute.xlu0 %4783
    %4785 = vrot.lane.b32.xlu0 %v4172, 96
    %v4786 = vpop.permute.xlu0 %4785
    %v4787 = vrot.slane %v4782, 4
    %v4788 = vrot.slane %v4784, 4
    %v4789 = vrot.slane %v4786, 4
    %4790 = vrot.lane.b32.xlu0 %v4206, 96
    %v4791 = vpop.permute.xlu0 %4790
    %4792 = vrot.lane.b32.xlu0 %v4207, 96
    %v4793 = vpop.permute.xlu0 %4792
    %v4794 = vunpack.c.l.b16 %v4787
    %v4795 = vunpack.c.l.b16 %v4788
    %v4796 = vunpack.c.l.b16 %v4789
    %v4797 = vpack.c.b16 %v4795, %v4794
    %v4798 = vpack.c.b16 %v4796, %v4796
    %v4800 = vsel %vm855, %v4791, 0
    %v4803 = vsel %vm855, %v4793, 0
    %v4806 = vsel %vm855, %v4797, 0
    %v4809 = vsel %vm855, %v4798, 0
    %4811 = vmatpush.bf16.xpose.msra.mxu0 0
    %4812 = vmatpush.bf16.xpose.msra.mxu0 0
    %4813 = vmatpush.bf16.xpose.msra.mxu0 0
    %4814 = vmatpush.bf16.xpose.msra.mxu0 0
    %4815 = vmatpush.bf16.xpose.msra.mxu0 0
    %4816 = vmatpush.bf16.xpose.msra.mxu0 0
    %4817 = vmatpush.bf16.xpose.msra.mxu0 %v4809
    %4818 = vmatpush.bf16.xpose.msra.mxu0 %v4806
    %4819 = vmatmul.bf16.gmra.mxu0 %v4800
    %v4820 = vpop.f32.mrf.mxu0
    %v4821 = vadd.f32 0.0, %v4820
    %v4822 = vpop.f32.mrf.mxu0
    %v4823 = vadd.f32 0.0, %v4822
    %4824 = vmatmul.bf16.gmra.mxu0 %v4803
    %v4825 = vpop.f32.mrf.mxu0
    %v4826 = vadd.f32 0.0, %v4825
    %v4827 = vpop.f32.mrf.mxu0
    %4828 = vdwg.mxu0
    %4829 = vrot.lane.b32.xlu0 %v4174, 96
    %v4830 = vpop.permute.xlu0 %4829
    %4831 = vrot.lane.b32.xlu0 %v4176, 96
    %v4832 = vpop.permute.xlu0 %4831
    %4833 = vrot.lane.b32.xlu0 %v4178, 96
    %v4834 = vpop.permute.xlu0 %4833
    %v4835 = vrot.slane %v4830, 4
    %v4836 = vrot.slane %v4832, 4
    %v4837 = vrot.slane %v4834, 4
    %4838 = vrot.lane.b32.xlu0 %v4252, 96
    %v4839 = vpop.permute.xlu0 %4838
    %4840 = vrot.lane.b32.xlu0 %v4253, 96
    %v4841 = vpop.permute.xlu0 %4840
    %v4842 = vunpack.c.l.b16 %v4835
    %v4843 = vunpack.c.l.b16 %v4836
    %v4844 = vunpack.c.l.b16 %v4837
    %v4845 = vpack.c.b16 %v4843, %v4842
    %v4846 = vpack.c.b16 %v4844, %v4844
    %v4848 = vsel %vm855, %v4839, 0
    %v4851 = vsel %vm855, %v4841, 0
    %v4854 = vsel %vm855, %v4845, 0
    %v4857 = vsel %vm855, %v4846, 0
    %4859 = vmatpush.bf16.xpose.msra.mxu0 0
    %4860 = vmatpush.bf16.xpose.msra.mxu0 0
    %4861 = vmatpush.bf16.xpose.msra.mxu0 0
    %4862 = vmatpush.bf16.xpose.msra.mxu0 0
    %4863 = vmatpush.bf16.xpose.msra.mxu0 0
    %4864 = vmatpush.bf16.xpose.msra.mxu0 0
    %4865 = vmatpush.bf16.xpose.msra.mxu0 %v4857
    %4866 = vmatpush.bf16.xpose.msra.mxu0 %v4854
    %4867 = vmatmul.bf16.gmra.mxu0 %v4848
    %v4868 = vpop.f32.mrf.mxu0
    %v4869 = vadd.f32 0.0, %v4868
    %v4870 = vpop.f32.mrf.mxu0
    %v4871 = vadd.f32 0.0, %v4870
    %4872 = vmatmul.bf16.gmra.mxu0 %v4851
    %v4873 = vpop.f32.mrf.mxu0
    %v4874 = vadd.f32 0.0, %v4873
    %v4875 = vpop.f32.mrf.mxu0
    %4876 = vdwg.mxu0
    %v4877 = vsel %vm932, %v4821, -inf
    %4878 = vmax.xlane.f32.xlu0 %v4877
    %v4879 = vpop.xlane.xlu0 %4878
    %v4880 = vsel %vm932, %v4823, -inf
    %4881 = vmax.xlane.f32.xlu0 %v4880
    %v4882 = vpop.xlane.xlu0 %4881
    %v4883 = vsel %vm932, %v4826, -inf
    %4884 = vmax.xlane.f32.xlu0 %v4883
    %v4885 = vpop.xlane.xlu0 %4884
    %v4886 = vsel %vm932, %v4869, -inf
    %4887 = vmax.xlane.f32.xlu0 %v4886
    %v4888 = vpop.xlane.xlu0 %4887
    %v4889 = vsel %vm932, %v4871, -inf
    %4890 = vmax.xlane.f32.xlu0 %v4889
    %v4891 = vpop.xlane.xlu0 %4890
    %v4892 = vsel %vm932, %v4874, -inf
    %4893 = vmax.xlane.f32.xlu0 %v4892
    %v4894 = vpop.xlane.xlu0 %4893
    %v4895 = vsub.f32 %v4821, %v4879
    %v4896 = vsub.f32 %v4823, %v4882
    %v4897 = vsub.f32 %v4826, %v4885
    %v4898 = vsub.f32 %v4869, %v4888
    %v4899 = vsub.f32 %v4871, %v4891
    %v4900 = vsub.f32 %v4874, %v4894
    %v4901 = vmul.f32 %v4895, 1.442695
    %v4902 = vpow.pop %v4901
    %v4903 = vmul.f32 %v4896, 1.442695
    %v4904 = vpow.pop %v4903
    %v4905 = vmul.f32 %v4897, 1.442695
    %v4906 = vpow.pop %v4905
    %v4907 = vmul.f32 %v4898, 1.442695
    %v4908 = vpow.pop %v4907
    %v4909 = vmul.f32 %v4899, 1.442695
    %v4910 = vpow.pop %v4909
    %v4911 = vmul.f32 %v4900, 1.442695
    %v4912 = vpow.pop %v4911
    %v4913 = vsel %vm932, %v4902, 0.0
    %4914 = vadd.xlane.f32.xlu0 %v4913
    %v4915 = vpop.xlane.xlu0 %4914
    %v4916 = vsel %vm932, %v4904, 0.0
    %4917 = vadd.xlane.f32.xlu0 %v4916
    %v4918 = vpop.xlane.xlu0 %4917
    %v4919 = vsel %vm932, %v4906, 0.0
    %4920 = vadd.xlane.f32.xlu0 %v4919
    %v4921 = vpop.xlane.xlu0 %4920
    %v4922 = vsel %vm932, %v4908, 0.0
    %4923 = vadd.xlane.f32.xlu0 %v4922
    %v4924 = vpop.xlane.xlu0 %4923
    %v4925 = vsel %vm932, %v4910, 0.0
    %4926 = vadd.xlane.f32.xlu0 %v4925
    %v4927 = vpop.xlane.xlu0 %4926
    %v4928 = vsel %vm932, %v4912, 0.0
    %4929 = vadd.xlane.f32.xlu0 %v4928
    %v4930 = vpop.xlane.xlu0 %4929
    %v4931 = vrcp.pop %v4915
    %v4932 = vrcp.pop %v4918
    %v4933 = vrcp.pop %v4921
    %v4934 = vrcp.pop %v4924
    %v4935 = vrcp.pop %v4927
    %v4936 = vrcp.pop %v4930
    %v4937 = vmul.f32 %v4902, %v4931
    %v4938 = vmul.f32 %v4904, %v4932
    %v4939 = vmul.f32 %v4906, %v4933
    %v4940 = vmul.f32 %v4908, %v4934
    %v4941 = vmul.f32 %v4910, %v4935
    %v4942 = vmul.f32 %v4912, %v4936
    %v4943 = vpack.c.bf16 %v4937, %v4937
    %v4944 = vpack.c.bf16 %v4938, %v4938
    %v4945 = vpack.c.bf16 %v4939, %v4939
    %v4946 = vpack.c.bf16 %v4940, %v4940
    %v4947 = vpack.c.bf16 %v4941, %v4941
    %v4948 = vpack.c.bf16 %v4942, %v4942
    %v4952 = vunpack.c.l.b16 %v4943
    %v4953 = vunpack.c.l.b16 %v4944
    %v4954 = vunpack.c.l.b16 %v4945
    %v4955 = vpack.c.b16 %v4953, %v4952
    %v4956 = vpack.c.b16 %v4954, %v4954
    %4957 = vrot.lane.b32.xlu0 %v4375, 96
    %v4958 = vpop.permute.xlu0 %4957
    %4959 = vrot.lane.b32.xlu0 %v4376, 96
    %v4960 = vpop.permute.xlu0 %4959
    %v4963 = vsel %vm932, %v4955, 0
    %v4966 = vsel %vm932, %v4956, 0
    %v4969 = vsel %vm1028, %v4960, 0
    %4971 = vmatpush.bf16.msra.mxu0 0
    %4972 = vmatpush.bf16.msra.mxu0 0
    %4973 = vmatpush.bf16.msra.mxu0 0
    %4974 = vmatpush.bf16.msra.mxu0 0
    %4975 = vmatpush.bf16.msra.mxu0 0
    %4976 = vmatpush.bf16.msra.mxu0 0
    %4977 = vmatpush.bf16.msra.mxu0 %v4969
    %4978 = vmatpush.bf16.msra.mxu0 %v4958
    %4979 = vmatmul.bf16.gmra.mxu0 %v4963
    %v4980 = vpop.f32.mrf.mxu0
    %v4981 = vadd.f32 0.0, %v4980
    %v4982 = vpop.f32.mrf.mxu0
    %v4983 = vadd.f32 0.0, %v4982
    %4984 = vmatmul.bf16.gmra.mxu0 %v4966
    %v4985 = vpop.f32.mrf.mxu0
    %v4986 = vadd.f32 0.0, %v4985
    %v4987 = vpop.f32.mrf.mxu0
    %4988 = vdwg.mxu0
    %v4992 = vunpack.c.l.b16 %v4946
    %v4993 = vunpack.c.l.b16 %v4947
    %v4994 = vunpack.c.l.b16 %v4948
    %v4995 = vpack.c.b16 %v4993, %v4992
    %v4996 = vpack.c.b16 %v4994, %v4994
    %4997 = vrot.lane.b32.xlu0 %v4419, 96
    %v4998 = vpop.permute.xlu0 %4997
    %4999 = vrot.lane.b32.xlu0 %v4420, 96
    %v5000 = vpop.permute.xlu0 %4999
    %v5003 = vsel %vm932, %v4995, 0
    %v5006 = vsel %vm932, %v4996, 0
    %v5009 = vsel %vm1028, %v5000, 0
    %5011 = vmatpush.bf16.msra.mxu0 0
    %5012 = vmatpush.bf16.msra.mxu0 0
    %5013 = vmatpush.bf16.msra.mxu0 0
    %5014 = vmatpush.bf16.msra.mxu0 0
    %5015 = vmatpush.bf16.msra.mxu0 0
    %5016 = vmatpush.bf16.msra.mxu0 0
    %5017 = vmatpush.bf16.msra.mxu0 %v5009
    %5018 = vmatpush.bf16.msra.mxu0 %v4998
    %5019 = vmatmul.bf16.gmra.mxu0 %v5003
    %v5020 = vpop.f32.mrf.mxu0
    %v5021 = vadd.f32 0.0, %v5020
    %v5022 = vpop.f32.mrf.mxu0
    %v5023 = vadd.f32 0.0, %v5022
    %5024 = vmatmul.bf16.gmra.mxu0 %v5006
    %v5025 = vpop.f32.mrf.mxu0
    %v5026 = vadd.f32 0.0, %v5025
    %v5027 = vpop.f32.mrf.mxu0
    %5028 = vdwg.mxu0
    %v5029 = vpack.c.bf16 %v4983, %v4981
    %v5030 = vpack.c.bf16 %v5021, %v4986
    %v5031 = vpack.c.bf16 %v5026, %v5023
    %v5034 = vunpack.c.l.b16 %v4185
    %v5035 = vunpack.c.l.b16 %v4186
    %v5036 = vpack.c.b16 %v5035, %v5034
    %v5039 = vsel %vm855, %v5029, 0
    %v5042 = vsel %vm855, %v5030, 0
    %v5045 = vsel %vm855, %v5031, 0
    %5047 = vmatpush.bf16.msra.mxu0 0
    %5048 = vmatpush.bf16.msra.mxu0 0
    %5049 = vmatpush.bf16.msra.mxu0 0
    %5050 = vmatpush.bf16.msra.mxu0 0
    %5051 = vmatpush.bf16.msra.mxu0 0
    %5052 = vmatpush.bf16.msra.mxu0 0
    %5053 = vmatpush.bf16.msra.mxu0 0
    %5054 = vmatpush.bf16.msra.mxu0 %v5036
    %5055 = vmatmul.bf16.gmra.mxu0 %v5039
    %v5056 = vpop.f32.mrf.mxu0
    %v5057 = vadd.f32 0.0, %v5056
    %v5058 = vpop.f32.mrf.mxu0
    %v5059 = vadd.f32 0.0, %v5058
    %5060 = vmatmul.bf16.gmra.mxu0 %v5042
    %v5061 = vpop.f32.mrf.mxu0
    %v5062 = vadd.f32 0.0, %v5061
    %v5063 = vpop.f32.mrf.mxu0
    %v5064 = vadd.f32 0.0, %v5063
    %5065 = vmatmul.bf16.gmra.mxu0 %v5045
    %v5066 = vpop.f32.mrf.mxu0
    %v5067 = vadd.f32 0.0, %v5066
    %v5068 = vpop.f32.mrf.mxu0
    %v5069 = vadd.f32 0.0, %v5068
    %5070 = vdwg.mxu0
    %v5071 = vadd.f32 %v4767, %v5057
    %v5072 = vadd.f32 %v4769, %v5059
    %v5073 = vadd.f32 %v4772, %v5062
    %v5074 = vadd.f32 %v4774, %v5064
    %v5075 = vadd.f32 %v4777, %v5067
    %v5076 = vadd.f32 %v4779, %v5069
    %5077 = vrot.lane.b32.xlu0 %v4168, 80
    %v5078 = vpop.permute.xlu0 %5077
    %5079 = vrot.lane.b32.xlu0 %v4170, 80
    %v5080 = vpop.permute.xlu0 %5079
    %5081 = vrot.lane.b32.xlu0 %v4172, 80
    %v5082 = vpop.permute.xlu0 %5081
    %v5083 = vrot.slane %v5078, 4
    %v5084 = vrot.slane %v5080, 4
    %v5085 = vrot.slane %v5082, 4
    %5086 = vrot.lane.b32.xlu0 %v4206, 80
    %v5087 = vpop.permute.xlu0 %5086
    %5088 = vrot.lane.b32.xlu0 %v4207, 80
    %v5089 = vpop.permute.xlu0 %5088
    %v5090 = vunpack.c.l.b16 %v5083
    %v5091 = vunpack.c.l.b16 %v5084
    %v5092 = vunpack.c.l.b16 %v5085
    %v5093 = vpack.c.b16 %v5091, %v5090
    %v5094 = vpack.c.b16 %v5092, %v5092
    %v5096 = vsel %vm855, %v5087, 0
    %v5099 = vsel %vm855, %v5089, 0
    %v5102 = vsel %vm855, %v5093, 0
    %v5105 = vsel %vm855, %v5094, 0
    %5107 = vmatpush.bf16.xpose.msra.mxu0 0
    %5108 = vmatpush.bf16.xpose.msra.mxu0 0
    %5109 = vmatpush.bf16.xpose.msra.mxu0 0
    %5110 = vmatpush.bf16.xpose.msra.mxu0 0
    %5111 = vmatpush.bf16.xpose.msra.mxu0 0
    %5112 = vmatpush.bf16.xpose.msra.mxu0 0
    %5113 = vmatpush.bf16.xpose.msra.mxu0 %v5105
    %5114 = vmatpush.bf16.xpose.msra.mxu0 %v5102
    %5115 = vmatmul.bf16.gmra.mxu0 %v5096
    %v5116 = vpop.f32.mrf.mxu0
    %v5117 = vadd.f32 0.0, %v5116
    %v5118 = vpop.f32.mrf.mxu0
    %v5119 = vadd.f32 0.0, %v5118
    %5120 = vmatmul.bf16.gmra.mxu0 %v5099
    %v5121 = vpop.f32.mrf.mxu0
    %v5122 = vadd.f32 0.0, %v5121
    %v5123 = vpop.f32.mrf.mxu0
    %5124 = vdwg.mxu0
    %5125 = vrot.lane.b32.xlu0 %v4174, 80
    %v5126 = vpop.permute.xlu0 %5125
    %5127 = vrot.lane.b32.xlu0 %v4176, 80
    %v5128 = vpop.permute.xlu0 %5127
    %5129 = vrot.lane.b32.xlu0 %v4178, 80
    %v5130 = vpop.permute.xlu0 %5129
    %v5131 = vrot.slane %v5126, 4
    %v5132 = vrot.slane %v5128, 4
    %v5133 = vrot.slane %v5130, 4
    %5134 = vrot.lane.b32.xlu0 %v4252, 80
    %v5135 = vpop.permute.xlu0 %5134
    %5136 = vrot.lane.b32.xlu0 %v4253, 80
    %v5137 = vpop.permute.xlu0 %5136
    %v5138 = vunpack.c.l.b16 %v5131
    %v5139 = vunpack.c.l.b16 %v5132
    %v5140 = vunpack.c.l.b16 %v5133
    %v5141 = vpack.c.b16 %v5139, %v5138
    %v5142 = vpack.c.b16 %v5140, %v5140
    %v5144 = vsel %vm855, %v5135, 0
    %v5147 = vsel %vm855, %v5137, 0
    %v5150 = vsel %vm855, %v5141, 0
    %v5153 = vsel %vm855, %v5142, 0
    %5155 = vmatpush.bf16.xpose.msra.mxu0 0
    %5156 = vmatpush.bf16.xpose.msra.mxu0 0
    %5157 = vmatpush.bf16.xpose.msra.mxu0 0
    %5158 = vmatpush.bf16.xpose.msra.mxu0 0
    %5159 = vmatpush.bf16.xpose.msra.mxu0 0
    %5160 = vmatpush.bf16.xpose.msra.mxu0 0
    %5161 = vmatpush.bf16.xpose.msra.mxu0 %v5153
    %5162 = vmatpush.bf16.xpose.msra.mxu0 %v5150
    %5163 = vmatmul.bf16.gmra.mxu0 %v5144
    %v5164 = vpop.f32.mrf.mxu0
    %v5165 = vadd.f32 0.0, %v5164
    %v5166 = vpop.f32.mrf.mxu0
    %v5167 = vadd.f32 0.0, %v5166
    %5168 = vmatmul.bf16.gmra.mxu0 %v5147
    %v5169 = vpop.f32.mrf.mxu0
    %v5170 = vadd.f32 0.0, %v5169
    %v5171 = vpop.f32.mrf.mxu0
    %5172 = vdwg.mxu0
    %v5173 = vsel %vm932, %v5117, -inf
    %5174 = vmax.xlane.f32.xlu0 %v5173
    %v5175 = vpop.xlane.xlu0 %5174
    %v5176 = vsel %vm932, %v5119, -inf
    %5177 = vmax.xlane.f32.xlu0 %v5176
    %v5178 = vpop.xlane.xlu0 %5177
    %v5179 = vsel %vm932, %v5122, -inf
    %5180 = vmax.xlane.f32.xlu0 %v5179
    %v5181 = vpop.xlane.xlu0 %5180
    %v5182 = vsel %vm932, %v5165, -inf
    %5183 = vmax.xlane.f32.xlu0 %v5182
    %v5184 = vpop.xlane.xlu0 %5183
    %v5185 = vsel %vm932, %v5167, -inf
    %5186 = vmax.xlane.f32.xlu0 %v5185
    %v5187 = vpop.xlane.xlu0 %5186
    %v5188 = vsel %vm932, %v5170, -inf
    %5189 = vmax.xlane.f32.xlu0 %v5188
    %v5190 = vpop.xlane.xlu0 %5189
    %v5191 = vsub.f32 %v5117, %v5175
    %v5192 = vsub.f32 %v5119, %v5178
    %v5193 = vsub.f32 %v5122, %v5181
    %v5194 = vsub.f32 %v5165, %v5184
    %v5195 = vsub.f32 %v5167, %v5187
    %v5196 = vsub.f32 %v5170, %v5190
    %v5197 = vmul.f32 %v5191, 1.442695
    %v5198 = vpow.pop %v5197
    %v5199 = vmul.f32 %v5192, 1.442695
    %v5200 = vpow.pop %v5199
    %v5201 = vmul.f32 %v5193, 1.442695
    %v5202 = vpow.pop %v5201
    %v5203 = vmul.f32 %v5194, 1.442695
    %v5204 = vpow.pop %v5203
    %v5205 = vmul.f32 %v5195, 1.442695
    %v5206 = vpow.pop %v5205
    %v5207 = vmul.f32 %v5196, 1.442695
    %v5208 = vpow.pop %v5207
    %v5209 = vsel %vm932, %v5198, 0.0
    %5210 = vadd.xlane.f32.xlu0 %v5209
    %v5211 = vpop.xlane.xlu0 %5210
    %v5212 = vsel %vm932, %v5200, 0.0
    %5213 = vadd.xlane.f32.xlu0 %v5212
    %v5214 = vpop.xlane.xlu0 %5213
    %v5215 = vsel %vm932, %v5202, 0.0
    %5216 = vadd.xlane.f32.xlu0 %v5215
    %v5217 = vpop.xlane.xlu0 %5216
    %v5218 = vsel %vm932, %v5204, 0.0
    %5219 = vadd.xlane.f32.xlu0 %v5218
    %v5220 = vpop.xlane.xlu0 %5219
    %v5221 = vsel %vm932, %v5206, 0.0
    %5222 = vadd.xlane.f32.xlu0 %v5221
    %v5223 = vpop.xlane.xlu0 %5222
    %v5224 = vsel %vm932, %v5208, 0.0
    %5225 = vadd.xlane.f32.xlu0 %v5224
    %v5226 = vpop.xlane.xlu0 %5225
    %v5227 = vrcp.pop %v5211
    %v5228 = vrcp.pop %v5214
    %v5229 = vrcp.pop %v5217
    %v5230 = vrcp.pop %v5220
    %v5231 = vrcp.pop %v5223
    %v5232 = vrcp.pop %v5226
    %v5233 = vmul.f32 %v5198, %v5227
    %v5234 = vmul.f32 %v5200, %v5228
    %v5235 = vmul.f32 %v5202, %v5229
    %v5236 = vmul.f32 %v5204, %v5230
    %v5237 = vmul.f32 %v5206, %v5231
    %v5238 = vmul.f32 %v5208, %v5232
    %v5239 = vpack.c.bf16 %v5233, %v5233
    %v5240 = vpack.c.bf16 %v5234, %v5234
    %v5241 = vpack.c.bf16 %v5235, %v5235
    %v5242 = vpack.c.bf16 %v5236, %v5236
    %v5243 = vpack.c.bf16 %v5237, %v5237
    %v5244 = vpack.c.bf16 %v5238, %v5238
    %v5248 = vunpack.c.l.b16 %v5239
    %v5249 = vunpack.c.l.b16 %v5240
    %v5250 = vunpack.c.l.b16 %v5241
    %v5251 = vpack.c.b16 %v5249, %v5248
    %v5252 = vpack.c.b16 %v5250, %v5250
    %5253 = vrot.lane.b32.xlu0 %v4375, 80
    %v5254 = vpop.permute.xlu0 %5253
    %5255 = vrot.lane.b32.xlu0 %v4376, 80
    %v5256 = vpop.permute.xlu0 %5255
    %v5259 = vsel %vm932, %v5251, 0
    %v5262 = vsel %vm932, %v5252, 0
    %v5265 = vsel %vm1028, %v5256, 0
    %5267 = vmatpush.bf16.msra.mxu0 0
    %5268 = vmatpush.bf16.msra.mxu0 0
    %5269 = vmatpush.bf16.msra.mxu0 0
    %5270 = vmatpush.bf16.msra.mxu0 0
    %5271 = vmatpush.bf16.msra.mxu0 0
    %5272 = vmatpush.bf16.msra.mxu0 0
    %5273 = vmatpush.bf16.msra.mxu0 %v5265
    %5274 = vmatpush.bf16.msra.mxu0 %v5254
    %5275 = vmatmul.bf16.gmra.mxu0 %v5259
    %v5276 = vpop.f32.mrf.mxu0
    %v5277 = vadd.f32 0.0, %v5276
    %v5278 = vpop.f32.mrf.mxu0
    %v5279 = vadd.f32 0.0, %v5278
    %5280 = vmatmul.bf16.gmra.mxu0 %v5262
    %v5281 = vpop.f32.mrf.mxu0
    %v5282 = vadd.f32 0.0, %v5281
    %v5283 = vpop.f32.mrf.mxu0
    %5284 = vdwg.mxu0
    %v5288 = vunpack.c.l.b16 %v5242
    %v5289 = vunpack.c.l.b16 %v5243
    %v5290 = vunpack.c.l.b16 %v5244
    %v5291 = vpack.c.b16 %v5289, %v5288
    %v5292 = vpack.c.b16 %v5290, %v5290
    %5293 = vrot.lane.b32.xlu0 %v4419, 80
    %v5294 = vpop.permute.xlu0 %5293
    %5295 = vrot.lane.b32.xlu0 %v4420, 80
    %v5296 = vpop.permute.xlu0 %5295
    %v5299 = vsel %vm932, %v5291, 0
    %v5302 = vsel %vm932, %v5292, 0
    %v5305 = vsel %vm1028, %v5296, 0
    %5307 = vmatpush.bf16.msra.mxu0 0
    %5308 = vmatpush.bf16.msra.mxu0 0
    %5309 = vmatpush.bf16.msra.mxu0 0
    %5310 = vmatpush.bf16.msra.mxu0 0
    %5311 = vmatpush.bf16.msra.mxu0 0
    %5312 = vmatpush.bf16.msra.mxu0 0
    %5313 = vmatpush.bf16.msra.mxu0 %v5305
    %5314 = vmatpush.bf16.msra.mxu0 %v5294
    %5315 = vmatmul.bf16.gmra.mxu0 %v5299
    %v5316 = vpop.f32.mrf.mxu0
    %v5317 = vadd.f32 0.0, %v5316
    %v5318 = vpop.f32.mrf.mxu0
    %v5319 = vadd.f32 0.0, %v5318
    %5320 = vmatmul.bf16.gmra.mxu0 %v5302
    %v5321 = vpop.f32.mrf.mxu0
    %v5322 = vadd.f32 0.0, %v5321
    %v5323 = vpop.f32.mrf.mxu0
    %5324 = vdwg.mxu0
    %v5325 = vpack.c.bf16 %v5279, %v5277
    %v5326 = vpack.c.bf16 %v5317, %v5282
    %v5327 = vpack.c.bf16 %v5322, %v5319
    %v5330 = vunpack.c.l.b16 %v4187
    %v5331 = vunpack.c.l.b16 %v4188
    %v5332 = vpack.c.b16 %v5331, %v5330
    %v5335 = vsel %vm855, %v5325, 0
    %v5338 = vsel %vm855, %v5326, 0
    %v5341 = vsel %vm855, %v5327, 0
    %5343 = vmatpush.bf16.msra.mxu0 0
    %5344 = vmatpush.bf16.msra.mxu0 0
    %5345 = vmatpush.bf16.msra.mxu0 0
    %5346 = vmatpush.bf16.msra.mxu0 0
    %5347 = vmatpush.bf16.msra.mxu0 0
    %5348 = vmatpush.bf16.msra.mxu0 0
    %5349 = vmatpush.bf16.msra.mxu0 0
    %5350 = vmatpush.bf16.msra.mxu0 %v5332
    %5351 = vmatmul.bf16.gmra.mxu0 %v5335
    %v5352 = vpop.f32.mrf.mxu0
    %v5353 = vadd.f32 0.0, %v5352
    %v5354 = vpop.f32.mrf.mxu0
    %v5355 = vadd.f32 0.0, %v5354
    %5356 = vmatmul.bf16.gmra.mxu0 %v5338
    %v5357 = vpop.f32.mrf.mxu0
    %v5358 = vadd.f32 0.0, %v5357
    %v5359 = vpop.f32.mrf.mxu0
    %v5360 = vadd.f32 0.0, %v5359
    %5361 = vmatmul.bf16.gmra.mxu0 %v5341
    %v5362 = vpop.f32.mrf.mxu0
    %v5363 = vadd.f32 0.0, %v5362
    %v5364 = vpop.f32.mrf.mxu0
    %v5365 = vadd.f32 0.0, %v5364
    %5366 = vdwg.mxu0
    %v5367 = vadd.f32 %v5071, %v5353
    %v5368 = vadd.f32 %v5072, %v5355
    %v5369 = vadd.f32 %v5073, %v5358
    %v5370 = vadd.f32 %v5074, %v5360
    %v5371 = vadd.f32 %v5075, %v5363
    %v5372 = vadd.f32 %v5076, %v5365
    %5373 = vrot.lane.b32.xlu0 %v4168, 64
    %v5374 = vpop.permute.xlu0 %5373
    %5375 = vrot.lane.b32.xlu0 %v4170, 64
    %v5376 = vpop.permute.xlu0 %5375
    %5377 = vrot.lane.b32.xlu0 %v4172, 64
    %v5378 = vpop.permute.xlu0 %5377
    %v5379 = vrot.slane %v5374, 4
    %v5380 = vrot.slane %v5376, 4
    %v5381 = vrot.slane %v5378, 4
    %5382 = vrot.lane.b32.xlu0 %v4206, 64
    %v5383 = vpop.permute.xlu0 %5382
    %5384 = vrot.lane.b32.xlu0 %v4207, 64
    %v5385 = vpop.permute.xlu0 %5384
    %v5386 = vunpack.c.l.b16 %v5379
    %v5387 = vunpack.c.l.b16 %v5380
    %v5388 = vunpack.c.l.b16 %v5381
    %v5389 = vpack.c.b16 %v5387, %v5386
    %v5390 = vpack.c.b16 %v5388, %v5388
    %v5392 = vsel %vm855, %v5383, 0
    %v5395 = vsel %vm855, %v5385, 0
    %v5398 = vsel %vm855, %v5389, 0
    %v5401 = vsel %vm855, %v5390, 0
    %5403 = vmatpush.bf16.xpose.msra.mxu0 0
    %5404 = vmatpush.bf16.xpose.msra.mxu0 0
    %5405 = vmatpush.bf16.xpose.msra.mxu0 0
    %5406 = vmatpush.bf16.xpose.msra.mxu0 0
    %5407 = vmatpush.bf16.xpose.msra.mxu0 0
    %5408 = vmatpush.bf16.xpose.msra.mxu0 0
    %5409 = vmatpush.bf16.xpose.msra.mxu0 %v5401
    %5410 = vmatpush.bf16.xpose.msra.mxu0 %v5398
    %5411 = vmatmul.bf16.gmra.mxu0 %v5392
    %v5412 = vpop.f32.mrf.mxu0
    %v5413 = vadd.f32 0.0, %v5412
    %v5414 = vpop.f32.mrf.mxu0
    %v5415 = vadd.f32 0.0, %v5414
    %5416 = vmatmul.bf16.gmra.mxu0 %v5395
    %v5417 = vpop.f32.mrf.mxu0
    %v5418 = vadd.f32 0.0, %v5417
    %v5419 = vpop.f32.mrf.mxu0
    %5420 = vdwg.mxu0
    %5421 = vrot.lane.b32.xlu0 %v4174, 64
    %v5422 = vpop.permute.xlu0 %5421
    %5423 = vrot.lane.b32.xlu0 %v4176, 64
    %v5424 = vpop.permute.xlu0 %5423
    %5425 = vrot.lane.b32.xlu0 %v4178, 64
    %v5426 = vpop.permute.xlu0 %5425
    %v5427 = vrot.slane %v5422, 4
    %v5428 = vrot.slane %v5424, 4
    %v5429 = vrot.slane %v5426, 4
    %5430 = vrot.lane.b32.xlu0 %v4252, 64
    %v5431 = vpop.permute.xlu0 %5430
    %5432 = vrot.lane.b32.xlu0 %v4253, 64
    %v5433 = vpop.permute.xlu0 %5432
    %v5434 = vunpack.c.l.b16 %v5427
    %v5435 = vunpack.c.l.b16 %v5428
    %v5436 = vunpack.c.l.b16 %v5429
    %v5437 = vpack.c.b16 %v5435, %v5434
    %v5438 = vpack.c.b16 %v5436, %v5436
    %v5440 = vsel %vm855, %v5431, 0
    %v5443 = vsel %vm855, %v5433, 0
    %v5446 = vsel %vm855, %v5437, 0
    %v5449 = vsel %vm855, %v5438, 0
    %5451 = vmatpush.bf16.xpose.msra.mxu0 0
    %5452 = vmatpush.bf16.xpose.msra.mxu0 0
    %5453 = vmatpush.bf16.xpose.msra.mxu0 0
    %5454 = vmatpush.bf16.xpose.msra.mxu0 0
    %5455 = vmatpush.bf16.xpose.msra.mxu0 0
    %5456 = vmatpush.bf16.xpose.msra.mxu0 0
    %5457 = vmatpush.bf16.xpose.msra.mxu0 %v5449
    %5458 = vmatpush.bf16.xpose.msra.mxu0 %v5446
    %5459 = vmatmul.bf16.gmra.mxu0 %v5440
    %v5460 = vpop.f32.mrf.mxu0
    %v5461 = vadd.f32 0.0, %v5460
    %v5462 = vpop.f32.mrf.mxu0
    %v5463 = vadd.f32 0.0, %v5462
    %5464 = vmatmul.bf16.gmra.mxu0 %v5443
    %v5465 = vpop.f32.mrf.mxu0
    %v5466 = vadd.f32 0.0, %v5465
    %v5467 = vpop.f32.mrf.mxu0
    %5468 = vdwg.mxu0
    %v5469 = vsel %vm932, %v5413, -inf
    %5470 = vmax.xlane.f32.xlu0 %v5469
    %v5471 = vpop.xlane.xlu0 %5470
    %v5472 = vsel %vm932, %v5415, -inf
    %5473 = vmax.xlane.f32.xlu0 %v5472
    %v5474 = vpop.xlane.xlu0 %5473
    %v5475 = vsel %vm932, %v5418, -inf
    %5476 = vmax.xlane.f32.xlu0 %v5475
    %v5477 = vpop.xlane.xlu0 %5476
    %v5478 = vsel %vm932, %v5461, -inf
    %5479 = vmax.xlane.f32.xlu0 %v5478
    %v5480 = vpop.xlane.xlu0 %5479
    %v5481 = vsel %vm932, %v5463, -inf
    %5482 = vmax.xlane.f32.xlu0 %v5481
    %v5483 = vpop.xlane.xlu0 %5482
    %v5484 = vsel %vm932, %v5466, -inf
    %5485 = vmax.xlane.f32.xlu0 %v5484
    %v5486 = vpop.xlane.xlu0 %5485
    %v5487 = vsub.f32 %v5413, %v5471
    %v5488 = vsub.f32 %v5415, %v5474
    %v5489 = vsub.f32 %v5418, %v5477
    %v5490 = vsub.f32 %v5461, %v5480
    %v5491 = vsub.f32 %v5463, %v5483
    %v5492 = vsub.f32 %v5466, %v5486
    %v5493 = vmul.f32 %v5487, 1.442695
    %v5494 = vpow.pop %v5493
    %v5495 = vmul.f32 %v5488, 1.442695
    %v5496 = vpow.pop %v5495
    %v5497 = vmul.f32 %v5489, 1.442695
    %v5498 = vpow.pop %v5497
    %v5499 = vmul.f32 %v5490, 1.442695
    %v5500 = vpow.pop %v5499
    %v5501 = vmul.f32 %v5491, 1.442695
    %v5502 = vpow.pop %v5501
    %v5503 = vmul.f32 %v5492, 1.442695
    %v5504 = vpow.pop %v5503
    %v5505 = vsel %vm932, %v5494, 0.0
    %5506 = vadd.xlane.f32.xlu0 %v5505
    %v5507 = vpop.xlane.xlu0 %5506
    %v5508 = vsel %vm932, %v5496, 0.0
    %5509 = vadd.xlane.f32.xlu0 %v5508
    %v5510 = vpop.xlane.xlu0 %5509
    %v5511 = vsel %vm932, %v5498, 0.0
    %5512 = vadd.xlane.f32.xlu0 %v5511
    %v5513 = vpop.xlane.xlu0 %5512
    %v5514 = vsel %vm932, %v5500, 0.0
    %5515 = vadd.xlane.f32.xlu0 %v5514
    %v5516 = vpop.xlane.xlu0 %5515
    %v5517 = vsel %vm932, %v5502, 0.0
    %5518 = vadd.xlane.f32.xlu0 %v5517
    %v5519 = vpop.xlane.xlu0 %5518
    %v5520 = vsel %vm932, %v5504, 0.0
    %5521 = vadd.xlane.f32.xlu0 %v5520
    %v5522 = vpop.xlane.xlu0 %5521
    %v5523 = vrcp.pop %v5507
    %v5524 = vrcp.pop %v5510
    %v5525 = vrcp.pop %v5513
    %v5526 = vrcp.pop %v5516
    %v5527 = vrcp.pop %v5519
    %v5528 = vrcp.pop %v5522
    %v5529 = vmul.f32 %v5494, %v5523
    %v5530 = vmul.f32 %v5496, %v5524
    %v5531 = vmul.f32 %v5498, %v5525
    %v5532 = vmul.f32 %v5500, %v5526
    %v5533 = vmul.f32 %v5502, %v5527
    %v5534 = vmul.f32 %v5504, %v5528
    %v5535 = vpack.c.bf16 %v5529, %v5529
    %v5536 = vpack.c.bf16 %v5530, %v5530
    %v5537 = vpack.c.bf16 %v5531, %v5531
    %v5538 = vpack.c.bf16 %v5532, %v5532
    %v5539 = vpack.c.bf16 %v5533, %v5533
    %v5540 = vpack.c.bf16 %v5534, %v5534
    %v5544 = vunpack.c.l.b16 %v5535
    %v5545 = vunpack.c.l.b16 %v5536
    %v5546 = vunpack.c.l.b16 %v5537
    %v5547 = vpack.c.b16 %v5545, %v5544
    %v5548 = vpack.c.b16 %v5546, %v5546
    %5549 = vrot.lane.b32.xlu0 %v4375, 64
    %v5550 = vpop.permute.xlu0 %5549
    %5551 = vrot.lane.b32.xlu0 %v4376, 64
    %v5552 = vpop.permute.xlu0 %5551
    %v5555 = vsel %vm932, %v5547, 0
    %v5558 = vsel %vm932, %v5548, 0
    %v5561 = vsel %vm1028, %v5552, 0
    %5563 = vmatpush.bf16.msra.mxu0 0
    %5564 = vmatpush.bf16.msra.mxu0 0
    %5565 = vmatpush.bf16.msra.mxu0 0
    %5566 = vmatpush.bf16.msra.mxu0 0
    %5567 = vmatpush.bf16.msra.mxu0 0
    %5568 = vmatpush.bf16.msra.mxu0 0
    %5569 = vmatpush.bf16.msra.mxu0 %v5561
    %5570 = vmatpush.bf16.msra.mxu0 %v5550
    %5571 = vmatmul.bf16.gmra.mxu0 %v5555
    %v5572 = vpop.f32.mrf.mxu0
    %v5573 = vadd.f32 0.0, %v5572
    %v5574 = vpop.f32.mrf.mxu0
    %v5575 = vadd.f32 0.0, %v5574
    %5576 = vmatmul.bf16.gmra.mxu0 %v5558
    %v5577 = vpop.f32.mrf.mxu0
    %v5578 = vadd.f32 0.0, %v5577
    %v5579 = vpop.f32.mrf.mxu0
    %5580 = vdwg.mxu0
    %v5584 = vunpack.c.l.b16 %v5538
    %v5585 = vunpack.c.l.b16 %v5539
    %v5586 = vunpack.c.l.b16 %v5540
    %v5587 = vpack.c.b16 %v5585, %v5584
    %v5588 = vpack.c.b16 %v5586, %v5586
    %5589 = vrot.lane.b32.xlu0 %v4419, 64
    %v5590 = vpop.permute.xlu0 %5589
    %5591 = vrot.lane.b32.xlu0 %v4420, 64
    %v5592 = vpop.permute.xlu0 %5591
    %v5595 = vsel %vm932, %v5587, 0
    %v5598 = vsel %vm932, %v5588, 0
    %v5601 = vsel %vm1028, %v5592, 0
    %5603 = vmatpush.bf16.msra.mxu0 0
    %5604 = vmatpush.bf16.msra.mxu0 0
    %5605 = vmatpush.bf16.msra.mxu0 0
    %5606 = vmatpush.bf16.msra.mxu0 0
    %5607 = vmatpush.bf16.msra.mxu0 0
    %5608 = vmatpush.bf16.msra.mxu0 0
    %5609 = vmatpush.bf16.msra.mxu0 %v5601
    %5610 = vmatpush.bf16.msra.mxu0 %v5590
    %5611 = vmatmul.bf16.gmra.mxu0 %v5595
    %v5612 = vpop.f32.mrf.mxu0
    %v5613 = vadd.f32 0.0, %v5612
    %v5614 = vpop.f32.mrf.mxu0
    %v5615 = vadd.f32 0.0, %v5614
    %5616 = vmatmul.bf16.gmra.mxu0 %v5598
    %v5617 = vpop.f32.mrf.mxu0
    %v5618 = vadd.f32 0.0, %v5617
    %v5619 = vpop.f32.mrf.mxu0
    %5620 = vdwg.mxu0
    %v5621 = vpack.c.bf16 %v5575, %v5573
    %v5622 = vpack.c.bf16 %v5613, %v5578
    %v5623 = vpack.c.bf16 %v5618, %v5615
    %v5626 = vunpack.c.l.b16 %v4189
    %v5627 = vunpack.c.l.b16 %v4190
    %v5628 = vpack.c.b16 %v5627, %v5626
    %v5631 = vsel %vm855, %v5621, 0
    %v5634 = vsel %vm855, %v5622, 0
    %v5637 = vsel %vm855, %v5623, 0
    %5639 = vmatpush.bf16.msra.mxu0 0
    %5640 = vmatpush.bf16.msra.mxu0 0
    %5641 = vmatpush.bf16.msra.mxu0 0
    %5642 = vmatpush.bf16.msra.mxu0 0
    %5643 = vmatpush.bf16.msra.mxu0 0
    %5644 = vmatpush.bf16.msra.mxu0 0
    %5645 = vmatpush.bf16.msra.mxu0 0
    %5646 = vmatpush.bf16.msra.mxu0 %v5628
    %5647 = vmatmul.bf16.gmra.mxu0 %v5631
    %v5648 = vpop.f32.mrf.mxu0
    %v5649 = vadd.f32 0.0, %v5648
    %v5650 = vpop.f32.mrf.mxu0
    %v5651 = vadd.f32 0.0, %v5650
    %5652 = vmatmul.bf16.gmra.mxu0 %v5634
    %v5653 = vpop.f32.mrf.mxu0
    %v5654 = vadd.f32 0.0, %v5653
    %v5655 = vpop.f32.mrf.mxu0
    %v5656 = vadd.f32 0.0, %v5655
    %5657 = vmatmul.bf16.gmra.mxu0 %v5637
    %v5658 = vpop.f32.mrf.mxu0
    %v5659 = vadd.f32 0.0, %v5658
    %v5660 = vpop.f32.mrf.mxu0
    %v5661 = vadd.f32 0.0, %v5660
    %5662 = vdwg.mxu0
    %v5663 = vadd.f32 %v5367, %v5649
    %v5664 = vadd.f32 %v5368, %v5651
    %v5665 = vadd.f32 %v5369, %v5654
    %v5666 = vadd.f32 %v5370, %v5656
    %v5667 = vadd.f32 %v5371, %v5659
    %v5668 = vadd.f32 %v5372, %v5661
    %5669 = vrot.lane.b32.xlu0 %v4168, 48
    %v5670 = vpop.permute.xlu0 %5669
    %5671 = vrot.lane.b32.xlu0 %v4170, 48
    %v5672 = vpop.permute.xlu0 %5671
    %5673 = vrot.lane.b32.xlu0 %v4172, 48
    %v5674 = vpop.permute.xlu0 %5673
    %v5675 = vrot.slane %v5670, 4
    %v5676 = vrot.slane %v5672, 4
    %v5677 = vrot.slane %v5674, 4
    %5678 = vrot.lane.b32.xlu0 %v4206, 48
    %v5679 = vpop.permute.xlu0 %5678
    %5680 = vrot.lane.b32.xlu0 %v4207, 48
    %v5681 = vpop.permute.xlu0 %5680
    %v5682 = vunpack.c.l.b16 %v5675
    %v5683 = vunpack.c.l.b16 %v5676
    %v5684 = vunpack.c.l.b16 %v5677
    %v5685 = vpack.c.b16 %v5683, %v5682
    %v5686 = vpack.c.b16 %v5684, %v5684
    %v5688 = vsel %vm855, %v5679, 0
    %v5691 = vsel %vm855, %v5681, 0
    %v5694 = vsel %vm855, %v5685, 0
    %v5697 = vsel %vm855, %v5686, 0
    %5699 = vmatpush.bf16.xpose.msra.mxu0 0
    %5700 = vmatpush.bf16.xpose.msra.mxu0 0
    %5701 = vmatpush.bf16.xpose.msra.mxu0 0
    %5702 = vmatpush.bf16.xpose.msra.mxu0 0
    %5703 = vmatpush.bf16.xpose.msra.mxu0 0
    %5704 = vmatpush.bf16.xpose.msra.mxu0 0
    %5705 = vmatpush.bf16.xpose.msra.mxu0 %v5697
    %5706 = vmatpush.bf16.xpose.msra.mxu0 %v5694
    %5707 = vmatmul.bf16.gmra.mxu0 %v5688
    %v5708 = vpop.f32.mrf.mxu0
    %v5709 = vadd.f32 0.0, %v5708
    %v5710 = vpop.f32.mrf.mxu0
    %v5711 = vadd.f32 0.0, %v5710
    %5712 = vmatmul.bf16.gmra.mxu0 %v5691
    %v5713 = vpop.f32.mrf.mxu0
    %v5714 = vadd.f32 0.0, %v5713
    %v5715 = vpop.f32.mrf.mxu0
    %5716 = vdwg.mxu0
    %5717 = vrot.lane.b32.xlu0 %v4174, 48
    %v5718 = vpop.permute.xlu0 %5717
    %5719 = vrot.lane.b32.xlu0 %v4176, 48
    %v5720 = vpop.permute.xlu0 %5719
    %5721 = vrot.lane.b32.xlu0 %v4178, 48
    %v5722 = vpop.permute.xlu0 %5721
    %v5723 = vrot.slane %v5718, 4
    %v5724 = vrot.slane %v5720, 4
    %v5725 = vrot.slane %v5722, 4
    %5726 = vrot.lane.b32.xlu0 %v4252, 48
    %v5727 = vpop.permute.xlu0 %5726
    %5728 = vrot.lane.b32.xlu0 %v4253, 48
    %v5729 = vpop.permute.xlu0 %5728
    %v5730 = vunpack.c.l.b16 %v5723
    %v5731 = vunpack.c.l.b16 %v5724
    %v5732 = vunpack.c.l.b16 %v5725
    %v5733 = vpack.c.b16 %v5731, %v5730
    %v5734 = vpack.c.b16 %v5732, %v5732
    %v5736 = vsel %vm855, %v5727, 0
    %v5739 = vsel %vm855, %v5729, 0
    %v5742 = vsel %vm855, %v5733, 0
    %v5745 = vsel %vm855, %v5734, 0
    %5747 = vmatpush.bf16.xpose.msra.mxu0 0
    %5748 = vmatpush.bf16.xpose.msra.mxu0 0
    %5749 = vmatpush.bf16.xpose.msra.mxu0 0
    %5750 = vmatpush.bf16.xpose.msra.mxu0 0
    %5751 = vmatpush.bf16.xpose.msra.mxu0 0
    %5752 = vmatpush.bf16.xpose.msra.mxu0 0
    %5753 = vmatpush.bf16.xpose.msra.mxu0 %v5745
    %5754 = vmatpush.bf16.xpose.msra.mxu0 %v5742
    %5755 = vmatmul.bf16.gmra.mxu0 %v5736
    %v5756 = vpop.f32.mrf.mxu0
    %v5757 = vadd.f32 0.0, %v5756
    %v5758 = vpop.f32.mrf.mxu0
    %v5759 = vadd.f32 0.0, %v5758
    %5760 = vmatmul.bf16.gmra.mxu0 %v5739
    %v5761 = vpop.f32.mrf.mxu0
    %v5762 = vadd.f32 0.0, %v5761
    %v5763 = vpop.f32.mrf.mxu0
    %5764 = vdwg.mxu0
    %v5765 = vsel %vm932, %v5709, -inf
    %5766 = vmax.xlane.f32.xlu0 %v5765
    %v5767 = vpop.xlane.xlu0 %5766
    %v5768 = vsel %vm932, %v5711, -inf
    %5769 = vmax.xlane.f32.xlu0 %v5768
    %v5770 = vpop.xlane.xlu0 %5769
    %v5771 = vsel %vm932, %v5714, -inf
    %5772 = vmax.xlane.f32.xlu0 %v5771
    %v5773 = vpop.xlane.xlu0 %5772
    %v5774 = vsel %vm932, %v5757, -inf
    %5775 = vmax.xlane.f32.xlu0 %v5774
    %v5776 = vpop.xlane.xlu0 %5775
    %v5777 = vsel %vm932, %v5759, -inf
    %5778 = vmax.xlane.f32.xlu0 %v5777
    %v5779 = vpop.xlane.xlu0 %5778
    %v5780 = vsel %vm932, %v5762, -inf
    %5781 = vmax.xlane.f32.xlu0 %v5780
    %v5782 = vpop.xlane.xlu0 %5781
    %v5783 = vsub.f32 %v5709, %v5767
    %v5784 = vsub.f32 %v5711, %v5770
    %v5785 = vsub.f32 %v5714, %v5773
    %v5786 = vsub.f32 %v5757, %v5776
    %v5787 = vsub.f32 %v5759, %v5779
    %v5788 = vsub.f32 %v5762, %v5782
    %v5789 = vmul.f32 %v5783, 1.442695
    %v5790 = vpow.pop %v5789
    %v5791 = vmul.f32 %v5784, 1.442695
    %v5792 = vpow.pop %v5791
    %v5793 = vmul.f32 %v5785, 1.442695
    %v5794 = vpow.pop %v5793
    %v5795 = vmul.f32 %v5786, 1.442695
    %v5796 = vpow.pop %v5795
    %v5797 = vmul.f32 %v5787, 1.442695
    %v5798 = vpow.pop %v5797
    %v5799 = vmul.f32 %v5788, 1.442695
    %v5800 = vpow.pop %v5799
    %v5801 = vsel %vm932, %v5790, 0.0
    %5802 = vadd.xlane.f32.xlu0 %v5801
    %v5803 = vpop.xlane.xlu0 %5802
    %v5804 = vsel %vm932, %v5792, 0.0
    %5805 = vadd.xlane.f32.xlu0 %v5804
    %v5806 = vpop.xlane.xlu0 %5805
    %v5807 = vsel %vm932, %v5794, 0.0
    %5808 = vadd.xlane.f32.xlu0 %v5807
    %v5809 = vpop.xlane.xlu0 %5808
    %v5810 = vsel %vm932, %v5796, 0.0
    %5811 = vadd.xlane.f32.xlu0 %v5810
    %v5812 = vpop.xlane.xlu0 %5811
    %v5813 = vsel %vm932, %v5798, 0.0
    %5814 = vadd.xlane.f32.xlu0 %v5813
    %v5815 = vpop.xlane.xlu0 %5814
    %v5816 = vsel %vm932, %v5800, 0.0
    %5817 = vadd.xlane.f32.xlu0 %v5816
    %v5818 = vpop.xlane.xlu0 %5817
    %v5819 = vrcp.pop %v5803
    %v5820 = vrcp.pop %v5806
    %v5821 = vrcp.pop %v5809
    %v5822 = vrcp.pop %v5812
    %v5823 = vrcp.pop %v5815
    %v5824 = vrcp.pop %v5818
    %v5825 = vmul.f32 %v5790, %v5819
    %v5826 = vmul.f32 %v5792, %v5820
    %v5827 = vmul.f32 %v5794, %v5821
    %v5828 = vmul.f32 %v5796, %v5822
    %v5829 = vmul.f32 %v5798, %v5823
    %v5830 = vmul.f32 %v5800, %v5824
    %v5831 = vpack.c.bf16 %v5825, %v5825
    %v5832 = vpack.c.bf16 %v5826, %v5826
    %v5833 = vpack.c.bf16 %v5827, %v5827
    %v5834 = vpack.c.bf16 %v5828, %v5828
    %v5835 = vpack.c.bf16 %v5829, %v5829
    %v5836 = vpack.c.bf16 %v5830, %v5830
    %v5840 = vunpack.c.l.b16 %v5831
    %v5841 = vunpack.c.l.b16 %v5832
    %v5842 = vunpack.c.l.b16 %v5833
    %v5843 = vpack.c.b16 %v5841, %v5840
    %v5844 = vpack.c.b16 %v5842, %v5842
    %5845 = vrot.lane.b32.xlu0 %v4375, 48
    %v5846 = vpop.permute.xlu0 %5845
    %5847 = vrot.lane.b32.xlu0 %v4376, 48
    %v5848 = vpop.permute.xlu0 %5847
    %v5851 = vsel %vm932, %v5843, 0
    %v5854 = vsel %vm932, %v5844, 0
    %v5857 = vsel %vm1028, %v5848, 0
    %5859 = vmatpush.bf16.msra.mxu0 0
    %5860 = vmatpush.bf16.msra.mxu0 0
    %5861 = vmatpush.bf16.msra.mxu0 0
    %5862 = vmatpush.bf16.msra.mxu0 0
    %5863 = vmatpush.bf16.msra.mxu0 0
    %5864 = vmatpush.bf16.msra.mxu0 0
    %5865 = vmatpush.bf16.msra.mxu0 %v5857
    %5866 = vmatpush.bf16.msra.mxu0 %v5846
    %5867 = vmatmul.bf16.gmra.mxu0 %v5851
    %v5868 = vpop.f32.mrf.mxu0
    %v5869 = vadd.f32 0.0, %v5868
    %v5870 = vpop.f32.mrf.mxu0
    %v5871 = vadd.f32 0.0, %v5870
    %5872 = vmatmul.bf16.gmra.mxu0 %v5854
    %v5873 = vpop.f32.mrf.mxu0
    %v5874 = vadd.f32 0.0, %v5873
    %v5875 = vpop.f32.mrf.mxu0
    %5876 = vdwg.mxu0
    %v5880 = vunpack.c.l.b16 %v5834
    %v5881 = vunpack.c.l.b16 %v5835
    %v5882 = vunpack.c.l.b16 %v5836
    %v5883 = vpack.c.b16 %v5881, %v5880
    %v5884 = vpack.c.b16 %v5882, %v5882
    %5885 = vrot.lane.b32.xlu0 %v4419, 48
    %v5886 = vpop.permute.xlu0 %5885
    %5887 = vrot.lane.b32.xlu0 %v4420, 48
    %v5888 = vpop.permute.xlu0 %5887
    %v5891 = vsel %vm932, %v5883, 0
    %v5894 = vsel %vm932, %v5884, 0
    %v5897 = vsel %vm1028, %v5888, 0
    %5899 = vmatpush.bf16.msra.mxu0 0
    %5900 = vmatpush.bf16.msra.mxu0 0
    %5901 = vmatpush.bf16.msra.mxu0 0
    %5902 = vmatpush.bf16.msra.mxu0 0
    %5903 = vmatpush.bf16.msra.mxu0 0
    %5904 = vmatpush.bf16.msra.mxu0 0
    %5905 = vmatpush.bf16.msra.mxu0 %v5897
    %5906 = vmatpush.bf16.msra.mxu0 %v5886
    %5907 = vmatmul.bf16.gmra.mxu0 %v5891
    %v5908 = vpop.f32.mrf.mxu0
    %v5909 = vadd.f32 0.0, %v5908
    %v5910 = vpop.f32.mrf.mxu0
    %v5911 = vadd.f32 0.0, %v5910
    %5912 = vmatmul.bf16.gmra.mxu0 %v5894
    %v5913 = vpop.f32.mrf.mxu0
    %v5914 = vadd.f32 0.0, %v5913
    %v5915 = vpop.f32.mrf.mxu0
    %5916 = vdwg.mxu0
    %v5917 = vpack.c.bf16 %v5871, %v5869
    %v5918 = vpack.c.bf16 %v5909, %v5874
    %v5919 = vpack.c.bf16 %v5914, %v5911
    %v5922 = vunpack.c.l.b16 %v4191
    %v5923 = vunpack.c.l.b16 %v4192
    %v5924 = vpack.c.b16 %v5923, %v5922
    %v5927 = vsel %vm855, %v5917, 0
    %v5930 = vsel %vm855, %v5918, 0
    %v5933 = vsel %vm855, %v5919, 0
    %5935 = vmatpush.bf16.msra.mxu0 0
    %5936 = vmatpush.bf16.msra.mxu0 0
    %5937 = vmatpush.bf16.msra.mxu0 0
    %5938 = vmatpush.bf16.msra.mxu0 0
    %5939 = vmatpush.bf16.msra.mxu0 0
    %5940 = vmatpush.bf16.msra.mxu0 0
    %5941 = vmatpush.bf16.msra.mxu0 0
    %5942 = vmatpush.bf16.msra.mxu0 %v5924
    %5943 = vmatmul.bf16.gmra.mxu0 %v5927
    %v5944 = vpop.f32.mrf.mxu0
    %v5945 = vadd.f32 0.0, %v5944
    %v5946 = vpop.f32.mrf.mxu0
    %v5947 = vadd.f32 0.0, %v5946
    %5948 = vmatmul.bf16.gmra.mxu0 %v5930
    %v5949 = vpop.f32.mrf.mxu0
    %v5950 = vadd.f32 0.0, %v5949
    %v5951 = vpop.f32.mrf.mxu0
    %v5952 = vadd.f32 0.0, %v5951
    %5953 = vmatmul.bf16.gmra.mxu0 %v5933
    %v5954 = vpop.f32.mrf.mxu0
    %v5955 = vadd.f32 0.0, %v5954
    %v5956 = vpop.f32.mrf.mxu0
    %v5957 = vadd.f32 0.0, %v5956
    %5958 = vdwg.mxu0
    %v5959 = vadd.f32 %v5663, %v5945
    %v5960 = vadd.f32 %v5664, %v5947
    %v5961 = vadd.f32 %v5665, %v5950
    %v5962 = vadd.f32 %v5666, %v5952
    %v5963 = vadd.f32 %v5667, %v5955
    %v5964 = vadd.f32 %v5668, %v5957
    %5965 = vrot.lane.b32.xlu0 %v4168, 32
    %v5966 = vpop.permute.xlu0 %5965
    %5967 = vrot.lane.b32.xlu0 %v4170, 32
    %v5968 = vpop.permute.xlu0 %5967
    %5969 = vrot.lane.b32.xlu0 %v4172, 32
    %v5970 = vpop.permute.xlu0 %5969
    %v5971 = vrot.slane %v5966, 4
    %v5972 = vrot.slane %v5968, 4
    %v5973 = vrot.slane %v5970, 4
    %5974 = vrot.lane.b32.xlu0 %v4206, 32
    %v5975 = vpop.permute.xlu0 %5974
    %5976 = vrot.lane.b32.xlu0 %v4207, 32
    %v5977 = vpop.permute.xlu0 %5976
    %v5978 = vunpack.c.l.b16 %v5971
    %v5979 = vunpack.c.l.b16 %v5972
    %v5980 = vunpack.c.l.b16 %v5973
    %v5981 = vpack.c.b16 %v5979, %v5978
    %v5982 = vpack.c.b16 %v5980, %v5980
    %v5984 = vsel %vm855, %v5975, 0
    %v5987 = vsel %vm855, %v5977, 0
    %v5990 = vsel %vm855, %v5981, 0
    %v5993 = vsel %vm855, %v5982, 0
    %5995 = vmatpush.bf16.xpose.msra.mxu0 0
    %5996 = vmatpush.bf16.xpose.msra.mxu0 0
    %5997 = vmatpush.bf16.xpose.msra.mxu0 0
    %5998 = vmatpush.bf16.xpose.msra.mxu0 0
    %5999 = vmatpush.bf16.xpose.msra.mxu0 0
    %6000 = vmatpush.bf16.xpose.msra.mxu0 0
    %6001 = vmatpush.bf16.xpose.msra.mxu0 %v5993
    %6002 = vmatpush.bf16.xpose.msra.mxu0 %v5990
    %6003 = vmatmul.bf16.gmra.mxu0 %v5984
    %v6004 = vpop.f32.mrf.mxu0
    %v6005 = vadd.f32 0.0, %v6004
    %v6006 = vpop.f32.mrf.mxu0
    %v6007 = vadd.f32 0.0, %v6006
    %6008 = vmatmul.bf16.gmra.mxu0 %v5987
    %v6009 = vpop.f32.mrf.mxu0
    %v6010 = vadd.f32 0.0, %v6009
    %v6011 = vpop.f32.mrf.mxu0
    %6012 = vdwg.mxu0
    %6013 = vrot.lane.b32.xlu0 %v4174, 32
    %v6014 = vpop.permute.xlu0 %6013
    %6015 = vrot.lane.b32.xlu0 %v4176, 32
    %v6016 = vpop.permute.xlu0 %6015
    %6017 = vrot.lane.b32.xlu0 %v4178, 32
    %v6018 = vpop.permute.xlu0 %6017
    %v6019 = vrot.slane %v6014, 4
    %v6020 = vrot.slane %v6016, 4
    %v6021 = vrot.slane %v6018, 4
    %6022 = vrot.lane.b32.xlu0 %v4252, 32
    %v6023 = vpop.permute.xlu0 %6022
    %6024 = vrot.lane.b32.xlu0 %v4253, 32
    %v6025 = vpop.permute.xlu0 %6024
    %v6026 = vunpack.c.l.b16 %v6019
    %v6027 = vunpack.c.l.b16 %v6020
    %v6028 = vunpack.c.l.b16 %v6021
    %v6029 = vpack.c.b16 %v6027, %v6026
    %v6030 = vpack.c.b16 %v6028, %v6028
    %v6032 = vsel %vm855, %v6023, 0
    %v6035 = vsel %vm855, %v6025, 0
    %v6038 = vsel %vm855, %v6029, 0
    %v6041 = vsel %vm855, %v6030, 0
    %6043 = vmatpush.bf16.xpose.msra.mxu0 0
    %6044 = vmatpush.bf16.xpose.msra.mxu0 0
    %6045 = vmatpush.bf16.xpose.msra.mxu0 0
    %6046 = vmatpush.bf16.xpose.msra.mxu0 0
    %6047 = vmatpush.bf16.xpose.msra.mxu0 0
    %6048 = vmatpush.bf16.xpose.msra.mxu0 0
    %6049 = vmatpush.bf16.xpose.msra.mxu0 %v6041
    %6050 = vmatpush.bf16.xpose.msra.mxu0 %v6038
    %6051 = vmatmul.bf16.gmra.mxu0 %v6032
    %v6052 = vpop.f32.mrf.mxu0
    %v6053 = vadd.f32 0.0, %v6052
    %v6054 = vpop.f32.mrf.mxu0
    %v6055 = vadd.f32 0.0, %v6054
    %6056 = vmatmul.bf16.gmra.mxu0 %v6035
    %v6057 = vpop.f32.mrf.mxu0
    %v6058 = vadd.f32 0.0, %v6057
    %v6059 = vpop.f32.mrf.mxu0
    %6060 = vdwg.mxu0
    %v6061 = vsel %vm932, %v6005, -inf
    %6062 = vmax.xlane.f32.xlu0 %v6061
    %v6063 = vpop.xlane.xlu0 %6062
    %v6064 = vsel %vm932, %v6007, -inf
    %6065 = vmax.xlane.f32.xlu0 %v6064
    %v6066 = vpop.xlane.xlu0 %6065
    %v6067 = vsel %vm932, %v6010, -inf
    %6068 = vmax.xlane.f32.xlu0 %v6067
    %v6069 = vpop.xlane.xlu0 %6068
    %v6070 = vsel %vm932, %v6053, -inf
    %6071 = vmax.xlane.f32.xlu0 %v6070
    %v6072 = vpop.xlane.xlu0 %6071
    %v6073 = vsel %vm932, %v6055, -inf
    %6074 = vmax.xlane.f32.xlu0 %v6073
    %v6075 = vpop.xlane.xlu0 %6074
    %v6076 = vsel %vm932, %v6058, -inf
    %6077 = vmax.xlane.f32.xlu0 %v6076
    %v6078 = vpop.xlane.xlu0 %6077
    %v6079 = vsub.f32 %v6005, %v6063
    %v6080 = vsub.f32 %v6007, %v6066
    %v6081 = vsub.f32 %v6010, %v6069
    %v6082 = vsub.f32 %v6053, %v6072
    %v6083 = vsub.f32 %v6055, %v6075
    %v6084 = vsub.f32 %v6058, %v6078
    %v6085 = vmul.f32 %v6079, 1.442695
    %v6086 = vpow.pop %v6085
    %v6087 = vmul.f32 %v6080, 1.442695
    %v6088 = vpow.pop %v6087
    %v6089 = vmul.f32 %v6081, 1.442695
    %v6090 = vpow.pop %v6089
    %v6091 = vmul.f32 %v6082, 1.442695
    %v6092 = vpow.pop %v6091
    %v6093 = vmul.f32 %v6083, 1.442695
    %v6094 = vpow.pop %v6093
    %v6095 = vmul.f32 %v6084, 1.442695
    %v6096 = vpow.pop %v6095
    %v6097 = vsel %vm932, %v6086, 0.0
    %6098 = vadd.xlane.f32.xlu0 %v6097
    %v6099 = vpop.xlane.xlu0 %6098
    %v6100 = vsel %vm932, %v6088, 0.0
    %6101 = vadd.xlane.f32.xlu0 %v6100
    %v6102 = vpop.xlane.xlu0 %6101
    %v6103 = vsel %vm932, %v6090, 0.0
    %6104 = vadd.xlane.f32.xlu0 %v6103
    %v6105 = vpop.xlane.xlu0 %6104
    %v6106 = vsel %vm932, %v6092, 0.0
    %6107 = vadd.xlane.f32.xlu0 %v6106
    %v6108 = vpop.xlane.xlu0 %6107
    %v6109 = vsel %vm932, %v6094, 0.0
    %6110 = vadd.xlane.f32.xlu0 %v6109
    %v6111 = vpop.xlane.xlu0 %6110
    %v6112 = vsel %vm932, %v6096, 0.0
    %6113 = vadd.xlane.f32.xlu0 %v6112
    %v6114 = vpop.xlane.xlu0 %6113
    %v6115 = vrcp.pop %v6099
    %v6116 = vrcp.pop %v6102
    %v6117 = vrcp.pop %v6105
    %v6118 = vrcp.pop %v6108
    %v6119 = vrcp.pop %v6111
    %v6120 = vrcp.pop %v6114
    %v6121 = vmul.f32 %v6086, %v6115
    %v6122 = vmul.f32 %v6088, %v6116
    %v6123 = vmul.f32 %v6090, %v6117
    %v6124 = vmul.f32 %v6092, %v6118
    %v6125 = vmul.f32 %v6094, %v6119
    %v6126 = vmul.f32 %v6096, %v6120
    %v6127 = vpack.c.bf16 %v6121, %v6121
    %v6128 = vpack.c.bf16 %v6122, %v6122
    %v6129 = vpack.c.bf16 %v6123, %v6123
    %v6130 = vpack.c.bf16 %v6124, %v6124
    %v6131 = vpack.c.bf16 %v6125, %v6125
    %v6132 = vpack.c.bf16 %v6126, %v6126
    %v6136 = vunpack.c.l.b16 %v6127
    %v6137 = vunpack.c.l.b16 %v6128
    %v6138 = vunpack.c.l.b16 %v6129
    %v6139 = vpack.c.b16 %v6137, %v6136
    %v6140 = vpack.c.b16 %v6138, %v6138
    %6141 = vrot.lane.b32.xlu0 %v4375, 32
    %v6142 = vpop.permute.xlu0 %6141
    %6143 = vrot.lane.b32.xlu0 %v4376, 32
    %v6144 = vpop.permute.xlu0 %6143
    %v6147 = vsel %vm932, %v6139, 0
    %v6150 = vsel %vm932, %v6140, 0
    %v6153 = vsel %vm1028, %v6144, 0
    %6155 = vmatpush.bf16.msra.mxu0 0
    %6156 = vmatpush.bf16.msra.mxu0 0
    %6157 = vmatpush.bf16.msra.mxu0 0
    %6158 = vmatpush.bf16.msra.mxu0 0
    %6159 = vmatpush.bf16.msra.mxu0 0
    %6160 = vmatpush.bf16.msra.mxu0 0
    %6161 = vmatpush.bf16.msra.mxu0 %v6153
    %6162 = vmatpush.bf16.msra.mxu0 %v6142
    %6163 = vmatmul.bf16.gmra.mxu0 %v6147
    %v6164 = vpop.f32.mrf.mxu0
    %v6165 = vadd.f32 0.0, %v6164
    %v6166 = vpop.f32.mrf.mxu0
    %v6167 = vadd.f32 0.0, %v6166
    %6168 = vmatmul.bf16.gmra.mxu0 %v6150
    %v6169 = vpop.f32.mrf.mxu0
    %v6170 = vadd.f32 0.0, %v6169
    %v6171 = vpop.f32.mrf.mxu0
    %6172 = vdwg.mxu0
    %v6176 = vunpack.c.l.b16 %v6130
    %v6177 = vunpack.c.l.b16 %v6131
    %v6178 = vunpack.c.l.b16 %v6132
    %v6179 = vpack.c.b16 %v6177, %v6176
    %v6180 = vpack.c.b16 %v6178, %v6178
    %6181 = vrot.lane.b32.xlu0 %v4419, 32
    %v6182 = vpop.permute.xlu0 %6181
    %6183 = vrot.lane.b32.xlu0 %v4420, 32
    %v6184 = vpop.permute.xlu0 %6183
    %v6187 = vsel %vm932, %v6179, 0
    %v6190 = vsel %vm932, %v6180, 0
    %v6193 = vsel %vm1028, %v6184, 0
    %6195 = vmatpush.bf16.msra.mxu0 0
    %6196 = vmatpush.bf16.msra.mxu0 0
    %6197 = vmatpush.bf16.msra.mxu0 0
    %6198 = vmatpush.bf16.msra.mxu0 0
    %6199 = vmatpush.bf16.msra.mxu0 0
    %6200 = vmatpush.bf16.msra.mxu0 0
    %6201 = vmatpush.bf16.msra.mxu0 %v6193
    %6202 = vmatpush.bf16.msra.mxu0 %v6182
    %6203 = vmatmul.bf16.gmra.mxu0 %v6187
    %v6204 = vpop.f32.mrf.mxu0
    %v6205 = vadd.f32 0.0, %v6204
    %v6206 = vpop.f32.mrf.mxu0
    %v6207 = vadd.f32 0.0, %v6206
    %6208 = vmatmul.bf16.gmra.mxu0 %v6190
    %v6209 = vpop.f32.mrf.mxu0
    %v6210 = vadd.f32 0.0, %v6209
    %v6211 = vpop.f32.mrf.mxu0
    %6212 = vdwg.mxu0
    %v6213 = vpack.c.bf16 %v6167, %v6165
    %v6214 = vpack.c.bf16 %v6205, %v6170
    %v6215 = vpack.c.bf16 %v6210, %v6207
    %v6218 = vunpack.c.l.b16 %v4193
    %v6219 = vunpack.c.l.b16 %v4194
    %v6220 = vpack.c.b16 %v6219, %v6218
    %v6223 = vsel %vm855, %v6213, 0
    %v6226 = vsel %vm855, %v6214, 0
    %v6229 = vsel %vm855, %v6215, 0
    %6231 = vmatpush.bf16.msra.mxu0 0
    %6232 = vmatpush.bf16.msra.mxu0 0
    %6233 = vmatpush.bf16.msra.mxu0 0
    %6234 = vmatpush.bf16.msra.mxu0 0
    %6235 = vmatpush.bf16.msra.mxu0 0
    %6236 = vmatpush.bf16.msra.mxu0 0
    %6237 = vmatpush.bf16.msra.mxu0 0
    %6238 = vmatpush.bf16.msra.mxu0 %v6220
    %6239 = vmatmul.bf16.gmra.mxu0 %v6223
    %v6240 = vpop.f32.mrf.mxu0
    %v6241 = vadd.f32 0.0, %v6240
    %v6242 = vpop.f32.mrf.mxu0
    %v6243 = vadd.f32 0.0, %v6242
    %6244 = vmatmul.bf16.gmra.mxu0 %v6226
    %v6245 = vpop.f32.mrf.mxu0
    %v6246 = vadd.f32 0.0, %v6245
    %v6247 = vpop.f32.mrf.mxu0
    %v6248 = vadd.f32 0.0, %v6247
    %6249 = vmatmul.bf16.gmra.mxu0 %v6229
    %v6250 = vpop.f32.mrf.mxu0
    %v6251 = vadd.f32 0.0, %v6250
    %v6252 = vpop.f32.mrf.mxu0
    %v6253 = vadd.f32 0.0, %v6252
    %6254 = vdwg.mxu0
    %v6255 = vadd.f32 %v5959, %v6241
    %v6256 = vadd.f32 %v5960, %v6243
    %v6257 = vadd.f32 %v5961, %v6246
    %v6258 = vadd.f32 %v5962, %v6248
    %v6259 = vadd.f32 %v5963, %v6251
    %v6260 = vadd.f32 %v5964, %v6253
    %6261 = vrot.lane.b32.xlu0 %v4168, 16
    %v6262 = vpop.permute.xlu0 %6261
    %6263 = vrot.lane.b32.xlu0 %v4170, 16
    %v6264 = vpop.permute.xlu0 %6263
    %6265 = vrot.lane.b32.xlu0 %v4172, 16
    %v6266 = vpop.permute.xlu0 %6265
    %v6267 = vrot.slane %v6262, 4
    %v6268 = vrot.slane %v6264, 4
    %v6269 = vrot.slane %v6266, 4
    %6270 = vrot.lane.b32.xlu0 %v4206, 16
    %v6271 = vpop.permute.xlu0 %6270
    %6272 = vrot.lane.b32.xlu0 %v4207, 16
    %v6273 = vpop.permute.xlu0 %6272
    %v6274 = vunpack.c.l.b16 %v6267
    %v6275 = vunpack.c.l.b16 %v6268
    %v6276 = vunpack.c.l.b16 %v6269
    %v6277 = vpack.c.b16 %v6275, %v6274
    %v6278 = vpack.c.b16 %v6276, %v6276
    %v6280 = vsel %vm855, %v6271, 0
    %v6283 = vsel %vm855, %v6273, 0
    %v6286 = vsel %vm855, %v6277, 0
    %v6289 = vsel %vm855, %v6278, 0
    %6291 = vmatpush.bf16.xpose.msra.mxu0 0
    %6292 = vmatpush.bf16.xpose.msra.mxu0 0
    %6293 = vmatpush.bf16.xpose.msra.mxu0 0
    %6294 = vmatpush.bf16.xpose.msra.mxu0 0
    %6295 = vmatpush.bf16.xpose.msra.mxu0 0
    %6296 = vmatpush.bf16.xpose.msra.mxu0 0
    %6297 = vmatpush.bf16.xpose.msra.mxu0 %v6289
    %6298 = vmatpush.bf16.xpose.msra.mxu0 %v6286
    %6299 = vmatmul.bf16.gmra.mxu0 %v6280
    %v6300 = vpop.f32.mrf.mxu0
    %v6301 = vadd.f32 0.0, %v6300
    %v6302 = vpop.f32.mrf.mxu0
    %v6303 = vadd.f32 0.0, %v6302
    %6304 = vmatmul.bf16.gmra.mxu0 %v6283
    %v6305 = vpop.f32.mrf.mxu0
    %v6306 = vadd.f32 0.0, %v6305
    %v6307 = vpop.f32.mrf.mxu0
    %6308 = vdwg.mxu0
    %6309 = vrot.lane.b32.xlu0 %v4174, 16
    %v6310 = vpop.permute.xlu0 %6309
    %6311 = vrot.lane.b32.xlu0 %v4176, 16
    %v6312 = vpop.permute.xlu0 %6311
    %6313 = vrot.lane.b32.xlu0 %v4178, 16
    %v6314 = vpop.permute.xlu0 %6313
    %v6315 = vrot.slane %v6310, 4
    %v6316 = vrot.slane %v6312, 4
    %v6317 = vrot.slane %v6314, 4
    %6318 = vrot.lane.b32.xlu0 %v4252, 16
    %v6319 = vpop.permute.xlu0 %6318
    %6320 = vrot.lane.b32.xlu0 %v4253, 16
    %v6321 = vpop.permute.xlu0 %6320
    %v6322 = vunpack.c.l.b16 %v6315
    %v6323 = vunpack.c.l.b16 %v6316
    %v6324 = vunpack.c.l.b16 %v6317
    %v6325 = vpack.c.b16 %v6323, %v6322
    %v6326 = vpack.c.b16 %v6324, %v6324
    %v6328 = vsel %vm855, %v6319, 0
    %v6331 = vsel %vm855, %v6321, 0
    %v6334 = vsel %vm855, %v6325, 0
    %v6337 = vsel %vm855, %v6326, 0
    %6339 = vmatpush.bf16.xpose.msra.mxu0 0
    %6340 = vmatpush.bf16.xpose.msra.mxu0 0
    %6341 = vmatpush.bf16.xpose.msra.mxu0 0
    %6342 = vmatpush.bf16.xpose.msra.mxu0 0
    %6343 = vmatpush.bf16.xpose.msra.mxu0 0
    %6344 = vmatpush.bf16.xpose.msra.mxu0 0
    %6345 = vmatpush.bf16.xpose.msra.mxu0 %v6337
    %6346 = vmatpush.bf16.xpose.msra.mxu0 %v6334
    %6347 = vmatmul.bf16.gmra.mxu0 %v6328
    %v6348 = vpop.f32.mrf.mxu0
    %v6349 = vadd.f32 0.0, %v6348
    %v6350 = vpop.f32.mrf.mxu0
    %v6351 = vadd.f32 0.0, %v6350
    %6352 = vmatmul.bf16.gmra.mxu0 %v6331
    %v6353 = vpop.f32.mrf.mxu0
    %v6354 = vadd.f32 0.0, %v6353
    %v6355 = vpop.f32.mrf.mxu0
    %6356 = vdwg.mxu0
    %v6357 = vsel %vm932, %v6301, -inf
    %6358 = vmax.xlane.f32.xlu0 %v6357
    %v6359 = vpop.xlane.xlu0 %6358
    %v6360 = vsel %vm932, %v6303, -inf
    %6361 = vmax.xlane.f32.xlu0 %v6360
    %v6362 = vpop.xlane.xlu0 %6361
    %v6363 = vsel %vm932, %v6306, -inf
    %6364 = vmax.xlane.f32.xlu0 %v6363
    %v6365 = vpop.xlane.xlu0 %6364
    %v6366 = vsel %vm932, %v6349, -inf
    %6367 = vmax.xlane.f32.xlu0 %v6366
    %v6368 = vpop.xlane.xlu0 %6367
    %v6369 = vsel %vm932, %v6351, -inf
    %6370 = vmax.xlane.f32.xlu0 %v6369
    %v6371 = vpop.xlane.xlu0 %6370
    %v6372 = vsel %vm932, %v6354, -inf
    %6373 = vmax.xlane.f32.xlu0 %v6372
    %v6374 = vpop.xlane.xlu0 %6373
    %v6375 = vsub.f32 %v6301, %v6359
    %v6376 = vsub.f32 %v6303, %v6362
    %v6377 = vsub.f32 %v6306, %v6365
    %v6378 = vsub.f32 %v6349, %v6368
    %v6379 = vsub.f32 %v6351, %v6371
    %v6380 = vsub.f32 %v6354, %v6374
    %v6381 = vmul.f32 %v6375, 1.442695
    %v6382 = vpow.pop %v6381
    %v6383 = vmul.f32 %v6376, 1.442695
    %v6384 = vpow.pop %v6383
    %v6385 = vmul.f32 %v6377, 1.442695
    %v6386 = vpow.pop %v6385
    %v6387 = vmul.f32 %v6378, 1.442695
    %v6388 = vpow.pop %v6387
    %v6389 = vmul.f32 %v6379, 1.442695
    %v6390 = vpow.pop %v6389
    %v6391 = vmul.f32 %v6380, 1.442695
    %v6392 = vpow.pop %v6391
    %v6393 = vsel %vm932, %v6382, 0.0
    %6394 = vadd.xlane.f32.xlu0 %v6393
    %v6395 = vpop.xlane.xlu0 %6394
    %v6396 = vsel %vm932, %v6384, 0.0
    %6397 = vadd.xlane.f32.xlu0 %v6396
    %v6398 = vpop.xlane.xlu0 %6397
    %v6399 = vsel %vm932, %v6386, 0.0
    %6400 = vadd.xlane.f32.xlu0 %v6399
    %v6401 = vpop.xlane.xlu0 %6400
    %v6402 = vsel %vm932, %v6388, 0.0
    %6403 = vadd.xlane.f32.xlu0 %v6402
    %v6404 = vpop.xlane.xlu0 %6403
    %v6405 = vsel %vm932, %v6390, 0.0
    %6406 = vadd.xlane.f32.xlu0 %v6405
    %v6407 = vpop.xlane.xlu0 %6406
    %v6408 = vsel %vm932, %v6392, 0.0
    %6409 = vadd.xlane.f32.xlu0 %v6408
    %v6410 = vpop.xlane.xlu0 %6409
    %v6411 = vrcp.pop %v6395
    %v6412 = vrcp.pop %v6398
    %v6413 = vrcp.pop %v6401
    %v6414 = vrcp.pop %v6404
    %v6415 = vrcp.pop %v6407
    %v6416 = vrcp.pop %v6410
    %v6417 = vmul.f32 %v6382, %v6411
    %v6418 = vmul.f32 %v6384, %v6412
    %v6419 = vmul.f32 %v6386, %v6413
    %v6420 = vmul.f32 %v6388, %v6414
    %v6421 = vmul.f32 %v6390, %v6415
    %v6422 = vmul.f32 %v6392, %v6416
    %v6423 = vpack.c.bf16 %v6417, %v6417
    %v6424 = vpack.c.bf16 %v6418, %v6418
    %v6425 = vpack.c.bf16 %v6419, %v6419
    %v6426 = vpack.c.bf16 %v6420, %v6420
    %v6427 = vpack.c.bf16 %v6421, %v6421
    %v6428 = vpack.c.bf16 %v6422, %v6422
    %v6432 = vunpack.c.l.b16 %v6423
    %v6433 = vunpack.c.l.b16 %v6424
    %v6434 = vunpack.c.l.b16 %v6425
    %v6435 = vpack.c.b16 %v6433, %v6432
    %v6436 = vpack.c.b16 %v6434, %v6434
    %6437 = vrot.lane.b32.xlu0 %v4375, 16
    %v6438 = vpop.permute.xlu0 %6437
    %6439 = vrot.lane.b32.xlu0 %v4376, 16
    %v6440 = vpop.permute.xlu0 %6439
    %v6443 = vsel %vm932, %v6435, 0
    %v6446 = vsel %vm932, %v6436, 0
    %v6449 = vsel %vm1028, %v6440, 0
    %6451 = vmatpush.bf16.msra.mxu0 0
    %6452 = vmatpush.bf16.msra.mxu0 0
    %6453 = vmatpush.bf16.msra.mxu0 0
    %6454 = vmatpush.bf16.msra.mxu0 0
    %6455 = vmatpush.bf16.msra.mxu0 0
    %6456 = vmatpush.bf16.msra.mxu0 0
    %6457 = vmatpush.bf16.msra.mxu0 %v6449
    %6458 = vmatpush.bf16.msra.mxu0 %v6438
    %6459 = vmatmul.bf16.gmra.mxu0 %v6443
    %v6460 = vpop.f32.mrf.mxu0
    %v6461 = vadd.f32 0.0, %v6460
    %v6462 = vpop.f32.mrf.mxu0
    %v6463 = vadd.f32 0.0, %v6462
    %6464 = vmatmul.bf16.gmra.mxu0 %v6446
    %v6465 = vpop.f32.mrf.mxu0
    %v6466 = vadd.f32 0.0, %v6465
    %v6467 = vpop.f32.mrf.mxu0
    %6468 = vdwg.mxu0
    %v6472 = vunpack.c.l.b16 %v6426
    %v6473 = vunpack.c.l.b16 %v6427
    %v6474 = vunpack.c.l.b16 %v6428
    %v6475 = vpack.c.b16 %v6473, %v6472
    %v6476 = vpack.c.b16 %v6474, %v6474
    %6477 = vrot.lane.b32.xlu0 %v4419, 16
    %v6478 = vpop.permute.xlu0 %6477
    %6479 = vrot.lane.b32.xlu0 %v4420, 16
    %v6480 = vpop.permute.xlu0 %6479
    %v6483 = vsel %vm932, %v6475, 0
    %v6486 = vsel %vm932, %v6476, 0
    %v6489 = vsel %vm1028, %v6480, 0
    %6491 = vmatpush.bf16.msra.mxu0 0
    %6492 = vmatpush.bf16.msra.mxu0 0
    %6493 = vmatpush.bf16.msra.mxu0 0
    %6494 = vmatpush.bf16.msra.mxu0 0
    %6495 = vmatpush.bf16.msra.mxu0 0
    %6496 = vmatpush.bf16.msra.mxu0 0
    %6497 = vmatpush.bf16.msra.mxu0 %v6489
    %6498 = vmatpush.bf16.msra.mxu0 %v6478
    %6499 = vmatmul.bf16.gmra.mxu0 %v6483
    %v6500 = vpop.f32.mrf.mxu0
    %v6501 = vadd.f32 0.0, %v6500
    %v6502 = vpop.f32.mrf.mxu0
    %v6503 = vadd.f32 0.0, %v6502
    %6504 = vmatmul.bf16.gmra.mxu0 %v6486
    %v6505 = vpop.f32.mrf.mxu0
    %v6506 = vadd.f32 0.0, %v6505
    %v6507 = vpop.f32.mrf.mxu0
    %6508 = vdwg.mxu0
    %v6509 = vpack.c.bf16 %v6463, %v6461
    %v6510 = vpack.c.bf16 %v6501, %v6466
    %v6511 = vpack.c.bf16 %v6506, %v6503
    %v6514 = vunpack.c.l.b16 %v4195
    %v6515 = vunpack.c.l.b16 %v4196
    %v6516 = vpack.c.b16 %v6515, %v6514
    %v6519 = vsel %vm855, %v6509, 0
    %v6522 = vsel %vm855, %v6510, 0
    %v6525 = vsel %vm855, %v6511, 0
    %6527 = vmatpush.bf16.msra.mxu0 0
    %6528 = vmatpush.bf16.msra.mxu0 0
    %6529 = vmatpush.bf16.msra.mxu0 0
    %6530 = vmatpush.bf16.msra.mxu0 0
    %6531 = vmatpush.bf16.msra.mxu0 0
    %6532 = vmatpush.bf16.msra.mxu0 0
    %6533 = vmatpush.bf16.msra.mxu0 0
    %6534 = vmatpush.bf16.msra.mxu0 %v6516
    %6535 = vmatmul.bf16.gmra.mxu0 %v6519
    %v6536 = vpop.f32.mrf.mxu0
    %v6537 = vadd.f32 0.0, %v6536
    %v6538 = vpop.f32.mrf.mxu0
    %v6539 = vadd.f32 0.0, %v6538
    %6540 = vmatmul.bf16.gmra.mxu0 %v6522
    %v6541 = vpop.f32.mrf.mxu0
    %v6542 = vadd.f32 0.0, %v6541
    %v6543 = vpop.f32.mrf.mxu0
    %v6544 = vadd.f32 0.0, %v6543
    %6545 = vmatmul.bf16.gmra.mxu0 %v6525
    %v6546 = vpop.f32.mrf.mxu0
    %v6547 = vadd.f32 0.0, %v6546
    %v6548 = vpop.f32.mrf.mxu0
    %v6549 = vadd.f32 0.0, %v6548
    %6550 = vdwg.mxu0
    %v6551 = vadd.f32 %v6255, %v6537
    %v6552 = vadd.f32 %v6256, %v6539
    %v6553 = vadd.f32 %v6257, %v6542
    %v6554 = vadd.f32 %v6258, %v6544
    %v6555 = vadd.f32 %v6259, %v6547
    %v6556 = vadd.f32 %v6260, %v6549
    %v6557 = vadd.f32 %v3791, %v6551
    %v6558 = vadd.f32 %v3792, %v6552
    %v6559 = vadd.f32 %v3793, %v6553
    %v6560 = vadd.f32 %v3794, %v6554
    %v6561 = vadd.f32 %v3795, %v6555
    %v6562 = vadd.f32 %v3796, %v6556
    %s6563 = scalar_lea.vmem %s8, 1
    %v6564 = vld [vmem:[%s6563] sm:$0x1]
    %v6566 = vperm.slane %v6564, 0
    %v6568 = vadd.f32 %v6557, %v6566
    %v6569 = vadd.f32 %v6558, %v6566
    %v6570 = vadd.f32 %v6559, %v6566
    %v6571 = vadd.f32 %v6560, %v6566
    %v6572 = vadd.f32 %v6561, %v6566
    %v6573 = vadd.f32 %v6562, %v6566
    %6574 = vadd.xlane.f32.xlu0 %v6568
    %v6575 = vpop.xlane.xlu0 %6574
    %6576 = vadd.xlane.f32.xlu0 %v6569
    %v6577 = vpop.xlane.xlu0 %6576
    %6578 = vadd.xlane.f32.xlu0 %v6570
    %v6579 = vpop.xlane.xlu0 %6578
    %6580 = vadd.xlane.f32.xlu0 %v6571
    %v6581 = vpop.xlane.xlu0 %6580
    %6582 = vadd.xlane.f32.xlu0 %v6572
    %v6583 = vpop.xlane.xlu0 %6582
    %6584 = vadd.xlane.f32.xlu0 %v6573
    %v6585 = vpop.xlane.xlu0 %6584
    %v6586 = vmul.f32 %v6575, 0.008333334
    %v6587 = vmul.f32 %v6577, 0.008333334
    %v6588 = vmul.f32 %v6579, 0.008333334
    %v6589 = vmul.f32 %v6581, 0.008333334
    %v6590 = vmul.f32 %v6583, 0.008333334
    %v6591 = vmul.f32 %v6585, 0.008333334
    %v6592 = vsub.f32 %v6568, %v6586
    %v6593 = vsub.f32 %v6569, %v6587
    %v6594 = vsub.f32 %v6570, %v6588
    %v6595 = vsub.f32 %v6571, %v6589
    %v6596 = vsub.f32 %v6572, %v6590
    %v6597 = vsub.f32 %v6573, %v6591
    %v6598 = vmul.f32 %v6592, %v225
    %v6599 = vmul.f32 %v6593, %v225
    %v6600 = vmul.f32 %v6594, %v225
    %v6601 = vmul.f32 %v6595, %v225
    %v6602 = vmul.f32 %v6596, %v225
    %v6603 = vmul.f32 %v6597, %v225
    %v6604 = vmul.f32 %v6598, %v6598
    %v6605 = vmul.f32 %v6599, %v6599
    %v6606 = vmul.f32 %v6600, %v6600
    %v6607 = vmul.f32 %v6601, %v6601
    %v6608 = vmul.f32 %v6602, %v6602
    %v6609 = vmul.f32 %v6603, %v6603
    %6610 = vadd.xlane.f32.xlu0 %v6604
    %v6611 = vpop.xlane.xlu0 %6610
    %6612 = vadd.xlane.f32.xlu0 %v6605
    %v6613 = vpop.xlane.xlu0 %6612
    %6614 = vadd.xlane.f32.xlu0 %v6606
    %v6615 = vpop.xlane.xlu0 %6614
    %6616 = vadd.xlane.f32.xlu0 %v6607
    %v6617 = vpop.xlane.xlu0 %6616
    %6618 = vadd.xlane.f32.xlu0 %v6608
    %v6619 = vpop.xlane.xlu0 %6618
    %6620 = vadd.xlane.f32.xlu0 %v6609
    %v6621 = vpop.xlane.xlu0 %6620
    %v6622 = vmul.f32 %v6611, 0.008333334
    %v6623 = vmul.f32 %v6613, 0.008333334
    %v6624 = vmul.f32 %v6615, 0.008333334
    %v6625 = vmul.f32 %v6617, 0.008333334
    %v6626 = vmul.f32 %v6619, 0.008333334
    %v6627 = vmul.f32 %v6621, 0.008333334
    %v6628 = vadd.f32 %v6622, 1e-05
    %v6629 = vadd.f32 %v6623, 1e-05
    %v6630 = vadd.f32 %v6624, 1e-05
    %v6631 = vadd.f32 %v6625, 1e-05
    %v6632 = vadd.f32 %v6626, 1e-05
    %v6633 = vadd.f32 %v6627, 1e-05
    %v6634 = vrsqrt.pop %v6628
    %v6635 = vmul.f32 %v6634, %v6628
    %v6636 = vmul.f32 %v6635, %v6634
    %v6637 = vmul.f32 0.5, %v6636
    %v6638 = vsub.f32 1.5, %v6637
    %v6639 = vmul.f32 %v6634, %v6638
    %vm6640 = vweird.f32 %v6628
    %vm6641 = vweird.f32 %v6634
    %vm6642 = vmor %vm6640, %vm6641
    %v6643 = vsel %vm6642, %v6634, %v6639
    %v6644 = vrsqrt.pop %v6629
    %v6645 = vmul.f32 %v6644, %v6629
    %v6646 = vmul.f32 %v6645, %v6644
    %v6647 = vmul.f32 0.5, %v6646
    %v6648 = vsub.f32 1.5, %v6647
    %v6649 = vmul.f32 %v6644, %v6648
    %vm6650 = vweird.f32 %v6629
    %vm6651 = vweird.f32 %v6644
    %vm6652 = vmor %vm6650, %vm6651
    %v6653 = vsel %vm6652, %v6644, %v6649
    %v6654 = vrsqrt.pop %v6630
    %v6655 = vmul.f32 %v6654, %v6630
    %v6656 = vmul.f32 %v6655, %v6654
    %v6657 = vmul.f32 0.5, %v6656
    %v6658 = vsub.f32 1.5, %v6657
    %v6659 = vmul.f32 %v6654, %v6658
    %vm6660 = vweird.f32 %v6630
    %vm6661 = vweird.f32 %v6654
    %vm6662 = vmor %vm6660, %vm6661
    %v6663 = vsel %vm6662, %v6654, %v6659
    %v6664 = vrsqrt.pop %v6631
    %v6665 = vmul.f32 %v6664, %v6631
    %v6666 = vmul.f32 %v6665, %v6664
    %v6667 = vmul.f32 0.5, %v6666
    %v6668 = vsub.f32 1.5, %v6667
    %v6669 = vmul.f32 %v6664, %v6668
    %vm6670 = vweird.f32 %v6631
    %vm6671 = vweird.f32 %v6664
    %vm6672 = vmor %vm6670, %vm6671
    %v6673 = vsel %vm6672, %v6664, %v6669
    %v6674 = vrsqrt.pop %v6632
    %v6675 = vmul.f32 %v6674, %v6632
    %v6676 = vmul.f32 %v6675, %v6674
    %v6677 = vmul.f32 0.5, %v6676
    %v6678 = vsub.f32 1.5, %v6677
    %v6679 = vmul.f32 %v6674, %v6678
    %vm6680 = vweird.f32 %v6632
    %vm6681 = vweird.f32 %v6674
    %vm6682 = vmor %vm6680, %vm6681
    %v6683 = vsel %vm6682, %v6674, %v6679
    %v6684 = vrsqrt.pop %v6633
    %v6685 = vmul.f32 %v6684, %v6633
    %v6686 = vmul.f32 %v6685, %v6684
    %v6687 = vmul.f32 0.5, %v6686
    %v6688 = vsub.f32 1.5, %v6687
    %v6689 = vmul.f32 %v6684, %v6688
    %vm6690 = vweird.f32 %v6633
    %vm6691 = vweird.f32 %v6684
    %vm6692 = vmor %vm6690, %vm6691
    %v6693 = vsel %vm6692, %v6684, %v6689
    %v6694 = vmul.f32 %v6598, %v6643
    %v6695 = vmul.f32 %v6599, %v6653
    %v6696 = vmul.f32 %v6600, %v6663
    %v6697 = vmul.f32 %v6601, %v6673
    %v6698 = vmul.f32 %v6602, %v6683
    %v6699 = vmul.f32 %v6603, %v6693
    %v6700 = vpack.c.bf16 %v6695, %v6694
    %v6701 = vpack.c.bf16 %v6697, %v6696
    %v6702 = vpack.c.bf16 %v6699, %v6698
    %s6703 = scalar_lea.vmem [#allocation16], 128
    %v6704 = vld [vmem:[%s6703] sm:$0xff]
    %v6705 = vld [vmem:[%s6703 + $0x8] sm:$0xff]
    %v6706 = vld [vmem:[%s6703 + $0x10] sm:$0xff]
    %v6707 = vld [vmem:[%s6703 + $0x18] sm:$0xff]
    %v6708 = vld [vmem:[%s6703 + $0x20] sm:$0xff]
    %v6709 = vld [vmem:[%s6703 + $0x28] sm:$0xff]
    %v6710 = vld [vmem:[%s6703 + $0x30] sm:$0xff]
    %v6711 = vld [vmem:[%s6703 + $0x38] sm:$0xff]
    %v6712 = vld [vmem:[%s6703 + $0x40] sm:$0xff]
    %v6713 = vld [vmem:[%s6703 + $0x48] sm:$0xff]
    %v6714 = vld [vmem:[%s6703 + $0x50] sm:$0xff]
    %v6715 = vld [vmem:[%s6703 + $0x58] sm:$0xff]
    %v6716 = vld [vmem:[%s6703 + $0x60] sm:$0xff]
    %v6717 = vld [vmem:[%s6703 + $0x68] sm:$0xff]
    %v6718 = vld [vmem:[%s6703 + $0x70] sm:$0xff]
    %v6719 = vld [vmem:[%s6703 + $0x78] sm:$0xff]
    %s6720 = scalar_lea.vmem %s10, 2
    %v6721 = vld [vmem:[%s6720] sm:$0x3]
    %v6723 = vperm.slane %v6721, 0
    %v6724 = vperm.slane %v6721, 1
    %v6743 = vunpack.c.l.b16 %v6704
    %v6744 = vunpack.c.h.b16 %v6704
    %v6745 = vunpack.c.l.b16 %v6705
    %v6746 = vunpack.c.h.b16 %v6705
    %v6747 = vunpack.c.l.b16 %v6706
    %v6748 = vunpack.c.h.b16 %v6706
    %v6749 = vunpack.c.l.b16 %v6707
    %v6750 = vunpack.c.h.b16 %v6707
    %v6751 = vunpack.c.l.b16 %v6708
    %v6752 = vunpack.c.h.b16 %v6708
    %v6753 = vunpack.c.l.b16 %v6709
    %v6754 = vunpack.c.h.b16 %v6709
    %v6755 = vunpack.c.l.b16 %v6710
    %v6756 = vunpack.c.h.b16 %v6710
    %v6757 = vunpack.c.l.b16 %v6711
    %v6758 = vunpack.c.h.b16 %v6711
    %v6759 = vunpack.c.l.b16 %v6712
    %v6760 = vunpack.c.h.b16 %v6712
    %v6761 = vunpack.c.l.b16 %v6713
    %v6762 = vunpack.c.h.b16 %v6713
    %v6763 = vunpack.c.l.b16 %v6714
    %v6764 = vunpack.c.h.b16 %v6714
    %v6765 = vunpack.c.l.b16 %v6715
    %v6766 = vunpack.c.h.b16 %v6715
    %v6767 = vunpack.c.l.b16 %v6716
    %v6768 = vunpack.c.h.b16 %v6716
    %v6769 = vunpack.c.l.b16 %v6717
    %v6770 = vunpack.c.h.b16 %v6717
    %v6771 = vunpack.c.l.b16 %v6718
    %v6772 = vunpack.c.h.b16 %v6718
    %v6773 = vunpack.c.l.b16 %v6719
    %v6774 = vunpack.c.h.b16 %v6719
    %v6775 = vpack.c.b16 %v6745, %v6743
    %v6776 = vpack.c.b16 %v6746, %v6744
    %v6777 = vpack.c.b16 %v6749, %v6747
    %v6778 = vpack.c.b16 %v6750, %v6748
    %v6779 = vpack.c.b16 %v6753, %v6751
    %v6780 = vpack.c.b16 %v6754, %v6752
    %v6781 = vpack.c.b16 %v6757, %v6755
    %v6782 = vpack.c.b16 %v6758, %v6756
    %v6783 = vpack.c.b16 %v6761, %v6759
    %v6784 = vpack.c.b16 %v6762, %v6760
    %v6785 = vpack.c.b16 %v6765, %v6763
    %v6786 = vpack.c.b16 %v6766, %v6764
    %v6787 = vpack.c.b16 %v6769, %v6767
    %v6788 = vpack.c.b16 %v6770, %v6768
    %v6789 = vpack.c.b16 %v6773, %v6771
    %v6790 = vpack.c.b16 %v6774, %v6772
    %6807 = vmatpush.bf16.msra.mxu0 %v6789
    %6808 = vmatpush.bf16.msra.mxu0 %v6787
    %6809 = vmatpush.bf16.msra.mxu0 %v6785
    %6810 = vmatpush.bf16.msra.mxu0 %v6783
    %6811 = vmatpush.bf16.msra.mxu0 %v6781
    %6812 = vmatpush.bf16.msra.mxu0 %v6779
    %6813 = vmatpush.bf16.msra.mxu0 %v6777
    %6814 = vmatpush.bf16.msra.mxu0 %v6775
    %6815 = vmatmul.bf16.gmra.mxu0 %v6700
    %v6816 = vpop.f32.mrf.mxu0
    %v6817 = vadd.f32 %v6723, %v6816
    %v6818 = vpop.f32.mrf.mxu0
    %v6819 = vadd.f32 %v6723, %v6818
    %6820 = vmatmul.bf16.gmra.mxu0 %v6701
    %v6821 = vpop.f32.mrf.mxu0
    %v6822 = vadd.f32 %v6723, %v6821
    %v6823 = vpop.f32.mrf.mxu0
    %v6824 = vadd.f32 %v6723, %v6823
    %6825 = vmatmul.bf16.gmra.mxu0 %v6702
    %v6826 = vpop.f32.mrf.mxu0
    %v6827 = vadd.f32 %v6723, %v6826
    %v6828 = vpop.f32.mrf.mxu0
    %v6829 = vadd.f32 %v6723, %v6828
    %6830 = vdwg.mxu0
    %6831 = vmatpush.bf16.msra.mxu0 %v6790
    %6832 = vmatpush.bf16.msra.mxu0 %v6788
    %6833 = vmatpush.bf16.msra.mxu0 %v6786
    %6834 = vmatpush.bf16.msra.mxu0 %v6784
    %6835 = vmatpush.bf16.msra.mxu0 %v6782
    %6836 = vmatpush.bf16.msra.mxu0 %v6780
    %6837 = vmatpush.bf16.msra.mxu0 %v6778
    %6838 = vmatpush.bf16.msra.mxu0 %v6776
    %6839 = vmatmul.bf16.gmra.mxu0 %v6700
    %v6840 = vpop.f32.mrf.mxu0
    %v6841 = vadd.f32 %v6724, %v6840
    %v6842 = vpop.f32.mrf.mxu0
    %v6843 = vadd.f32 %v6724, %v6842
    %6844 = vmatmul.bf16.gmra.mxu0 %v6701
    %v6845 = vpop.f32.mrf.mxu0
    %v6846 = vadd.f32 %v6724, %v6845
    %v6847 = vpop.f32.mrf.mxu0
    %v6848 = vadd.f32 %v6724, %v6847
    %6849 = vmatmul.bf16.gmra.mxu0 %v6702
    %v6850 = vpop.f32.mrf.mxu0
    %v6851 = vadd.f32 %v6724, %v6850
    %v6852 = vpop.f32.mrf.mxu0
    %v6853 = vadd.f32 %v6724, %v6852
    %6854 = vdwg.mxu0
    %v6855 = vmul.f32 %v6817, %v6817
    %v6856 = vmul.f32 %v6841, %v6841
    %v6857 = vmul.f32 %v6819, %v6819
    %v6858 = vmul.f32 %v6843, %v6843
    %v6859 = vmul.f32 %v6822, %v6822
    %v6860 = vmul.f32 %v6846, %v6846
    %v6861 = vmul.f32 %v6824, %v6824
    %v6862 = vmul.f32 %v6848, %v6848
    %v6863 = vmul.f32 %v6827, %v6827
    %v6864 = vmul.f32 %v6851, %v6851
    %v6865 = vmul.f32 %v6829, %v6829
    %v6866 = vmul.f32 %v6853, %v6853
    %v6867 = vmul.f32 %v6817, %v6855
    %v6868 = vmul.f32 %v6841, %v6856
    %v6869 = vmul.f32 %v6819, %v6857
    %v6870 = vmul.f32 %v6843, %v6858
    %v6871 = vmul.f32 %v6822, %v6859
    %v6872 = vmul.f32 %v6846, %v6860
    %v6873 = vmul.f32 %v6824, %v6861
    %v6874 = vmul.f32 %v6848, %v6862
    %v6875 = vmul.f32 %v6827, %v6863
    %v6876 = vmul.f32 %v6851, %v6864
    %v6877 = vmul.f32 %v6829, %v6865
    %v6878 = vmul.f32 %v6853, %v6866
    %v6879 = vmul.f32 %v6867, 0.044715
    %v6880 = vmul.f32 %v6868, 0.044715
    %v6881 = vmul.f32 %v6869, 0.044715
    %v6882 = vmul.f32 %v6870, 0.044715
    %v6883 = vmul.f32 %v6871, 0.044715
    %v6884 = vmul.f32 %v6872, 0.044715
    %v6885 = vmul.f32 %v6873, 0.044715
    %v6886 = vmul.f32 %v6874, 0.044715
    %v6887 = vmul.f32 %v6875, 0.044715
    %v6888 = vmul.f32 %v6876, 0.044715
    %v6889 = vmul.f32 %v6877, 0.044715
    %v6890 = vmul.f32 %v6878, 0.044715
    %v6891 = vadd.f32 %v6817, %v6879
    %v6892 = vadd.f32 %v6841, %v6880
    %v6893 = vadd.f32 %v6819, %v6881
    %v6894 = vadd.f32 %v6843, %v6882
    %v6895 = vadd.f32 %v6822, %v6883
    %v6896 = vadd.f32 %v6846, %v6884
    %v6897 = vadd.f32 %v6824, %v6885
    %v6898 = vadd.f32 %v6848, %v6886
    %v6899 = vadd.f32 %v6827, %v6887
    %v6900 = vadd.f32 %v6851, %v6888
    %v6901 = vadd.f32 %v6829, %v6889
    %v6902 = vadd.f32 %v6853, %v6890
    %v6903 = vmul.f32 %v6891, 0.7978846
    %v6904 = vmul.f32 %v6892, 0.7978846
    %v6905 = vmul.f32 %v6893, 0.7978846
    %v6906 = vmul.f32 %v6894, 0.7978846
    %v6907 = vmul.f32 %v6895, 0.7978846
    %v6908 = vmul.f32 %v6896, 0.7978846
    %v6909 = vmul.f32 %v6897, 0.7978846
    %v6910 = vmul.f32 %v6898, 0.7978846
    %v6911 = vmul.f32 %v6899, 0.7978846
    %v6912 = vmul.f32 %v6900, 0.7978846
    %v6913 = vmul.f32 %v6901, 0.7978846
    %v6914 = vmul.f32 %v6902, 0.7978846
    %v6915 = vtanh.pop %v6903
    %v6916 = vtanh.pop %v6904
    %v6917 = vtanh.pop %v6905
    %v6918 = vtanh.pop %v6906
    %v6919 = vtanh.pop %v6907
    %v6920 = vtanh.pop %v6908
    %v6921 = vtanh.pop %v6909
    %v6922 = vtanh.pop %v6910
    %v6923 = vtanh.pop %v6911
    %v6924 = vtanh.pop %v6912
    %v6925 = vtanh.pop %v6913
    %v6926 = vtanh.pop %v6914
    %v6927 = vadd.f32 %v6915, 1.0
    %v6928 = vadd.f32 %v6916, 1.0
    %v6929 = vadd.f32 %v6917, 1.0
    %v6930 = vadd.f32 %v6918, 1.0
    %v6931 = vadd.f32 %v6919, 1.0
    %v6932 = vadd.f32 %v6920, 1.0
    %v6933 = vadd.f32 %v6921, 1.0
    %v6934 = vadd.f32 %v6922, 1.0
    %v6935 = vadd.f32 %v6923, 1.0
    %v6936 = vadd.f32 %v6924, 1.0
    %v6937 = vadd.f32 %v6925, 1.0
    %v6938 = vadd.f32 %v6926, 1.0
    %v6939 = vmul.f32 %v6927, 0.5
    %v6940 = vmul.f32 %v6928, 0.5
    %v6941 = vmul.f32 %v6929, 0.5
    %v6942 = vmul.f32 %v6930, 0.5
    %v6943 = vmul.f32 %v6931, 0.5
    %v6944 = vmul.f32 %v6932, 0.5
    %v6945 = vmul.f32 %v6933, 0.5
    %v6946 = vmul.f32 %v6934, 0.5
    %v6947 = vmul.f32 %v6935, 0.5
    %v6948 = vmul.f32 %v6936, 0.5
    %v6949 = vmul.f32 %v6937, 0.5
    %v6950 = vmul.f32 %v6938, 0.5
    %v6951 = vmul.f32 %v6817, %v6939
    %v6952 = vmul.f32 %v6841, %v6940
    %v6953 = vmul.f32 %v6819, %v6941
    %v6954 = vmul.f32 %v6843, %v6942
    %v6955 = vmul.f32 %v6822, %v6943
    %v6956 = vmul.f32 %v6846, %v6944
    %v6957 = vmul.f32 %v6824, %v6945
    %v6958 = vmul.f32 %v6848, %v6946
    %v6959 = vmul.f32 %v6827, %v6947
    %v6960 = vmul.f32 %v6851, %v6948
    %v6961 = vmul.f32 %v6829, %v6949
    %v6962 = vmul.f32 %v6853, %v6950
    %v6963 = vpack.c.bf16 %v6953, %v6951
    %v6964 = vpack.c.bf16 %v6954, %v6952
    %v6965 = vpack.c.bf16 %v6957, %v6955
    %v6966 = vpack.c.bf16 %v6958, %v6956
    %v6967 = vpack.c.bf16 %v6961, %v6959
    %v6968 = vpack.c.bf16 %v6962, %v6960
    %s6969 = scalar_lea.vmem [#allocation17], 128
    %v6970 = vld [vmem:[%s6969] sm:$0xf]
    %v6971 = vld [vmem:[%s6969 + $0x4] sm:$0xf]
    %v6972 = vld [vmem:[%s6969 + $0x8] sm:$0xf]
    %v6973 = vld [vmem:[%s6969 + $0xc] sm:$0xf]
    %v6974 = vld [vmem:[%s6969 + $0x10] sm:$0xf]
    %v6975 = vld [vmem:[%s6969 + $0x14] sm:$0xf]
    %v6976 = vld [vmem:[%s6969 + $0x18] sm:$0xf]
    %v6977 = vld [vmem:[%s6969 + $0x1c] sm:$0xf]
    %v6978 = vld [vmem:[%s6969 + $0x20] sm:$0xf]
    %v6979 = vld [vmem:[%s6969 + $0x24] sm:$0xf]
    %v6980 = vld [vmem:[%s6969 + $0x28] sm:$0xf]
    %v6981 = vld [vmem:[%s6969 + $0x2c] sm:$0xf]
    %v6982 = vld [vmem:[%s6969 + $0x30] sm:$0xf]
    %v6983 = vld [vmem:[%s6969 + $0x34] sm:$0xf]
    %v6984 = vld [vmem:[%s6969 + $0x38] sm:$0xf]
    %v6985 = vld [vmem:[%s6969 + $0x3c] sm:$0xf]
    %v6986 = vld [vmem:[%s6969 + $0x40] sm:$0xf]
    %v6987 = vld [vmem:[%s6969 + $0x44] sm:$0xf]
    %v6988 = vld [vmem:[%s6969 + $0x48] sm:$0xf]
    %v6989 = vld [vmem:[%s6969 + $0x4c] sm:$0xf]
    %v6990 = vld [vmem:[%s6969 + $0x50] sm:$0xf]
    %v6991 = vld [vmem:[%s6969 + $0x54] sm:$0xf]
    %v6992 = vld [vmem:[%s6969 + $0x58] sm:$0xf]
    %v6993 = vld [vmem:[%s6969 + $0x5c] sm:$0xf]
    %v6994 = vld [vmem:[%s6969 + $0x60] sm:$0xf]
    %v6995 = vld [vmem:[%s6969 + $0x64] sm:$0xf]
    %v6996 = vld [vmem:[%s6969 + $0x68] sm:$0xf]
    %v6997 = vld [vmem:[%s6969 + $0x6c] sm:$0xf]
    %v6998 = vld [vmem:[%s6969 + $0x70] sm:$0xf]
    %v6999 = vld [vmem:[%s6969 + $0x74] sm:$0xf]
    %v7000 = vld [vmem:[%s6969 + $0x78] sm:$0xf]
    %v7001 = vld [vmem:[%s6969 + $0x7c] sm:$0xf]
    %s7002 = scalar_lea.vmem %s12, 1
    %v7003 = vld [vmem:[%s7002] sm:$0x1]
    %v7005 = vperm.slane %v7003, 0
    %v7039 = vunpack.c.l.b16 %v6970
    %v7040 = vunpack.c.l.b16 %v6971
    %v7041 = vunpack.c.l.b16 %v6972
    %v7042 = vunpack.c.l.b16 %v6973
    %v7043 = vunpack.c.l.b16 %v6974
    %v7044 = vunpack.c.l.b16 %v6975
    %v7045 = vunpack.c.l.b16 %v6976
    %v7046 = vunpack.c.l.b16 %v6977
    %v7047 = vunpack.c.l.b16 %v6978
    %v7048 = vunpack.c.l.b16 %v6979
    %v7049 = vunpack.c.l.b16 %v6980
    %v7050 = vunpack.c.l.b16 %v6981
    %v7051 = vunpack.c.l.b16 %v6982
    %v7052 = vunpack.c.l.b16 %v6983
    %v7053 = vunpack.c.l.b16 %v6984
    %v7054 = vunpack.c.l.b16 %v6985
    %v7055 = vunpack.c.l.b16 %v6986
    %v7056 = vunpack.c.l.b16 %v6987
    %v7057 = vunpack.c.l.b16 %v6988
    %v7058 = vunpack.c.l.b16 %v6989
    %v7059 = vunpack.c.l.b16 %v6990
    %v7060 = vunpack.c.l.b16 %v6991
    %v7061 = vunpack.c.l.b16 %v6992
    %v7062 = vunpack.c.l.b16 %v6993
    %v7063 = vunpack.c.l.b16 %v6994
    %v7064 = vunpack.c.l.b16 %v6995
    %v7065 = vunpack.c.l.b16 %v6996
    %v7066 = vunpack.c.l.b16 %v6997
    %v7067 = vunpack.c.l.b16 %v6998
    %v7068 = vunpack.c.l.b16 %v6999
    %v7069 = vunpack.c.l.b16 %v7000
    %v7070 = vunpack.c.l.b16 %v7001
    %v7071 = vpack.c.b16 %v7040, %v7039
    %v7072 = vpack.c.b16 %v7042, %v7041
    %v7073 = vpack.c.b16 %v7044, %v7043
    %v7074 = vpack.c.b16 %v7046, %v7045
    %v7075 = vpack.c.b16 %v7048, %v7047
    %v7076 = vpack.c.b16 %v7050, %v7049
    %v7077 = vpack.c.b16 %v7052, %v7051
    %v7078 = vpack.c.b16 %v7054, %v7053
    %v7079 = vpack.c.b16 %v7056, %v7055
    %v7080 = vpack.c.b16 %v7058, %v7057
    %v7081 = vpack.c.b16 %v7060, %v7059
    %v7082 = vpack.c.b16 %v7062, %v7061
    %v7083 = vpack.c.b16 %v7064, %v7063
    %v7084 = vpack.c.b16 %v7066, %v7065
    %v7085 = vpack.c.b16 %v7068, %v7067
    %v7086 = vpack.c.b16 %v7070, %v7069
    %7103 = vmatpush.bf16.msra.mxu0 %v7078
    %7104 = vmatpush.bf16.msra.mxu0 %v7077
    %7105 = vmatpush.bf16.msra.mxu0 %v7076
    %7106 = vmatpush.bf16.msra.mxu0 %v7075
    %7107 = vmatpush.bf16.msra.mxu0 %v7074
    %7108 = vmatpush.bf16.msra.mxu0 %v7073
    %7109 = vmatpush.bf16.msra.mxu0 %v7072
    %7110 = vmatpush.bf16.msra.mxu0 %v7071
    %7111 = vmatmul.bf16.gmra.mxu0 %v6963
    %v7112 = vpop.f32.mrf.mxu0
    %v7113 = vadd.f32 %v7005, %v7112
    %v7114 = vpop.f32.mrf.mxu0
    %v7115 = vadd.f32 %v7005, %v7114
    %7116 = vmatmul.bf16.gmra.mxu0 %v6965
    %v7117 = vpop.f32.mrf.mxu0
    %v7118 = vadd.f32 %v7005, %v7117
    %v7119 = vpop.f32.mrf.mxu0
    %v7120 = vadd.f32 %v7005, %v7119
    %7121 = vmatmul.bf16.gmra.mxu0 %v6967
    %v7122 = vpop.f32.mrf.mxu0
    %v7123 = vadd.f32 %v7005, %v7122
    %v7124 = vpop.f32.mrf.mxu0
    %v7125 = vadd.f32 %v7005, %v7124
    %7126 = vdwg.mxu0
    %7127 = vmatpush.bf16.msra.mxu0 %v7086
    %7128 = vmatpush.bf16.msra.mxu0 %v7085
    %7129 = vmatpush.bf16.msra.mxu0 %v7084
    %7130 = vmatpush.bf16.msra.mxu0 %v7083
    %7131 = vmatpush.bf16.msra.mxu0 %v7082
    %7132 = vmatpush.bf16.msra.mxu0 %v7081
    %7133 = vmatpush.bf16.msra.mxu0 %v7080
    %7134 = vmatpush.bf16.msra.mxu0 %v7079
    %7135 = vmatmul.bf16.gmra.mxu0 %v6964
    %v7136 = vpop.f32.mrf.mxu0
    %v7137 = vadd.f32 %v7113, %v7136
    %v7138 = vpop.f32.mrf.mxu0
    %v7139 = vadd.f32 %v7115, %v7138
    %7140 = vmatmul.bf16.gmra.mxu0 %v6966
    %v7141 = vpop.f32.mrf.mxu0
    %v7142 = vadd.f32 %v7118, %v7141
    %v7143 = vpop.f32.mrf.mxu0
    %v7144 = vadd.f32 %v7120, %v7143
    %7145 = vmatmul.bf16.gmra.mxu0 %v6968
    %v7146 = vpop.f32.mrf.mxu0
    %v7147 = vadd.f32 %v7123, %v7146
    %v7148 = vpop.f32.mrf.mxu0
    %v7149 = vadd.f32 %v7125, %v7148
    %7150 = vdwg.mxu0
    %v7151 = vadd.f32 %v6568, %v7137
    %v7152 = vadd.f32 %v6569, %v7139
    %v7153 = vadd.f32 %v6570, %v7142
    %v7154 = vadd.f32 %v6571, %v7144
    %v7155 = vadd.f32 %v6572, %v7147
    %v7156 = vadd.f32 %v6573, %v7149
    %7157 = vadd.xlane.f32.xlu0 %v7151
    %v7158 = vpop.xlane.xlu0 %7157
    %7159 = vadd.xlane.f32.xlu0 %v7152
    %v7160 = vpop.xlane.xlu0 %7159
    %7161 = vadd.xlane.f32.xlu0 %v7153
    %v7162 = vpop.xlane.xlu0 %7161
    %7163 = vadd.xlane.f32.xlu0 %v7154
    %v7164 = vpop.xlane.xlu0 %7163
    %7165 = vadd.xlane.f32.xlu0 %v7155
    %v7166 = vpop.xlane.xlu0 %7165
    %7167 = vadd.xlane.f32.xlu0 %v7156
    %v7168 = vpop.xlane.xlu0 %7167
    %v7169 = vmul.f32 %v7158, 0.008333334
    %v7170 = vmul.f32 %v7160, 0.008333334
    %v7171 = vmul.f32 %v7162, 0.008333334
    %v7172 = vmul.f32 %v7164, 0.008333334
    %v7173 = vmul.f32 %v7166, 0.008333334
    %v7174 = vmul.f32 %v7168, 0.008333334
    %v7175 = vsub.f32 %v7151, %v7169
    %v7176 = vsub.f32 %v7152, %v7170
    %v7177 = vsub.f32 %v7153, %v7171
    %v7178 = vsub.f32 %v7154, %v7172
    %v7179 = vsub.f32 %v7155, %v7173
    %v7180 = vsub.f32 %v7156, %v7174
    %v7181 = vmul.f32 %v7175, %v225
    %v7182 = vmul.f32 %v7176, %v225
    %v7183 = vmul.f32 %v7177, %v225
    %v7184 = vmul.f32 %v7178, %v225
    %v7185 = vmul.f32 %v7179, %v225
    %v7186 = vmul.f32 %v7180, %v225
    %v7187 = vmul.f32 %v7181, %v7181
    %v7188 = vmul.f32 %v7182, %v7182
    %v7189 = vmul.f32 %v7183, %v7183
    %v7190 = vmul.f32 %v7184, %v7184
    %v7191 = vmul.f32 %v7185, %v7185
    %v7192 = vmul.f32 %v7186, %v7186
    %7193 = vadd.xlane.f32.xlu0 %v7187
    %v7194 = vpop.xlane.xlu0 %7193
    %7195 = vadd.xlane.f32.xlu0 %v7188
    %v7196 = vpop.xlane.xlu0 %7195
    %7197 = vadd.xlane.f32.xlu0 %v7189
    %v7198 = vpop.xlane.xlu0 %7197
    %7199 = vadd.xlane.f32.xlu0 %v7190
    %v7200 = vpop.xlane.xlu0 %7199
    %7201 = vadd.xlane.f32.xlu0 %v7191
    %v7202 = vpop.xlane.xlu0 %7201
    %7203 = vadd.xlane.f32.xlu0 %v7192
    %v7204 = vpop.xlane.xlu0 %7203
    %v7205 = vmul.f32 %v7194, 0.008333334
    %v7206 = vmul.f32 %v7196, 0.008333334
    %v7207 = vmul.f32 %v7198, 0.008333334
    %v7208 = vmul.f32 %v7200, 0.008333334
    %v7209 = vmul.f32 %v7202, 0.008333334
    %v7210 = vmul.f32 %v7204, 0.008333334
    %v7211 = vadd.f32 %v7205, 1e-05
    %v7212 = vadd.f32 %v7206, 1e-05
    %v7213 = vadd.f32 %v7207, 1e-05
    %v7214 = vadd.f32 %v7208, 1e-05
    %v7215 = vadd.f32 %v7209, 1e-05
    %v7216 = vadd.f32 %v7210, 1e-05
    %v7217 = vrsqrt.pop %v7211
    %v7218 = vmul.f32 %v7217, %v7211
    %v7219 = vmul.f32 %v7218, %v7217
    %v7220 = vmul.f32 0.5, %v7219
    %v7221 = vsub.f32 1.5, %v7220
    %v7222 = vmul.f32 %v7217, %v7221
    %vm7223 = vweird.f32 %v7211
    %vm7224 = vweird.f32 %v7217
    %vm7225 = vmor %vm7223, %vm7224
    %v7226 = vsel %vm7225, %v7217, %v7222
    %v7227 = vrsqrt.pop %v7212
    %v7228 = vmul.f32 %v7227, %v7212
    %v7229 = vmul.f32 %v7228, %v7227
    %v7230 = vmul.f32 0.5, %v7229
    %v7231 = vsub.f32 1.5, %v7230
    %v7232 = vmul.f32 %v7227, %v7231
    %vm7233 = vweird.f32 %v7212
    %vm7234 = vweird.f32 %v7227
    %vm7235 = vmor %vm7233, %vm7234
    %v7236 = vsel %vm7235, %v7227, %v7232
    %v7237 = vrsqrt.pop %v7213
    %v7238 = vmul.f32 %v7237, %v7213
    %v7239 = vmul.f32 %v7238, %v7237
    %v7240 = vmul.f32 0.5, %v7239
    %v7241 = vsub.f32 1.5, %v7240
    %v7242 = vmul.f32 %v7237, %v7241
    %vm7243 = vweird.f32 %v7213
    %vm7244 = vweird.f32 %v7237
    %vm7245 = vmor %vm7243, %vm7244
    %v7246 = vsel %vm7245, %v7237, %v7242
    %v7247 = vrsqrt.pop %v7214
    %v7248 = vmul.f32 %v7247, %v7214
    %v7249 = vmul.f32 %v7248, %v7247
    %v7250 = vmul.f32 0.5, %v7249
    %v7251 = vsub.f32 1.5, %v7250
    %v7252 = vmul.f32 %v7247, %v7251
    %vm7253 = vweird.f32 %v7214
    %vm7254 = vweird.f32 %v7247
    %vm7255 = vmor %vm7253, %vm7254
    %v7256 = vsel %vm7255, %v7247, %v7252
    %v7257 = vrsqrt.pop %v7215
    %v7258 = vmul.f32 %v7257, %v7215
    %v7259 = vmul.f32 %v7258, %v7257
    %v7260 = vmul.f32 0.5, %v7259
    %v7261 = vsub.f32 1.5, %v7260
    %v7262 = vmul.f32 %v7257, %v7261
    %vm7263 = vweird.f32 %v7215
    %vm7264 = vweird.f32 %v7257
    %vm7265 = vmor %vm7263, %vm7264
    %v7266 = vsel %vm7265, %v7257, %v7262
    %v7267 = vrsqrt.pop %v7216
    %v7268 = vmul.f32 %v7267, %v7216
    %v7269 = vmul.f32 %v7268, %v7267
    %v7270 = vmul.f32 0.5, %v7269
    %v7271 = vsub.f32 1.5, %v7270
    %v7272 = vmul.f32 %v7267, %v7271
    %vm7273 = vweird.f32 %v7216
    %vm7274 = vweird.f32 %v7267
    %vm7275 = vmor %vm7273, %vm7274
    %v7276 = vsel %vm7275, %v7267, %v7272
    %v7277 = vmul.f32 %v7181, %v7226
    %v7278 = vmul.f32 %v7182, %v7236
    %v7279 = vmul.f32 %v7183, %v7246
    %v7280 = vmul.f32 %v7184, %v7256
    %v7281 = vmul.f32 %v7185, %v7266
    %v7282 = vmul.f32 %v7186, %v7276
    %v7283 = vpack.c.bf16 %v7278, %v7277
    %v7284 = vpack.c.bf16 %v7280, %v7279
    %v7285 = vpack.c.bf16 %v7282, %v7281
    %v7286 = vld [vmem:[#allocation19] sm:$0xf]
    %v7287 = vld [vmem:[#allocation19 + $0x4] sm:$0xf]
    %v7288 = vld [vmem:[#allocation19 + $0x8] sm:$0xf]
    %v7289 = vld [vmem:[#allocation19 + $0xc] sm:$0xf]
    %v7290 = vld [vmem:[#allocation19 + $0x10] sm:$0xf]
    %v7291 = vld [vmem:[#allocation19 + $0x14] sm:$0xf]
    %v7292 = vld [vmem:[#allocation19 + $0x18] sm:$0xf]
    %v7293 = vld [vmem:[#allocation19 + $0x1c] sm:$0xf]
    %v7294 = vld [vmem:[#allocation19 + $0x20] sm:$0xf]
    %v7295 = vld [vmem:[#allocation19 + $0x24] sm:$0xf]
    %v7296 = vld [vmem:[#allocation19 + $0x28] sm:$0xf]
    %v7297 = vld [vmem:[#allocation19 + $0x2c] sm:$0xf]
    %v7298 = vld [vmem:[#allocation19 + $0x30] sm:$0xf]
    %v7299 = vld [vmem:[#allocation19 + $0x34] sm:$0xf]
    %v7300 = vld [vmem:[#allocation19 + $0x38] sm:$0xf]
    %v7301 = vld [vmem:[#allocation19 + $0x3c] sm:$0xf]
    %v7302 = vld [vmem:[%s14] sm:$0x1]
    %v7304 = vperm.slane %v7302, 0
    %v7322 = vunpack.c.l.b16 %v7286
    %v7323 = vunpack.c.l.b16 %v7287
    %v7324 = vunpack.c.l.b16 %v7288
    %v7325 = vunpack.c.l.b16 %v7289
    %v7326 = vunpack.c.l.b16 %v7290
    %v7327 = vunpack.c.l.b16 %v7291
    %v7328 = vunpack.c.l.b16 %v7292
    %v7329 = vunpack.c.l.b16 %v7293
    %v7330 = vunpack.c.l.b16 %v7294
    %v7331 = vunpack.c.l.b16 %v7295
    %v7332 = vunpack.c.l.b16 %v7296
    %v7333 = vunpack.c.l.b16 %v7297
    %v7334 = vunpack.c.l.b16 %v7298
    %v7335 = vunpack.c.l.b16 %v7299
    %v7336 = vunpack.c.l.b16 %v7300
    %v7337 = vunpack.c.l.b16 %v7301
    %v7338 = vpack.c.b16 %v7323, %v7322
    %v7339 = vpack.c.b16 %v7325, %v7324
    %v7340 = vpack.c.b16 %v7327, %v7326
    %v7341 = vpack.c.b16 %v7329, %v7328
    %v7342 = vpack.c.b16 %v7331, %v7330
    %v7343 = vpack.c.b16 %v7333, %v7332
    %v7344 = vpack.c.b16 %v7335, %v7334
    %v7345 = vpack.c.b16 %v7337, %v7336
    %7354 = vmatpush.bf16.msra.mxu0 %v7345
    %7355 = vmatpush.bf16.msra.mxu0 %v7344
    %7356 = vmatpush.bf16.msra.mxu0 %v7343
    %7357 = vmatpush.bf16.msra.mxu0 %v7342
    %7358 = vmatpush.bf16.msra.mxu0 %v7341
    %7359 = vmatpush.bf16.msra.mxu0 %v7340
    %7360 = vmatpush.bf16.msra.mxu0 %v7339
    %7361 = vmatpush.bf16.msra.mxu0 %v7338
    %7362 = vmatmul.bf16.gmra.mxu0 %v7283
    %v7363 = vpop.f32.mrf.mxu0
    %v7364 = vadd.f32 %v7304, %v7363
    %v7365 = vpop.f32.mrf.mxu0
    %v7366 = vadd.f32 %v7304, %v7365
    %7367 = vmatmul.bf16.gmra.mxu0 %v7284
    %v7368 = vpop.f32.mrf.mxu0
    %v7369 = vadd.f32 %v7304, %v7368
    %v7370 = vpop.f32.mrf.mxu0
    %v7371 = vadd.f32 %v7304, %v7370
    %7372 = vmatmul.bf16.gmra.mxu0 %v7285
    %v7373 = vpop.f32.mrf.mxu0
    %v7374 = vadd.f32 %v7304, %v7373
    %v7375 = vpop.f32.mrf.mxu0
    %v7376 = vadd.f32 %v7304, %v7375
    %7377 = vdwg.mxu0
    %7378 = vmax.xlane.f32.xlu0 %v7364
    %v7379 = vpop.xlane.xlu0 %7378
    %7380 = vmax.xlane.f32.xlu0 %v7366
    %v7381 = vpop.xlane.xlu0 %7380
    %7382 = vmax.xlane.f32.xlu0 %v7369
    %v7383 = vpop.xlane.xlu0 %7382
    %7384 = vmax.xlane.f32.xlu0 %v7371
    %v7385 = vpop.xlane.xlu0 %7384
    %7386 = vmax.xlane.f32.xlu0 %v7374
    %v7387 = vpop.xlane.xlu0 %7386
    %7388 = vmax.xlane.f32.xlu0 %v7376
    %v7389 = vpop.xlane.xlu0 %7388
    %v7390 = vsub.f32 %v7364, %v7379
    %v7391 = vsub.f32 %v7366, %v7381
    %v7392 = vsub.f32 %v7369, %v7383
    %v7393 = vsub.f32 %v7371, %v7385
    %v7394 = vsub.f32 %v7374, %v7387
    %v7395 = vsub.f32 %v7376, %v7389
    %v7396 = vmul.f32 %v7390, 1.442695
    %v7397 = vpow.pop %v7396
    %v7398 = vmul.f32 %v7391, 1.442695
    %v7399 = vpow.pop %v7398
    %v7400 = vmul.f32 %v7392, 1.442695
    %v7401 = vpow.pop %v7400
    %v7402 = vmul.f32 %v7393, 1.442695
    %v7403 = vpow.pop %v7402
    %v7404 = vmul.f32 %v7394, 1.442695
    %v7405 = vpow.pop %v7404
    %v7406 = vmul.f32 %v7395, 1.442695
    %v7407 = vpow.pop %v7406
    %7408 = vadd.xlane.f32.xlu0 %v7397
    %v7409 = vpop.xlane.xlu0 %7408
    %7410 = vadd.xlane.f32.xlu0 %v7399
    %v7411 = vpop.xlane.xlu0 %7410
    %7412 = vadd.xlane.f32.xlu0 %v7401
    %v7413 = vpop.xlane.xlu0 %7412
    %7414 = vadd.xlane.f32.xlu0 %v7403
    %v7415 = vpop.xlane.xlu0 %7414
    %7416 = vadd.xlane.f32.xlu0 %v7405
    %v7417 = vpop.xlane.xlu0 %7416
    %7418 = vadd.xlane.f32.xlu0 %v7407
    %v7419 = vpop.xlane.xlu0 %7418
    %v7420 = vlog2.pop %v7409
    %v7421 = vmul.f32 %v7420, 0.6931472
    %v7422 = vlog2.pop %v7411
    %v7423 = vmul.f32 %v7422, 0.6931472
    %v7424 = vlog2.pop %v7413
    %v7425 = vmul.f32 %v7424, 0.6931472
    %v7426 = vlog2.pop %v7415
    %v7427 = vmul.f32 %v7426, 0.6931472
    %v7428 = vlog2.pop %v7417
    %v7429 = vmul.f32 %v7428, 0.6931472
    %v7430 = vlog2.pop %v7419
    %v7431 = vmul.f32 %v7430, 0.6931472
    %v7432 = vsub.f32 %v7390, %v7421
    %v7433 = vsub.f32 %v7391, %v7423
    %v7434 = vsub.f32 %v7392, %v7425
    %v7435 = vsub.f32 %v7393, %v7427
    %v7436 = vsub.f32 %v7394, %v7429
    %v7437 = vsub.f32 %v7395, %v7431
    %7438 = vst [vmem:[#allocation20] sm:$0xff] %v7432
    %7439 = vst [vmem:[#allocation20 + $0x8] sm:$0xff] %v7433
    %7440 = vst [vmem:[#allocation20 + $0x10] sm:$0xff] %v7434
    %7441 = vst [vmem:[#allocation20 + $0x18] sm:$0xff] %v7435
    %7442 = vst [vmem:[#allocation20 + $0x20] sm:$0xff] %v7436
    %7443 = vst [vmem:[#allocation20 + $0x28] sm:$0xff] %v7437
    // Predicated region
    $region106: #{tpu_custom_call.1} parent=1 // pred_check
      _
    $region107: #{tpu_custom_call.1} parent=1 // pred_check_branch
      %7445 = sbr.rel (0) target = $region109
    $region108: #{tpu_custom_call.1} parent=1 // pred_region
      %7447 = vsyncadd [#allocation4], 0
      %s7448 = sshll.u32 [#allocation20], 4
      %s7449 = int_to_ptr.vmem [resolvable:$true] %s7448
      %s7450 = sshll.u32 %s15, 4
      %s7451 = int_to_ptr.hbm [resolvable:$true] %s7450
      %7456 = dma.vmem_to_hbm [thread:$0]  %s7449, 768, %s7451, [#allocation4], 128, 128, 8
    $region109: #{tpu_custom_call.1} parent=1 // pred_fallthru
      _
    // Predicated region
    $region110: #{tpu_custom_call.1} parent=1 // pred_check
      _
    $region111: #{tpu_custom_call.1} parent=1 // pred_check_branch
      %7458 = sbr.rel (0) target = $region113
    $region112: #{tpu_custom_call.1} parent=1 // pred_region
      %7460 = dma.done [#allocation4], 768
    $region113: #{tpu_custom_call.1} parent=1 // pred_fallthru
      _
    %7461 = vsyncpa [#allocation3], 1
    %7462 = vsyncpa [#allocation6], 1
    %7463 = vsyncpa [#allocation9], 1
    %7464 = vsyncpa [#allocation12], 1
    %7465 = vsyncpa [#allocation15], 1
    %7466 = vsyncpa [#allocation18], 1
    %7467 = vsyncpa [#allocation4], 1

</llo_original>
